<compile_context>
chip_gen: v7x
topology: tpu7x:2x2x1
jax: 0.10.0
libtpu: 0.0.40
codegen_flags: <defaults>
</compile_context>

<pallas_src>
import functools

import jax
import jax.numpy as jnp
from jax.experimental import pallas as pl
from jax.experimental.pallas import tpu as pltpu

NEG_SLOPE = 0.2      # LeakyReLU(0.2)
BN_EPS = 1e-5
LANE = 128
MAX_TM = 512         # output pixels (lanes) per grid step


def _leaky(x):
    return jnp.where(x >= 0.0, x, NEG_SLOPE * x)


# ----------------------------------------------------------------------------
# Pallas kernel: fused (deferred-BN+leaky prologue) -> matmul -> (bias/leaky) epilogue
#                + masked per-channel sum / sumsq of the raw conv output.
# ----------------------------------------------------------------------------
def _conv_kernel(p_ref, w_ref, ps_ref, pb_ref, eb_ref,
                 o_ref, ssum_ref, ssq_ref, *,
                 prologue, epi_bias, epi_leaky, m_valid, block_m):
    p = p_ref[...]                                                  # (K, TM) bf16
    if prologue:
        # previous layer's BatchNorm + LeakyReLU, applied per input channel
        # (tiled over the kh*kw kernel positions of the K axis); f32 math.
        pf = p.astype(jnp.float32) * ps_ref[...] + pb_ref[...]
        p = _leaky(pf).astype(jnp.bfloat16)

    acc = jnp.dot(w_ref[...], p, preferred_element_type=jnp.float32)  # (Cout, TM) f32

    # per-channel batch statistics of the raw conv output, masking padded columns
    col = pl.program_id(0) * block_m + jax.lax.broadcasted_iota(
        jnp.int32, (1, block_m), 1)
    masked = jnp.where(col < m_valid, acc, 0.0)
    ssum_ref[...] = jnp.sum(masked, axis=1, keepdims=True)[None]       # (1, Cout, 1)
    ssq_ref[...] = jnp.sum(masked * masked, axis=1, keepdims=True)[None]

    out = acc
    if epi_bias:
        out = out + eb_ref[...]
    if epi_leaky:
        out = _leaky(out)
    o_ref[...] = out.astype(o_ref.dtype)


# ----------------------------------------------------------------------------
# Wrapper around the Pallas conv kernel
# ----------------------------------------------------------------------------
def _round_up(x, m):
    return ((x + m - 1) // m) * m


def _choose_tm(m_pad):
    """Largest tile <= MAX_TM dividing m_pad, preferring >=2 grid steps (v7x dual TC)."""
    tm = min(MAX_TM, m_pad)
    while tm > LANE and (m_pad % tm != 0 or m_pad // tm < 2):
        tm -= LANE
    return tm


def _conv_pallas(patches, w_mat, pro_scale, pro_shift, bias, *,
                 prologue, epi_bias, epi_leaky, out_dtype):
    """patches: (K, M) bf16 (im2col, K = kernel-pos-major / channel-minor),
       w_mat: (Cout, K).  Returns (out[Cout, M], per-channel sum, sumsq)."""
    patches = patches.astype(jnp.bfloat16)
    K, M = patches.shape
    cout = w_mat.shape[0]
    cout_p = _round_up(cout, 8)
    m_pad = _round_up(M, LANE)
    tm = _choose_tm(m_pad)
    ntiles = m_pad // tm

    if m_pad != M:
        patches = jnp.pad(patches, ((0, 0), (0, m_pad - M)))
    w_p = jnp.zeros((cout_p, K), jnp.bfloat16).at[:cout].set(w_mat.astype(jnp.bfloat16))
    if bias is None:
        bias = jnp.zeros((cout,), jnp.float32)
    eb = jnp.zeros((cout_p, 1), jnp.float32).at[:cout, 0].set(bias.astype(jnp.float32))
    if pro_scale is None:
        ps = jnp.ones((K, 1), jnp.float32)
        pb = jnp.zeros((K, 1), jnp.float32)
    else:
        reps = K // pro_scale.shape[0]          # = kh*kw (K is pos-major, channel-minor)
        ps = jnp.tile(pro_scale.astype(jnp.float32), reps).reshape(K, 1)
        pb = jnp.tile(pro_shift.astype(jnp.float32), reps).reshape(K, 1)

    kernel = functools.partial(
        _conv_kernel, prologue=prologue, epi_bias=epi_bias, epi_leaky=epi_leaky,
        m_valid=M, block_m=tm)

    out, ssum, ssq = pl.pallas_call(
        kernel,
        out_shape=(
            jax.ShapeDtypeStruct((cout_p, m_pad), out_dtype),
            jax.ShapeDtypeStruct((ntiles, cout_p, 1), jnp.float32),
            jax.ShapeDtypeStruct((ntiles, cout_p, 1), jnp.float32),
        ),
        grid_spec=pltpu.PrefetchScalarGridSpec(
            num_scalar_prefetch=0,
            grid=(ntiles,),
            in_specs=[
                pl.BlockSpec((K, tm), lambda i: (0, i)),       # patch tile (bf16)
                pl.BlockSpec((cout_p, K), lambda i: (0, 0)),   # weights (bf16, resident)
                pl.BlockSpec((K, 1), lambda i: (0, 0)),        # prologue scale (f32)
                pl.BlockSpec((K, 1), lambda i: (0, 0)),        # prologue shift (f32)
                pl.BlockSpec((cout_p, 1), lambda i: (0, 0)),   # epilogue bias (f32)
            ],
            out_specs=[
                pl.BlockSpec((cout_p, tm), lambda i: (0, i)),      # lane-dense output
                pl.BlockSpec((1, cout_p, 1), lambda i: (i, 0, 0)),  # per-tile sum
                pl.BlockSpec((1, cout_p, 1), lambda i: (i, 0, 0)),  # per-tile sumsq
            ],
        ),
        compiler_params=pltpu.CompilerParams(dimension_semantics=("parallel",)),
    )(patches, w_p, ps, pb, eb)

    out = out[:cout, :M]
    ssum = jnp.sum(ssum[:, :cout, 0], axis=0)      # (cout,)
    ssq = jnp.sum(ssq[:, :cout, 0], axis=0)
    return out, ssum, ssq


# ----------------------------------------------------------------------------
# JAX glue: channels-first im2col + weight packing
# ----------------------------------------------------------------------------
def _im2col_cf(x, kh, kw, stride):
    """x: (C, N, H, W) -> patches (kh*kw*C, N*Ho*Wo); K ordered (ki, kj, c)."""
    c, n, h, w = x.shape
    ho = (h - kh) // stride + 1
    wo = (w - kw) // stride + 1
    cols = [x[:, :, i:i + stride * ho:stride, j:j + stride * wo:stride]
            for i in range(kh) for j in range(kw)]
    p = jnp.stack(cols, axis=0)                       # (kh*kw, C, N, Ho, Wo)
    return p.reshape(kh * kw * c, n * ho * wo), ho, wo


def _w_mat(w):
    """(kh, kw, cin, cout) -> (cout, kh*kw*cin), K ordered (ki, kj, c)."""
    kh, kw, cin, cout = w.shape
    return jnp.transpose(w, (3, 0, 1, 2)).reshape(cout, kh * kw * cin)


def _reflect_pad_hw(x, p):
    return jnp.pad(x, ((0, 0), (0, 0), (p, p), (p, p)), mode="reflect")


# ----------------------------------------------------------------------------
# Discriminator parameters + forward
# ----------------------------------------------------------------------------
def init_params(key, in_channels=3, fmaps=(8, 16, 32, 64)):
    keys = jax.random.split(key, 16)
    idx = 0

    def rnd(shape):
        nonlocal idx
        out = 0.05 * jax.random.normal(keys[idx], shape, jnp.float32)
        idx += 1
        return out

    params = {
        # initLayer: Conv2d(in*2 -> fmaps[0], k4, s2, p1 reflect, bias) + LeakyReLU
        "w0": rnd((4, 4, in_channels * 2, fmaps[0])),
        "b0": rnd((fmaps[0],)),
        "blocks": [],
    }
    cin = fmaps[0]
    for f in fmaps[1:]:
        stride = 1 if f == fmaps[-1] else 2
        params["blocks"].append(dict(
            w=rnd((4, 4, cin, f)),
            gamma=jnp.ones((f,), jnp.float32),   # torch BatchNorm2d default weight
            beta=jnp.zeros((f,), jnp.float32),   # torch BatchNorm2d default bias
            stride=stride,
        ))
        cin = f
    # final: Conv2d(fmaps[-1] -> 1, k4, s1, p1 reflect, bias)
    params["wf"] = rnd((4, 4, cin, 1))
    params["bf"] = rnd((1,))
    return params


def discriminator_forward(params, x_nchw, y_nchw):
    n = x_nchw.shape[0]
    # NCHW -> channels-first 2D layout (C, N, H, W); torch.cat(dim=1) == axis-0 concat.
    x = jnp.transpose(x_nchw, (1, 0, 2, 3))
    y = jnp.transpose(y_nchw, (1, 0, 2, 3))
    h = jnp.concatenate([x, y], axis=0).astype(jnp.bfloat16)

    # initLayer: conv(k4, s2, p1 reflect, bias) + LeakyReLU(0.2)
    h = _reflect_pad_hw(h, 1)
    patches, ho, wo = _im2col_cf(h, 4, 4, 2)
    cur, _, _ = _conv_pallas(patches, _w_mat(params["w0"]), None, None, params["b0"],
                             prologue=False, epi_bias=True, epi_leaky=True,
                             out_dtype=jnp.bfloat16)
    hw = (ho, wo)
    pending = None   # deferred (scale_c, shift_c) of the previous block's BN+leaky

    # ConvBlocks: conv(k4, stride, p0, no bias) -> BatchNorm2d -> LeakyReLU(0.2)
    # BN+LeakyReLU of block i is applied as the prologue of the following conv kernel;
    # the batch statistics are produced by block i's own conv kernel (masked sums).
    for blk in params["blocks"]:
        c = cur.shape[0]
        x4 = cur.reshape(c, n, hw[0], hw[1])
        patches, ho, wo = _im2col_cf(x4, 4, 4, blk["stride"])
        ps, pb = (None, None) if pending is None else pending
        out, ssum, ssq = _conv_pallas(patches, _w_mat(blk["w"]), ps, pb, None,
                                      prologue=pending is not None,
                                      epi_bias=False, epi_leaky=False,
                                      out_dtype=jnp.bfloat16)
        m_count = out.shape[1]                              # N*Ho*Wo valid pixels
        mean = ssum / m_count
        var = jnp.maximum(ssq / m_count - mean * mean, 0.0)  # biased var (training-mode BN)
        scale = blk["gamma"] * jax.lax.rsqrt(var + BN_EPS)
        shift = blk["beta"] - mean * scale
        pending = (scale, shift)
        cur, hw = out, (ho, wo)

    # final conv: k4, s1, p1 reflect, bias, no activation.  The last ConvBlock's
    # BN+LeakyReLU rides along as the prologue (commutes with reflect padding).
    c = cur.shape[0]
    x4 = _reflect_pad_hw(cur.reshape(c, n, hw[0], hw[1]), 1)
    patches, ho, wo = _im2col_cf(x4, 4, 4, 1)
    ps, pb = pending
    out, _, _ = _conv_pallas(patches, _w_mat(params["wf"]), ps, pb, params["bf"],
                             prologue=True, epi_bias=True, epi_leaky=False,
                             out_dtype=jnp.float32)
    return jnp.transpose(out.reshape(1, n, ho, wo), (1, 0, 2, 3))   # -> NCHW


if __name__ == "__main__":
    key = jax.random.PRNGKey(0)
    kp, kx, ky = jax.random.split(key, 3)

    in_channels = 3
    fmaps = (8, 16, 32, 64)          # scaled-down feature_maps_sizes for a small test
    batch, spatial = 2, 64

    params = init_params(kp, in_channels, fmaps)
    x = jax.random.normal(kx, (batch, in_channels, spatial, spatial), jnp.float32)
    y = jax.random.normal(ky, (batch, in_channels, spatial, spatial), jnp.float32)

    fwd = jax.jit(lambda xx, yy: discriminator_forward(params, xx, yy))
    out = jax.block_until_ready(fwd(x, y))

    # spatial trace: 64 -> 32 -> 15 -> 6 -> 3 -> 2 ; PatchGAN output [N, 1, 2, 2]
    assert out.shape == (batch, 1, 2, 2), out.shape
    assert bool(jnp.all(jnp.isfinite(out)))
    print("KERNEL_OK")
</pallas_src>

<mosaic_0001>
module attributes {stable_mosaic.version = 11 : i64} {
  func.func @_conv_kernel(%arg0: i32, %arg1: memref<96x512xbf16, #tpu.memory_space<vmem>>, %arg2: memref<8x96xbf16, #tpu.memory_space<vmem>>, %arg3: memref<96x1xf32, #tpu.memory_space<vmem>>, %arg4: memref<96x1xf32, #tpu.memory_space<vmem>>, %arg5: memref<8x1xf32, #tpu.memory_space<vmem>>, %arg6: memref<8x512xbf16, #tpu.memory_space<vmem>>, %arg7: memref<1x8x1xf32, #tpu.memory_space<vmem>>, %arg8: memref<1x8x1xf32, #tpu.memory_space<vmem>>) attributes {dimension_semantics = [#tpu.dimension_semantics<parallel>], iteration_bounds = array<i64: 4>, scalar_prefetch = 0 : i64, scratch_operands = 0 : i64, tpu.core_type = #tpu.core_type<tc>, window_params = [{transform_indices = @transform_0, window_bounds = array<i64: 96, 512>}, {pipeline_mode = #tpu.pipeline_mode<synchronous>, transform_indices = @transform_1, window_bounds = array<i64: 8, 96>}, {pipeline_mode = #tpu.pipeline_mode<synchronous>, transform_indices = @transform_2, window_bounds = array<i64: 96, 1>}, {pipeline_mode = #tpu.pipeline_mode<synchronous>, transform_indices = @transform_3, window_bounds = array<i64: 96, 1>}, {pipeline_mode = #tpu.pipeline_mode<synchronous>, transform_indices = @transform_4, window_bounds = array<i64: 8, 1>}, {transform_indices = @transform_5, window_bounds = array<i64: 8, 512>}, {transform_indices = @transform_6, window_bounds = array<i64: 1, 8, 1>}, {transform_indices = @transform_7, window_bounds = array<i64: 1, 8, 1>}]} {
    %c0 = arith.constant 0 : index
    %c0_0 = arith.constant 0 : index
    %0 = vector.load %arg1[%c0, %c0_0] : memref<96x512xbf16, #tpu.memory_space<vmem>>, vector<96x512xbf16>
    %c0_1 = arith.constant 0 : index
    %c0_2 = arith.constant 0 : index
    %1 = vector.load %arg2[%c0_1, %c0_2] : memref<8x96xbf16, #tpu.memory_space<vmem>>, vector<8x96xbf16>
    %cst = arith.constant dense<0.000000e+00> : vector<8x512xf32>
    %2 = tpu.matmul %1, %0, %cst {dimension_numbers = #tpu.dot_dimension_numbers<[1], [0], [0], [1], [0, 0, 1, 1], [], []>} : vector<8x96xbf16>, vector<96x512xbf16>, vector<8x512xf32> -> vector<8x512xf32>
    %c512_i32 = arith.constant 512 : i32
    %3 = arith.muli %arg0, %c512_i32 : i32
    %4 = tpu.iota {dimensions = array<i32: 1>} : vector<1x512xi32>
    %5 = vector.broadcast %3 : i32 to vector<1x512xi32>
    %6 = arith.addi %5, %4 : vector<1x512xi32>
    %c2048_i32 = arith.constant 2048 : i32
    %7 = vector.broadcast %c2048_i32 : i32 to vector<1x512xi32>
    %8 = arith.cmpi slt, %6, %7 : vector<1x512xi32>
    %cst_3 = arith.constant 0.000000e+00 : f32
    %9 = vector.shape_cast %8 : vector<1x512xi1> to vector<1x512xi1>
    %10 = vector.broadcast %9 : vector<1x512xi1> to vector<8x512xi1>
    %11 = vector.broadcast %cst_3 : f32 to vector<8x512xf32>
    %12 = arith.select %10, %2, %11 : vector<8x512xi1>, vector<8x512xf32>
    %cst_4 = arith.constant dense<0.000000e+00> : vector<8xf32>
    %13 = vector.multi_reduction <add>, %12, %cst_4 [1] : vector<8x512xf32> to vector<8xf32>
    %14 = vector.shape_cast %13 : vector<8xf32> to vector<8x1xf32>
    %15 = vector.shape_cast %14 : vector<8x1xf32> to vector<1x8x1xf32>
    %c0_5 = arith.constant 0 : index
    %c0_6 = arith.constant 0 : index
    %c0_7 = arith.constant 0 : index
    %16 = vector.load %arg7[%c0_5, %c0_6, %c0_7] : memref<1x8x1xf32, #tpu.memory_space<vmem>>, vector<1x8x1xf32>
    tpu.vector_store %arg7[%c0_5, %c0_6, %c0_7], %15 {strides = array<i32>} : memref<1x8x1xf32, #tpu.memory_space<vmem>>, vector<1x8x1xf32>,
    %17 = arith.mulf %12, %12 : vector<8x512xf32>
    %cst_8 = arith.constant dense<0.000000e+00> : vector<8xf32>
    %18 = vector.multi_reduction <add>, %17, %cst_8 [1] : vector<8x512xf32> to vector<8xf32>
    %19 = vector.shape_cast %18 : vector<8xf32> to vector<8x1xf32>
    %20 = vector.shape_cast %19 : vector<8x1xf32> to vector<1x8x1xf32>
    %c0_9 = arith.constant 0 : index
    %c0_10 = arith.constant 0 : index
    %c0_11 = arith.constant 0 : index
    %21 = vector.load %arg8[%c0_9, %c0_10, %c0_11] : memref<1x8x1xf32, #tpu.memory_space<vmem>>, vector<1x8x1xf32>
    tpu.vector_store %arg8[%c0_9, %c0_10, %c0_11], %20 {strides = array<i32>} : memref<1x8x1xf32, #tpu.memory_space<vmem>>, vector<1x8x1xf32>,
    %c0_12 = arith.constant 0 : index
    %c0_13 = arith.constant 0 : index
    %22 = vector.load %arg5[%c0_12, %c0_13] : memref<8x1xf32, #tpu.memory_space<vmem>>, vector<8x1xf32>
    %23 = vector.broadcast %22 : vector<8x1xf32> to vector<8x512xf32>
    %24 = arith.addf %2, %23 : vector<8x512xf32>
    %cst_14 = arith.constant 0.000000e+00 : f32
    %25 = vector.broadcast %cst_14 : f32 to vector<8x512xf32>
    %26 = arith.cmpf oge, %24, %25 : vector<8x512xf32>
    %cst_15 = arith.constant 2.000000e-01 : f32
    %27 = vector.broadcast %cst_15 : f32 to vector<8x512xf32>
    %28 = arith.mulf %27, %24 : vector<8x512xf32>
    %29 = arith.select %26, %24, %28 : vector<8x512xi1>, vector<8x512xf32>
    %30 = arith.truncf %29 : vector<8x512xf32> to vector<8x512xbf16>
    %c0_16 = arith.constant 0 : index
    %c0_17 = arith.constant 0 : index
    %31 = vector.load %arg6[%c0_16, %c0_17] : memref<8x512xbf16, #tpu.memory_space<vmem>>, vector<8x512xbf16>
    tpu.vector_store %arg6[%c0_16, %c0_17], %30 {strides = array<i32>} : memref<8x512xbf16, #tpu.memory_space<vmem>>, vector<8x512xbf16>,
    return
  }
  func.func @transform_0(%arg0: i32) -> (i32, i32) {
    %c0_i32 = arith.constant 0 : i32
    %c0_i32_0 = arith.constant 0 : i32
    return %c0_i32, %arg0 : i32, i32
  }
  func.func @transform_1(%arg0: i32) -> (i32, i32) {
    %c0_i32 = arith.constant 0 : i32
    %c0_i32_0 = arith.constant 0 : i32
    %c0_i32_1 = arith.constant 0 : i32
    return %c0_i32, %c0_i32_0 : i32, i32
  }
  func.func @transform_2(%arg0: i32) -> (i32, i32) {
    %c0_i32 = arith.constant 0 : i32
    %c0_i32_0 = arith.constant 0 : i32
    %c0_i32_1 = arith.constant 0 : i32
    return %c0_i32, %c0_i32_0 : i32, i32
  }
  func.func @transform_3(%arg0: i32) -> (i32, i32) {
    %c0_i32 = arith.constant 0 : i32
    %c0_i32_0 = arith.constant 0 : i32
    %c0_i32_1 = arith.constant 0 : i32
    return %c0_i32, %c0_i32_0 : i32, i32
  }
  func.func @transform_4(%arg0: i32) -> (i32, i32) {
    %c0_i32 = arith.constant 0 : i32
    %c0_i32_0 = arith.constant 0 : i32
    %c0_i32_1 = arith.constant 0 : i32
    return %c0_i32, %c0_i32_0 : i32, i32
  }
  func.func @transform_5(%arg0: i32) -> (i32, i32) {
    %c0_i32 = arith.constant 0 : i32
    %c0_i32_0 = arith.constant 0 : i32
    return %c0_i32, %arg0 : i32, i32
  }
  func.func @transform_6(%arg0: i32) -> (i32, i32, i32) {
    %c0_i32 = arith.constant 0 : i32
    %c0_i32_0 = arith.constant 0 : i32
    %c0_i32_1 = arith.constant 0 : i32
    return %arg0, %c0_i32, %c0_i32_0 : i32, i32, i32
  }
  func.func @transform_7(%arg0: i32) -> (i32, i32, i32) {
    %c0_i32 = arith.constant 0 : i32
    %c0_i32_0 = arith.constant 0 : i32
    %c0_i32_1 = arith.constant 0 : i32
    return %arg0, %c0_i32, %c0_i32_0 : i32, i32, i32
  }
}

module attributes {stable_mosaic.version = 11 : i64} {
  func.func @_conv_kernel(%arg0: i32, %arg1: memref<128x256xbf16, #tpu.memory_space<vmem>>, %arg2: memref<16x128xbf16, #tpu.memory_space<vmem>>, %arg3: memref<128x1xf32, #tpu.memory_space<vmem>>, %arg4: memref<128x1xf32, #tpu.memory_space<vmem>>, %arg5: memref<16x1xf32, #tpu.memory_space<vmem>>, %arg6: memref<16x256xbf16, #tpu.memory_space<vmem>>, %arg7: memref<1x16x1xf32, #tpu.memory_space<vmem>>, %arg8: memref<1x16x1xf32, #tpu.memory_space<vmem>>) attributes {dimension_semantics = [#tpu.dimension_semantics<parallel>], iteration_bounds = array<i64: 2>, scalar_prefetch = 0 : i64, scratch_operands = 0 : i64, tpu.core_type = #tpu.core_type<tc>, window_params = [{transform_indices = @transform_0, window_bounds = array<i64: 128, 256>}, {pipeline_mode = #tpu.pipeline_mode<synchronous>, transform_indices = @transform_1, window_bounds = array<i64: 16, 128>}, {pipeline_mode = #tpu.pipeline_mode<synchronous>, transform_indices = @transform_2, window_bounds = array<i64: 128, 1>}, {pipeline_mode = #tpu.pipeline_mode<synchronous>, transform_indices = @transform_3, window_bounds = array<i64: 128, 1>}, {pipeline_mode = #tpu.pipeline_mode<synchronous>, transform_indices = @transform_4, window_bounds = array<i64: 16, 1>}, {transform_indices = @transform_5, window_bounds = array<i64: 16, 256>}, {transform_indices = @transform_6, window_bounds = array<i64: 1, 16, 1>}, {transform_indices = @transform_7, window_bounds = array<i64: 1, 16, 1>}]} {
    %c0 = arith.constant 0 : index
    %c0_0 = arith.constant 0 : index
    %0 = vector.load %arg1[%c0, %c0_0] : memref<128x256xbf16, #tpu.memory_space<vmem>>, vector<128x256xbf16>
    %c0_1 = arith.constant 0 : index
    %c0_2 = arith.constant 0 : index
    %1 = vector.load %arg2[%c0_1, %c0_2] : memref<16x128xbf16, #tpu.memory_space<vmem>>, vector<16x128xbf16>
    %cst = arith.constant dense<0.000000e+00> : vector<16x256xf32>
    %2 = tpu.matmul %1, %0, %cst {dimension_numbers = #tpu.dot_dimension_numbers<[1], [0], [0], [1], [0, 0, 1, 1], [], []>} : vector<16x128xbf16>, vector<128x256xbf16>, vector<16x256xf32> -> vector<16x256xf32>
    %c256_i32 = arith.constant 256 : i32
    %3 = arith.muli %arg0, %c256_i32 : i32
    %4 = tpu.iota {dimensions = array<i32: 1>} : vector<1x256xi32>
    %5 = vector.broadcast %3 : i32 to vector<1x256xi32>
    %6 = arith.addi %5, %4 : vector<1x256xi32>
    %c450_i32 = arith.constant 450 : i32
    %7 = vector.broadcast %c450_i32 : i32 to vector<1x256xi32>
    %8 = arith.cmpi slt, %6, %7 : vector<1x256xi32>
    %cst_3 = arith.constant 0.000000e+00 : f32
    %9 = vector.shape_cast %8 : vector<1x256xi1> to vector<1x256xi1>
    %10 = vector.broadcast %9 : vector<1x256xi1> to vector<16x256xi1>
    %11 = vector.broadcast %cst_3 : f32 to vector<16x256xf32>
    %12 = arith.select %10, %2, %11 : vector<16x256xi1>, vector<16x256xf32>
    %cst_4 = arith.constant dense<0.000000e+00> : vector<16xf32>
    %13 = vector.multi_reduction <add>, %12, %cst_4 [1] : vector<16x256xf32> to vector<16xf32>
    %14 = vector.shape_cast %13 : vector<16xf32> to vector<16x1xf32>
    %15 = vector.shape_cast %14 : vector<16x1xf32> to vector<1x16x1xf32>
    %c0_5 = arith.constant 0 : index
    %c0_6 = arith.constant 0 : index
    %c0_7 = arith.constant 0 : index
    %16 = vector.load %arg7[%c0_5, %c0_6, %c0_7] : memref<1x16x1xf32, #tpu.memory_space<vmem>>, vector<1x16x1xf32>
    tpu.vector_store %arg7[%c0_5, %c0_6, %c0_7], %15 {strides = array<i32>} : memref<1x16x1xf32, #tpu.memory_space<vmem>>, vector<1x16x1xf32>,
    %17 = arith.mulf %12, %12 : vector<16x256xf32>
    %cst_8 = arith.constant dense<0.000000e+00> : vector<16xf32>
    %18 = vector.multi_reduction <add>, %17, %cst_8 [1] : vector<16x256xf32> to vector<16xf32>
    %19 = vector.shape_cast %18 : vector<16xf32> to vector<16x1xf32>
    %20 = vector.shape_cast %19 : vector<16x1xf32> to vector<1x16x1xf32>
    %c0_9 = arith.constant 0 : index
    %c0_10 = arith.constant 0 : index
    %c0_11 = arith.constant 0 : index
    %21 = vector.load %arg8[%c0_9, %c0_10, %c0_11] : memref<1x16x1xf32, #tpu.memory_space<vmem>>, vector<1x16x1xf32>
    tpu.vector_store %arg8[%c0_9, %c0_10, %c0_11], %20 {strides = array<i32>} : memref<1x16x1xf32, #tpu.memory_space<vmem>>, vector<1x16x1xf32>,
    %22 = arith.truncf %2 : vector<16x256xf32> to vector<16x256xbf16>
    %c0_12 = arith.constant 0 : index
    %c0_13 = arith.constant 0 : index
    %23 = vector.load %arg6[%c0_12, %c0_13] : memref<16x256xbf16, #tpu.memory_space<vmem>>, vector<16x256xbf16>
    tpu.vector_store %arg6[%c0_12, %c0_13], %22 {strides = array<i32>} : memref<16x256xbf16, #tpu.memory_space<vmem>>, vector<16x256xbf16>,
    return
  }
  func.func @transform_0(%arg0: i32) -> (i32, i32) {
    %c0_i32 = arith.constant 0 : i32
    %c0_i32_0 = arith.constant 0 : i32
    return %c0_i32, %arg0 : i32, i32
  }
  func.func @transform_1(%arg0: i32) -> (i32, i32) {
    %c0_i32 = arith.constant 0 : i32
    %c0_i32_0 = arith.constant 0 : i32
    %c0_i32_1 = arith.constant 0 : i32
    return %c0_i32, %c0_i32_0 : i32, i32
  }
  func.func @transform_2(%arg0: i32) -> (i32, i32) {
    %c0_i32 = arith.constant 0 : i32
    %c0_i32_0 = arith.constant 0 : i32
    %c0_i32_1 = arith.constant 0 : i32
    return %c0_i32, %c0_i32_0 : i32, i32
  }
  func.func @transform_3(%arg0: i32) -> (i32, i32) {
    %c0_i32 = arith.constant 0 : i32
    %c0_i32_0 = arith.constant 0 : i32
    %c0_i32_1 = arith.constant 0 : i32
    return %c0_i32, %c0_i32_0 : i32, i32
  }
  func.func @transform_4(%arg0: i32) -> (i32, i32) {
    %c0_i32 = arith.constant 0 : i32
    %c0_i32_0 = arith.constant 0 : i32
    %c0_i32_1 = arith.constant 0 : i32
    return %c0_i32, %c0_i32_0 : i32, i32
  }
  func.func @transform_5(%arg0: i32) -> (i32, i32) {
    %c0_i32 = arith.constant 0 : i32
    %c0_i32_0 = arith.constant 0 : i32
    return %c0_i32, %arg0 : i32, i32
  }
  func.func @transform_6(%arg0: i32) -> (i32, i32, i32) {
    %c0_i32 = arith.constant 0 : i32
    %c0_i32_0 = arith.constant 0 : i32
    %c0_i32_1 = arith.constant 0 : i32
    return %arg0, %c0_i32, %c0_i32_0 : i32, i32, i32
  }
  func.func @transform_7(%arg0: i32) -> (i32, i32, i32) {
    %c0_i32 = arith.constant 0 : i32
    %c0_i32_0 = arith.constant 0 : i32
    %c0_i32_1 = arith.constant 0 : i32
    return %arg0, %c0_i32, %c0_i32_0 : i32, i32, i32
  }
}

module attributes {stable_mosaic.version = 11 : i64} {
  func.func @_conv_kernel(%arg0: i32, %arg1: memref<256x128xbf16, #tpu.memory_space<vmem>>, %arg2: memref<32x256xbf16, #tpu.memory_space<vmem>>, %arg3: memref<256x1xf32, #tpu.memory_space<vmem>>, %arg4: memref<256x1xf32, #tpu.memory_space<vmem>>, %arg5: memref<32x1xf32, #tpu.memory_space<vmem>>, %arg6: memref<32x128xbf16, #tpu.memory_space<vmem>>, %arg7: memref<1x32x1xf32, #tpu.memory_space<vmem>>, %arg8: memref<1x32x1xf32, #tpu.memory_space<vmem>>) attributes {dimension_semantics = [#tpu.dimension_semantics<parallel>], iteration_bounds = array<i64: 1>, scalar_prefetch = 0 : i64, scratch_operands = 0 : i64, tpu.core_type = #tpu.core_type<tc>, window_params = [{transform_indices = @transform_0, window_bounds = array<i64: 256, 128>}, {pipeline_mode = #tpu.pipeline_mode<synchronous>, transform_indices = @transform_1, window_bounds = array<i64: 32, 256>}, {pipeline_mode = #tpu.pipeline_mode<synchronous>, transform_indices = @transform_2, window_bounds = array<i64: 256, 1>}, {pipeline_mode = #tpu.pipeline_mode<synchronous>, transform_indices = @transform_3, window_bounds = array<i64: 256, 1>}, {pipeline_mode = #tpu.pipeline_mode<synchronous>, transform_indices = @transform_4, window_bounds = array<i64: 32, 1>}, {transform_indices = @transform_5, window_bounds = array<i64: 32, 128>}, {transform_indices = @transform_6, window_bounds = array<i64: 1, 32, 1>}, {transform_indices = @transform_7, window_bounds = array<i64: 1, 32, 1>}]} {
    %c0 = arith.constant 0 : index
    %c0_0 = arith.constant 0 : index
    %0 = vector.load %arg1[%c0, %c0_0] : memref<256x128xbf16, #tpu.memory_space<vmem>>, vector<256x128xbf16>
    %1 = arith.extf %0 : vector<256x128xbf16> to vector<256x128xf32>
    %c0_1 = arith.constant 0 : index
    %c0_2 = arith.constant 0 : index
    %2 = vector.load %arg3[%c0_1, %c0_2] : memref<256x1xf32, #tpu.memory_space<vmem>>, vector<256x1xf32>
    %3 = vector.broadcast %2 : vector<256x1xf32> to vector<256x128xf32>
    %4 = arith.mulf %1, %3 : vector<256x128xf32>
    %c0_3 = arith.constant 0 : index
    %c0_4 = arith.constant 0 : index
    %5 = vector.load %arg4[%c0_3, %c0_4] : memref<256x1xf32, #tpu.memory_space<vmem>>, vector<256x1xf32>
    %6 = vector.broadcast %5 : vector<256x1xf32> to vector<256x128xf32>
    %7 = arith.addf %4, %6 : vector<256x128xf32>
    %cst = arith.constant 0.000000e+00 : f32
    %8 = vector.broadcast %cst : f32 to vector<256x128xf32>
    %9 = arith.cmpf oge, %7, %8 : vector<256x128xf32>
    %cst_5 = arith.constant 2.000000e-01 : f32
    %10 = vector.broadcast %cst_5 : f32 to vector<256x128xf32>
    %11 = arith.mulf %10, %7 : vector<256x128xf32>
    %12 = arith.select %9, %7, %11 : vector<256x128xi1>, vector<256x128xf32>
    %13 = arith.truncf %12 : vector<256x128xf32> to vector<256x128xbf16>
    %c0_6 = arith.constant 0 : index
    %c0_7 = arith.constant 0 : index
    %14 = vector.load %arg2[%c0_6, %c0_7] : memref<32x256xbf16, #tpu.memory_space<vmem>>, vector<32x256xbf16>
    %cst_8 = arith.constant dense<0.000000e+00> : vector<32x128xf32>
    %15 = tpu.matmul %14, %13, %cst_8 {dimension_numbers = #tpu.dot_dimension_numbers<[1], [0], [0], [1], [0, 0, 1, 1], [], []>} : vector<32x256xbf16>, vector<256x128xbf16>, vector<32x128xf32> -> vector<32x128xf32>
    %c128_i32 = arith.constant 128 : i32
    %16 = arith.muli %arg0, %c128_i32 : i32
    %17 = tpu.iota {dimensions = array<i32: 1>} : vector<1x128xi32>
    %18 = vector.broadcast %16 : i32 to vector<1x128xi32>
    %19 = arith.addi %18, %17 : vector<1x128xi32>
    %c72_i32 = arith.constant 72 : i32
    %20 = vector.broadcast %c72_i32 : i32 to vector<1x128xi32>
    %21 = arith.cmpi slt, %19, %20 : vector<1x128xi32>
    %cst_9 = arith.constant 0.000000e+00 : f32
    %22 = vector.shape_cast %21 : vector<1x128xi1> to vector<1x128xi1>
    %23 = vector.broadcast %22 : vector<1x128xi1> to vector<32x128xi1>
    %24 = vector.broadcast %cst_9 : f32 to vector<32x128xf32>
    %25 = arith.select %23, %15, %24 : vector<32x128xi1>, vector<32x128xf32>
    %cst_10 = arith.constant dense<0.000000e+00> : vector<32xf32>
    %26 = vector.multi_reduction <add>, %25, %cst_10 [1] : vector<32x128xf32> to vector<32xf32>
    %27 = vector.shape_cast %26 : vector<32xf32> to vector<32x1xf32>
    %28 = vector.shape_cast %27 : vector<32x1xf32> to vector<1x32x1xf32>
    %c0_11 = arith.constant 0 : index
    %c0_12 = arith.constant 0 : index
    %c0_13 = arith.constant 0 : index
    %29 = vector.load %arg7[%c0_11, %c0_12, %c0_13] : memref<1x32x1xf32, #tpu.memory_space<vmem>>, vector<1x32x1xf32>
    tpu.vector_store %arg7[%c0_11, %c0_12, %c0_13], %28 {strides = array<i32>} : memref<1x32x1xf32, #tpu.memory_space<vmem>>, vector<1x32x1xf32>,
    %30 = arith.mulf %25, %25 : vector<32x128xf32>
    %cst_14 = arith.constant dense<0.000000e+00> : vector<32xf32>
    %31 = vector.multi_reduction <add>, %30, %cst_14 [1] : vector<32x128xf32> to vector<32xf32>
    %32 = vector.shape_cast %31 : vector<32xf32> to vector<32x1xf32>
    %33 = vector.shape_cast %32 : vector<32x1xf32> to vector<1x32x1xf32>
    %c0_15 = arith.constant 0 : index
    %c0_16 = arith.constant 0 : index
    %c0_17 = arith.constant 0 : index
    %34 = vector.load %arg8[%c0_15, %c0_16, %c0_17] : memref<1x32x1xf32, #tpu.memory_space<vmem>>, vector<1x32x1xf32>
    tpu.vector_store %arg8[%c0_15, %c0_16, %c0_17], %33 {strides = array<i32>} : memref<1x32x1xf32, #tpu.memory_space<vmem>>, vector<1x32x1xf32>,
    %35 = arith.truncf %15 : vector<32x128xf32> to vector<32x128xbf16>
    %c0_18 = arith.constant 0 : index
    %c0_19 = arith.constant 0 : index
    %36 = vector.load %arg6[%c0_18, %c0_19] : memref<32x128xbf16, #tpu.memory_space<vmem>>, vector<32x128xbf16>
    tpu.vector_store %arg6[%c0_18, %c0_19], %35 {strides = array<i32>} : memref<32x128xbf16, #tpu.memory_space<vmem>>, vector<32x128xbf16>,
    return
  }
  func.func @transform_0(%arg0: i32) -> (i32, i32) {
    %c0_i32 = arith.constant 0 : i32
    %c0_i32_0 = arith.constant 0 : i32
    return %c0_i32, %arg0 : i32, i32
  }
  func.func @transform_1(%arg0: i32) -> (i32, i32) {
    %c0_i32 = arith.constant 0 : i32
    %c0_i32_0 = arith.constant 0 : i32
    %c0_i32_1 = arith.constant 0 : i32
    return %c0_i32, %c0_i32_0 : i32, i32
  }
  func.func @transform_2(%arg0: i32) -> (i32, i32) {
    %c0_i32 = arith.constant 0 : i32
    %c0_i32_0 = arith.constant 0 : i32
    %c0_i32_1 = arith.constant 0 : i32
    return %c0_i32, %c0_i32_0 : i32, i32
  }
  func.func @transform_3(%arg0: i32) -> (i32, i32) {
    %c0_i32 = arith.constant 0 : i32
    %c0_i32_0 = arith.constant 0 : i32
    %c0_i32_1 = arith.constant 0 : i32
    return %c0_i32, %c0_i32_0 : i32, i32
  }
  func.func @transform_4(%arg0: i32) -> (i32, i32) {
    %c0_i32 = arith.constant 0 : i32
    %c0_i32_0 = arith.constant 0 : i32
    %c0_i32_1 = arith.constant 0 : i32
    return %c0_i32, %c0_i32_0 : i32, i32
  }
  func.func @transform_5(%arg0: i32) -> (i32, i32) {
    %c0_i32 = arith.constant 0 : i32
    %c0_i32_0 = arith.constant 0 : i32
    return %c0_i32, %arg0 : i32, i32
  }
  func.func @transform_6(%arg0: i32) -> (i32, i32, i32) {
    %c0_i32 = arith.constant 0 : i32
    %c0_i32_0 = arith.constant 0 : i32
    %c0_i32_1 = arith.constant 0 : i32
    return %arg0, %c0_i32, %c0_i32_0 : i32, i32, i32
  }
  func.func @transform_7(%arg0: i32) -> (i32, i32, i32) {
    %c0_i32 = arith.constant 0 : i32
    %c0_i32_0 = arith.constant 0 : i32
    %c0_i32_1 = arith.constant 0 : i32
    return %arg0, %c0_i32, %c0_i32_0 : i32, i32, i32
  }
}

module attributes {stable_mosaic.version = 11 : i64} {
  func.func @_conv_kernel(%arg0: i32, %arg1: memref<512x128xbf16, #tpu.memory_space<vmem>>, %arg2: memref<64x512xbf16, #tpu.memory_space<vmem>>, %arg3: memref<512x1xf32, #tpu.memory_space<vmem>>, %arg4: memref<512x1xf32, #tpu.memory_space<vmem>>, %arg5: memref<64x1xf32, #tpu.memory_space<vmem>>, %arg6: memref<64x128xbf16, #tpu.memory_space<vmem>>, %arg7: memref<1x64x1xf32, #tpu.memory_space<vmem>>, %arg8: memref<1x64x1xf32, #tpu.memory_space<vmem>>) attributes {dimension_semantics = [#tpu.dimension_semantics<parallel>], iteration_bounds = array<i64: 1>, scalar_prefetch = 0 : i64, scratch_operands = 0 : i64, tpu.core_type = #tpu.core_type<tc>, window_params = [{transform_indices = @transform_0, window_bounds = array<i64: 512, 128>}, {pipeline_mode = #tpu.pipeline_mode<synchronous>, transform_indices = @transform_1, window_bounds = array<i64: 64, 512>}, {pipeline_mode = #tpu.pipeline_mode<synchronous>, transform_indices = @transform_2, window_bounds = array<i64: 512, 1>}, {pipeline_mode = #tpu.pipeline_mode<synchronous>, transform_indices = @transform_3, window_bounds = array<i64: 512, 1>}, {pipeline_mode = #tpu.pipeline_mode<synchronous>, transform_indices = @transform_4, window_bounds = array<i64: 64, 1>}, {transform_indices = @transform_5, window_bounds = array<i64: 64, 128>}, {transform_indices = @transform_6, window_bounds = array<i64: 1, 64, 1>}, {transform_indices = @transform_7, window_bounds = array<i64: 1, 64, 1>}]} {
    %c0 = arith.constant 0 : index
    %c0_0 = arith.constant 0 : index
    %0 = vector.load %arg1[%c0, %c0_0] : memref<512x128xbf16, #tpu.memory_space<vmem>>, vector<512x128xbf16>
    %1 = arith.extf %0 : vector<512x128xbf16> to vector<512x128xf32>
    %c0_1 = arith.constant 0 : index
    %c0_2 = arith.constant 0 : index
    %2 = vector.load %arg3[%c0_1, %c0_2] : memref<512x1xf32, #tpu.memory_space<vmem>>, vector<512x1xf32>
    %3 = vector.broadcast %2 : vector<512x1xf32> to vector<512x128xf32>
    %4 = arith.mulf %1, %3 : vector<512x128xf32>
    %c0_3 = arith.constant 0 : index
    %c0_4 = arith.constant 0 : index
    %5 = vector.load %arg4[%c0_3, %c0_4] : memref<512x1xf32, #tpu.memory_space<vmem>>, vector<512x1xf32>
    %6 = vector.broadcast %5 : vector<512x1xf32> to vector<512x128xf32>
    %7 = arith.addf %4, %6 : vector<512x128xf32>
    %cst = arith.constant 0.000000e+00 : f32
    %8 = vector.broadcast %cst : f32 to vector<512x128xf32>
    %9 = arith.cmpf oge, %7, %8 : vector<512x128xf32>
    %cst_5 = arith.constant 2.000000e-01 : f32
    %10 = vector.broadcast %cst_5 : f32 to vector<512x128xf32>
    %11 = arith.mulf %10, %7 : vector<512x128xf32>
    %12 = arith.select %9, %7, %11 : vector<512x128xi1>, vector<512x128xf32>
    %13 = arith.truncf %12 : vector<512x128xf32> to vector<512x128xbf16>
    %c0_6 = arith.constant 0 : index
    %c0_7 = arith.constant 0 : index
    %14 = vector.load %arg2[%c0_6, %c0_7] : memref<64x512xbf16, #tpu.memory_space<vmem>>, vector<64x512xbf16>
    %cst_8 = arith.constant dense<0.000000e+00> : vector<64x128xf32>
    %15 = tpu.matmul %14, %13, %cst_8 {dimension_numbers = #tpu.dot_dimension_numbers<[1], [0], [0], [1], [0, 0, 1, 1], [], []>} : vector<64x512xbf16>, vector<512x128xbf16>, vector<64x128xf32> -> vector<64x128xf32>
    %c128_i32 = arith.constant 128 : i32
    %16 = arith.muli %arg0, %c128_i32 : i32
    %17 = tpu.iota {dimensions = array<i32: 1>} : vector<1x128xi32>
    %18 = vector.broadcast %16 : i32 to vector<1x128xi32>
    %19 = arith.addi %18, %17 : vector<1x128xi32>
    %c18_i32 = arith.constant 18 : i32
    %20 = vector.broadcast %c18_i32 : i32 to vector<1x128xi32>
    %21 = arith.cmpi slt, %19, %20 : vector<1x128xi32>
    %cst_9 = arith.constant 0.000000e+00 : f32
    %22 = vector.shape_cast %21 : vector<1x128xi1> to vector<1x128xi1>
    %23 = vector.broadcast %22 : vector<1x128xi1> to vector<64x128xi1>
    %24 = vector.broadcast %cst_9 : f32 to vector<64x128xf32>
    %25 = arith.select %23, %15, %24 : vector<64x128xi1>, vector<64x128xf32>
    %cst_10 = arith.constant dense<0.000000e+00> : vector<64xf32>
    %26 = vector.multi_reduction <add>, %25, %cst_10 [1] : vector<64x128xf32> to vector<64xf32>
    %27 = vector.shape_cast %26 : vector<64xf32> to vector<64x1xf32>
    %28 = vector.shape_cast %27 : vector<64x1xf32> to vector<1x64x1xf32>
    %c0_11 = arith.constant 0 : index
    %c0_12 = arith.constant 0 : index
    %c0_13 = arith.constant 0 : index
    %29 = vector.load %arg7[%c0_11, %c0_12, %c0_13] : memref<1x64x1xf32, #tpu.memory_space<vmem>>, vector<1x64x1xf32>
    tpu.vector_store %arg7[%c0_11, %c0_12, %c0_13], %28 {strides = array<i32>} : memref<1x64x1xf32, #tpu.memory_space<vmem>>, vector<1x64x1xf32>,
    %30 = arith.mulf %25, %25 : vector<64x128xf32>
    %cst_14 = arith.constant dense<0.000000e+00> : vector<64xf32>
    %31 = vector.multi_reduction <add>, %30, %cst_14 [1] : vector<64x128xf32> to vector<64xf32>
    %32 = vector.shape_cast %31 : vector<64xf32> to vector<64x1xf32>
    %33 = vector.shape_cast %32 : vector<64x1xf32> to vector<1x64x1xf32>
    %c0_15 = arith.constant 0 : index
    %c0_16 = arith.constant 0 : index
    %c0_17 = arith.constant 0 : index
    %34 = vector.load %arg8[%c0_15, %c0_16, %c0_17] : memref<1x64x1xf32, #tpu.memory_space<vmem>>, vector<1x64x1xf32>
    tpu.vector_store %arg8[%c0_15, %c0_16, %c0_17], %33 {strides = array<i32>} : memref<1x64x1xf32, #tpu.memory_space<vmem>>, vector<1x64x1xf32>,
    %35 = arith.truncf %15 : vector<64x128xf32> to vector<64x128xbf16>
    %c0_18 = arith.constant 0 : index
    %c0_19 = arith.constant 0 : index
    %36 = vector.load %arg6[%c0_18, %c0_19] : memref<64x128xbf16, #tpu.memory_space<vmem>>, vector<64x128xbf16>
    tpu.vector_store %arg6[%c0_18, %c0_19], %35 {strides = array<i32>} : memref<64x128xbf16, #tpu.memory_space<vmem>>, vector<64x128xbf16>,
    return
  }
  func.func @transform_0(%arg0: i32) -> (i32, i32) {
    %c0_i32 = arith.constant 0 : i32
    %c0_i32_0 = arith.constant 0 : i32
    return %c0_i32, %arg0 : i32, i32
  }
  func.func @transform_1(%arg0: i32) -> (i32, i32) {
    %c0_i32 = arith.constant 0 : i32
    %c0_i32_0 = arith.constant 0 : i32
    %c0_i32_1 = arith.constant 0 : i32
    return %c0_i32, %c0_i32_0 : i32, i32
  }
  func.func @transform_2(%arg0: i32) -> (i32, i32) {
    %c0_i32 = arith.constant 0 : i32
    %c0_i32_0 = arith.constant 0 : i32
    %c0_i32_1 = arith.constant 0 : i32
    return %c0_i32, %c0_i32_0 : i32, i32
  }
  func.func @transform_3(%arg0: i32) -> (i32, i32) {
    %c0_i32 = arith.constant 0 : i32
    %c0_i32_0 = arith.constant 0 : i32
    %c0_i32_1 = arith.constant 0 : i32
    return %c0_i32, %c0_i32_0 : i32, i32
  }
  func.func @transform_4(%arg0: i32) -> (i32, i32) {
    %c0_i32 = arith.constant 0 : i32
    %c0_i32_0 = arith.constant 0 : i32
    %c0_i32_1 = arith.constant 0 : i32
    return %c0_i32, %c0_i32_0 : i32, i32
  }
  func.func @transform_5(%arg0: i32) -> (i32, i32) {
    %c0_i32 = arith.constant 0 : i32
    %c0_i32_0 = arith.constant 0 : i32
    return %c0_i32, %arg0 : i32, i32
  }
  func.func @transform_6(%arg0: i32) -> (i32, i32, i32) {
    %c0_i32 = arith.constant 0 : i32
    %c0_i32_0 = arith.constant 0 : i32
    %c0_i32_1 = arith.constant 0 : i32
    return %arg0, %c0_i32, %c0_i32_0 : i32, i32, i32
  }
  func.func @transform_7(%arg0: i32) -> (i32, i32, i32) {
    %c0_i32 = arith.constant 0 : i32
    %c0_i32_0 = arith.constant 0 : i32
    %c0_i32_1 = arith.constant 0 : i32
    return %arg0, %c0_i32, %c0_i32_0 : i32, i32, i32
  }
}

module attributes {stable_mosaic.version = 11 : i64} {
  func.func @_conv_kernel(%arg0: i32, %arg1: memref<1024x128xbf16, #tpu.memory_space<vmem>>, %arg2: memref<8x1024xbf16, #tpu.memory_space<vmem>>, %arg3: memref<1024x1xf32, #tpu.memory_space<vmem>>, %arg4: memref<1024x1xf32, #tpu.memory_space<vmem>>, %arg5: memref<8x1xf32, #tpu.memory_space<vmem>>, %arg6: memref<8x128xf32, #tpu.memory_space<vmem>>, %arg7: memref<1x8x1xf32, #tpu.memory_space<vmem>>, %arg8: memref<1x8x1xf32, #tpu.memory_space<vmem>>) attributes {dimension_semantics = [#tpu.dimension_semantics<parallel>], iteration_bounds = array<i64: 1>, scalar_prefetch = 0 : i64, scratch_operands = 0 : i64, tpu.core_type = #tpu.core_type<tc>, window_params = [{transform_indices = @transform_0, window_bounds = array<i64: 1024, 128>}, {pipeline_mode = #tpu.pipeline_mode<synchronous>, transform_indices = @transform_1, window_bounds = array<i64: 8, 1024>}, {pipeline_mode = #tpu.pipeline_mode<synchronous>, transform_indices = @transform_2, window_bounds = array<i64: 1024, 1>}, {pipeline_mode = #tpu.pipeline_mode<synchronous>, transform_indices = @transform_3, window_bounds = array<i64: 1024, 1>}, {pipeline_mode = #tpu.pipeline_mode<synchronous>, transform_indices = @transform_4, window_bounds = array<i64: 8, 1>}, {transform_indices = @transform_5, window_bounds = array<i64: 8, 128>}, {transform_indices = @transform_6, window_bounds = array<i64: 1, 8, 1>}, {transform_indices = @transform_7, window_bounds = array<i64: 1, 8, 1>}]} {
    %c0 = arith.constant 0 : index
    %c0_0 = arith.constant 0 : index
    %0 = vector.load %arg1[%c0, %c0_0] : memref<1024x128xbf16, #tpu.memory_space<vmem>>, vector<1024x128xbf16>
    %1 = arith.extf %0 : vector<1024x128xbf16> to vector<1024x128xf32>
    %c0_1 = arith.constant 0 : index
    %c0_2 = arith.constant 0 : index
    %2 = vector.load %arg3[%c0_1, %c0_2] : memref<1024x1xf32, #tpu.memory_space<vmem>>, vector<1024x1xf32>
    %3 = vector.broadcast %2 : vector<1024x1xf32> to vector<1024x128xf32>
    %4 = arith.mulf %1, %3 : vector<1024x128xf32>
    %c0_3 = arith.constant 0 : index
    %c0_4 = arith.constant 0 : index
    %5 = vector.load %arg4[%c0_3, %c0_4] : memref<1024x1xf32, #tpu.memory_space<vmem>>, vector<1024x1xf32>
    %6 = vector.broadcast %5 : vector<1024x1xf32> to vector<1024x128xf32>
    %7 = arith.addf %4, %6 : vector<1024x128xf32>
    %cst = arith.constant 0.000000e+00 : f32
    %8 = vector.broadcast %cst : f32 to vector<1024x128xf32>
    %9 = arith.cmpf oge, %7, %8 : vector<1024x128xf32>
    %cst_5 = arith.constant 2.000000e-01 : f32
    %10 = vector.broadcast %cst_5 : f32 to vector<1024x128xf32>
    %11 = arith.mulf %10, %7 : vector<1024x128xf32>
    %12 = arith.select %9, %7, %11 : vector<1024x128xi1>, vector<1024x128xf32>
    %13 = arith.truncf %12 : vector<1024x128xf32> to vector<1024x128xbf16>
    %c0_6 = arith.constant 0 : index
    %c0_7 = arith.constant 0 : index
    %14 = vector.load %arg2[%c0_6, %c0_7] : memref<8x1024xbf16, #tpu.memory_space<vmem>>, vector<8x1024xbf16>
    %cst_8 = arith.constant dense<0.000000e+00> : vector<8x128xf32>
    %15 = tpu.matmul %14, %13, %cst_8 {dimension_numbers = #tpu.dot_dimension_numbers<[1], [0], [0], [1], [0, 0, 1, 1], [], []>} : vector<8x1024xbf16>, vector<1024x128xbf16>, vector<8x128xf32> -> vector<8x128xf32>
    %c128_i32 = arith.constant 128 : i32
    %16 = arith.muli %arg0, %c128_i32 : i32
    %17 = tpu.iota {dimensions = array<i32: 1>} : vector<1x128xi32>
    %18 = vector.broadcast %16 : i32 to vector<1x128xi32>
    %19 = arith.addi %18, %17 : vector<1x128xi32>
    %c8_i32 = arith.constant 8 : i32
    %20 = vector.broadcast %c8_i32 : i32 to vector<1x128xi32>
    %21 = arith.cmpi slt, %19, %20 : vector<1x128xi32>
    %cst_9 = arith.constant 0.000000e+00 : f32
    %22 = vector.shape_cast %21 : vector<1x128xi1> to vector<1x128xi1>
    %23 = vector.broadcast %22 : vector<1x128xi1> to vector<8x128xi1>
    %24 = vector.broadcast %cst_9 : f32 to vector<8x128xf32>
    %25 = arith.select %23, %15, %24 : vector<8x128xi1>, vector<8x128xf32>
    %cst_10 = arith.constant dense<0.000000e+00> : vector<8xf32>
    %26 = vector.multi_reduction <add>, %25, %cst_10 [1] : vector<8x128xf32> to vector<8xf32>
    %27 = vector.shape_cast %26 : vector<8xf32> to vector<8x1xf32>
    %28 = vector.shape_cast %27 : vector<8x1xf32> to vector<1x8x1xf32>
    %c0_11 = arith.constant 0 : index
    %c0_12 = arith.constant 0 : index
    %c0_13 = arith.constant 0 : index
    %29 = vector.load %arg7[%c0_11, %c0_12, %c0_13] : memref<1x8x1xf32, #tpu.memory_space<vmem>>, vector<1x8x1xf32>
    tpu.vector_store %arg7[%c0_11, %c0_12, %c0_13], %28 {strides = array<i32>} : memref<1x8x1xf32, #tpu.memory_space<vmem>>, vector<1x8x1xf32>,
    %30 = arith.mulf %25, %25 : vector<8x128xf32>
    %cst_14 = arith.constant dense<0.000000e+00> : vector<8xf32>
    %31 = vector.multi_reduction <add>, %30, %cst_14 [1] : vector<8x128xf32> to vector<8xf32>
    %32 = vector.shape_cast %31 : vector<8xf32> to vector<8x1xf32>
    %33 = vector.shape_cast %32 : vector<8x1xf32> to vector<1x8x1xf32>
    %c0_15 = arith.constant 0 : index
    %c0_16 = arith.constant 0 : index
    %c0_17 = arith.constant 0 : index
    %34 = vector.load %arg8[%c0_15, %c0_16, %c0_17] : memref<1x8x1xf32, #tpu.memory_space<vmem>>, vector<1x8x1xf32>
    tpu.vector_store %arg8[%c0_15, %c0_16, %c0_17], %33 {strides = array<i32>} : memref<1x8x1xf32, #tpu.memory_space<vmem>>, vector<1x8x1xf32>,
    %c0_18 = arith.constant 0 : index
    %c0_19 = arith.constant 0 : index
    %35 = vector.load %arg5[%c0_18, %c0_19] : memref<8x1xf32, #tpu.memory_space<vmem>>, vector<8x1xf32>
    %36 = vector.broadcast %35 : vector<8x1xf32> to vector<8x128xf32>
    %37 = arith.addf %15, %36 : vector<8x128xf32>
    %c0_20 = arith.constant 0 : index
    %c0_21 = arith.constant 0 : index
    %38 = vector.load %arg6[%c0_20, %c0_21] : memref<8x128xf32, #tpu.memory_space<vmem>>, vector<8x128xf32>
    tpu.vector_store %arg6[%c0_20, %c0_21], %37 {strides = array<i32>} : memref<8x128xf32, #tpu.memory_space<vmem>>, vector<8x128xf32>,
    return
  }
  func.func @transform_0(%arg0: i32) -> (i32, i32) {
    %c0_i32 = arith.constant 0 : i32
    %c0_i32_0 = arith.constant 0 : i32
    return %c0_i32, %arg0 : i32, i32
  }
  func.func @transform_1(%arg0: i32) -> (i32, i32) {
    %c0_i32 = arith.constant 0 : i32
    %c0_i32_0 = arith.constant 0 : i32
    %c0_i32_1 = arith.constant 0 : i32
    return %c0_i32, %c0_i32_0 : i32, i32
  }
  func.func @transform_2(%arg0: i32) -> (i32, i32) {
    %c0_i32 = arith.constant 0 : i32
    %c0_i32_0 = arith.constant 0 : i32
    %c0_i32_1 = arith.constant 0 : i32
    return %c0_i32, %c0_i32_0 : i32, i32
  }
  func.func @transform_3(%arg0: i32) -> (i32, i32) {
    %c0_i32 = arith.constant 0 : i32
    %c0_i32_0 = arith.constant 0 : i32
    %c0_i32_1 = arith.constant 0 : i32
    return %c0_i32, %c0_i32_0 : i32, i32
  }
  func.func @transform_4(%arg0: i32) -> (i32, i32) {
    %c0_i32 = arith.constant 0 : i32
    %c0_i32_0 = arith.constant 0 : i32
    %c0_i32_1 = arith.constant 0 : i32
    return %c0_i32, %c0_i32_0 : i32, i32
  }
  func.func @transform_5(%arg0: i32) -> (i32, i32) {
    %c0_i32 = arith.constant 0 : i32
    %c0_i32_0 = arith.constant 0 : i32
    return %c0_i32, %arg0 : i32, i32
  }
  func.func @transform_6(%arg0: i32) -> (i32, i32, i32) {
    %c0_i32 = arith.constant 0 : i32
    %c0_i32_0 = arith.constant 0 : i32
    %c0_i32_1 = arith.constant 0 : i32
    return %arg0, %c0_i32, %c0_i32_0 : i32, i32, i32
  }
  func.func @transform_7(%arg0: i32) -> (i32, i32, i32) {
    %c0_i32 = arith.constant 0 : i32
    %c0_i32_0 = arith.constant 0 : i32
    %c0_i32_1 = arith.constant 0 : i32
    return %arg0, %c0_i32, %c0_i32_0 : i32, i32, i32
  }
}

</mosaic_0001>

<llo_original>
// kernel: _lambda_.5
$region0: #{_lambda_.5}
  #allocation0 [shape = 'u32[]', space=smem, size = 0x4, offset = 0x4, fixed_abs, tag = 'smem constant byte address 0x4 - core index']
  #allocation1 [shape = 'u32[144,128]{1,0:T(1,128)}', space=vmem, size = 0x12000, scoped, tag = 'internal scratch']
  %s0 = inlined_call_operand.vmem [shape: bf16[96,2048], index: 0, kind: input, shape index: {}]
  %s1 = inlined_call_operand.vmem [shape: bf16[8,96], index: 1, kind: input, shape index: {}]
  %s2 = inlined_call_operand.vmem [shape: f32[96,1], index: 2, kind: input, shape index: {}]
  %s3 = inlined_call_operand.vmem [shape: f32[96,1], index: 3, kind: input, shape index: {}]
  %s4 = inlined_call_operand.vmem [shape: f32[8,1], index: 4, kind: input, shape index: {}]
  %s5 = inlined_call_operand.vmem [shape: bf16[8,2048], index: 5, kind: output, shape index: {0}]
  %s6 = inlined_call_operand.hbm [shape: f32[4,8,1], index: 6, kind: output, shape index: {1}]
  %s7 = inlined_call_operand.hbm [shape: f32[4,8,1], index: 7, kind: output, shape index: {2}]
  %8 = xla_tuple %s5, %s6, %s7
  %s9 = sld [smem:[#allocation0]]
  $region92: #{_lambda_.5} parent=0
    _
  %s11 = ssub.s32 1, %s9
  %s12 = scalar_select 0, %s11, %s9
  $region1: #{_lambda_.5} parent=0
    #allocation2 [shape = 'u8[196608]{0}', space=vmem, size = 0x30000, scoped, tag = 'input window, operand 0']
    #allocation3 [shape = 'u8[8192]{0}', space=vmem, size = 0x2000, scoped, tag = 'output window, operand 1']
    #allocation4 [shape = 's32[2]{0}', space=sflag, size = 0x8, scoped, tag = 'scoped memory for _lambda_.5']
    #allocation5 [shape = 'u8[8192]{0}', space=vmem, size = 0x2000, scoped, tag = 'output window, operand 2']
    #allocation6 [shape = 's32[2]{0}', space=sflag, size = 0x8, scoped, tag = 'scoped memory for _lambda_.5']
    %13 = vsyncpa [#allocation4], 0
    %s14 = scalar_lea.sflag [#allocation4], 1
    %15 = vsyncpa %s14, 0
    %16 = vsyncpa [#allocation6], 0
    %s17 = scalar_lea.sflag [#allocation6], 1
    %18 = vsyncpa %s17, 0
    loop: start=0, step=1, limit=6
    $region2: #{_lambda_.5} parent=1 // loop_pre_header
      _
    $region3: #{_lambda_.5} parent=1 // loop_header
      %s20 = sphi 0, %s24
      %p21 = scmp.ge.s32.totalorder %s20, 6
      %s30 = sphi 0, %s32
      %s33 = sphi 0, %s30
      %s34 = sphi 0, %s33
      %s50 = sphi 0, %s34
      %s54 = sphi 0, %s54
      %s56 = sphi 0, %s54
      %s57 = sphi 0, %s56
      %s71 = sphi 0, %s57
      %s75 = sphi 0, %s75
      %s77 = sphi 0, %s75
      %s78 = sphi 0, %s77
      %s92 = sphi 0, %s78
      %s96 = sphi 0, %s96
      %s98 = sphi 0, %s96
      %s99 = sphi 0, %s98
      %s113 = sphi 0, %s99
      %s117 = sphi 0, %s117
      %s119 = sphi 0, %s117
      %s120 = sphi 0, %s119
      %s134 = sphi 0, %s120
      %s140 = sphi 0, %s142
      %s143 = sphi 0, %s140
      %s144 = sphi 0, %s143
      %s160 = sphi 0, %s144
      %s166 = sphi 0, %s168
      %s169 = sphi 0, %s166
      %s170 = sphi 0, %s169
      %s186 = sphi 0, %s170
      %s192 = sphi 0, %s194
      %s195 = sphi 0, %s192
      %s196 = sphi 0, %s195
      %s212 = sphi 0, %s196
    $region4: #{_lambda_.5} parent=1 // loop_header_branch
      %23 = sbr.rel (%p21) target = $region8
    $region5: #{_lambda_.5} parent=1 // loop_body
      %s25 = ssub.s32 %s20, 1
      %s26 = ssub.s32 %s20, 2
      %s27 = sadd.s32 %s20, 1
      %s28 = ssub.s32 %s20, %s27
      %p29 = scmp.eq.s32.totalorder %s28, 0
      %s31 = sadd.s32 %s30, 1
      %s32 = scalar_select %p29, %s30, %s31
      %p35 = pneg %p29
      %p36 = scmp.eq.s32.totalorder %s20, 3
      %p37 = por %p35, %p36
      %p38 = scmp.ne.s32.totalorder %s30, %s33
      %p39 = scmp.eq.s32.totalorder %s20, 0
      %p40 = por %p38, %p39
      %p41 = scmp.ne.s32.totalorder %s30, %s33
      %p42 = scmp.eq.s32.totalorder %s25, 3
      %p43 = por %p41, %p42
      %p44 = scmp.ne.s32.totalorder %s33, %s34
      %p45 = scmp.eq.s32.totalorder %s25, 0
      %p46 = por %p44, %p45
      %p47 = scmp.ne.s32.totalorder %s33, %s34
      %p48 = scmp.eq.s32.totalorder %s26, 3
      %p49 = por %p47, %p48
      %p51 = scmp.ne.s32.totalorder %s34, %s50
      %p52 = scmp.eq.s32.totalorder %s26, 0
      %p53 = por %p51, %p52
      %s55 = sadd.s32 %s54, 1
      %p58 = scmp.eq.s32.totalorder %s20, 3
      %p59 = scmp.ne.s32.totalorder %s54, %s56
      %p60 = scmp.eq.s32.totalorder %s20, 0
      %p61 = por %p59, %p60
      %p62 = scmp.ne.s32.totalorder %s54, %s56
      %p63 = scmp.eq.s32.totalorder %s25, 3
      %p64 = por %p62, %p63
      %p65 = scmp.ne.s32.totalorder %s56, %s57
      %p66 = scmp.eq.s32.totalorder %s25, 0
      %p67 = por %p65, %p66
      %p68 = scmp.ne.s32.totalorder %s56, %s57
      %p69 = scmp.eq.s32.totalorder %s26, 3
      %p70 = por %p68, %p69
      %p72 = scmp.ne.s32.totalorder %s57, %s71
      %p73 = scmp.eq.s32.totalorder %s26, 0
      %p74 = por %p72, %p73
      %s76 = sadd.s32 %s75, 1
      %p79 = scmp.eq.s32.totalorder %s20, 3
      %p80 = scmp.ne.s32.totalorder %s75, %s77
      %p81 = scmp.eq.s32.totalorder %s20, 0
      %p82 = por %p80, %p81
      %p83 = scmp.ne.s32.totalorder %s75, %s77
      %p84 = scmp.eq.s32.totalorder %s25, 3
      %p85 = por %p83, %p84
      %p86 = scmp.ne.s32.totalorder %s77, %s78
      %p87 = scmp.eq.s32.totalorder %s25, 0
      %p88 = por %p86, %p87
      %p89 = scmp.ne.s32.totalorder %s77, %s78
      %p90 = scmp.eq.s32.totalorder %s26, 3
      %p91 = por %p89, %p90
      %p93 = scmp.ne.s32.totalorder %s78, %s92
      %p94 = scmp.eq.s32.totalorder %s26, 0
      %p95 = por %p93, %p94
      %s97 = sadd.s32 %s96, 1
      %p100 = scmp.eq.s32.totalorder %s20, 3
      %p101 = scmp.ne.s32.totalorder %s96, %s98
      %p102 = scmp.eq.s32.totalorder %s20, 0
      %p103 = por %p101, %p102
      %p104 = scmp.ne.s32.totalorder %s96, %s98
      %p105 = scmp.eq.s32.totalorder %s25, 3
      %p106 = por %p104, %p105
      %p107 = scmp.ne.s32.totalorder %s98, %s99
      %p108 = scmp.eq.s32.totalorder %s25, 0
      %p109 = por %p107, %p108
      %p110 = scmp.ne.s32.totalorder %s98, %s99
      %p111 = scmp.eq.s32.totalorder %s26, 3
      %p112 = por %p110, %p111
      %p114 = scmp.ne.s32.totalorder %s99, %s113
      %p115 = scmp.eq.s32.totalorder %s26, 0
      %p116 = por %p114, %p115
      %s118 = sadd.s32 %s117, 1
      %p121 = scmp.eq.s32.totalorder %s20, 3
      %p122 = scmp.ne.s32.totalorder %s117, %s119
      %p123 = scmp.eq.s32.totalorder %s20, 0
      %p124 = por %p122, %p123
      %p125 = scmp.ne.s32.totalorder %s117, %s119
      %p126 = scmp.eq.s32.totalorder %s25, 3
      %p127 = por %p125, %p126
      %p128 = scmp.ne.s32.totalorder %s119, %s120
      %p129 = scmp.eq.s32.totalorder %s25, 0
      %p130 = por %p128, %p129
      %p131 = scmp.ne.s32.totalorder %s119, %s120
      %p132 = scmp.eq.s32.totalorder %s26, 3
      %p133 = por %p131, %p132
      %p135 = scmp.ne.s32.totalorder %s120, %s134
      %p136 = scmp.eq.s32.totalorder %s26, 0
      %p137 = por %p135, %p136
      %s138 = ssub.s32 %s20, %s27
      %p139 = scmp.eq.s32.totalorder %s138, 0
      %s141 = sadd.s32 %s140, 1
      %s142 = scalar_select %p139, %s140, %s141
      %p145 = pneg %p139
      %p146 = scmp.eq.s32.totalorder %s20, 3
      %p147 = por %p145, %p146
      %p148 = scmp.ne.s32.totalorder %s140, %s143
      %p149 = scmp.eq.s32.totalorder %s20, 0
      %p150 = por %p148, %p149
      %p151 = scmp.ne.s32.totalorder %s140, %s143
      %p152 = scmp.eq.s32.totalorder %s25, 3
      %p153 = por %p151, %p152
      %p154 = scmp.ne.s32.totalorder %s143, %s144
      %p155 = scmp.eq.s32.totalorder %s25, 0
      %p156 = por %p154, %p155
      %p157 = scmp.ne.s32.totalorder %s143, %s144
      %p158 = scmp.eq.s32.totalorder %s26, 3
      %p159 = por %p157, %p158
      %p161 = scmp.ne.s32.totalorder %s144, %s160
      %p162 = scmp.eq.s32.totalorder %s26, 0
      %p163 = por %p161, %p162
      %s164 = ssub.s32 %s20, %s27
      %p165 = scmp.eq.s32.totalorder %s164, 0
      %s167 = sadd.s32 %s166, 1
      %s168 = scalar_select %p165, %s166, %s167
      %p171 = pneg %p165
      %p172 = scmp.eq.s32.totalorder %s20, 3
      %p173 = por %p171, %p172
      %p174 = scmp.ne.s32.totalorder %s166, %s169
      %p175 = scmp.eq.s32.totalorder %s20, 0
      %p176 = por %p174, %p175
      %p177 = scmp.ne.s32.totalorder %s166, %s169
      %p178 = scmp.eq.s32.totalorder %s25, 3
      %p179 = por %p177, %p178
      %p180 = scmp.ne.s32.totalorder %s169, %s170
      %p181 = scmp.eq.s32.totalorder %s25, 0
      %p182 = por %p180, %p181
      %p183 = scmp.ne.s32.totalorder %s169, %s170
      %p184 = scmp.eq.s32.totalorder %s26, 3
      %p185 = por %p183, %p184
      %p187 = scmp.ne.s32.totalorder %s170, %s186
      %p188 = scmp.eq.s32.totalorder %s26, 0
      %p189 = por %p187, %p188
      %s190 = ssub.s32 %s20, %s27
      %p191 = scmp.eq.s32.totalorder %s190, 0
      %s193 = sadd.s32 %s192, 1
      %s194 = scalar_select %p191, %s192, %s193
      %p197 = pneg %p191
      %p198 = scmp.eq.s32.totalorder %s20, 3
      %p199 = por %p197, %p198
      %p200 = scmp.ne.s32.totalorder %s192, %s195
      %p201 = scmp.eq.s32.totalorder %s20, 0
      %p202 = por %p200, %p201
      %p203 = scmp.ne.s32.totalorder %s192, %s195
      %p204 = scmp.eq.s32.totalorder %s25, 3
      %p205 = por %p203, %p204
      %p206 = scmp.ne.s32.totalorder %s195, %s196
      %p207 = scmp.eq.s32.totalorder %s25, 0
      %p208 = por %p206, %p207
      %p209 = scmp.ne.s32.totalorder %s195, %s196
      %p210 = scmp.eq.s32.totalorder %s26, 3
      %p211 = por %p209, %p210
      %p213 = scmp.ne.s32.totalorder %s196, %s212
      %p214 = scmp.eq.s32.totalorder %s26, 0
      %p215 = por %p213, %p214
      %p216 = scmp.le.s32.totalorder 1, %s20
      %p217 = scmp.lt.s32.totalorder %s20, 5
      %p218 = pnand %p216, %p217
      %p219 = pneg %p218
      // Predicated region
      $region9: #{_lambda_.5} parent=5 // pred_check
        _
      $region10: #{_lambda_.5} parent=5 // pred_check_branch
        %221 = sbr.rel (%p218) target = $region12
      $region11: #{_lambda_.5} parent=5 // pred_region
        %s222 = ssub.s32 %s20, 1
        // Predicated region
        $region13: #{_lambda_.5} parent=11 // pred_check
          %p223 = pneg %p67
        $region14: #{_lambda_.5} parent=11 // pred_check_branch
          %225 = sbr.rel (%p223) target = $region16
        $region15: #{_lambda_.5} parent=11 // pred_region
          _
        $region16: #{_lambda_.5} parent=11 // pred_fallthru
          _
        // Predicated region
        $region17: #{_lambda_.5} parent=11 // pred_check
          %p226 = pneg %p88
        $region18: #{_lambda_.5} parent=11 // pred_check_branch
          %228 = sbr.rel (%p226) target = $region20
        $region19: #{_lambda_.5} parent=11 // pred_region
          _
        $region20: #{_lambda_.5} parent=11 // pred_fallthru
          _
        // Predicated region
        $region21: #{_lambda_.5} parent=11 // pred_check
          %p229 = pneg %p109
        $region22: #{_lambda_.5} parent=11 // pred_check_branch
          %231 = sbr.rel (%p229) target = $region24
        $region23: #{_lambda_.5} parent=11 // pred_region
          _
        $region24: #{_lambda_.5} parent=11 // pred_fallthru
          _
        // Predicated region
        $region25: #{_lambda_.5} parent=11 // pred_check
          %p232 = pneg %p130
        $region26: #{_lambda_.5} parent=11 // pred_check_branch
          %234 = sbr.rel (%p232) target = $region28
        $region27: #{_lambda_.5} parent=11 // pred_region
          _
        $region28: #{_lambda_.5} parent=11 // pred_fallthru
          _
      $region12: #{_lambda_.5} parent=5 // pred_fallthru
        _
      %p235 = scmp.lt.s32.totalorder %s20, 4
      // Predicated region
      $region29: #{_lambda_.5} parent=5 // pred_check
        %p236 = pneg %p235
      $region30: #{_lambda_.5} parent=5 // pred_check_branch
        %238 = sbr.rel (%p236) target = $region32
      $region31: #{_lambda_.5} parent=5 // pred_region
        // Predicated region
        $region33: #{_lambda_.5} parent=31 // pred_check
          %p239 = pneg %p40
        $region34: #{_lambda_.5} parent=31 // pred_check_branch
          %241 = sbr.rel (%p239) target = $region36
        $region35: #{_lambda_.5} parent=31 // pred_region
          %s242 = sand.u32 %s30, 1
          %s243 = sand.u32 %s30, 1
          %s244 = smul.addr %s243, 192
          %s245 = scalar_lea.vmem [#allocation2], %s244
          %s246 = smul.u32 4, %s20
          %s247 = smul.addr %s246, 4
          %s248 = scalar_lea.vmem %s0, %s247
          // Predicated region
          $region37: #{_lambda_.5} parent=35 // pred_check
            _
          $region38: #{_lambda_.5} parent=35 // pred_check_branch
            %250 = sbr.rel (0) target = $region40
          $region39: #{_lambda_.5} parent=35 // pred_region
            // Predicated region
            $region41: #{_lambda_.5} parent=39 // pred_check
              _
            $region42: #{_lambda_.5} parent=39 // pred_check_branch
              %252 = sbr.rel (0) target = $region44
            $region43: #{_lambda_.5} parent=39 // pred_region
              loop: start=0, step=1, limit=1
              $region45: #{_lambda_.5} parent=43 // loop_pre_header
                _
              $region46: #{_lambda_.5} parent=43 // loop_header
                %s254 = sphi 0, %s258
                %p255 = scmp.ge.s32.totalorder %s254, 1
                %s259 = sphi %s248, %s248
                %s260 = sphi %s245, %s245
              $region47: #{_lambda_.5} parent=43 // loop_header_branch
                %257 = sbr.rel (%p255) target = $region51
              $region48: #{_lambda_.5} parent=43 // loop_body
                %v261 = vld [vmem:[%s259] sm:$0xff]
                %262 = vst [vmem:[%s260] sm:$0xff] %v261
                %v263 = vld [vmem:[%s259 + $0x8] sm:$0xff]
                %264 = vst [vmem:[%s260 + $0x8] sm:$0xff] %v263
                %v265 = vld [vmem:[%s259 + $0x40] sm:$0xff]
                %266 = vst [vmem:[%s260 + $0x10] sm:$0xff] %v265
                %v267 = vld [vmem:[%s259 + $0x48] sm:$0xff]
                %268 = vst [vmem:[%s260 + $0x18] sm:$0xff] %v267
                %v269 = vld [vmem:[%s259 + $0x80] sm:$0xff]
                %270 = vst [vmem:[%s260 + $0x20] sm:$0xff] %v269
                %v271 = vld [vmem:[%s259 + $0x88] sm:$0xff]
                %272 = vst [vmem:[%s260 + $0x28] sm:$0xff] %v271
                %v273 = vld [vmem:[%s259 + $0xc0] sm:$0xff]
                %274 = vst [vmem:[%s260 + $0x30] sm:$0xff] %v273
                %v275 = vld [vmem:[%s259 + $0xc8] sm:$0xff]
                %276 = vst [vmem:[%s260 + $0x38] sm:$0xff] %v275
                %v277 = vld [vmem:[%s259 + $0x100] sm:$0xff]
                %278 = vst [vmem:[%s260 + $0x40] sm:$0xff] %v277
                %v279 = vld [vmem:[%s259 + $0x108] sm:$0xff]
                %280 = vst [vmem:[%s260 + $0x48] sm:$0xff] %v279
                %v281 = vld [vmem:[%s259 + $0x140] sm:$0xff]
                %282 = vst [vmem:[%s260 + $0x50] sm:$0xff] %v281
                %v283 = vld [vmem:[%s259 + $0x148] sm:$0xff]
                %284 = vst [vmem:[%s260 + $0x58] sm:$0xff] %v283
                %v285 = vld [vmem:[%s259 + $0x180] sm:$0xff]
                %286 = vst [vmem:[%s260 + $0x60] sm:$0xff] %v285
                %v287 = vld [vmem:[%s259 + $0x188] sm:$0xff]
                %288 = vst [vmem:[%s260 + $0x68] sm:$0xff] %v287
                %v289 = vld [vmem:[%s259 + $0x1c0] sm:$0xff]
                %290 = vst [vmem:[%s260 + $0x70] sm:$0xff] %v289
                %v291 = vld [vmem:[%s259 + $0x1c8] sm:$0xff]
                %292 = vst [vmem:[%s260 + $0x78] sm:$0xff] %v291
                %v293 = vld [vmem:[%s259 + $0x200] sm:$0xff]
                %294 = vst [vmem:[%s260 + $0x80] sm:$0xff] %v293
                %v295 = vld [vmem:[%s259 + $0x208] sm:$0xff]
                %296 = vst [vmem:[%s260 + $0x88] sm:$0xff] %v295
                %v297 = vld [vmem:[%s259 + $0x240] sm:$0xff]
                %298 = vst [vmem:[%s260 + $0x90] sm:$0xff] %v297
                %v299 = vld [vmem:[%s259 + $0x248] sm:$0xff]
                %300 = vst [vmem:[%s260 + $0x98] sm:$0xff] %v299
                %v301 = vld [vmem:[%s259 + $0x280] sm:$0xff]
                %302 = vst [vmem:[%s260 + $0xa0] sm:$0xff] %v301
                %v303 = vld [vmem:[%s259 + $0x288] sm:$0xff]
                %304 = vst [vmem:[%s260 + $0xa8] sm:$0xff] %v303
                %v305 = vld [vmem:[%s259 + $0x2c0] sm:$0xff]
                %306 = vst [vmem:[%s260 + $0xb0] sm:$0xff] %v305
                %v307 = vld [vmem:[%s259 + $0x2c8] sm:$0xff]
                %308 = vst [vmem:[%s260 + $0xb8] sm:$0xff] %v307
              $region49: #{_lambda_.5} parent=43 // loop_footer
                %s258 = sadd.s32 1, %s254
              $region50: #{_lambda_.5} parent=43 // loop_footer_branch
                %253 = sbr.rel target = $region46
              $region51: #{_lambda_.5} parent=43 // loop_exit
                _
            $region44: #{_lambda_.5} parent=39 // pred_fallthru
              _
            // Predicated region
            $region52: #{_lambda_.5} parent=39 // pred_check
              _
            $region53: #{_lambda_.5} parent=39 // pred_check_branch
              %310 = sbr.rel target = $region55
            $region54: #{_lambda_.5} parent=39 // pred_region
              _
            $region55: #{_lambda_.5} parent=39 // pred_fallthru
              _
          $region40: #{_lambda_.5} parent=35 // pred_fallthru
            _
          %311 = vnop
        $region36: #{_lambda_.5} parent=31 // pred_fallthru
          _
      $region32: #{_lambda_.5} parent=5 // pred_fallthru
        _
      %p312 = scmp.le.s32.totalorder 1, %s20
      %p313 = scmp.lt.s32.totalorder %s20, 5
      %p314 = pnand %p312, %p313
      %p315 = pneg %p314
      // Predicated region
      $region56: #{_lambda_.5} parent=5 // pred_check
        _
      $region57: #{_lambda_.5} parent=5 // pred_check_branch
        %317 = sbr.rel (%p314) target = $region59
      $region58: #{_lambda_.5} parent=5 // pred_region
        %s318 = ssub.s32 %s20, 1
        %s319 = sand.u32 %s33, 1
        %s320 = sand.u32 %s33, 1
        %s321 = smul.addr %s320, 192
        %s322 = scalar_lea.vmem [#allocation2], %s321
        // Predicated region
        $region60: #{_lambda_.5} parent=58 // pred_check
          %p323 = pneg %p46
        $region61: #{_lambda_.5} parent=58 // pred_check_branch
          %325 = sbr.rel (%p323) target = $region63
        $region62: #{_lambda_.5} parent=58 // pred_region
          _
        $region63: #{_lambda_.5} parent=58 // pred_fallthru
          _
        %s326 = sand.u32 %s33, 1
        %s327 = sand.u32 %s33, 1
        %s328 = smul.addr %s327, 192
        %s329 = scalar_lea.vmem [#allocation2], %s328
        %p330 = pneg %p46
        %p331 = pneg %p43
        %p332 = pneg %p67
        %p333 = pneg %p64
        %p334 = pneg %p88
        %p335 = pneg %p85
        %p336 = pneg %p109
        %p337 = pneg %p106
        %p338 = pneg %p130
        %p339 = pneg %p127
        %p340 = pneg %p156
        %p341 = pneg %p153
        %s342 = smul.u32 4, %s25
        %p343 = scmp.lt.s32.totalorder %s342, 15
        %s344 = scalar_select %p343, %s342, 15
        %s345 = smul.addr %s344, 4
        %s346 = scalar_lea.vmem %s5, %s345
        %p347 = pneg %p182
        %p348 = pneg %p179
        %s349 = sand.u32 %s169, 1
        %s350 = scalar_lea.sflag [#allocation4], %s349
        %s351 = sand.u32 %s169, 1
        %s352 = smul.addr %s351, 8
        %s353 = scalar_lea.vmem [#allocation3], %s352
        %p354 = pneg %p208
        %p355 = pneg %p205
        %s356 = sand.u32 %s195, 1
        %s357 = scalar_lea.sflag [#allocation6], %s356
        %s358 = sand.u32 %s195, 1
        %s359 = smul.addr %s358, 8
        %s360 = scalar_lea.vmem [#allocation5], %s359
        %s361 = smul.u32 4, %s25
        %s362 = smul.u32 4, %s25
        %p363 = scmp.lt.s32.totalorder %s362, 15
        %s364 = scalar_select %p363, %s362, 15
        %s365 = smul.addr %s364, 4
        %s366 = scalar_lea.vmem %s5, %s365
        %s367 = smul.u32 4, %s25
        %v369 = vld [vmem:[%s322] sm:$0xff]
        %v370 = vld [vmem:[%s322 + $0x8] sm:$0xff]
        %v371 = vld [vmem:[%s322 + $0x10] sm:$0xff]
        %v372 = vld [vmem:[%s322 + $0x18] sm:$0xff]
        %v373 = vld [vmem:[%s322 + $0x20] sm:$0xff]
        %v374 = vld [vmem:[%s322 + $0x28] sm:$0xff]
        %v375 = vld [vmem:[%s322 + $0x30] sm:$0xff]
        %v376 = vld [vmem:[%s322 + $0x38] sm:$0xff]
        %v377 = vld [vmem:[%s322 + $0x40] sm:$0xff]
        %v378 = vld [vmem:[%s322 + $0x48] sm:$0xff]
        %v379 = vld [vmem:[%s322 + $0x50] sm:$0xff]
        %v380 = vld [vmem:[%s322 + $0x58] sm:$0xff]
        %v381 = vld [vmem:[%s322 + $0x60] sm:$0xff]
        %v382 = vld [vmem:[%s322 + $0x68] sm:$0xff]
        %v383 = vld [vmem:[%s322 + $0x70] sm:$0xff]
        %v384 = vld [vmem:[%s322 + $0x78] sm:$0xff]
        %v385 = vld [vmem:[%s322 + $0x80] sm:$0xff]
        %v386 = vld [vmem:[%s322 + $0x88] sm:$0xff]
        %v387 = vld [vmem:[%s322 + $0x90] sm:$0xff]
        %v388 = vld [vmem:[%s322 + $0x98] sm:$0xff]
        %v389 = vld [vmem:[%s322 + $0xa0] sm:$0xff]
        %v390 = vld [vmem:[%s322 + $0xa8] sm:$0xff]
        %v391 = vld [vmem:[%s322 + $0xb0] sm:$0xff]
        %v392 = vld [vmem:[%s322 + $0xb8] sm:$0xff]
        %v393 = vld [vmem:[%s1] sm:$0xf]
        %v418 = vunpack.c.l.b16 %v369
        %v419 = vunpack.c.h.b16 %v369
        %v420 = vunpack.c.l.b16 %v370
        %v421 = vunpack.c.h.b16 %v370
        %v422 = vunpack.c.l.b16 %v371
        %v423 = vunpack.c.h.b16 %v371
        %v424 = vunpack.c.l.b16 %v372
        %v425 = vunpack.c.h.b16 %v372
        %v426 = vunpack.c.l.b16 %v373
        %v427 = vunpack.c.h.b16 %v373
        %v428 = vunpack.c.l.b16 %v374
        %v429 = vunpack.c.h.b16 %v374
        %v430 = vunpack.c.l.b16 %v375
        %v431 = vunpack.c.h.b16 %v375
        %v432 = vunpack.c.l.b16 %v376
        %v433 = vunpack.c.h.b16 %v376
        %v434 = vunpack.c.l.b16 %v377
        %v435 = vunpack.c.h.b16 %v377
        %v436 = vunpack.c.l.b16 %v378
        %v437 = vunpack.c.h.b16 %v378
        %v438 = vunpack.c.l.b16 %v379
        %v439 = vunpack.c.h.b16 %v379
        %v440 = vunpack.c.l.b16 %v380
        %v441 = vunpack.c.h.b16 %v380
        %v442 = vunpack.c.l.b16 %v381
        %v443 = vunpack.c.h.b16 %v381
        %v444 = vunpack.c.l.b16 %v382
        %v445 = vunpack.c.h.b16 %v382
        %v446 = vunpack.c.l.b16 %v383
        %v447 = vunpack.c.h.b16 %v383
        %v448 = vunpack.c.l.b16 %v384
        %v449 = vunpack.c.h.b16 %v384
        %v450 = vunpack.c.l.b16 %v385
        %v451 = vunpack.c.h.b16 %v385
        %v452 = vunpack.c.l.b16 %v386
        %v453 = vunpack.c.h.b16 %v386
        %v454 = vunpack.c.l.b16 %v387
        %v455 = vunpack.c.h.b16 %v387
        %v456 = vunpack.c.l.b16 %v388
        %v457 = vunpack.c.h.b16 %v388
        %v458 = vunpack.c.l.b16 %v389
        %v459 = vunpack.c.h.b16 %v389
        %v460 = vunpack.c.l.b16 %v390
        %v461 = vunpack.c.h.b16 %v390
        %v462 = vunpack.c.l.b16 %v391
        %v463 = vunpack.c.h.b16 %v391
        %v464 = vunpack.c.l.b16 %v392
        %v465 = vunpack.c.h.b16 %v392
        %v466 = vpack.c.b16 %v422, %v418
        %v467 = vpack.c.b16 %v423, %v419
        %v468 = vpack.c.b16 %v424, %v420
        %v469 = vpack.c.b16 %v425, %v421
        %v470 = vpack.c.b16 %v430, %v426
        %v471 = vpack.c.b16 %v431, %v427
        %v472 = vpack.c.b16 %v432, %v428
        %v473 = vpack.c.b16 %v433, %v429
        %v474 = vpack.c.b16 %v438, %v434
        %v475 = vpack.c.b16 %v439, %v435
        %v476 = vpack.c.b16 %v440, %v436
        %v477 = vpack.c.b16 %v441, %v437
        %v478 = vpack.c.b16 %v446, %v442
        %v479 = vpack.c.b16 %v447, %v443
        %v480 = vpack.c.b16 %v448, %v444
        %v481 = vpack.c.b16 %v449, %v445
        %v482 = vpack.c.b16 %v454, %v450
        %v483 = vpack.c.b16 %v455, %v451
        %v484 = vpack.c.b16 %v456, %v452
        %v485 = vpack.c.b16 %v457, %v453
        %v486 = vpack.c.b16 %v462, %v458
        %v487 = vpack.c.b16 %v463, %v459
        %v488 = vpack.c.b16 %v464, %v460
        %v489 = vpack.c.b16 %v465, %v461
        %vm514 = vcmask 785408
        %v516 = vsel %vm514, %v393, 0
        %518 = vmatprep.subr.bf16.mxu0 %v467
        %519 = vmatpush1.bf16.msra.mxu0 %v466
        %520 = vmatprep.subr.bf16.mxu0 %v471
        %521 = vmatpush1.bf16.msra.mxu0 %v470
        %522 = vmatprep.subr.bf16.mxu0 %v475
        %523 = vmatpush1.bf16.msra.mxu0 %v474
        %524 = vmatprep.subr.bf16.mxu0 %v479
        %525 = vmatpush1.bf16.msra.mxu0 %v478
        %526 = vmatprep.subr.bf16.mxu0 %v483
        %527 = vmatpush1.bf16.msra.mxu0 %v482
        %528 = vmatprep.subr.bf16.mxu0 %v487
        %529 = vmatpush1.bf16.msra.mxu0 %v486
        %530 = vmatprep.subr.bf16.mxu0 0
        %531 = vmatpush1.bf16.msra.mxu0 0
        %532 = vmatprep.subr.bf16.mxu0 0
        %533 = vmatpush1.bf16.msra.mxu0 0
        %534 = vmatprep.subr.bf16.mxu0 0
        %535 = vmatpush1.bf16.msra.mxu0 0
        %536 = vmatprep.subr.bf16.mxu0 0
        %537 = vmatpush1.bf16.msra.mxu0 0
        %538 = vmatprep.subr.bf16.mxu0 0
        %539 = vmatpush1.bf16.msra.mxu0 0
        %540 = vmatprep.subr.bf16.mxu0 0
        %541 = vmatpush1.bf16.msra.mxu0 0
        %542 = vmatprep.subr.bf16.mxu0 0
        %543 = vmatpush1.bf16.msra.mxu0 0
        %544 = vmatprep.subr.bf16.mxu0 0
        %545 = vmatpush1.bf16.msra.mxu0 0
        %546 = vmatprep.subr.bf16.mxu0 0
        %547 = vmatpush1.bf16.msra.mxu0 0
        %548 = vmatprep.subr.bf16.mxu0 0
        %549 = vmatpush1.bf16.msra.mxu0 0
        %550 = vmatprep.mubr.bf16.mxu0 0
        %551 = vmatmul.mubr.bf16.gmra.mrb[0].mxu0 %v516
        %v552 = vpop.f32.mrb[0].mxu0
        %v553 = vadd.f32 0.0, %v552
        %v554 = vpop.f32.mrb[0].mxu0
        %v555 = vadd.f32 0.0, %v554
        %v556 = vpop.f32.mrb[0].mxu0
        %v557 = vpop.f32.mrb[0].mxu0
        %558 = vdwg.mxu0
        %559 = vmatprep.subr.bf16.mxu0 %v469
        %560 = vmatpush1.bf16.msra.mxu0 %v468
        %561 = vmatprep.subr.bf16.mxu0 %v473
        %562 = vmatpush1.bf16.msra.mxu0 %v472
        %563 = vmatprep.subr.bf16.mxu0 %v477
        %564 = vmatpush1.bf16.msra.mxu0 %v476
        %565 = vmatprep.subr.bf16.mxu0 %v481
        %566 = vmatpush1.bf16.msra.mxu0 %v480
        %567 = vmatprep.subr.bf16.mxu0 %v485
        %568 = vmatpush1.bf16.msra.mxu0 %v484
        %569 = vmatprep.subr.bf16.mxu0 %v489
        %570 = vmatpush1.bf16.msra.mxu0 %v488
        %571 = vmatprep.subr.bf16.mxu0 0
        %572 = vmatpush1.bf16.msra.mxu0 0
        %573 = vmatprep.subr.bf16.mxu0 0
        %574 = vmatpush1.bf16.msra.mxu0 0
        %575 = vmatprep.subr.bf16.mxu0 0
        %576 = vmatpush1.bf16.msra.mxu0 0
        %577 = vmatprep.subr.bf16.mxu0 0
        %578 = vmatpush1.bf16.msra.mxu0 0
        %579 = vmatprep.subr.bf16.mxu0 0
        %580 = vmatpush1.bf16.msra.mxu0 0
        %581 = vmatprep.subr.bf16.mxu0 0
        %582 = vmatpush1.bf16.msra.mxu0 0
        %583 = vmatprep.subr.bf16.mxu0 0
        %584 = vmatpush1.bf16.msra.mxu0 0
        %585 = vmatprep.subr.bf16.mxu0 0
        %586 = vmatpush1.bf16.msra.mxu0 0
        %587 = vmatprep.subr.bf16.mxu0 0
        %588 = vmatpush1.bf16.msra.mxu0 0
        %589 = vmatprep.subr.bf16.mxu0 0
        %590 = vmatpush1.bf16.msra.mxu0 0
        %591 = vmatprep.mubr.bf16.mxu0 0
        %592 = vmatmul.mubr.bf16.gmra.mrb[0].mxu0 %v516
        %v593 = vpop.f32.mrb[0].mxu0
        %v594 = vadd.f32 0.0, %v593
        %v595 = vpop.f32.mrb[0].mxu0
        %v596 = vadd.f32 0.0, %v595
        %v597 = vpop.f32.mrb[0].mxu0
        %v598 = vpop.f32.mrb[0].mxu0
        %599 = vdwg.mxu0
        %s600 = smul.u32 %s25, 512
        %v601 = vlaneseq
        %v602 = vand.u32 %v601, 127
        %v603 = vadd.s32 %v602, 128
        %v604 = vadd.s32 %v602, 256
        %v605 = vadd.s32 %v602, 384
        %v606 = vstv %s600
        %v607 = vadd.s32 %v606, %v602
        %v608 = vadd.s32 %v606, %v603
        %v609 = vadd.s32 %v606, %v604
        %v610 = vadd.s32 %v606, %v605
        %vm611 = vcmp.lt.s32.totalorder %v607, 2048
        %vm612 = vcmp.lt.s32.totalorder %v608, 2048
        %vm613 = vcmp.lt.s32.totalorder %v609, 2048
        %vm614 = vcmp.lt.s32.totalorder %v610, 2048
        %v615 = vsel %vm611, 1, 0
        %v616 = vsel %vm612, 1, 0
        %v617 = vsel %vm613, 1, 0
        %v618 = vsel %vm614, 1, 0
        %vm619 = vcmp.eq.s32.totalorder %v615, 1
        %vm620 = vcmp.eq.s32.totalorder %v616, 1
        %vm621 = vcmp.eq.s32.totalorder %v617, 1
        %vm622 = vcmp.eq.s32.totalorder %v618, 1
        %v623 = vsel %vm619, %v553, 0.0
        %v624 = vsel %vm620, %v555, 0.0
        %v625 = vsel %vm621, %v594, 0.0
        %v626 = vsel %vm622, %v596, 0.0
        %v627 = vadd.f32 %v623, %v624
        %v628 = vadd.f32 %v627, %v625
        %v629 = vadd.f32 %v628, %v626
        %630 = vadd.xlane.f32.xlu0 %v629
        %v631 = vpop.xlane.xlu0 %630
        %vm632 = vcmask 7168
        %633 = vst.msk [vmem:[%s353] sm:$0xff] %vm632, %v631
        %v634 = vmul.f32 %v623, %v623
        %v635 = vmul.f32 %v624, %v624
        %v636 = vmul.f32 %v625, %v625
        %v637 = vmul.f32 %v626, %v626
        %v638 = vadd.f32 %v634, %v635
        %v639 = vadd.f32 %v638, %v636
        %v640 = vadd.f32 %v639, %v637
        %641 = vadd.xlane.f32.xlu0 %v640
        %v642 = vpop.xlane.xlu0 %641
        %643 = vst.msk [vmem:[%s360] sm:$0xff] %vm632, %v642
        %v644 = vld [vmem:[%s4] sm:$0xff]
        %646 = vset.pattern.permute.xlu0 0
        %647 = vperm.xlu0 %646, %v644
        %v648 = vpop.permute.xlu0 %647
        %v650 = vadd.f32 %v553, %v648
        %v651 = vadd.f32 %v555, %v648
        %v652 = vadd.f32 %v594, %v648
        %v653 = vadd.f32 %v596, %v648
        %vm654 = vcmp.ge.f32.partialorder %v650, 0.0
        %vm655 = vcmp.ge.f32.partialorder %v651, 0.0
        %vm656 = vcmp.ge.f32.partialorder %v652, 0.0
        %vm657 = vcmp.ge.f32.partialorder %v653, 0.0
        %v658 = vmul.f32 %v650, 0.2
        %v659 = vmul.f32 %v651, 0.2
        %v660 = vmul.f32 %v652, 0.2
        %v661 = vmul.f32 %v653, 0.2
        %v662 = vsel %vm654, %v650, %v658
        %v663 = vsel %vm655, %v651, %v659
        %v664 = vsel %vm656, %v652, %v660
        %v665 = vsel %vm657, %v653, %v661
        %v666 = vpack.c.bf16 %v662, %v662
        %v667 = vpack.c.bf16 %v663, %v663
        %v668 = vpack.c.bf16 %v664, %v664
        %v669 = vpack.c.bf16 %v665, %v665
        %v674 = vunpack.c.l.b16 %v666
        %v675 = vunpack.c.l.b16 %v667
        %v676 = vunpack.c.l.b16 %v668
        %v677 = vunpack.c.l.b16 %v669
        %v678 = vpack.c.b16 %v675, %v674
        %v679 = vpack.c.b16 %v677, %v676
        %682 = vst [vmem:[%s366] sm:$0xff] %v678
        %683 = vst [vmem:[%s366 + $0x8] sm:$0xff] %v679
        %s684 = smul.u32 4, %s25
        %p685 = scmp.lt.s32.totalorder %s684, 15
        %s686 = scalar_select %p685, %s684, 15
        %s687 = smul.addr %s686, 4
        %s688 = scalar_lea.vmem %s5, %s687
        %s689 = sand.u32 %s169, 1
        %s690 = scalar_lea.sflag [#allocation4], %s689
        %s691 = sand.u32 %s169, 1
        %s692 = smul.addr %s691, 8
        %s693 = scalar_lea.vmem [#allocation3], %s692
        %s694 = sand.u32 %s195, 1
        %s695 = scalar_lea.sflag [#allocation6], %s694
        %s696 = sand.u32 %s195, 1
        %s697 = smul.addr %s696, 8
        %s698 = scalar_lea.vmem [#allocation5], %s697
        // Predicated region
        $region64: #{_lambda_.5} parent=58 // pred_check
          %p699 = pneg %p153
        $region65: #{_lambda_.5} parent=58 // pred_check_branch
          %701 = sbr.rel (%p699) target = $region67
        $region66: #{_lambda_.5} parent=58 // pred_region
          %s702 = smul.u32 4, %s25
        $region67: #{_lambda_.5} parent=58 // pred_fallthru
          _
        // Predicated region
        $region68: #{_lambda_.5} parent=58 // pred_check
          %p703 = pneg %p179
        $region69: #{_lambda_.5} parent=58 // pred_check_branch
          %705 = sbr.rel (%p703) target = $region71
        $region70: #{_lambda_.5} parent=58 // pred_region
          %s707 = ssub.s32 128, 128
          %708 = vsyncadd %s690, %s707
          %s709 = smul.addr %s25, 128
          %s710 = scalar_lea.hbm %s6, %s709
          %s712 = sshll.u32 %s693, 4
          %s713 = int_to_ptr.vmem [resolvable:$true] %s712
          %715 = dma.vmem_to_hbm [thread:$0]  %s713, 128, %s710, %s690
        $region71: #{_lambda_.5} parent=58 // pred_fallthru
          _
        // Predicated region
        $region72: #{_lambda_.5} parent=58 // pred_check
          %p716 = pneg %p205
        $region73: #{_lambda_.5} parent=58 // pred_check_branch
          %718 = sbr.rel (%p716) target = $region75
        $region74: #{_lambda_.5} parent=58 // pred_region
          %s720 = ssub.s32 128, 128
          %721 = vsyncadd %s695, %s720
          %s722 = smul.addr %s25, 128
          %s723 = scalar_lea.hbm %s7, %s722
          %s725 = sshll.u32 %s698, 4
          %s726 = int_to_ptr.vmem [resolvable:$true] %s725
          %728 = dma.vmem_to_hbm [thread:$0]  %s726, 128, %s723, %s695
        $region75: #{_lambda_.5} parent=58 // pred_fallthru
          _
      $region59: #{_lambda_.5} parent=5 // pred_fallthru
        _
      %p729 = scmp.le.s32.totalorder 2, %s20
      // Predicated region
      $region76: #{_lambda_.5} parent=5 // pred_check
        %p730 = pneg %p729
      $region77: #{_lambda_.5} parent=5 // pred_check_branch
        %732 = sbr.rel (%p730) target = $region79
      $region78: #{_lambda_.5} parent=5 // pred_region
        %s733 = ssub.s32 %s20, 2
        // Predicated region
        $region80: #{_lambda_.5} parent=78 // pred_check
          %p734 = pneg %p159
        $region81: #{_lambda_.5} parent=78 // pred_check_branch
          %736 = sbr.rel (%p734) target = $region83
        $region82: #{_lambda_.5} parent=78 // pred_region
          %s737 = smul.u32 4, %s26
          %p738 = scmp.lt.s32.totalorder %s737, 15
          %s739 = scalar_select %p738, %s737, 15
          %s740 = smul.addr %s739, 4
          %s741 = scalar_lea.vmem %s5, %s740
        $region83: #{_lambda_.5} parent=78 // pred_fallthru
          _
        // Predicated region
        $region84: #{_lambda_.5} parent=78 // pred_check
          %p742 = pneg %p185
        $region85: #{_lambda_.5} parent=78 // pred_check_branch
          %744 = sbr.rel (%p742) target = $region87
        $region86: #{_lambda_.5} parent=78 // pred_region
          %s745 = sand.u32 %s170, 1
          %s746 = scalar_lea.sflag [#allocation4], %s745
          %s747 = sand.u32 %s170, 1
          %s748 = smul.addr %s747, 8
          %s749 = scalar_lea.vmem [#allocation3], %s748
          %750 = dma.done %s746, 128
        $region87: #{_lambda_.5} parent=78 // pred_fallthru
          _
        // Predicated region
        $region88: #{_lambda_.5} parent=78 // pred_check
          %p751 = pneg %p211
        $region89: #{_lambda_.5} parent=78 // pred_check_branch
          %753 = sbr.rel (%p751) target = $region91
        $region90: #{_lambda_.5} parent=78 // pred_region
          %s754 = sand.u32 %s196, 1
          %s755 = scalar_lea.sflag [#allocation6], %s754
          %s756 = sand.u32 %s196, 1
          %s757 = smul.addr %s756, 8
          %s758 = scalar_lea.vmem [#allocation5], %s757
          %759 = dma.done %s755, 128
        $region91: #{_lambda_.5} parent=78 // pred_fallthru
          _
      $region79: #{_lambda_.5} parent=5 // pred_fallthru
        _
    $region6: #{_lambda_.5} parent=1 // loop_footer
      %s24 = sadd.s32 1, %s20
    $region7: #{_lambda_.5} parent=1 // loop_footer_branch
      %19 = sbr.rel target = $region3
    $region8: #{_lambda_.5} parent=1 // loop_exit
      _
    %760 = vsyncpa [#allocation4], 1
    %s761 = scalar_lea.sflag [#allocation4], 1
    %762 = vsyncpa %s761, 1
    %763 = vsyncpa [#allocation6], 1
    %s764 = scalar_lea.sflag [#allocation6], 1
    %765 = vsyncpa %s764, 1

// kernel: tile.33
$region0: #{tile.33}
  #allocation0 [shape = 's32[1]{0}', space=sflag, size = 0x4, scoped, tag = 'scoped memory for tile.33']
  %s0 = inlined_call_operand.vmem [shape: f32[16], index: 0, kind: input, shape index: {}]
  %s1 = inlined_call_operand.vmem [shape: f32[16,16], index: 1, kind: output, shape index: {}]
  // Predicated region
  $region2: #{tile.33} parent=0 // pred_check
    _
  $region3: #{tile.33} parent=0 // pred_check_branch
    %3 = sbr.rel (0) target = $region5
  $region4: #{tile.33} parent=0 // pred_region
    _
  $region5: #{tile.33} parent=0 // pred_fallthru
    _
  %v4 = vld [vmem:[%s0] ss:$0 sm:$0xff]
  %5 = vst [vmem:[%s1] sm:$0xff] %v4
  %s6 = scalar_lea.vmem %s1, 8
  %7 = vst [vmem:[%s6] sm:$0xff] %v4

// kernel: tile.0
$region0: #{tile.0}
  %s0 = inlined_call_operand.vmem [shape: f32[16,16], index: 0, kind: input, shape index: {}]
  %s1 = inlined_call_operand.vmem [shape: f32[256,1], index: 1, kind: output, shape index: {}]
  %v2 = vld [vmem:[%s0] sm:$0xff]
  %vm3 = vcmask 7168
  %4 = vst.msk [vmem:[%s1] ss:$16 sm:$0x3] %vm3, %v2
  %5 = vst.msk [vmem:[%s1] ss:$16 sm:$0xc] %vm3, %v2
  %6 = vst.msk [vmem:[%s1] ss:$16 sm:$0x30] %vm3, %v2
  %7 = vst.msk [vmem:[%s1] ss:$16 sm:$0xc0] %vm3, %v2
  %s8 = scalar_lea.vmem %s0, 8
  %v9 = vld [vmem:[%s8] sm:$0xff]
  %vm10 = vcmask 7168
  %s11 = scalar_lea.vmem %s1, 128
  %12 = vst.msk [vmem:[%s11] ss:$16 sm:$0x3] %vm10, %v9
  %s13 = scalar_lea.vmem %s1, 128
  %14 = vst.msk [vmem:[%s13] ss:$16 sm:$0xc] %vm10, %v9
  %s15 = scalar_lea.vmem %s1, 128
  %16 = vst.msk [vmem:[%s15] ss:$16 sm:$0x30] %vm10, %v9
  %s17 = scalar_lea.vmem %s1, 128
  %18 = vst.msk [vmem:[%s17] ss:$16 sm:$0xc0] %vm10, %v9
  %v19 = vld [vmem:[%s0] sm:$0xff]
  %20 = vrot.lane.b32.xlu0 %v19, 127
  %v21 = vpop.permute.xlu0 %20
  %vm22 = vcmask 7168
  %s23 = scalar_lea.vmem %s1, 1
  %24 = vst.msk [vmem:[%s23] ss:$16 sm:$0x3] %vm22, %v21
  %s25 = scalar_lea.vmem %s1, 1
  %26 = vst.msk [vmem:[%s25] ss:$16 sm:$0xc] %vm22, %v21
  %s27 = scalar_lea.vmem %s1, 1
  %28 = vst.msk [vmem:[%s27] ss:$16 sm:$0x30] %vm22, %v21
  %s29 = scalar_lea.vmem %s1, 1
  %30 = vst.msk [vmem:[%s29] ss:$16 sm:$0xc0] %vm22, %v21
  %s31 = scalar_lea.vmem %s0, 8
  %v32 = vld [vmem:[%s31] sm:$0xff]
  %33 = vrot.lane.b32.xlu0 %v32, 127
  %v34 = vpop.permute.xlu0 %33
  %vm35 = vcmask 7168
  %s36 = scalar_lea.vmem %s1, 129
  %37 = vst.msk [vmem:[%s36] ss:$16 sm:$0x3] %vm35, %v34
  %s38 = scalar_lea.vmem %s1, 129
  %39 = vst.msk [vmem:[%s38] ss:$16 sm:$0xc] %vm35, %v34
  %s40 = scalar_lea.vmem %s1, 129
  %41 = vst.msk [vmem:[%s40] ss:$16 sm:$0x30] %vm35, %v34
  %s42 = scalar_lea.vmem %s1, 129
  %43 = vst.msk [vmem:[%s42] ss:$16 sm:$0xc0] %vm35, %v34
  %v44 = vld [vmem:[%s0] sm:$0xff]
  %45 = vrot.lane.b32.xlu0 %v44, 126
  %v46 = vpop.permute.xlu0 %45
  %vm47 = vcmask 7168
  %s48 = scalar_lea.vmem %s1, 2
  %49 = vst.msk [vmem:[%s48] ss:$16 sm:$0x3] %vm47, %v46
  %s50 = scalar_lea.vmem %s1, 2
  %51 = vst.msk [vmem:[%s50] ss:$16 sm:$0xc] %vm47, %v46
  %s52 = scalar_lea.vmem %s1, 2
  %53 = vst.msk [vmem:[%s52] ss:$16 sm:$0x30] %vm47, %v46
  %s54 = scalar_lea.vmem %s1, 2
  %55 = vst.msk [vmem:[%s54] ss:$16 sm:$0xc0] %vm47, %v46
  %s56 = scalar_lea.vmem %s0, 8
  %v57 = vld [vmem:[%s56] sm:$0xff]
  %58 = vrot.lane.b32.xlu0 %v57, 126
  %v59 = vpop.permute.xlu0 %58
  %vm60 = vcmask 7168
  %s61 = scalar_lea.vmem %s1, 130
  %62 = vst.msk [vmem:[%s61] ss:$16 sm:$0x3] %vm60, %v59
  %s63 = scalar_lea.vmem %s1, 130
  %64 = vst.msk [vmem:[%s63] ss:$16 sm:$0xc] %vm60, %v59
  %s65 = scalar_lea.vmem %s1, 130
  %66 = vst.msk [vmem:[%s65] ss:$16 sm:$0x30] %vm60, %v59
  %s67 = scalar_lea.vmem %s1, 130
  %68 = vst.msk [vmem:[%s67] ss:$16 sm:$0xc0] %vm60, %v59
  %v69 = vld [vmem:[%s0] sm:$0xff]
  %70 = vrot.lane.b32.xlu0 %v69, 125
  %v71 = vpop.permute.xlu0 %70
  %vm72 = vcmask 7168
  %s73 = scalar_lea.vmem %s1, 3
  %74 = vst.msk [vmem:[%s73] ss:$16 sm:$0x3] %vm72, %v71
  %s75 = scalar_lea.vmem %s1, 3
  %76 = vst.msk [vmem:[%s75] ss:$16 sm:$0xc] %vm72, %v71
  %s77 = scalar_lea.vmem %s1, 3
  %78 = vst.msk [vmem:[%s77] ss:$16 sm:$0x30] %vm72, %v71
  %s79 = scalar_lea.vmem %s1, 3
  %80 = vst.msk [vmem:[%s79] ss:$16 sm:$0xc0] %vm72, %v71
  %s81 = scalar_lea.vmem %s0, 8
  %v82 = vld [vmem:[%s81] sm:$0xff]
  %83 = vrot.lane.b32.xlu0 %v82, 125
  %v84 = vpop.permute.xlu0 %83
  %vm85 = vcmask 7168
  %s86 = scalar_lea.vmem %s1, 131
  %87 = vst.msk [vmem:[%s86] ss:$16 sm:$0x3] %vm85, %v84
  %s88 = scalar_lea.vmem %s1, 131
  %89 = vst.msk [vmem:[%s88] ss:$16 sm:$0xc] %vm85, %v84
  %s90 = scalar_lea.vmem %s1, 131
  %91 = vst.msk [vmem:[%s90] ss:$16 sm:$0x30] %vm85, %v84
  %s92 = scalar_lea.vmem %s1, 131
  %93 = vst.msk [vmem:[%s92] ss:$16 sm:$0xc0] %vm85, %v84
  %v94 = vld [vmem:[%s0] sm:$0xff]
  %95 = vrot.lane.b32.xlu0 %v94, 124
  %v96 = vpop.permute.xlu0 %95
  %vm97 = vcmask 7168
  %s98 = scalar_lea.vmem %s1, 4
  %99 = vst.msk [vmem:[%s98] ss:$16 sm:$0x3] %vm97, %v96
  %s100 = scalar_lea.vmem %s1, 4
  %101 = vst.msk [vmem:[%s100] ss:$16 sm:$0xc] %vm97, %v96
  %s102 = scalar_lea.vmem %s1, 4
  %103 = vst.msk [vmem:[%s102] ss:$16 sm:$0x30] %vm97, %v96
  %s104 = scalar_lea.vmem %s1, 4
  %105 = vst.msk [vmem:[%s104] ss:$16 sm:$0xc0] %vm97, %v96
  %s106 = scalar_lea.vmem %s0, 8
  %v107 = vld [vmem:[%s106] sm:$0xff]
  %108 = vrot.lane.b32.xlu0 %v107, 124
  %v109 = vpop.permute.xlu0 %108
  %vm110 = vcmask 7168
  %s111 = scalar_lea.vmem %s1, 132
  %112 = vst.msk [vmem:[%s111] ss:$16 sm:$0x3] %vm110, %v109
  %s113 = scalar_lea.vmem %s1, 132
  %114 = vst.msk [vmem:[%s113] ss:$16 sm:$0xc] %vm110, %v109
  %s115 = scalar_lea.vmem %s1, 132
  %116 = vst.msk [vmem:[%s115] ss:$16 sm:$0x30] %vm110, %v109
  %s117 = scalar_lea.vmem %s1, 132
  %118 = vst.msk [vmem:[%s117] ss:$16 sm:$0xc0] %vm110, %v109
  %v119 = vld [vmem:[%s0] sm:$0xff]
  %120 = vrot.lane.b32.xlu0 %v119, 123
  %v121 = vpop.permute.xlu0 %120
  %vm122 = vcmask 7168
  %s123 = scalar_lea.vmem %s1, 5
  %124 = vst.msk [vmem:[%s123] ss:$16 sm:$0x3] %vm122, %v121
  %s125 = scalar_lea.vmem %s1, 5
  %126 = vst.msk [vmem:[%s125] ss:$16 sm:$0xc] %vm122, %v121
  %s127 = scalar_lea.vmem %s1, 5
  %128 = vst.msk [vmem:[%s127] ss:$16 sm:$0x30] %vm122, %v121
  %s129 = scalar_lea.vmem %s1, 5
  %130 = vst.msk [vmem:[%s129] ss:$16 sm:$0xc0] %vm122, %v121
  %s131 = scalar_lea.vmem %s0, 8
  %v132 = vld [vmem:[%s131] sm:$0xff]
  %133 = vrot.lane.b32.xlu0 %v132, 123
  %v134 = vpop.permute.xlu0 %133
  %vm135 = vcmask 7168
  %s136 = scalar_lea.vmem %s1, 133
  %137 = vst.msk [vmem:[%s136] ss:$16 sm:$0x3] %vm135, %v134
  %s138 = scalar_lea.vmem %s1, 133
  %139 = vst.msk [vmem:[%s138] ss:$16 sm:$0xc] %vm135, %v134
  %s140 = scalar_lea.vmem %s1, 133
  %141 = vst.msk [vmem:[%s140] ss:$16 sm:$0x30] %vm135, %v134
  %s142 = scalar_lea.vmem %s1, 133
  %143 = vst.msk [vmem:[%s142] ss:$16 sm:$0xc0] %vm135, %v134
  %v144 = vld [vmem:[%s0] sm:$0xff]
  %145 = vrot.lane.b32.xlu0 %v144, 122
  %v146 = vpop.permute.xlu0 %145
  %vm147 = vcmask 7168
  %s148 = scalar_lea.vmem %s1, 6
  %149 = vst.msk [vmem:[%s148] ss:$16 sm:$0x3] %vm147, %v146
  %s150 = scalar_lea.vmem %s1, 6
  %151 = vst.msk [vmem:[%s150] ss:$16 sm:$0xc] %vm147, %v146
  %s152 = scalar_lea.vmem %s1, 6
  %153 = vst.msk [vmem:[%s152] ss:$16 sm:$0x30] %vm147, %v146
  %s154 = scalar_lea.vmem %s1, 6
  %155 = vst.msk [vmem:[%s154] ss:$16 sm:$0xc0] %vm147, %v146
  %s156 = scalar_lea.vmem %s0, 8
  %v157 = vld [vmem:[%s156] sm:$0xff]
  %158 = vrot.lane.b32.xlu0 %v157, 122
  %v159 = vpop.permute.xlu0 %158
  %vm160 = vcmask 7168
  %s161 = scalar_lea.vmem %s1, 134
  %162 = vst.msk [vmem:[%s161] ss:$16 sm:$0x3] %vm160, %v159
  %s163 = scalar_lea.vmem %s1, 134
  %164 = vst.msk [vmem:[%s163] ss:$16 sm:$0xc] %vm160, %v159
  %s165 = scalar_lea.vmem %s1, 134
  %166 = vst.msk [vmem:[%s165] ss:$16 sm:$0x30] %vm160, %v159
  %s167 = scalar_lea.vmem %s1, 134
  %168 = vst.msk [vmem:[%s167] ss:$16 sm:$0xc0] %vm160, %v159
  %v169 = vld [vmem:[%s0] sm:$0xff]
  %170 = vrot.lane.b32.xlu0 %v169, 121
  %v171 = vpop.permute.xlu0 %170
  %vm172 = vcmask 7168
  %s173 = scalar_lea.vmem %s1, 7
  %174 = vst.msk [vmem:[%s173] ss:$16 sm:$0x3] %vm172, %v171
  %s175 = scalar_lea.vmem %s1, 7
  %176 = vst.msk [vmem:[%s175] ss:$16 sm:$0xc] %vm172, %v171
  %s177 = scalar_lea.vmem %s1, 7
  %178 = vst.msk [vmem:[%s177] ss:$16 sm:$0x30] %vm172, %v171
  %s179 = scalar_lea.vmem %s1, 7
  %180 = vst.msk [vmem:[%s179] ss:$16 sm:$0xc0] %vm172, %v171
  %s181 = scalar_lea.vmem %s0, 8
  %v182 = vld [vmem:[%s181] sm:$0xff]
  %183 = vrot.lane.b32.xlu0 %v182, 121
  %v184 = vpop.permute.xlu0 %183
  %vm185 = vcmask 7168
  %s186 = scalar_lea.vmem %s1, 135
  %187 = vst.msk [vmem:[%s186] ss:$16 sm:$0x3] %vm185, %v184
  %s188 = scalar_lea.vmem %s1, 135
  %189 = vst.msk [vmem:[%s188] ss:$16 sm:$0xc] %vm185, %v184
  %s190 = scalar_lea.vmem %s1, 135
  %191 = vst.msk [vmem:[%s190] ss:$16 sm:$0x30] %vm185, %v184
  %s192 = scalar_lea.vmem %s1, 135
  %193 = vst.msk [vmem:[%s192] ss:$16 sm:$0xc0] %vm185, %v184
  %v194 = vld [vmem:[%s0] sm:$0xff]
  %195 = vrot.lane.b32.xlu0 %v194, 120
  %v196 = vpop.permute.xlu0 %195
  %vm197 = vcmask 7168
  %s198 = scalar_lea.vmem %s1, 8
  %199 = vst.msk [vmem:[%s198] ss:$16 sm:$0x3] %vm197, %v196
  %s200 = scalar_lea.vmem %s1, 8
  %201 = vst.msk [vmem:[%s200] ss:$16 sm:$0xc] %vm197, %v196
  %s202 = scalar_lea.vmem %s1, 8
  %203 = vst.msk [vmem:[%s202] ss:$16 sm:$0x30] %vm197, %v196
  %s204 = scalar_lea.vmem %s1, 8
  %205 = vst.msk [vmem:[%s204] ss:$16 sm:$0xc0] %vm197, %v196
  %s206 = scalar_lea.vmem %s0, 8
  %v207 = vld [vmem:[%s206] sm:$0xff]
  %208 = vrot.lane.b32.xlu0 %v207, 120
  %v209 = vpop.permute.xlu0 %208
  %vm210 = vcmask 7168
  %s211 = scalar_lea.vmem %s1, 136
  %212 = vst.msk [vmem:[%s211] ss:$16 sm:$0x3] %vm210, %v209
  %s213 = scalar_lea.vmem %s1, 136
  %214 = vst.msk [vmem:[%s213] ss:$16 sm:$0xc] %vm210, %v209
  %s215 = scalar_lea.vmem %s1, 136
  %216 = vst.msk [vmem:[%s215] ss:$16 sm:$0x30] %vm210, %v209
  %s217 = scalar_lea.vmem %s1, 136
  %218 = vst.msk [vmem:[%s217] ss:$16 sm:$0xc0] %vm210, %v209
  %v219 = vld [vmem:[%s0] sm:$0xff]
  %220 = vrot.lane.b32.xlu0 %v219, 119
  %v221 = vpop.permute.xlu0 %220
  %vm222 = vcmask 7168
  %s223 = scalar_lea.vmem %s1, 9
  %224 = vst.msk [vmem:[%s223] ss:$16 sm:$0x3] %vm222, %v221
  %s225 = scalar_lea.vmem %s1, 9
  %226 = vst.msk [vmem:[%s225] ss:$16 sm:$0xc] %vm222, %v221
  %s227 = scalar_lea.vmem %s1, 9
  %228 = vst.msk [vmem:[%s227] ss:$16 sm:$0x30] %vm222, %v221
  %s229 = scalar_lea.vmem %s1, 9
  %230 = vst.msk [vmem:[%s229] ss:$16 sm:$0xc0] %vm222, %v221
  %s231 = scalar_lea.vmem %s0, 8
  %v232 = vld [vmem:[%s231] sm:$0xff]
  %233 = vrot.lane.b32.xlu0 %v232, 119
  %v234 = vpop.permute.xlu0 %233
  %vm235 = vcmask 7168
  %s236 = scalar_lea.vmem %s1, 137
  %237 = vst.msk [vmem:[%s236] ss:$16 sm:$0x3] %vm235, %v234
  %s238 = scalar_lea.vmem %s1, 137
  %239 = vst.msk [vmem:[%s238] ss:$16 sm:$0xc] %vm235, %v234
  %s240 = scalar_lea.vmem %s1, 137
  %241 = vst.msk [vmem:[%s240] ss:$16 sm:$0x30] %vm235, %v234
  %s242 = scalar_lea.vmem %s1, 137
  %243 = vst.msk [vmem:[%s242] ss:$16 sm:$0xc0] %vm235, %v234
  %v244 = vld [vmem:[%s0] sm:$0xff]
  %245 = vrot.lane.b32.xlu0 %v244, 118
  %v246 = vpop.permute.xlu0 %245
  %vm247 = vcmask 7168
  %s248 = scalar_lea.vmem %s1, 10
  %249 = vst.msk [vmem:[%s248] ss:$16 sm:$0x3] %vm247, %v246
  %s250 = scalar_lea.vmem %s1, 10
  %251 = vst.msk [vmem:[%s250] ss:$16 sm:$0xc] %vm247, %v246
  %s252 = scalar_lea.vmem %s1, 10
  %253 = vst.msk [vmem:[%s252] ss:$16 sm:$0x30] %vm247, %v246
  %s254 = scalar_lea.vmem %s1, 10
  %255 = vst.msk [vmem:[%s254] ss:$16 sm:$0xc0] %vm247, %v246
  %s256 = scalar_lea.vmem %s0, 8
  %v257 = vld [vmem:[%s256] sm:$0xff]
  %258 = vrot.lane.b32.xlu0 %v257, 118
  %v259 = vpop.permute.xlu0 %258
  %vm260 = vcmask 7168
  %s261 = scalar_lea.vmem %s1, 138
  %262 = vst.msk [vmem:[%s261] ss:$16 sm:$0x3] %vm260, %v259
  %s263 = scalar_lea.vmem %s1, 138
  %264 = vst.msk [vmem:[%s263] ss:$16 sm:$0xc] %vm260, %v259
  %s265 = scalar_lea.vmem %s1, 138
  %266 = vst.msk [vmem:[%s265] ss:$16 sm:$0x30] %vm260, %v259
  %s267 = scalar_lea.vmem %s1, 138
  %268 = vst.msk [vmem:[%s267] ss:$16 sm:$0xc0] %vm260, %v259
  %v269 = vld [vmem:[%s0] sm:$0xff]
  %270 = vrot.lane.b32.xlu0 %v269, 117
  %v271 = vpop.permute.xlu0 %270
  %vm272 = vcmask 7168
  %s273 = scalar_lea.vmem %s1, 11
  %274 = vst.msk [vmem:[%s273] ss:$16 sm:$0x3] %vm272, %v271
  %s275 = scalar_lea.vmem %s1, 11
  %276 = vst.msk [vmem:[%s275] ss:$16 sm:$0xc] %vm272, %v271
  %s277 = scalar_lea.vmem %s1, 11
  %278 = vst.msk [vmem:[%s277] ss:$16 sm:$0x30] %vm272, %v271
  %s279 = scalar_lea.vmem %s1, 11
  %280 = vst.msk [vmem:[%s279] ss:$16 sm:$0xc0] %vm272, %v271
  %s281 = scalar_lea.vmem %s0, 8
  %v282 = vld [vmem:[%s281] sm:$0xff]
  %283 = vrot.lane.b32.xlu0 %v282, 117
  %v284 = vpop.permute.xlu0 %283
  %vm285 = vcmask 7168
  %s286 = scalar_lea.vmem %s1, 139
  %287 = vst.msk [vmem:[%s286] ss:$16 sm:$0x3] %vm285, %v284
  %s288 = scalar_lea.vmem %s1, 139
  %289 = vst.msk [vmem:[%s288] ss:$16 sm:$0xc] %vm285, %v284
  %s290 = scalar_lea.vmem %s1, 139
  %291 = vst.msk [vmem:[%s290] ss:$16 sm:$0x30] %vm285, %v284
  %s292 = scalar_lea.vmem %s1, 139
  %293 = vst.msk [vmem:[%s292] ss:$16 sm:$0xc0] %vm285, %v284
  %v294 = vld [vmem:[%s0] sm:$0xff]
  %295 = vrot.lane.b32.xlu0 %v294, 116
  %v296 = vpop.permute.xlu0 %295
  %vm297 = vcmask 7168
  %s298 = scalar_lea.vmem %s1, 12
  %299 = vst.msk [vmem:[%s298] ss:$16 sm:$0x3] %vm297, %v296
  %s300 = scalar_lea.vmem %s1, 12
  %301 = vst.msk [vmem:[%s300] ss:$16 sm:$0xc] %vm297, %v296
  %s302 = scalar_lea.vmem %s1, 12
  %303 = vst.msk [vmem:[%s302] ss:$16 sm:$0x30] %vm297, %v296
  %s304 = scalar_lea.vmem %s1, 12
  %305 = vst.msk [vmem:[%s304] ss:$16 sm:$0xc0] %vm297, %v296
  %s306 = scalar_lea.vmem %s0, 8
  %v307 = vld [vmem:[%s306] sm:$0xff]
  %308 = vrot.lane.b32.xlu0 %v307, 116
  %v309 = vpop.permute.xlu0 %308
  %vm310 = vcmask 7168
  %s311 = scalar_lea.vmem %s1, 140
  %312 = vst.msk [vmem:[%s311] ss:$16 sm:$0x3] %vm310, %v309
  %s313 = scalar_lea.vmem %s1, 140
  %314 = vst.msk [vmem:[%s313] ss:$16 sm:$0xc] %vm310, %v309
  %s315 = scalar_lea.vmem %s1, 140
  %316 = vst.msk [vmem:[%s315] ss:$16 sm:$0x30] %vm310, %v309
  %s317 = scalar_lea.vmem %s1, 140
  %318 = vst.msk [vmem:[%s317] ss:$16 sm:$0xc0] %vm310, %v309
  %v319 = vld [vmem:[%s0] sm:$0xff]
  %320 = vrot.lane.b32.xlu0 %v319, 115
  %v321 = vpop.permute.xlu0 %320
  %vm322 = vcmask 7168
  %s323 = scalar_lea.vmem %s1, 13
  %324 = vst.msk [vmem:[%s323] ss:$16 sm:$0x3] %vm322, %v321
  %s325 = scalar_lea.vmem %s1, 13
  %326 = vst.msk [vmem:[%s325] ss:$16 sm:$0xc] %vm322, %v321
  %s327 = scalar_lea.vmem %s1, 13
  %328 = vst.msk [vmem:[%s327] ss:$16 sm:$0x30] %vm322, %v321
  %s329 = scalar_lea.vmem %s1, 13
  %330 = vst.msk [vmem:[%s329] ss:$16 sm:$0xc0] %vm322, %v321
  %s331 = scalar_lea.vmem %s0, 8
  %v332 = vld [vmem:[%s331] sm:$0xff]
  %333 = vrot.lane.b32.xlu0 %v332, 115
  %v334 = vpop.permute.xlu0 %333
  %vm335 = vcmask 7168
  %s336 = scalar_lea.vmem %s1, 141
  %337 = vst.msk [vmem:[%s336] ss:$16 sm:$0x3] %vm335, %v334
  %s338 = scalar_lea.vmem %s1, 141
  %339 = vst.msk [vmem:[%s338] ss:$16 sm:$0xc] %vm335, %v334
  %s340 = scalar_lea.vmem %s1, 141
  %341 = vst.msk [vmem:[%s340] ss:$16 sm:$0x30] %vm335, %v334
  %s342 = scalar_lea.vmem %s1, 141
  %343 = vst.msk [vmem:[%s342] ss:$16 sm:$0xc0] %vm335, %v334
  %v344 = vld [vmem:[%s0] sm:$0xff]
  %345 = vrot.lane.b32.xlu0 %v344, 114
  %v346 = vpop.permute.xlu0 %345
  %vm347 = vcmask 7168
  %s348 = scalar_lea.vmem %s1, 14
  %349 = vst.msk [vmem:[%s348] ss:$16 sm:$0x3] %vm347, %v346
  %s350 = scalar_lea.vmem %s1, 14
  %351 = vst.msk [vmem:[%s350] ss:$16 sm:$0xc] %vm347, %v346
  %s352 = scalar_lea.vmem %s1, 14
  %353 = vst.msk [vmem:[%s352] ss:$16 sm:$0x30] %vm347, %v346
  %s354 = scalar_lea.vmem %s1, 14
  %355 = vst.msk [vmem:[%s354] ss:$16 sm:$0xc0] %vm347, %v346
  %s356 = scalar_lea.vmem %s0, 8
  %v357 = vld [vmem:[%s356] sm:$0xff]
  %358 = vrot.lane.b32.xlu0 %v357, 114
  %v359 = vpop.permute.xlu0 %358
  %vm360 = vcmask 7168
  %s361 = scalar_lea.vmem %s1, 142
  %362 = vst.msk [vmem:[%s361] ss:$16 sm:$0x3] %vm360, %v359
  %s363 = scalar_lea.vmem %s1, 142
  %364 = vst.msk [vmem:[%s363] ss:$16 sm:$0xc] %vm360, %v359
  %s365 = scalar_lea.vmem %s1, 142
  %366 = vst.msk [vmem:[%s365] ss:$16 sm:$0x30] %vm360, %v359
  %s367 = scalar_lea.vmem %s1, 142
  %368 = vst.msk [vmem:[%s367] ss:$16 sm:$0xc0] %vm360, %v359
  %v369 = vld [vmem:[%s0] sm:$0xff]
  %370 = vrot.lane.b32.xlu0 %v369, 113
  %v371 = vpop.permute.xlu0 %370
  %vm372 = vcmask 7168
  %s373 = scalar_lea.vmem %s1, 15
  %374 = vst.msk [vmem:[%s373] ss:$16 sm:$0x3] %vm372, %v371
  %s375 = scalar_lea.vmem %s1, 15
  %376 = vst.msk [vmem:[%s375] ss:$16 sm:$0xc] %vm372, %v371
  %s377 = scalar_lea.vmem %s1, 15
  %378 = vst.msk [vmem:[%s377] ss:$16 sm:$0x30] %vm372, %v371
  %s379 = scalar_lea.vmem %s1, 15
  %380 = vst.msk [vmem:[%s379] ss:$16 sm:$0xc0] %vm372, %v371
  %s381 = scalar_lea.vmem %s0, 8
  %v382 = vld [vmem:[%s381] sm:$0xff]
  %383 = vrot.lane.b32.xlu0 %v382, 113
  %v384 = vpop.permute.xlu0 %383
  %vm385 = vcmask 7168
  %s386 = scalar_lea.vmem %s1, 143
  %387 = vst.msk [vmem:[%s386] ss:$16 sm:$0x3] %vm385, %v384
  %s388 = scalar_lea.vmem %s1, 143
  %389 = vst.msk [vmem:[%s388] ss:$16 sm:$0xc] %vm385, %v384
  %s390 = scalar_lea.vmem %s1, 143
  %391 = vst.msk [vmem:[%s390] ss:$16 sm:$0x30] %vm385, %v384
  %s392 = scalar_lea.vmem %s1, 143
  %393 = vst.msk [vmem:[%s392] ss:$16 sm:$0xc0] %vm385, %v384

// kernel: _lambda_.6
$region0: #{_lambda_.6}
  #allocation0 [shape = 'u32[]', space=smem, size = 0x4, offset = 0x4, fixed_abs, tag = 'smem constant byte address 0x4 - core index']
  #allocation1 [shape = 'u32[144,128]{1,0:T(1,128)}', space=vmem, size = 0x12000, scoped, tag = 'internal scratch']
  %s0 = inlined_call_operand.vmem [shape: bf16[128,512], index: 0, kind: input, shape index: {}]
  %s1 = inlined_call_operand.vmem [shape: bf16[16,128], index: 1, kind: input, shape index: {}]
  %s2 = inlined_call_operand.vmem [shape: f32[128,1], index: 2, kind: input, shape index: {}]
  %s3 = inlined_call_operand.vmem [shape: f32[128,1], index: 3, kind: input, shape index: {}]
  %s4 = inlined_call_operand.vmem [shape: f32[16,1], index: 4, kind: input, shape index: {}]
  %s5 = inlined_call_operand.vmem [shape: bf16[16,512], index: 5, kind: output, shape index: {0}]
  %s6 = inlined_call_operand.vmem [shape: f32[2,16,1], index: 6, kind: output, shape index: {1}]
  %s7 = inlined_call_operand.vmem [shape: f32[2,16,1], index: 7, kind: output, shape index: {2}]
  %8 = xla_tuple %s5, %s6, %s7
  %s9 = sld [smem:[#allocation0]]
  $region141: #{_lambda_.6} parent=0
    _
  %s11 = ssub.s32 1, %s9
  %s12 = scalar_select 0, %s11, %s9
  $region1: #{_lambda_.6} parent=0
    #allocation2 [shape = 'u8[131072]{0}', space=vmem, size = 0x20000, scoped, tag = 'input window, operand 0']
    #allocation3 [shape = 'u8[16384]{0}', space=vmem, size = 0x4000, scoped, tag = 'output window, operand 0']
    loop: start=0, step=1, limit=4
    $region2: #{_lambda_.6} parent=1 // loop_pre_header
      _
    $region3: #{_lambda_.6} parent=1 // loop_header
      %s14 = sphi 0, %s18
      %p15 = scmp.ge.s32.totalorder %s14, 4
      %s24 = sphi 0, %s26
      %s27 = sphi 0, %s24
      %s28 = sphi 0, %s27
      %s44 = sphi 0, %s28
      %s48 = sphi 0, %s48
      %s50 = sphi 0, %s48
      %s51 = sphi 0, %s50
      %s65 = sphi 0, %s51
      %s69 = sphi 0, %s69
      %s71 = sphi 0, %s69
      %s72 = sphi 0, %s71
      %s86 = sphi 0, %s72
      %s90 = sphi 0, %s90
      %s92 = sphi 0, %s90
      %s93 = sphi 0, %s92
      %s107 = sphi 0, %s93
      %s111 = sphi 0, %s111
      %s113 = sphi 0, %s111
      %s114 = sphi 0, %s113
      %s128 = sphi 0, %s114
      %s134 = sphi 0, %s136
      %s137 = sphi 0, %s134
      %s138 = sphi 0, %s137
      %s154 = sphi 0, %s138
      %s160 = sphi 0, %s162
      %s163 = sphi 0, %s160
      %s164 = sphi 0, %s163
      %s180 = sphi 0, %s164
      %s186 = sphi 0, %s188
      %s189 = sphi 0, %s186
      %s190 = sphi 0, %s189
      %s206 = sphi 0, %s190
    $region4: #{_lambda_.6} parent=1 // loop_header_branch
      %17 = sbr.rel (%p15) target = $region8
    $region5: #{_lambda_.6} parent=1 // loop_body
      %s19 = ssub.s32 %s14, 1
      %s20 = ssub.s32 %s14, 2
      %s21 = sadd.s32 %s14, 1
      %s22 = ssub.s32 %s14, %s21
      %p23 = scmp.eq.s32.totalorder %s22, 0
      %s25 = sadd.s32 %s24, 1
      %s26 = scalar_select %p23, %s24, %s25
      %p29 = pneg %p23
      %p30 = scmp.eq.s32.totalorder %s14, 1
      %p31 = por %p29, %p30
      %p32 = scmp.ne.s32.totalorder %s24, %s27
      %p33 = scmp.eq.s32.totalorder %s14, 0
      %p34 = por %p32, %p33
      %p35 = scmp.ne.s32.totalorder %s24, %s27
      %p36 = scmp.eq.s32.totalorder %s19, 1
      %p37 = por %p35, %p36
      %p38 = scmp.ne.s32.totalorder %s27, %s28
      %p39 = scmp.eq.s32.totalorder %s19, 0
      %p40 = por %p38, %p39
      %p41 = scmp.ne.s32.totalorder %s27, %s28
      %p42 = scmp.eq.s32.totalorder %s20, 1
      %p43 = por %p41, %p42
      %p45 = scmp.ne.s32.totalorder %s28, %s44
      %p46 = scmp.eq.s32.totalorder %s20, 0
      %p47 = por %p45, %p46
      %s49 = sadd.s32 %s48, 1
      %p52 = scmp.eq.s32.totalorder %s14, 1
      %p53 = scmp.ne.s32.totalorder %s48, %s50
      %p54 = scmp.eq.s32.totalorder %s14, 0
      %p55 = por %p53, %p54
      %p56 = scmp.ne.s32.totalorder %s48, %s50
      %p57 = scmp.eq.s32.totalorder %s19, 1
      %p58 = por %p56, %p57
      %p59 = scmp.ne.s32.totalorder %s50, %s51
      %p60 = scmp.eq.s32.totalorder %s19, 0
      %p61 = por %p59, %p60
      %p62 = scmp.ne.s32.totalorder %s50, %s51
      %p63 = scmp.eq.s32.totalorder %s20, 1
      %p64 = por %p62, %p63
      %p66 = scmp.ne.s32.totalorder %s51, %s65
      %p67 = scmp.eq.s32.totalorder %s20, 0
      %p68 = por %p66, %p67
      %s70 = sadd.s32 %s69, 1
      %p73 = scmp.eq.s32.totalorder %s14, 1
      %p74 = scmp.ne.s32.totalorder %s69, %s71
      %p75 = scmp.eq.s32.totalorder %s14, 0
      %p76 = por %p74, %p75
      %p77 = scmp.ne.s32.totalorder %s69, %s71
      %p78 = scmp.eq.s32.totalorder %s19, 1
      %p79 = por %p77, %p78
      %p80 = scmp.ne.s32.totalorder %s71, %s72
      %p81 = scmp.eq.s32.totalorder %s19, 0
      %p82 = por %p80, %p81
      %p83 = scmp.ne.s32.totalorder %s71, %s72
      %p84 = scmp.eq.s32.totalorder %s20, 1
      %p85 = por %p83, %p84
      %p87 = scmp.ne.s32.totalorder %s72, %s86
      %p88 = scmp.eq.s32.totalorder %s20, 0
      %p89 = por %p87, %p88
      %s91 = sadd.s32 %s90, 1
      %p94 = scmp.eq.s32.totalorder %s14, 1
      %p95 = scmp.ne.s32.totalorder %s90, %s92
      %p96 = scmp.eq.s32.totalorder %s14, 0
      %p97 = por %p95, %p96
      %p98 = scmp.ne.s32.totalorder %s90, %s92
      %p99 = scmp.eq.s32.totalorder %s19, 1
      %p100 = por %p98, %p99
      %p101 = scmp.ne.s32.totalorder %s92, %s93
      %p102 = scmp.eq.s32.totalorder %s19, 0
      %p103 = por %p101, %p102
      %p104 = scmp.ne.s32.totalorder %s92, %s93
      %p105 = scmp.eq.s32.totalorder %s20, 1
      %p106 = por %p104, %p105
      %p108 = scmp.ne.s32.totalorder %s93, %s107
      %p109 = scmp.eq.s32.totalorder %s20, 0
      %p110 = por %p108, %p109
      %s112 = sadd.s32 %s111, 1
      %p115 = scmp.eq.s32.totalorder %s14, 1
      %p116 = scmp.ne.s32.totalorder %s111, %s113
      %p117 = scmp.eq.s32.totalorder %s14, 0
      %p118 = por %p116, %p117
      %p119 = scmp.ne.s32.totalorder %s111, %s113
      %p120 = scmp.eq.s32.totalorder %s19, 1
      %p121 = por %p119, %p120
      %p122 = scmp.ne.s32.totalorder %s113, %s114
      %p123 = scmp.eq.s32.totalorder %s19, 0
      %p124 = por %p122, %p123
      %p125 = scmp.ne.s32.totalorder %s113, %s114
      %p126 = scmp.eq.s32.totalorder %s20, 1
      %p127 = por %p125, %p126
      %p129 = scmp.ne.s32.totalorder %s114, %s128
      %p130 = scmp.eq.s32.totalorder %s20, 0
      %p131 = por %p129, %p130
      %s132 = ssub.s32 %s14, %s21
      %p133 = scmp.eq.s32.totalorder %s132, 0
      %s135 = sadd.s32 %s134, 1
      %s136 = scalar_select %p133, %s134, %s135
      %p139 = pneg %p133
      %p140 = scmp.eq.s32.totalorder %s14, 1
      %p141 = por %p139, %p140
      %p142 = scmp.ne.s32.totalorder %s134, %s137
      %p143 = scmp.eq.s32.totalorder %s14, 0
      %p144 = por %p142, %p143
      %p145 = scmp.ne.s32.totalorder %s134, %s137
      %p146 = scmp.eq.s32.totalorder %s19, 1
      %p147 = por %p145, %p146
      %p148 = scmp.ne.s32.totalorder %s137, %s138
      %p149 = scmp.eq.s32.totalorder %s19, 0
      %p150 = por %p148, %p149
      %p151 = scmp.ne.s32.totalorder %s137, %s138
      %p152 = scmp.eq.s32.totalorder %s20, 1
      %p153 = por %p151, %p152
      %p155 = scmp.ne.s32.totalorder %s138, %s154
      %p156 = scmp.eq.s32.totalorder %s20, 0
      %p157 = por %p155, %p156
      %s158 = ssub.s32 %s14, %s21
      %p159 = scmp.eq.s32.totalorder %s158, 0
      %s161 = sadd.s32 %s160, 1
      %s162 = scalar_select %p159, %s160, %s161
      %p165 = pneg %p159
      %p166 = scmp.eq.s32.totalorder %s14, 1
      %p167 = por %p165, %p166
      %p168 = scmp.ne.s32.totalorder %s160, %s163
      %p169 = scmp.eq.s32.totalorder %s14, 0
      %p170 = por %p168, %p169
      %p171 = scmp.ne.s32.totalorder %s160, %s163
      %p172 = scmp.eq.s32.totalorder %s19, 1
      %p173 = por %p171, %p172
      %p174 = scmp.ne.s32.totalorder %s163, %s164
      %p175 = scmp.eq.s32.totalorder %s19, 0
      %p176 = por %p174, %p175
      %p177 = scmp.ne.s32.totalorder %s163, %s164
      %p178 = scmp.eq.s32.totalorder %s20, 1
      %p179 = por %p177, %p178
      %p181 = scmp.ne.s32.totalorder %s164, %s180
      %p182 = scmp.eq.s32.totalorder %s20, 0
      %p183 = por %p181, %p182
      %s184 = ssub.s32 %s14, %s21
      %p185 = scmp.eq.s32.totalorder %s184, 0
      %s187 = sadd.s32 %s186, 1
      %s188 = scalar_select %p185, %s186, %s187
      %p191 = pneg %p185
      %p192 = scmp.eq.s32.totalorder %s14, 1
      %p193 = por %p191, %p192
      %p194 = scmp.ne.s32.totalorder %s186, %s189
      %p195 = scmp.eq.s32.totalorder %s14, 0
      %p196 = por %p194, %p195
      %p197 = scmp.ne.s32.totalorder %s186, %s189
      %p198 = scmp.eq.s32.totalorder %s19, 1
      %p199 = por %p197, %p198
      %p200 = scmp.ne.s32.totalorder %s189, %s190
      %p201 = scmp.eq.s32.totalorder %s19, 0
      %p202 = por %p200, %p201
      %p203 = scmp.ne.s32.totalorder %s189, %s190
      %p204 = scmp.eq.s32.totalorder %s20, 1
      %p205 = por %p203, %p204
      %p207 = scmp.ne.s32.totalorder %s190, %s206
      %p208 = scmp.eq.s32.totalorder %s20, 0
      %p209 = por %p207, %p208
      %p210 = scmp.le.s32.totalorder 1, %s14
      %p211 = scmp.lt.s32.totalorder %s14, 3
      %p212 = pnand %p210, %p211
      %p213 = pneg %p212
      // Predicated region
      $region9: #{_lambda_.6} parent=5 // pred_check
        _
      $region10: #{_lambda_.6} parent=5 // pred_check_branch
        %215 = sbr.rel (%p212) target = $region12
      $region11: #{_lambda_.6} parent=5 // pred_region
        %s216 = ssub.s32 %s14, 1
        // Predicated region
        $region13: #{_lambda_.6} parent=11 // pred_check
          %p217 = pneg %p61
        $region14: #{_lambda_.6} parent=11 // pred_check_branch
          %219 = sbr.rel (%p217) target = $region16
        $region15: #{_lambda_.6} parent=11 // pred_region
          _
        $region16: #{_lambda_.6} parent=11 // pred_fallthru
          _
        // Predicated region
        $region17: #{_lambda_.6} parent=11 // pred_check
          %p220 = pneg %p82
        $region18: #{_lambda_.6} parent=11 // pred_check_branch
          %222 = sbr.rel (%p220) target = $region20
        $region19: #{_lambda_.6} parent=11 // pred_region
          _
        $region20: #{_lambda_.6} parent=11 // pred_fallthru
          _
        // Predicated region
        $region21: #{_lambda_.6} parent=11 // pred_check
          %p223 = pneg %p103
        $region22: #{_lambda_.6} parent=11 // pred_check_branch
          %225 = sbr.rel (%p223) target = $region24
        $region23: #{_lambda_.6} parent=11 // pred_region
          _
        $region24: #{_lambda_.6} parent=11 // pred_fallthru
          _
        // Predicated region
        $region25: #{_lambda_.6} parent=11 // pred_check
          %p226 = pneg %p124
        $region26: #{_lambda_.6} parent=11 // pred_check_branch
          %228 = sbr.rel (%p226) target = $region28
        $region27: #{_lambda_.6} parent=11 // pred_region
          _
        $region28: #{_lambda_.6} parent=11 // pred_fallthru
          _
      $region12: #{_lambda_.6} parent=5 // pred_fallthru
        _
      %p229 = scmp.lt.s32.totalorder %s14, 2
      // Predicated region
      $region29: #{_lambda_.6} parent=5 // pred_check
        %p230 = pneg %p229
      $region30: #{_lambda_.6} parent=5 // pred_check_branch
        %232 = sbr.rel (%p230) target = $region32
      $region31: #{_lambda_.6} parent=5 // pred_region
        // Predicated region
        $region33: #{_lambda_.6} parent=31 // pred_check
          %p233 = pneg %p34
        $region34: #{_lambda_.6} parent=31 // pred_check_branch
          %235 = sbr.rel (%p233) target = $region36
        $region35: #{_lambda_.6} parent=31 // pred_region
          %s236 = sand.u32 %s24, 1
          %s237 = sand.u32 %s24, 1
          %s238 = smul.addr %s237, 128
          %s239 = scalar_lea.vmem [#allocation2], %s238
          %s240 = smul.u32 2, %s14
          %s241 = smul.addr %s240, 4
          %s242 = scalar_lea.vmem %s0, %s241
          // Predicated region
          $region37: #{_lambda_.6} parent=35 // pred_check
            _
          $region38: #{_lambda_.6} parent=35 // pred_check_branch
            %244 = sbr.rel (0) target = $region40
          $region39: #{_lambda_.6} parent=35 // pred_region
            // Predicated region
            $region41: #{_lambda_.6} parent=39 // pred_check
              _
            $region42: #{_lambda_.6} parent=39 // pred_check_branch
              %246 = sbr.rel (0) target = $region44
            $region43: #{_lambda_.6} parent=39 // pred_region
              // Predicated region
              $region56: #{_lambda_.6} parent=43 // pred_check
                _
              $region57: #{_lambda_.6} parent=43 // pred_check_branch
                %291 = sbr.rel (0) target = $region59
              $region58: #{_lambda_.6} parent=43 // pred_region
                loop: start=0, step=1, limit=1
                $region60: #{_lambda_.6} parent=58 // loop_pre_header
                  _
                $region61: #{_lambda_.6} parent=58 // loop_header
                  %s293 = sphi 0, %s297
                  %p294 = scmp.ge.s32.totalorder %s293, 1
                  %s298 = sphi %s242, %s242
                  %s299 = sphi %s239, %s239
                $region62: #{_lambda_.6} parent=58 // loop_header_branch
                  %296 = sbr.rel (%p294) target = $region66
                $region63: #{_lambda_.6} parent=58 // loop_body
                  %v300 = vld [vmem:[%s298] sm:$0xff]
                  %301 = vst [vmem:[%s299] sm:$0xff] %v300
                  %v302 = vld [vmem:[%s298 + $0x10] sm:$0xff]
                  %303 = vst [vmem:[%s299 + $0x8] sm:$0xff] %v302
                  %v304 = vld [vmem:[%s298 + $0x20] sm:$0xff]
                  %305 = vst [vmem:[%s299 + $0x10] sm:$0xff] %v304
                  %v306 = vld [vmem:[%s298 + $0x30] sm:$0xff]
                  %307 = vst [vmem:[%s299 + $0x18] sm:$0xff] %v306
                  %v308 = vld [vmem:[%s298 + $0x40] sm:$0xff]
                  %309 = vst [vmem:[%s299 + $0x20] sm:$0xff] %v308
                  %v310 = vld [vmem:[%s298 + $0x50] sm:$0xff]
                  %311 = vst [vmem:[%s299 + $0x28] sm:$0xff] %v310
                  %v312 = vld [vmem:[%s298 + $0x60] sm:$0xff]
                  %313 = vst [vmem:[%s299 + $0x30] sm:$0xff] %v312
                  %v314 = vld [vmem:[%s298 + $0x70] sm:$0xff]
                  %315 = vst [vmem:[%s299 + $0x38] sm:$0xff] %v314
                  %v316 = vld [vmem:[%s298 + $0x80] sm:$0xff]
                  %317 = vst [vmem:[%s299 + $0x40] sm:$0xff] %v316
                  %v318 = vld [vmem:[%s298 + $0x90] sm:$0xff]
                  %319 = vst [vmem:[%s299 + $0x48] sm:$0xff] %v318
                  %v320 = vld [vmem:[%s298 + $0xa0] sm:$0xff]
                  %321 = vst [vmem:[%s299 + $0x50] sm:$0xff] %v320
                  %v322 = vld [vmem:[%s298 + $0xb0] sm:$0xff]
                  %323 = vst [vmem:[%s299 + $0x58] sm:$0xff] %v322
                  %v324 = vld [vmem:[%s298 + $0xc0] sm:$0xff]
                  %325 = vst [vmem:[%s299 + $0x60] sm:$0xff] %v324
                  %v326 = vld [vmem:[%s298 + $0xd0] sm:$0xff]
                  %327 = vst [vmem:[%s299 + $0x68] sm:$0xff] %v326
                  %v328 = vld [vmem:[%s298 + $0xe0] sm:$0xff]
                  %329 = vst [vmem:[%s299 + $0x70] sm:$0xff] %v328
                  %v330 = vld [vmem:[%s298 + $0xf0] sm:$0xff]
                  %331 = vst [vmem:[%s299 + $0x78] sm:$0xff] %v330
                $region64: #{_lambda_.6} parent=58 // loop_footer
                  %s297 = sadd.s32 1, %s293
                $region65: #{_lambda_.6} parent=58 // loop_footer_branch
                  %292 = sbr.rel target = $region61
                $region66: #{_lambda_.6} parent=58 // loop_exit
                  _
              $region59: #{_lambda_.6} parent=43 // pred_fallthru
                _
              // Predicated region
              $region67: #{_lambda_.6} parent=43 // pred_check
                _
              $region68: #{_lambda_.6} parent=43 // pred_check_branch
                %333 = sbr.rel target = $region70
              $region69: #{_lambda_.6} parent=43 // pred_region
                _
              $region70: #{_lambda_.6} parent=43 // pred_fallthru
                _
            $region44: #{_lambda_.6} parent=39 // pred_fallthru
              _
            // Predicated region
            $region45: #{_lambda_.6} parent=39 // pred_check
              _
            $region46: #{_lambda_.6} parent=39 // pred_check_branch
              %248 = sbr.rel target = $region48
            $region47: #{_lambda_.6} parent=39 // pred_region
              loop: start=0, step=1, limit=1
              $region49: #{_lambda_.6} parent=47 // loop_pre_header
                _
              $region50: #{_lambda_.6} parent=47 // loop_header
                %s251 = sphi 0, %s255
                %p252 = scmp.ge.s32.totalorder %s251, 1
                %s256 = sphi %s242, %s242
                %s257 = sphi %s239, %s239
              $region51: #{_lambda_.6} parent=47 // loop_header_branch
                %254 = sbr.rel (%p252) target = $region55
              $region52: #{_lambda_.6} parent=47 // loop_body
                %v258 = vld [vmem:[%s256] sm:$0xff]
                %259 = vst [vmem:[%s257] sm:$0xff] %v258
                %v260 = vld [vmem:[%s256 + $0x10] sm:$0xff]
                %261 = vst [vmem:[%s257 + $0x8] sm:$0xff] %v260
                %v262 = vld [vmem:[%s256 + $0x20] sm:$0xff]
                %263 = vst [vmem:[%s257 + $0x10] sm:$0xff] %v262
                %v264 = vld [vmem:[%s256 + $0x30] sm:$0xff]
                %265 = vst [vmem:[%s257 + $0x18] sm:$0xff] %v264
                %v266 = vld [vmem:[%s256 + $0x40] sm:$0xff]
                %267 = vst [vmem:[%s257 + $0x20] sm:$0xff] %v266
                %v268 = vld [vmem:[%s256 + $0x50] sm:$0xff]
                %269 = vst [vmem:[%s257 + $0x28] sm:$0xff] %v268
                %v270 = vld [vmem:[%s256 + $0x60] sm:$0xff]
                %271 = vst [vmem:[%s257 + $0x30] sm:$0xff] %v270
                %v272 = vld [vmem:[%s256 + $0x70] sm:$0xff]
                %273 = vst [vmem:[%s257 + $0x38] sm:$0xff] %v272
                %v274 = vld [vmem:[%s256 + $0x80] sm:$0xff]
                %275 = vst [vmem:[%s257 + $0x40] sm:$0xff] %v274
                %v276 = vld [vmem:[%s256 + $0x90] sm:$0xff]
                %277 = vst [vmem:[%s257 + $0x48] sm:$0xff] %v276
                %v278 = vld [vmem:[%s256 + $0xa0] sm:$0xff]
                %279 = vst [vmem:[%s257 + $0x50] sm:$0xff] %v278
                %v280 = vld [vmem:[%s256 + $0xb0] sm:$0xff]
                %281 = vst [vmem:[%s257 + $0x58] sm:$0xff] %v280
                %v282 = vld [vmem:[%s256 + $0xc0] sm:$0xff]
                %283 = vst [vmem:[%s257 + $0x60] sm:$0xff] %v282
                %v284 = vld [vmem:[%s256 + $0xd0] sm:$0xff]
                %285 = vst [vmem:[%s257 + $0x68] sm:$0xff] %v284
                %v286 = vld [vmem:[%s256 + $0xe0] sm:$0xff]
                %287 = vst [vmem:[%s257 + $0x70] sm:$0xff] %v286
                %v288 = vld [vmem:[%s256 + $0xf0] sm:$0xff]
                %289 = vst [vmem:[%s257 + $0x78] sm:$0xff] %v288
              $region53: #{_lambda_.6} parent=47 // loop_footer
                %s255 = sadd.s32 1, %s251
              $region54: #{_lambda_.6} parent=47 // loop_footer_branch
                %250 = sbr.rel target = $region50
              $region55: #{_lambda_.6} parent=47 // loop_exit
                _
            $region48: #{_lambda_.6} parent=39 // pred_fallthru
              _
          $region40: #{_lambda_.6} parent=35 // pred_fallthru
            _
          %334 = vnop
        $region36: #{_lambda_.6} parent=31 // pred_fallthru
          _
      $region32: #{_lambda_.6} parent=5 // pred_fallthru
        _
      %p335 = scmp.le.s32.totalorder 1, %s14
      %p336 = scmp.lt.s32.totalorder %s14, 3
      %p337 = pnand %p335, %p336
      %p338 = pneg %p337
      // Predicated region
      $region71: #{_lambda_.6} parent=5 // pred_check
        _
      $region72: #{_lambda_.6} parent=5 // pred_check_branch
        %340 = sbr.rel (%p337) target = $region74
      $region73: #{_lambda_.6} parent=5 // pred_region
        %s341 = ssub.s32 %s14, 1
        %s342 = sand.u32 %s27, 1
        %s343 = sand.u32 %s27, 1
        %s344 = smul.addr %s343, 128
        %s345 = scalar_lea.vmem [#allocation2], %s344
        // Predicated region
        $region75: #{_lambda_.6} parent=73 // pred_check
          %p346 = pneg %p40
        $region76: #{_lambda_.6} parent=73 // pred_check_branch
          %348 = sbr.rel (%p346) target = $region78
        $region77: #{_lambda_.6} parent=73 // pred_region
          _
        $region78: #{_lambda_.6} parent=73 // pred_fallthru
          _
        %s349 = sand.u32 %s27, 1
        %s350 = sand.u32 %s27, 1
        %s351 = smul.addr %s350, 128
        %s352 = scalar_lea.vmem [#allocation2], %s351
        %p353 = pneg %p40
        %p354 = pneg %p37
        %p355 = pneg %p61
        %p356 = pneg %p58
        %p357 = pneg %p82
        %p358 = pneg %p79
        %p359 = pneg %p103
        %p360 = pneg %p100
        %p361 = pneg %p124
        %p362 = pneg %p121
        %p363 = pneg %p150
        %p364 = pneg %p147
        %s365 = sand.u32 %s137, 1
        %s366 = sand.u32 %s137, 1
        %s367 = smul.addr %s366, 16
        %s368 = scalar_lea.vmem [#allocation3], %s367
        %p369 = pneg %p176
        %p370 = pneg %p173
        %p371 = scmp.lt.s32.totalorder %s19, 1
        %s372 = scalar_select %p371, %s19, 1
        %s373 = smul.addr %s372, 2
        %s374 = smul.addr %s373, 8
        %s375 = scalar_lea.vmem %s6, %s374
        %p376 = pneg %p202
        %p377 = pneg %p199
        %p378 = scmp.lt.s32.totalorder %s19, 1
        %s379 = scalar_select %p378, %s19, 1
        %s380 = smul.addr %s379, 2
        %s381 = smul.addr %s380, 8
        %s382 = scalar_lea.vmem %s7, %s381
        %s383 = smul.u32 2, %s19
        %s384 = smul.u32 2, %s19
        %p385 = scmp.lt.s32.totalorder %s19, 1
        %s386 = scalar_select %p385, %s19, 1
        %s387 = smul.addr %s386, 2
        %s388 = smul.addr %s387, 8
        %s389 = scalar_lea.vmem %s6, %s388
        %p390 = scmp.lt.s32.totalorder %s19, 1
        %s391 = scalar_select %p390, %s19, 1
        %s392 = smul.addr %s391, 2
        %s393 = smul.addr %s392, 8
        %s394 = scalar_lea.vmem %s7, %s393
        %v396 = vld [vmem:[%s345] sm:$0xff]
        %v397 = vld [vmem:[%s345 + $0x8] sm:$0xff]
        %v398 = vld [vmem:[%s345 + $0x10] sm:$0xff]
        %v399 = vld [vmem:[%s345 + $0x18] sm:$0xff]
        %v400 = vld [vmem:[%s345 + $0x20] sm:$0xff]
        %v401 = vld [vmem:[%s345 + $0x28] sm:$0xff]
        %v402 = vld [vmem:[%s345 + $0x30] sm:$0xff]
        %v403 = vld [vmem:[%s345 + $0x38] sm:$0xff]
        %v404 = vld [vmem:[%s345 + $0x40] sm:$0xff]
        %v405 = vld [vmem:[%s345 + $0x48] sm:$0xff]
        %v406 = vld [vmem:[%s345 + $0x50] sm:$0xff]
        %v407 = vld [vmem:[%s345 + $0x58] sm:$0xff]
        %v408 = vld [vmem:[%s345 + $0x60] sm:$0xff]
        %v409 = vld [vmem:[%s345 + $0x68] sm:$0xff]
        %v410 = vld [vmem:[%s345 + $0x70] sm:$0xff]
        %v411 = vld [vmem:[%s345 + $0x78] sm:$0xff]
        %v412 = vld [vmem:[%s1] sm:$0xf]
        %v413 = vld [vmem:[%s1 + $0x4] sm:$0xf]
        %v416 = vunpack.c.l.b16 %v412
        %v417 = vunpack.c.l.b16 %v413
        %v418 = vpack.c.b16 %v417, %v416
        %v436 = vunpack.c.l.b16 %v396
        %v437 = vunpack.c.h.b16 %v396
        %v438 = vunpack.c.l.b16 %v397
        %v439 = vunpack.c.h.b16 %v397
        %v440 = vunpack.c.l.b16 %v398
        %v441 = vunpack.c.h.b16 %v398
        %v442 = vunpack.c.l.b16 %v399
        %v443 = vunpack.c.h.b16 %v399
        %v444 = vunpack.c.l.b16 %v400
        %v445 = vunpack.c.h.b16 %v400
        %v446 = vunpack.c.l.b16 %v401
        %v447 = vunpack.c.h.b16 %v401
        %v448 = vunpack.c.l.b16 %v402
        %v449 = vunpack.c.h.b16 %v402
        %v450 = vunpack.c.l.b16 %v403
        %v451 = vunpack.c.h.b16 %v403
        %v452 = vunpack.c.l.b16 %v404
        %v453 = vunpack.c.h.b16 %v404
        %v454 = vunpack.c.l.b16 %v405
        %v455 = vunpack.c.h.b16 %v405
        %v456 = vunpack.c.l.b16 %v406
        %v457 = vunpack.c.h.b16 %v406
        %v458 = vunpack.c.l.b16 %v407
        %v459 = vunpack.c.h.b16 %v407
        %v460 = vunpack.c.l.b16 %v408
        %v461 = vunpack.c.h.b16 %v408
        %v462 = vunpack.c.l.b16 %v409
        %v463 = vunpack.c.h.b16 %v409
        %v464 = vunpack.c.l.b16 %v410
        %v465 = vunpack.c.h.b16 %v410
        %v466 = vunpack.c.l.b16 %v411
        %v467 = vunpack.c.h.b16 %v411
        %v468 = vpack.c.b16 %v438, %v436
        %v469 = vpack.c.b16 %v439, %v437
        %v470 = vpack.c.b16 %v442, %v440
        %v471 = vpack.c.b16 %v443, %v441
        %v472 = vpack.c.b16 %v446, %v444
        %v473 = vpack.c.b16 %v447, %v445
        %v474 = vpack.c.b16 %v450, %v448
        %v475 = vpack.c.b16 %v451, %v449
        %v476 = vpack.c.b16 %v454, %v452
        %v477 = vpack.c.b16 %v455, %v453
        %v478 = vpack.c.b16 %v458, %v456
        %v479 = vpack.c.b16 %v459, %v457
        %v480 = vpack.c.b16 %v462, %v460
        %v481 = vpack.c.b16 %v463, %v461
        %v482 = vpack.c.b16 %v466, %v464
        %v483 = vpack.c.b16 %v467, %v465
        %500 = vmatprep.subr.bf16.mxu0 %v469
        %501 = vmatpush1.bf16.msra.mxu0 %v468
        %502 = vmatprep.subr.bf16.mxu0 %v471
        %503 = vmatpush1.bf16.msra.mxu0 %v470
        %504 = vmatprep.subr.bf16.mxu0 %v473
        %505 = vmatpush1.bf16.msra.mxu0 %v472
        %506 = vmatprep.subr.bf16.mxu0 %v475
        %507 = vmatpush1.bf16.msra.mxu0 %v474
        %508 = vmatprep.subr.bf16.mxu0 %v477
        %509 = vmatpush1.bf16.msra.mxu0 %v476
        %510 = vmatprep.subr.bf16.mxu0 %v479
        %511 = vmatpush1.bf16.msra.mxu0 %v478
        %512 = vmatprep.subr.bf16.mxu0 %v481
        %513 = vmatpush1.bf16.msra.mxu0 %v480
        %514 = vmatprep.subr.bf16.mxu0 %v483
        %515 = vmatpush1.bf16.msra.mxu0 %v482
        %516 = vmatprep.subr.bf16.mxu0 0
        %517 = vmatpush1.bf16.msra.mxu0 0
        %518 = vmatprep.subr.bf16.mxu0 0
        %519 = vmatpush1.bf16.msra.mxu0 0
        %520 = vmatprep.subr.bf16.mxu0 0
        %521 = vmatpush1.bf16.msra.mxu0 0
        %522 = vmatprep.subr.bf16.mxu0 0
        %523 = vmatpush1.bf16.msra.mxu0 0
        %524 = vmatprep.subr.bf16.mxu0 0
        %525 = vmatpush1.bf16.msra.mxu0 0
        %526 = vmatprep.subr.bf16.mxu0 0
        %527 = vmatpush1.bf16.msra.mxu0 0
        %528 = vmatprep.subr.bf16.mxu0 0
        %529 = vmatpush1.bf16.msra.mxu0 0
        %530 = vmatprep.subr.bf16.mxu0 0
        %531 = vmatpush1.bf16.msra.mxu0 0
        %532 = vmatprep.mubr.bf16.mxu0 0
        %533 = vmatmul.mubr.bf16.gmra.mrb[0].mxu0 %v418
        %v534 = vpop.f32.mrb[0].mxu0
        %v535 = vadd.f32 0.0, %v534
        %v536 = vpop.f32.mrb[0].mxu0
        %v537 = vadd.f32 0.0, %v536
        %v538 = vpop.f32.mrb[0].mxu0
        %v539 = vadd.f32 0.0, %v538
        %v540 = vpop.f32.mrb[0].mxu0
        %v541 = vadd.f32 0.0, %v540
        %542 = vdwg.mxu0
        %s543 = smul.u32 %s19, 256
        %v544 = vlaneseq
        %v545 = vand.u32 %v544, 127
        %v546 = vadd.s32 %v545, 128
        %v547 = vstv %s543
        %v548 = vadd.s32 %v547, %v545
        %v549 = vadd.s32 %v547, %v546
        %vm550 = vcmp.lt.s32.totalorder %v548, 450
        %vm551 = vcmp.lt.s32.totalorder %v549, 450
        %v552 = vsel %vm550, 1, 0
        %v553 = vsel %vm551, 1, 0
        %vm554 = vcmp.eq.s32.totalorder %v552, 1
        %vm555 = vcmp.eq.s32.totalorder %v553, 1
        %v556 = vsel %vm554, %v535, 0.0
        %v557 = vsel %vm555, %v537, 0.0
        %v558 = vsel %vm554, %v539, 0.0
        %v559 = vsel %vm555, %v541, 0.0
        %v560 = vadd.f32 %v556, %v557
        %561 = vadd.xlane.f32.xlu0 %v560
        %v562 = vpop.xlane.xlu0 %561
        %v563 = vadd.f32 %v558, %v559
        %564 = vadd.xlane.f32.xlu0 %v563
        %v565 = vpop.xlane.xlu0 %564
        %vm566 = vcmask 7168
        %567 = vst.msk [vmem:[%s389] sm:$0xff] %vm566, %v562
        %568 = vst.msk [vmem:[%s389 + $0x8] sm:$0xff] %vm566, %v565
        %v569 = vmul.f32 %v556, %v556
        %v570 = vmul.f32 %v557, %v557
        %v571 = vmul.f32 %v558, %v558
        %v572 = vmul.f32 %v559, %v559
        %v573 = vadd.f32 %v569, %v570
        %574 = vadd.xlane.f32.xlu0 %v573
        %v575 = vpop.xlane.xlu0 %574
        %v576 = vadd.f32 %v571, %v572
        %577 = vadd.xlane.f32.xlu0 %v576
        %v578 = vpop.xlane.xlu0 %577
        %579 = vst.msk [vmem:[%s394] sm:$0xff] %vm566, %v575
        %580 = vst.msk [vmem:[%s394 + $0x8] sm:$0xff] %vm566, %v578
        %v581 = vpack.c.bf16 %v539, %v535
        %v582 = vpack.c.bf16 %v541, %v537
        %v585 = vunpack.c.l.b16 %v581
        %v586 = vunpack.c.l.b16 %v582
        %v587 = vunpack.c.h.b16 %v581
        %v588 = vunpack.c.h.b16 %v582
        %v589 = vpack.c.b16 %v586, %v585
        %v590 = vpack.c.b16 %v588, %v587
        %593 = vst [vmem:[%s368] sm:$0xff] %v589
        %594 = vst [vmem:[%s368 + $0x8] sm:$0xff] %v590
        %s595 = sand.u32 %s137, 1
        %s596 = sand.u32 %s137, 1
        %s597 = smul.addr %s596, 16
        %s598 = scalar_lea.vmem [#allocation3], %s597
        %p599 = scmp.lt.s32.totalorder %s19, 1
        %s600 = scalar_select %p599, %s19, 1
        %s601 = smul.addr %s600, 2
        %s602 = smul.addr %s601, 8
        %s603 = scalar_lea.vmem %s6, %s602
        %p604 = scmp.lt.s32.totalorder %s19, 1
        %s605 = scalar_select %p604, %s19, 1
        %s606 = smul.addr %s605, 2
        %s607 = smul.addr %s606, 8
        %s608 = scalar_lea.vmem %s7, %s607
        // Predicated region
        $region79: #{_lambda_.6} parent=73 // pred_check
          %p609 = pneg %p147
        $region80: #{_lambda_.6} parent=73 // pred_check_branch
          %611 = sbr.rel (%p609) target = $region82
        $region81: #{_lambda_.6} parent=73 // pred_region
          %s612 = smul.u32 2, %s19
          %s613 = smul.addr %s612, 4
          %s614 = scalar_lea.vmem %s5, %s613
          // Predicated region
          $region83: #{_lambda_.6} parent=81 // pred_check
            _
          $region84: #{_lambda_.6} parent=81 // pred_check_branch
            %616 = sbr.rel (0) target = $region86
          $region85: #{_lambda_.6} parent=81 // pred_region
            // Predicated region
            $region87: #{_lambda_.6} parent=85 // pred_check
              _
            $region88: #{_lambda_.6} parent=85 // pred_check_branch
              %618 = sbr.rel (0) target = $region90
            $region89: #{_lambda_.6} parent=85 // pred_region
              // Predicated region
              $region102: #{_lambda_.6} parent=89 // pred_check
                _
              $region103: #{_lambda_.6} parent=89 // pred_check_branch
                %635 = sbr.rel (0) target = $region105
              $region104: #{_lambda_.6} parent=89 // pred_region
                loop: start=0, step=1, limit=1
                $region106: #{_lambda_.6} parent=104 // loop_pre_header
                  _
                $region107: #{_lambda_.6} parent=104 // loop_header
                  %s637 = sphi 0, %s641
                  %p638 = scmp.ge.s32.totalorder %s637, 1
                  %s642 = sphi %s598, %s598
                  %s643 = sphi %s614, %s614
                $region108: #{_lambda_.6} parent=104 // loop_header_branch
                  %640 = sbr.rel (%p638) target = $region112
                $region109: #{_lambda_.6} parent=104 // loop_body
                  %v644 = vld [vmem:[%s642] sm:$0xff]
                  %645 = vst [vmem:[%s643] sm:$0xff] %v644
                  %v646 = vld [vmem:[%s642 + $0x8] sm:$0xff]
                  %647 = vst [vmem:[%s643 + $0x10] sm:$0xff] %v646
                $region110: #{_lambda_.6} parent=104 // loop_footer
                  %s641 = sadd.s32 1, %s637
                $region111: #{_lambda_.6} parent=104 // loop_footer_branch
                  %636 = sbr.rel target = $region107
                $region112: #{_lambda_.6} parent=104 // loop_exit
                  _
              $region105: #{_lambda_.6} parent=89 // pred_fallthru
                _
              // Predicated region
              $region113: #{_lambda_.6} parent=89 // pred_check
                _
              $region114: #{_lambda_.6} parent=89 // pred_check_branch
                %649 = sbr.rel target = $region116
              $region115: #{_lambda_.6} parent=89 // pred_region
                _
              $region116: #{_lambda_.6} parent=89 // pred_fallthru
                _
            $region90: #{_lambda_.6} parent=85 // pred_fallthru
              _
            // Predicated region
            $region91: #{_lambda_.6} parent=85 // pred_check
              _
            $region92: #{_lambda_.6} parent=85 // pred_check_branch
              %620 = sbr.rel target = $region94
            $region93: #{_lambda_.6} parent=85 // pred_region
              loop: start=0, step=1, limit=1
              $region95: #{_lambda_.6} parent=93 // loop_pre_header
                _
              $region96: #{_lambda_.6} parent=93 // loop_header
                %s623 = sphi 0, %s627
                %p624 = scmp.ge.s32.totalorder %s623, 1
                %s628 = sphi %s598, %s598
                %s629 = sphi %s614, %s614
              $region97: #{_lambda_.6} parent=93 // loop_header_branch
                %626 = sbr.rel (%p624) target = $region101
              $region98: #{_lambda_.6} parent=93 // loop_body
                %v630 = vld [vmem:[%s628] sm:$0xff]
                %631 = vst [vmem:[%s629] sm:$0xff] %v630
                %v632 = vld [vmem:[%s628 + $0x8] sm:$0xff]
                %633 = vst [vmem:[%s629 + $0x10] sm:$0xff] %v632
              $region99: #{_lambda_.6} parent=93 // loop_footer
                %s627 = sadd.s32 1, %s623
              $region100: #{_lambda_.6} parent=93 // loop_footer_branch
                %622 = sbr.rel target = $region96
              $region101: #{_lambda_.6} parent=93 // loop_exit
                _
            $region94: #{_lambda_.6} parent=85 // pred_fallthru
              _
          $region86: #{_lambda_.6} parent=81 // pred_fallthru
            _
          %650 = vnop
        $region82: #{_lambda_.6} parent=73 // pred_fallthru
          _
        // Predicated region
        $region117: #{_lambda_.6} parent=73 // pred_check
          %p651 = pneg %p173
        $region118: #{_lambda_.6} parent=73 // pred_check_branch
          %653 = sbr.rel (%p651) target = $region120
        $region119: #{_lambda_.6} parent=73 // pred_region
          _
        $region120: #{_lambda_.6} parent=73 // pred_fallthru
          _
        // Predicated region
        $region121: #{_lambda_.6} parent=73 // pred_check
          %p654 = pneg %p199
        $region122: #{_lambda_.6} parent=73 // pred_check_branch
          %656 = sbr.rel (%p654) target = $region124
        $region123: #{_lambda_.6} parent=73 // pred_region
          _
        $region124: #{_lambda_.6} parent=73 // pred_fallthru
          _
      $region74: #{_lambda_.6} parent=5 // pred_fallthru
        _
      %p657 = scmp.le.s32.totalorder 2, %s14
      // Predicated region
      $region125: #{_lambda_.6} parent=5 // pred_check
        %p658 = pneg %p657
      $region126: #{_lambda_.6} parent=5 // pred_check_branch
        %660 = sbr.rel (%p658) target = $region128
      $region127: #{_lambda_.6} parent=5 // pred_region
        %s661 = ssub.s32 %s14, 2
        // Predicated region
        $region129: #{_lambda_.6} parent=127 // pred_check
          %p662 = pneg %p153
        $region130: #{_lambda_.6} parent=127 // pred_check_branch
          %664 = sbr.rel (%p662) target = $region132
        $region131: #{_lambda_.6} parent=127 // pred_region
          %s665 = sand.u32 %s138, 1
          %s666 = sand.u32 %s138, 1
          %s667 = smul.addr %s666, 16
          %s668 = scalar_lea.vmem [#allocation3], %s667
        $region132: #{_lambda_.6} parent=127 // pred_fallthru
          _
        // Predicated region
        $region133: #{_lambda_.6} parent=127 // pred_check
          %p669 = pneg %p179
        $region134: #{_lambda_.6} parent=127 // pred_check_branch
          %671 = sbr.rel (%p669) target = $region136
        $region135: #{_lambda_.6} parent=127 // pred_region
          %p672 = scmp.lt.s32.totalorder %s20, 1
          %s673 = scalar_select %p672, %s20, 1
          %s674 = smul.addr %s673, 2
          %s675 = smul.addr %s674, 8
          %s676 = scalar_lea.vmem %s6, %s675
        $region136: #{_lambda_.6} parent=127 // pred_fallthru
          _
        // Predicated region
        $region137: #{_lambda_.6} parent=127 // pred_check
          %p677 = pneg %p205
        $region138: #{_lambda_.6} parent=127 // pred_check_branch
          %679 = sbr.rel (%p677) target = $region140
        $region139: #{_lambda_.6} parent=127 // pred_region
          %p680 = scmp.lt.s32.totalorder %s20, 1
          %s681 = scalar_select %p680, %s20, 1
          %s682 = smul.addr %s681, 2
          %s683 = smul.addr %s682, 8
          %s684 = scalar_lea.vmem %s7, %s683
        $region140: #{_lambda_.6} parent=127 // pred_fallthru
          _
      $region128: #{_lambda_.6} parent=5 // pred_fallthru
        _
    $region6: #{_lambda_.6} parent=1 // loop_footer
      %s18 = sadd.s32 1, %s14
    $region7: #{_lambda_.6} parent=1 // loop_footer_branch
      %13 = sbr.rel target = $region3
    $region8: #{_lambda_.6} parent=1 // loop_exit
      _

// kernel: tile.43
$region0: #{tile.43}
  #allocation0 [shape = 's32[1]{0}', space=sflag, size = 0x4, scoped, tag = 'scoped memory for tile.43']
  %s0 = inlined_call_operand.vmem [shape: f32[32], index: 0, kind: input, shape index: {}]
  %s1 = inlined_call_operand.vmem [shape: f32[16,32], index: 1, kind: output, shape index: {}]
  // Predicated region
  $region2: #{tile.43} parent=0 // pred_check
    _
  $region3: #{tile.43} parent=0 // pred_check_branch
    %3 = sbr.rel (0) target = $region5
  $region4: #{tile.43} parent=0 // pred_region
    _
  $region5: #{tile.43} parent=0 // pred_fallthru
    _
  %v4 = vld [vmem:[%s0] ss:$0 sm:$0xff]
  %5 = vst [vmem:[%s1] sm:$0xff] %v4
  %s6 = scalar_lea.vmem %s1, 8
  %7 = vst [vmem:[%s6] sm:$0xff] %v4

// kernel: tile.2
$region0: #{tile.2}
  %s0 = inlined_call_operand.vmem [shape: f32[16,32], index: 0, kind: input, shape index: {}]
  %s1 = inlined_call_operand.vmem [shape: f32[512,1], index: 1, kind: output, shape index: {}]
  %v2 = vld [vmem:[%s0] sm:$0xff]
  %vm3 = vcmask 7168
  %4 = vst.msk [vmem:[%s1] sm:$0x1] %vm3, %v2
  %s5 = scalar_lea.vmem %s1, 31
  %6 = vst.msk [vmem:[%s5] sm:$0x2] %vm3, %v2
  %s7 = scalar_lea.vmem %s1, 62
  %8 = vst.msk [vmem:[%s7] sm:$0x4] %vm3, %v2
  %s9 = scalar_lea.vmem %s1, 93
  %10 = vst.msk [vmem:[%s9] sm:$0x8] %vm3, %v2
  %s11 = scalar_lea.vmem %s1, 124
  %12 = vst.msk [vmem:[%s11] sm:$0x10] %vm3, %v2
  %s13 = scalar_lea.vmem %s1, 155
  %14 = vst.msk [vmem:[%s13] sm:$0x20] %vm3, %v2
  %s15 = scalar_lea.vmem %s1, 186
  %16 = vst.msk [vmem:[%s15] sm:$0x40] %vm3, %v2
  %s17 = scalar_lea.vmem %s1, 217
  %18 = vst.msk [vmem:[%s17] sm:$0x80] %vm3, %v2
  %s19 = scalar_lea.vmem %s0, 8
  %v20 = vld [vmem:[%s19] sm:$0xff]
  %vm21 = vcmask 7168
  %s22 = scalar_lea.vmem %s1, 256
  %23 = vst.msk [vmem:[%s22] sm:$0x1] %vm21, %v20
  %s24 = scalar_lea.vmem %s1, 287
  %25 = vst.msk [vmem:[%s24] sm:$0x2] %vm21, %v20
  %s26 = scalar_lea.vmem %s1, 318
  %27 = vst.msk [vmem:[%s26] sm:$0x4] %vm21, %v20
  %s28 = scalar_lea.vmem %s1, 349
  %29 = vst.msk [vmem:[%s28] sm:$0x8] %vm21, %v20
  %s30 = scalar_lea.vmem %s1, 380
  %31 = vst.msk [vmem:[%s30] sm:$0x10] %vm21, %v20
  %s32 = scalar_lea.vmem %s1, 411
  %33 = vst.msk [vmem:[%s32] sm:$0x20] %vm21, %v20
  %s34 = scalar_lea.vmem %s1, 442
  %35 = vst.msk [vmem:[%s34] sm:$0x40] %vm21, %v20
  %s36 = scalar_lea.vmem %s1, 473
  %37 = vst.msk [vmem:[%s36] sm:$0x80] %vm21, %v20
  %v38 = vld [vmem:[%s0] sm:$0xff]
  %39 = vrot.lane.b32.xlu0 %v38, 127
  %v40 = vpop.permute.xlu0 %39
  %vm41 = vcmask 7168
  %s42 = scalar_lea.vmem %s1, 1
  %43 = vst.msk [vmem:[%s42] sm:$0x1] %vm41, %v40
  %s44 = scalar_lea.vmem %s1, 32
  %45 = vst.msk [vmem:[%s44] sm:$0x2] %vm41, %v40
  %s46 = scalar_lea.vmem %s1, 63
  %47 = vst.msk [vmem:[%s46] sm:$0x4] %vm41, %v40
  %s48 = scalar_lea.vmem %s1, 94
  %49 = vst.msk [vmem:[%s48] sm:$0x8] %vm41, %v40
  %s50 = scalar_lea.vmem %s1, 125
  %51 = vst.msk [vmem:[%s50] sm:$0x10] %vm41, %v40
  %s52 = scalar_lea.vmem %s1, 156
  %53 = vst.msk [vmem:[%s52] sm:$0x20] %vm41, %v40
  %s54 = scalar_lea.vmem %s1, 187
  %55 = vst.msk [vmem:[%s54] sm:$0x40] %vm41, %v40
  %s56 = scalar_lea.vmem %s1, 218
  %57 = vst.msk [vmem:[%s56] sm:$0x80] %vm41, %v40
  %s58 = scalar_lea.vmem %s0, 8
  %v59 = vld [vmem:[%s58] sm:$0xff]
  %60 = vrot.lane.b32.xlu0 %v59, 127
  %v61 = vpop.permute.xlu0 %60
  %vm62 = vcmask 7168
  %s63 = scalar_lea.vmem %s1, 257
  %64 = vst.msk [vmem:[%s63] sm:$0x1] %vm62, %v61
  %s65 = scalar_lea.vmem %s1, 288
  %66 = vst.msk [vmem:[%s65] sm:$0x2] %vm62, %v61
  %s67 = scalar_lea.vmem %s1, 319
  %68 = vst.msk [vmem:[%s67] sm:$0x4] %vm62, %v61
  %s69 = scalar_lea.vmem %s1, 350
  %70 = vst.msk [vmem:[%s69] sm:$0x8] %vm62, %v61
  %s71 = scalar_lea.vmem %s1, 381
  %72 = vst.msk [vmem:[%s71] sm:$0x10] %vm62, %v61
  %s73 = scalar_lea.vmem %s1, 412
  %74 = vst.msk [vmem:[%s73] sm:$0x20] %vm62, %v61
  %s75 = scalar_lea.vmem %s1, 443
  %76 = vst.msk [vmem:[%s75] sm:$0x40] %vm62, %v61
  %s77 = scalar_lea.vmem %s1, 474
  %78 = vst.msk [vmem:[%s77] sm:$0x80] %vm62, %v61
  %v79 = vld [vmem:[%s0] sm:$0xff]
  %80 = vrot.lane.b32.xlu0 %v79, 126
  %v81 = vpop.permute.xlu0 %80
  %vm82 = vcmask 7168
  %s83 = scalar_lea.vmem %s1, 2
  %84 = vst.msk [vmem:[%s83] sm:$0x1] %vm82, %v81
  %s85 = scalar_lea.vmem %s1, 33
  %86 = vst.msk [vmem:[%s85] sm:$0x2] %vm82, %v81
  %s87 = scalar_lea.vmem %s1, 64
  %88 = vst.msk [vmem:[%s87] sm:$0x4] %vm82, %v81
  %s89 = scalar_lea.vmem %s1, 95
  %90 = vst.msk [vmem:[%s89] sm:$0x8] %vm82, %v81
  %s91 = scalar_lea.vmem %s1, 126
  %92 = vst.msk [vmem:[%s91] sm:$0x10] %vm82, %v81
  %s93 = scalar_lea.vmem %s1, 157
  %94 = vst.msk [vmem:[%s93] sm:$0x20] %vm82, %v81
  %s95 = scalar_lea.vmem %s1, 188
  %96 = vst.msk [vmem:[%s95] sm:$0x40] %vm82, %v81
  %s97 = scalar_lea.vmem %s1, 219
  %98 = vst.msk [vmem:[%s97] sm:$0x80] %vm82, %v81
  %s99 = scalar_lea.vmem %s0, 8
  %v100 = vld [vmem:[%s99] sm:$0xff]
  %101 = vrot.lane.b32.xlu0 %v100, 126
  %v102 = vpop.permute.xlu0 %101
  %vm103 = vcmask 7168
  %s104 = scalar_lea.vmem %s1, 258
  %105 = vst.msk [vmem:[%s104] sm:$0x1] %vm103, %v102
  %s106 = scalar_lea.vmem %s1, 289
  %107 = vst.msk [vmem:[%s106] sm:$0x2] %vm103, %v102
  %s108 = scalar_lea.vmem %s1, 320
  %109 = vst.msk [vmem:[%s108] sm:$0x4] %vm103, %v102
  %s110 = scalar_lea.vmem %s1, 351
  %111 = vst.msk [vmem:[%s110] sm:$0x8] %vm103, %v102
  %s112 = scalar_lea.vmem %s1, 382
  %113 = vst.msk [vmem:[%s112] sm:$0x10] %vm103, %v102
  %s114 = scalar_lea.vmem %s1, 413
  %115 = vst.msk [vmem:[%s114] sm:$0x20] %vm103, %v102
  %s116 = scalar_lea.vmem %s1, 444
  %117 = vst.msk [vmem:[%s116] sm:$0x40] %vm103, %v102
  %s118 = scalar_lea.vmem %s1, 475
  %119 = vst.msk [vmem:[%s118] sm:$0x80] %vm103, %v102
  %v120 = vld [vmem:[%s0] sm:$0xff]
  %121 = vrot.lane.b32.xlu0 %v120, 125
  %v122 = vpop.permute.xlu0 %121
  %vm123 = vcmask 7168
  %s124 = scalar_lea.vmem %s1, 3
  %125 = vst.msk [vmem:[%s124] sm:$0x1] %vm123, %v122
  %s126 = scalar_lea.vmem %s1, 34
  %127 = vst.msk [vmem:[%s126] sm:$0x2] %vm123, %v122
  %s128 = scalar_lea.vmem %s1, 65
  %129 = vst.msk [vmem:[%s128] sm:$0x4] %vm123, %v122
  %s130 = scalar_lea.vmem %s1, 96
  %131 = vst.msk [vmem:[%s130] sm:$0x8] %vm123, %v122
  %s132 = scalar_lea.vmem %s1, 127
  %133 = vst.msk [vmem:[%s132] sm:$0x10] %vm123, %v122
  %s134 = scalar_lea.vmem %s1, 158
  %135 = vst.msk [vmem:[%s134] sm:$0x20] %vm123, %v122
  %s136 = scalar_lea.vmem %s1, 189
  %137 = vst.msk [vmem:[%s136] sm:$0x40] %vm123, %v122
  %s138 = scalar_lea.vmem %s1, 220
  %139 = vst.msk [vmem:[%s138] sm:$0x80] %vm123, %v122
  %s140 = scalar_lea.vmem %s0, 8
  %v141 = vld [vmem:[%s140] sm:$0xff]
  %142 = vrot.lane.b32.xlu0 %v141, 125
  %v143 = vpop.permute.xlu0 %142
  %vm144 = vcmask 7168
  %s145 = scalar_lea.vmem %s1, 259
  %146 = vst.msk [vmem:[%s145] sm:$0x1] %vm144, %v143
  %s147 = scalar_lea.vmem %s1, 290
  %148 = vst.msk [vmem:[%s147] sm:$0x2] %vm144, %v143
  %s149 = scalar_lea.vmem %s1, 321
  %150 = vst.msk [vmem:[%s149] sm:$0x4] %vm144, %v143
  %s151 = scalar_lea.vmem %s1, 352
  %152 = vst.msk [vmem:[%s151] sm:$0x8] %vm144, %v143
  %s153 = scalar_lea.vmem %s1, 383
  %154 = vst.msk [vmem:[%s153] sm:$0x10] %vm144, %v143
  %s155 = scalar_lea.vmem %s1, 414
  %156 = vst.msk [vmem:[%s155] sm:$0x20] %vm144, %v143
  %s157 = scalar_lea.vmem %s1, 445
  %158 = vst.msk [vmem:[%s157] sm:$0x40] %vm144, %v143
  %s159 = scalar_lea.vmem %s1, 476
  %160 = vst.msk [vmem:[%s159] sm:$0x80] %vm144, %v143
  %v161 = vld [vmem:[%s0] sm:$0xff]
  %162 = vrot.lane.b32.xlu0 %v161, 124
  %v163 = vpop.permute.xlu0 %162
  %vm164 = vcmask 7168
  %s165 = scalar_lea.vmem %s1, 4
  %166 = vst.msk [vmem:[%s165] sm:$0x1] %vm164, %v163
  %s167 = scalar_lea.vmem %s1, 35
  %168 = vst.msk [vmem:[%s167] sm:$0x2] %vm164, %v163
  %s169 = scalar_lea.vmem %s1, 66
  %170 = vst.msk [vmem:[%s169] sm:$0x4] %vm164, %v163
  %s171 = scalar_lea.vmem %s1, 97
  %172 = vst.msk [vmem:[%s171] sm:$0x8] %vm164, %v163
  %s173 = scalar_lea.vmem %s1, 128
  %174 = vst.msk [vmem:[%s173] sm:$0x10] %vm164, %v163
  %s175 = scalar_lea.vmem %s1, 159
  %176 = vst.msk [vmem:[%s175] sm:$0x20] %vm164, %v163
  %s177 = scalar_lea.vmem %s1, 190
  %178 = vst.msk [vmem:[%s177] sm:$0x40] %vm164, %v163
  %s179 = scalar_lea.vmem %s1, 221
  %180 = vst.msk [vmem:[%s179] sm:$0x80] %vm164, %v163
  %s181 = scalar_lea.vmem %s0, 8
  %v182 = vld [vmem:[%s181] sm:$0xff]
  %183 = vrot.lane.b32.xlu0 %v182, 124
  %v184 = vpop.permute.xlu0 %183
  %vm185 = vcmask 7168
  %s186 = scalar_lea.vmem %s1, 260
  %187 = vst.msk [vmem:[%s186] sm:$0x1] %vm185, %v184
  %s188 = scalar_lea.vmem %s1, 291
  %189 = vst.msk [vmem:[%s188] sm:$0x2] %vm185, %v184
  %s190 = scalar_lea.vmem %s1, 322
  %191 = vst.msk [vmem:[%s190] sm:$0x4] %vm185, %v184
  %s192 = scalar_lea.vmem %s1, 353
  %193 = vst.msk [vmem:[%s192] sm:$0x8] %vm185, %v184
  %s194 = scalar_lea.vmem %s1, 384
  %195 = vst.msk [vmem:[%s194] sm:$0x10] %vm185, %v184
  %s196 = scalar_lea.vmem %s1, 415
  %197 = vst.msk [vmem:[%s196] sm:$0x20] %vm185, %v184
  %s198 = scalar_lea.vmem %s1, 446
  %199 = vst.msk [vmem:[%s198] sm:$0x40] %vm185, %v184
  %s200 = scalar_lea.vmem %s1, 477
  %201 = vst.msk [vmem:[%s200] sm:$0x80] %vm185, %v184
  %v202 = vld [vmem:[%s0] sm:$0xff]
  %203 = vrot.lane.b32.xlu0 %v202, 123
  %v204 = vpop.permute.xlu0 %203
  %vm205 = vcmask 7168
  %s206 = scalar_lea.vmem %s1, 5
  %207 = vst.msk [vmem:[%s206] sm:$0x1] %vm205, %v204
  %s208 = scalar_lea.vmem %s1, 36
  %209 = vst.msk [vmem:[%s208] sm:$0x2] %vm205, %v204
  %s210 = scalar_lea.vmem %s1, 67
  %211 = vst.msk [vmem:[%s210] sm:$0x4] %vm205, %v204
  %s212 = scalar_lea.vmem %s1, 98
  %213 = vst.msk [vmem:[%s212] sm:$0x8] %vm205, %v204
  %s214 = scalar_lea.vmem %s1, 129
  %215 = vst.msk [vmem:[%s214] sm:$0x10] %vm205, %v204
  %s216 = scalar_lea.vmem %s1, 160
  %217 = vst.msk [vmem:[%s216] sm:$0x20] %vm205, %v204
  %s218 = scalar_lea.vmem %s1, 191
  %219 = vst.msk [vmem:[%s218] sm:$0x40] %vm205, %v204
  %s220 = scalar_lea.vmem %s1, 222
  %221 = vst.msk [vmem:[%s220] sm:$0x80] %vm205, %v204
  %s222 = scalar_lea.vmem %s0, 8
  %v223 = vld [vmem:[%s222] sm:$0xff]
  %224 = vrot.lane.b32.xlu0 %v223, 123
  %v225 = vpop.permute.xlu0 %224
  %vm226 = vcmask 7168
  %s227 = scalar_lea.vmem %s1, 261
  %228 = vst.msk [vmem:[%s227] sm:$0x1] %vm226, %v225
  %s229 = scalar_lea.vmem %s1, 292
  %230 = vst.msk [vmem:[%s229] sm:$0x2] %vm226, %v225
  %s231 = scalar_lea.vmem %s1, 323
  %232 = vst.msk [vmem:[%s231] sm:$0x4] %vm226, %v225
  %s233 = scalar_lea.vmem %s1, 354
  %234 = vst.msk [vmem:[%s233] sm:$0x8] %vm226, %v225
  %s235 = scalar_lea.vmem %s1, 385
  %236 = vst.msk [vmem:[%s235] sm:$0x10] %vm226, %v225
  %s237 = scalar_lea.vmem %s1, 416
  %238 = vst.msk [vmem:[%s237] sm:$0x20] %vm226, %v225
  %s239 = scalar_lea.vmem %s1, 447
  %240 = vst.msk [vmem:[%s239] sm:$0x40] %vm226, %v225
  %s241 = scalar_lea.vmem %s1, 478
  %242 = vst.msk [vmem:[%s241] sm:$0x80] %vm226, %v225
  %v243 = vld [vmem:[%s0] sm:$0xff]
  %244 = vrot.lane.b32.xlu0 %v243, 122
  %v245 = vpop.permute.xlu0 %244
  %vm246 = vcmask 7168
  %s247 = scalar_lea.vmem %s1, 6
  %248 = vst.msk [vmem:[%s247] sm:$0x1] %vm246, %v245
  %s249 = scalar_lea.vmem %s1, 37
  %250 = vst.msk [vmem:[%s249] sm:$0x2] %vm246, %v245
  %s251 = scalar_lea.vmem %s1, 68
  %252 = vst.msk [vmem:[%s251] sm:$0x4] %vm246, %v245
  %s253 = scalar_lea.vmem %s1, 99
  %254 = vst.msk [vmem:[%s253] sm:$0x8] %vm246, %v245
  %s255 = scalar_lea.vmem %s1, 130
  %256 = vst.msk [vmem:[%s255] sm:$0x10] %vm246, %v245
  %s257 = scalar_lea.vmem %s1, 161
  %258 = vst.msk [vmem:[%s257] sm:$0x20] %vm246, %v245
  %s259 = scalar_lea.vmem %s1, 192
  %260 = vst.msk [vmem:[%s259] sm:$0x40] %vm246, %v245
  %s261 = scalar_lea.vmem %s1, 223
  %262 = vst.msk [vmem:[%s261] sm:$0x80] %vm246, %v245
  %s263 = scalar_lea.vmem %s0, 8
  %v264 = vld [vmem:[%s263] sm:$0xff]
  %265 = vrot.lane.b32.xlu0 %v264, 122
  %v266 = vpop.permute.xlu0 %265
  %vm267 = vcmask 7168
  %s268 = scalar_lea.vmem %s1, 262
  %269 = vst.msk [vmem:[%s268] sm:$0x1] %vm267, %v266
  %s270 = scalar_lea.vmem %s1, 293
  %271 = vst.msk [vmem:[%s270] sm:$0x2] %vm267, %v266
  %s272 = scalar_lea.vmem %s1, 324
  %273 = vst.msk [vmem:[%s272] sm:$0x4] %vm267, %v266
  %s274 = scalar_lea.vmem %s1, 355
  %275 = vst.msk [vmem:[%s274] sm:$0x8] %vm267, %v266
  %s276 = scalar_lea.vmem %s1, 386
  %277 = vst.msk [vmem:[%s276] sm:$0x10] %vm267, %v266
  %s278 = scalar_lea.vmem %s1, 417
  %279 = vst.msk [vmem:[%s278] sm:$0x20] %vm267, %v266
  %s280 = scalar_lea.vmem %s1, 448
  %281 = vst.msk [vmem:[%s280] sm:$0x40] %vm267, %v266
  %s282 = scalar_lea.vmem %s1, 479
  %283 = vst.msk [vmem:[%s282] sm:$0x80] %vm267, %v266
  %v284 = vld [vmem:[%s0] sm:$0xff]
  %285 = vrot.lane.b32.xlu0 %v284, 121
  %v286 = vpop.permute.xlu0 %285
  %vm287 = vcmask 7168
  %s288 = scalar_lea.vmem %s1, 7
  %289 = vst.msk [vmem:[%s288] sm:$0x1] %vm287, %v286
  %s290 = scalar_lea.vmem %s1, 38
  %291 = vst.msk [vmem:[%s290] sm:$0x2] %vm287, %v286
  %s292 = scalar_lea.vmem %s1, 69
  %293 = vst.msk [vmem:[%s292] sm:$0x4] %vm287, %v286
  %s294 = scalar_lea.vmem %s1, 100
  %295 = vst.msk [vmem:[%s294] sm:$0x8] %vm287, %v286
  %s296 = scalar_lea.vmem %s1, 131
  %297 = vst.msk [vmem:[%s296] sm:$0x10] %vm287, %v286
  %s298 = scalar_lea.vmem %s1, 162
  %299 = vst.msk [vmem:[%s298] sm:$0x20] %vm287, %v286
  %s300 = scalar_lea.vmem %s1, 193
  %301 = vst.msk [vmem:[%s300] sm:$0x40] %vm287, %v286
  %s302 = scalar_lea.vmem %s1, 224
  %303 = vst.msk [vmem:[%s302] sm:$0x80] %vm287, %v286
  %s304 = scalar_lea.vmem %s0, 8
  %v305 = vld [vmem:[%s304] sm:$0xff]
  %306 = vrot.lane.b32.xlu0 %v305, 121
  %v307 = vpop.permute.xlu0 %306
  %vm308 = vcmask 7168
  %s309 = scalar_lea.vmem %s1, 263
  %310 = vst.msk [vmem:[%s309] sm:$0x1] %vm308, %v307
  %s311 = scalar_lea.vmem %s1, 294
  %312 = vst.msk [vmem:[%s311] sm:$0x2] %vm308, %v307
  %s313 = scalar_lea.vmem %s1, 325
  %314 = vst.msk [vmem:[%s313] sm:$0x4] %vm308, %v307
  %s315 = scalar_lea.vmem %s1, 356
  %316 = vst.msk [vmem:[%s315] sm:$0x8] %vm308, %v307
  %s317 = scalar_lea.vmem %s1, 387
  %318 = vst.msk [vmem:[%s317] sm:$0x10] %vm308, %v307
  %s319 = scalar_lea.vmem %s1, 418
  %320 = vst.msk [vmem:[%s319] sm:$0x20] %vm308, %v307
  %s321 = scalar_lea.vmem %s1, 449
  %322 = vst.msk [vmem:[%s321] sm:$0x40] %vm308, %v307
  %s323 = scalar_lea.vmem %s1, 480
  %324 = vst.msk [vmem:[%s323] sm:$0x80] %vm308, %v307
  %v325 = vld [vmem:[%s0] sm:$0xff]
  %326 = vrot.lane.b32.xlu0 %v325, 120
  %v327 = vpop.permute.xlu0 %326
  %vm328 = vcmask 7168
  %s329 = scalar_lea.vmem %s1, 8
  %330 = vst.msk [vmem:[%s329] sm:$0x1] %vm328, %v327
  %s331 = scalar_lea.vmem %s1, 39
  %332 = vst.msk [vmem:[%s331] sm:$0x2] %vm328, %v327
  %s333 = scalar_lea.vmem %s1, 70
  %334 = vst.msk [vmem:[%s333] sm:$0x4] %vm328, %v327
  %s335 = scalar_lea.vmem %s1, 101
  %336 = vst.msk [vmem:[%s335] sm:$0x8] %vm328, %v327
  %s337 = scalar_lea.vmem %s1, 132
  %338 = vst.msk [vmem:[%s337] sm:$0x10] %vm328, %v327
  %s339 = scalar_lea.vmem %s1, 163
  %340 = vst.msk [vmem:[%s339] sm:$0x20] %vm328, %v327
  %s341 = scalar_lea.vmem %s1, 194
  %342 = vst.msk [vmem:[%s341] sm:$0x40] %vm328, %v327
  %s343 = scalar_lea.vmem %s1, 225
  %344 = vst.msk [vmem:[%s343] sm:$0x80] %vm328, %v327
  %s345 = scalar_lea.vmem %s0, 8
  %v346 = vld [vmem:[%s345] sm:$0xff]
  %347 = vrot.lane.b32.xlu0 %v346, 120
  %v348 = vpop.permute.xlu0 %347
  %vm349 = vcmask 7168
  %s350 = scalar_lea.vmem %s1, 264
  %351 = vst.msk [vmem:[%s350] sm:$0x1] %vm349, %v348
  %s352 = scalar_lea.vmem %s1, 295
  %353 = vst.msk [vmem:[%s352] sm:$0x2] %vm349, %v348
  %s354 = scalar_lea.vmem %s1, 326
  %355 = vst.msk [vmem:[%s354] sm:$0x4] %vm349, %v348
  %s356 = scalar_lea.vmem %s1, 357
  %357 = vst.msk [vmem:[%s356] sm:$0x8] %vm349, %v348
  %s358 = scalar_lea.vmem %s1, 388
  %359 = vst.msk [vmem:[%s358] sm:$0x10] %vm349, %v348
  %s360 = scalar_lea.vmem %s1, 419
  %361 = vst.msk [vmem:[%s360] sm:$0x20] %vm349, %v348
  %s362 = scalar_lea.vmem %s1, 450
  %363 = vst.msk [vmem:[%s362] sm:$0x40] %vm349, %v348
  %s364 = scalar_lea.vmem %s1, 481
  %365 = vst.msk [vmem:[%s364] sm:$0x80] %vm349, %v348
  %v366 = vld [vmem:[%s0] sm:$0xff]
  %367 = vrot.lane.b32.xlu0 %v366, 119
  %v368 = vpop.permute.xlu0 %367
  %vm369 = vcmask 7168
  %s370 = scalar_lea.vmem %s1, 9
  %371 = vst.msk [vmem:[%s370] sm:$0x1] %vm369, %v368
  %s372 = scalar_lea.vmem %s1, 40
  %373 = vst.msk [vmem:[%s372] sm:$0x2] %vm369, %v368
  %s374 = scalar_lea.vmem %s1, 71
  %375 = vst.msk [vmem:[%s374] sm:$0x4] %vm369, %v368
  %s376 = scalar_lea.vmem %s1, 102
  %377 = vst.msk [vmem:[%s376] sm:$0x8] %vm369, %v368
  %s378 = scalar_lea.vmem %s1, 133
  %379 = vst.msk [vmem:[%s378] sm:$0x10] %vm369, %v368
  %s380 = scalar_lea.vmem %s1, 164
  %381 = vst.msk [vmem:[%s380] sm:$0x20] %vm369, %v368
  %s382 = scalar_lea.vmem %s1, 195
  %383 = vst.msk [vmem:[%s382] sm:$0x40] %vm369, %v368
  %s384 = scalar_lea.vmem %s1, 226
  %385 = vst.msk [vmem:[%s384] sm:$0x80] %vm369, %v368
  %s386 = scalar_lea.vmem %s0, 8
  %v387 = vld [vmem:[%s386] sm:$0xff]
  %388 = vrot.lane.b32.xlu0 %v387, 119
  %v389 = vpop.permute.xlu0 %388
  %vm390 = vcmask 7168
  %s391 = scalar_lea.vmem %s1, 265
  %392 = vst.msk [vmem:[%s391] sm:$0x1] %vm390, %v389
  %s393 = scalar_lea.vmem %s1, 296
  %394 = vst.msk [vmem:[%s393] sm:$0x2] %vm390, %v389
  %s395 = scalar_lea.vmem %s1, 327
  %396 = vst.msk [vmem:[%s395] sm:$0x4] %vm390, %v389
  %s397 = scalar_lea.vmem %s1, 358
  %398 = vst.msk [vmem:[%s397] sm:$0x8] %vm390, %v389
  %s399 = scalar_lea.vmem %s1, 389
  %400 = vst.msk [vmem:[%s399] sm:$0x10] %vm390, %v389
  %s401 = scalar_lea.vmem %s1, 420
  %402 = vst.msk [vmem:[%s401] sm:$0x20] %vm390, %v389
  %s403 = scalar_lea.vmem %s1, 451
  %404 = vst.msk [vmem:[%s403] sm:$0x40] %vm390, %v389
  %s405 = scalar_lea.vmem %s1, 482
  %406 = vst.msk [vmem:[%s405] sm:$0x80] %vm390, %v389
  %v407 = vld [vmem:[%s0] sm:$0xff]
  %408 = vrot.lane.b32.xlu0 %v407, 118
  %v409 = vpop.permute.xlu0 %408
  %vm410 = vcmask 7168
  %s411 = scalar_lea.vmem %s1, 10
  %412 = vst.msk [vmem:[%s411] sm:$0x1] %vm410, %v409
  %s413 = scalar_lea.vmem %s1, 41
  %414 = vst.msk [vmem:[%s413] sm:$0x2] %vm410, %v409
  %s415 = scalar_lea.vmem %s1, 72
  %416 = vst.msk [vmem:[%s415] sm:$0x4] %vm410, %v409
  %s417 = scalar_lea.vmem %s1, 103
  %418 = vst.msk [vmem:[%s417] sm:$0x8] %vm410, %v409
  %s419 = scalar_lea.vmem %s1, 134
  %420 = vst.msk [vmem:[%s419] sm:$0x10] %vm410, %v409
  %s421 = scalar_lea.vmem %s1, 165
  %422 = vst.msk [vmem:[%s421] sm:$0x20] %vm410, %v409
  %s423 = scalar_lea.vmem %s1, 196
  %424 = vst.msk [vmem:[%s423] sm:$0x40] %vm410, %v409
  %s425 = scalar_lea.vmem %s1, 227
  %426 = vst.msk [vmem:[%s425] sm:$0x80] %vm410, %v409
  %s427 = scalar_lea.vmem %s0, 8
  %v428 = vld [vmem:[%s427] sm:$0xff]
  %429 = vrot.lane.b32.xlu0 %v428, 118
  %v430 = vpop.permute.xlu0 %429
  %vm431 = vcmask 7168
  %s432 = scalar_lea.vmem %s1, 266
  %433 = vst.msk [vmem:[%s432] sm:$0x1] %vm431, %v430
  %s434 = scalar_lea.vmem %s1, 297
  %435 = vst.msk [vmem:[%s434] sm:$0x2] %vm431, %v430
  %s436 = scalar_lea.vmem %s1, 328
  %437 = vst.msk [vmem:[%s436] sm:$0x4] %vm431, %v430
  %s438 = scalar_lea.vmem %s1, 359
  %439 = vst.msk [vmem:[%s438] sm:$0x8] %vm431, %v430
  %s440 = scalar_lea.vmem %s1, 390
  %441 = vst.msk [vmem:[%s440] sm:$0x10] %vm431, %v430
  %s442 = scalar_lea.vmem %s1, 421
  %443 = vst.msk [vmem:[%s442] sm:$0x20] %vm431, %v430
  %s444 = scalar_lea.vmem %s1, 452
  %445 = vst.msk [vmem:[%s444] sm:$0x40] %vm431, %v430
  %s446 = scalar_lea.vmem %s1, 483
  %447 = vst.msk [vmem:[%s446] sm:$0x80] %vm431, %v430
  %v448 = vld [vmem:[%s0] sm:$0xff]
  %449 = vrot.lane.b32.xlu0 %v448, 117
  %v450 = vpop.permute.xlu0 %449
  %vm451 = vcmask 7168
  %s452 = scalar_lea.vmem %s1, 11
  %453 = vst.msk [vmem:[%s452] sm:$0x1] %vm451, %v450
  %s454 = scalar_lea.vmem %s1, 42
  %455 = vst.msk [vmem:[%s454] sm:$0x2] %vm451, %v450
  %s456 = scalar_lea.vmem %s1, 73
  %457 = vst.msk [vmem:[%s456] sm:$0x4] %vm451, %v450
  %s458 = scalar_lea.vmem %s1, 104
  %459 = vst.msk [vmem:[%s458] sm:$0x8] %vm451, %v450
  %s460 = scalar_lea.vmem %s1, 135
  %461 = vst.msk [vmem:[%s460] sm:$0x10] %vm451, %v450
  %s462 = scalar_lea.vmem %s1, 166
  %463 = vst.msk [vmem:[%s462] sm:$0x20] %vm451, %v450
  %s464 = scalar_lea.vmem %s1, 197
  %465 = vst.msk [vmem:[%s464] sm:$0x40] %vm451, %v450
  %s466 = scalar_lea.vmem %s1, 228
  %467 = vst.msk [vmem:[%s466] sm:$0x80] %vm451, %v450
  %s468 = scalar_lea.vmem %s0, 8
  %v469 = vld [vmem:[%s468] sm:$0xff]
  %470 = vrot.lane.b32.xlu0 %v469, 117
  %v471 = vpop.permute.xlu0 %470
  %vm472 = vcmask 7168
  %s473 = scalar_lea.vmem %s1, 267
  %474 = vst.msk [vmem:[%s473] sm:$0x1] %vm472, %v471
  %s475 = scalar_lea.vmem %s1, 298
  %476 = vst.msk [vmem:[%s475] sm:$0x2] %vm472, %v471
  %s477 = scalar_lea.vmem %s1, 329
  %478 = vst.msk [vmem:[%s477] sm:$0x4] %vm472, %v471
  %s479 = scalar_lea.vmem %s1, 360
  %480 = vst.msk [vmem:[%s479] sm:$0x8] %vm472, %v471
  %s481 = scalar_lea.vmem %s1, 391
  %482 = vst.msk [vmem:[%s481] sm:$0x10] %vm472, %v471
  %s483 = scalar_lea.vmem %s1, 422
  %484 = vst.msk [vmem:[%s483] sm:$0x20] %vm472, %v471
  %s485 = scalar_lea.vmem %s1, 453
  %486 = vst.msk [vmem:[%s485] sm:$0x40] %vm472, %v471
  %s487 = scalar_lea.vmem %s1, 484
  %488 = vst.msk [vmem:[%s487] sm:$0x80] %vm472, %v471
  %v489 = vld [vmem:[%s0] sm:$0xff]
  %490 = vrot.lane.b32.xlu0 %v489, 116
  %v491 = vpop.permute.xlu0 %490
  %vm492 = vcmask 7168
  %s493 = scalar_lea.vmem %s1, 12
  %494 = vst.msk [vmem:[%s493] sm:$0x1] %vm492, %v491
  %s495 = scalar_lea.vmem %s1, 43
  %496 = vst.msk [vmem:[%s495] sm:$0x2] %vm492, %v491
  %s497 = scalar_lea.vmem %s1, 74
  %498 = vst.msk [vmem:[%s497] sm:$0x4] %vm492, %v491
  %s499 = scalar_lea.vmem %s1, 105
  %500 = vst.msk [vmem:[%s499] sm:$0x8] %vm492, %v491
  %s501 = scalar_lea.vmem %s1, 136
  %502 = vst.msk [vmem:[%s501] sm:$0x10] %vm492, %v491
  %s503 = scalar_lea.vmem %s1, 167
  %504 = vst.msk [vmem:[%s503] sm:$0x20] %vm492, %v491
  %s505 = scalar_lea.vmem %s1, 198
  %506 = vst.msk [vmem:[%s505] sm:$0x40] %vm492, %v491
  %s507 = scalar_lea.vmem %s1, 229
  %508 = vst.msk [vmem:[%s507] sm:$0x80] %vm492, %v491
  %s509 = scalar_lea.vmem %s0, 8
  %v510 = vld [vmem:[%s509] sm:$0xff]
  %511 = vrot.lane.b32.xlu0 %v510, 116
  %v512 = vpop.permute.xlu0 %511
  %vm513 = vcmask 7168
  %s514 = scalar_lea.vmem %s1, 268
  %515 = vst.msk [vmem:[%s514] sm:$0x1] %vm513, %v512
  %s516 = scalar_lea.vmem %s1, 299
  %517 = vst.msk [vmem:[%s516] sm:$0x2] %vm513, %v512
  %s518 = scalar_lea.vmem %s1, 330
  %519 = vst.msk [vmem:[%s518] sm:$0x4] %vm513, %v512
  %s520 = scalar_lea.vmem %s1, 361
  %521 = vst.msk [vmem:[%s520] sm:$0x8] %vm513, %v512
  %s522 = scalar_lea.vmem %s1, 392
  %523 = vst.msk [vmem:[%s522] sm:$0x10] %vm513, %v512
  %s524 = scalar_lea.vmem %s1, 423
  %525 = vst.msk [vmem:[%s524] sm:$0x20] %vm513, %v512
  %s526 = scalar_lea.vmem %s1, 454
  %527 = vst.msk [vmem:[%s526] sm:$0x40] %vm513, %v512
  %s528 = scalar_lea.vmem %s1, 485
  %529 = vst.msk [vmem:[%s528] sm:$0x80] %vm513, %v512
  %v530 = vld [vmem:[%s0] sm:$0xff]
  %531 = vrot.lane.b32.xlu0 %v530, 115
  %v532 = vpop.permute.xlu0 %531
  %vm533 = vcmask 7168
  %s534 = scalar_lea.vmem %s1, 13
  %535 = vst.msk [vmem:[%s534] sm:$0x1] %vm533, %v532
  %s536 = scalar_lea.vmem %s1, 44
  %537 = vst.msk [vmem:[%s536] sm:$0x2] %vm533, %v532
  %s538 = scalar_lea.vmem %s1, 75
  %539 = vst.msk [vmem:[%s538] sm:$0x4] %vm533, %v532
  %s540 = scalar_lea.vmem %s1, 106
  %541 = vst.msk [vmem:[%s540] sm:$0x8] %vm533, %v532
  %s542 = scalar_lea.vmem %s1, 137
  %543 = vst.msk [vmem:[%s542] sm:$0x10] %vm533, %v532
  %s544 = scalar_lea.vmem %s1, 168
  %545 = vst.msk [vmem:[%s544] sm:$0x20] %vm533, %v532
  %s546 = scalar_lea.vmem %s1, 199
  %547 = vst.msk [vmem:[%s546] sm:$0x40] %vm533, %v532
  %s548 = scalar_lea.vmem %s1, 230
  %549 = vst.msk [vmem:[%s548] sm:$0x80] %vm533, %v532
  %s550 = scalar_lea.vmem %s0, 8
  %v551 = vld [vmem:[%s550] sm:$0xff]
  %552 = vrot.lane.b32.xlu0 %v551, 115
  %v553 = vpop.permute.xlu0 %552
  %vm554 = vcmask 7168
  %s555 = scalar_lea.vmem %s1, 269
  %556 = vst.msk [vmem:[%s555] sm:$0x1] %vm554, %v553
  %s557 = scalar_lea.vmem %s1, 300
  %558 = vst.msk [vmem:[%s557] sm:$0x2] %vm554, %v553
  %s559 = scalar_lea.vmem %s1, 331
  %560 = vst.msk [vmem:[%s559] sm:$0x4] %vm554, %v553
  %s561 = scalar_lea.vmem %s1, 362
  %562 = vst.msk [vmem:[%s561] sm:$0x8] %vm554, %v553
  %s563 = scalar_lea.vmem %s1, 393
  %564 = vst.msk [vmem:[%s563] sm:$0x10] %vm554, %v553
  %s565 = scalar_lea.vmem %s1, 424
  %566 = vst.msk [vmem:[%s565] sm:$0x20] %vm554, %v553
  %s567 = scalar_lea.vmem %s1, 455
  %568 = vst.msk [vmem:[%s567] sm:$0x40] %vm554, %v553
  %s569 = scalar_lea.vmem %s1, 486
  %570 = vst.msk [vmem:[%s569] sm:$0x80] %vm554, %v553
  %v571 = vld [vmem:[%s0] sm:$0xff]
  %572 = vrot.lane.b32.xlu0 %v571, 114
  %v573 = vpop.permute.xlu0 %572
  %vm574 = vcmask 7168
  %s575 = scalar_lea.vmem %s1, 14
  %576 = vst.msk [vmem:[%s575] sm:$0x1] %vm574, %v573
  %s577 = scalar_lea.vmem %s1, 45
  %578 = vst.msk [vmem:[%s577] sm:$0x2] %vm574, %v573
  %s579 = scalar_lea.vmem %s1, 76
  %580 = vst.msk [vmem:[%s579] sm:$0x4] %vm574, %v573
  %s581 = scalar_lea.vmem %s1, 107
  %582 = vst.msk [vmem:[%s581] sm:$0x8] %vm574, %v573
  %s583 = scalar_lea.vmem %s1, 138
  %584 = vst.msk [vmem:[%s583] sm:$0x10] %vm574, %v573
  %s585 = scalar_lea.vmem %s1, 169
  %586 = vst.msk [vmem:[%s585] sm:$0x20] %vm574, %v573
  %s587 = scalar_lea.vmem %s1, 200
  %588 = vst.msk [vmem:[%s587] sm:$0x40] %vm574, %v573
  %s589 = scalar_lea.vmem %s1, 231
  %590 = vst.msk [vmem:[%s589] sm:$0x80] %vm574, %v573
  %s591 = scalar_lea.vmem %s0, 8
  %v592 = vld [vmem:[%s591] sm:$0xff]
  %593 = vrot.lane.b32.xlu0 %v592, 114
  %v594 = vpop.permute.xlu0 %593
  %vm595 = vcmask 7168
  %s596 = scalar_lea.vmem %s1, 270
  %597 = vst.msk [vmem:[%s596] sm:$0x1] %vm595, %v594
  %s598 = scalar_lea.vmem %s1, 301
  %599 = vst.msk [vmem:[%s598] sm:$0x2] %vm595, %v594
  %s600 = scalar_lea.vmem %s1, 332
  %601 = vst.msk [vmem:[%s600] sm:$0x4] %vm595, %v594
  %s602 = scalar_lea.vmem %s1, 363
  %603 = vst.msk [vmem:[%s602] sm:$0x8] %vm595, %v594
  %s604 = scalar_lea.vmem %s1, 394
  %605 = vst.msk [vmem:[%s604] sm:$0x10] %vm595, %v594
  %s606 = scalar_lea.vmem %s1, 425
  %607 = vst.msk [vmem:[%s606] sm:$0x20] %vm595, %v594
  %s608 = scalar_lea.vmem %s1, 456
  %609 = vst.msk [vmem:[%s608] sm:$0x40] %vm595, %v594
  %s610 = scalar_lea.vmem %s1, 487
  %611 = vst.msk [vmem:[%s610] sm:$0x80] %vm595, %v594
  %v612 = vld [vmem:[%s0] sm:$0xff]
  %613 = vrot.lane.b32.xlu0 %v612, 113
  %v614 = vpop.permute.xlu0 %613
  %vm615 = vcmask 7168
  %s616 = scalar_lea.vmem %s1, 15
  %617 = vst.msk [vmem:[%s616] sm:$0x1] %vm615, %v614
  %s618 = scalar_lea.vmem %s1, 46
  %619 = vst.msk [vmem:[%s618] sm:$0x2] %vm615, %v614
  %s620 = scalar_lea.vmem %s1, 77
  %621 = vst.msk [vmem:[%s620] sm:$0x4] %vm615, %v614
  %s622 = scalar_lea.vmem %s1, 108
  %623 = vst.msk [vmem:[%s622] sm:$0x8] %vm615, %v614
  %s624 = scalar_lea.vmem %s1, 139
  %625 = vst.msk [vmem:[%s624] sm:$0x10] %vm615, %v614
  %s626 = scalar_lea.vmem %s1, 170
  %627 = vst.msk [vmem:[%s626] sm:$0x20] %vm615, %v614
  %s628 = scalar_lea.vmem %s1, 201
  %629 = vst.msk [vmem:[%s628] sm:$0x40] %vm615, %v614
  %s630 = scalar_lea.vmem %s1, 232
  %631 = vst.msk [vmem:[%s630] sm:$0x80] %vm615, %v614
  %s632 = scalar_lea.vmem %s0, 8
  %v633 = vld [vmem:[%s632] sm:$0xff]
  %634 = vrot.lane.b32.xlu0 %v633, 113
  %v635 = vpop.permute.xlu0 %634
  %vm636 = vcmask 7168
  %s637 = scalar_lea.vmem %s1, 271
  %638 = vst.msk [vmem:[%s637] sm:$0x1] %vm636, %v635
  %s639 = scalar_lea.vmem %s1, 302
  %640 = vst.msk [vmem:[%s639] sm:$0x2] %vm636, %v635
  %s641 = scalar_lea.vmem %s1, 333
  %642 = vst.msk [vmem:[%s641] sm:$0x4] %vm636, %v635
  %s643 = scalar_lea.vmem %s1, 364
  %644 = vst.msk [vmem:[%s643] sm:$0x8] %vm636, %v635
  %s645 = scalar_lea.vmem %s1, 395
  %646 = vst.msk [vmem:[%s645] sm:$0x10] %vm636, %v635
  %s647 = scalar_lea.vmem %s1, 426
  %648 = vst.msk [vmem:[%s647] sm:$0x20] %vm636, %v635
  %s649 = scalar_lea.vmem %s1, 457
  %650 = vst.msk [vmem:[%s649] sm:$0x40] %vm636, %v635
  %s651 = scalar_lea.vmem %s1, 488
  %652 = vst.msk [vmem:[%s651] sm:$0x80] %vm636, %v635
  %v653 = vld [vmem:[%s0] sm:$0xff]
  %654 = vrot.lane.b32.xlu0 %v653, 112
  %v655 = vpop.permute.xlu0 %654
  %vm656 = vcmask 7168
  %s657 = scalar_lea.vmem %s1, 16
  %658 = vst.msk [vmem:[%s657] sm:$0x1] %vm656, %v655
  %s659 = scalar_lea.vmem %s1, 47
  %660 = vst.msk [vmem:[%s659] sm:$0x2] %vm656, %v655
  %s661 = scalar_lea.vmem %s1, 78
  %662 = vst.msk [vmem:[%s661] sm:$0x4] %vm656, %v655
  %s663 = scalar_lea.vmem %s1, 109
  %664 = vst.msk [vmem:[%s663] sm:$0x8] %vm656, %v655
  %s665 = scalar_lea.vmem %s1, 140
  %666 = vst.msk [vmem:[%s665] sm:$0x10] %vm656, %v655
  %s667 = scalar_lea.vmem %s1, 171
  %668 = vst.msk [vmem:[%s667] sm:$0x20] %vm656, %v655
  %s669 = scalar_lea.vmem %s1, 202
  %670 = vst.msk [vmem:[%s669] sm:$0x40] %vm656, %v655
  %s671 = scalar_lea.vmem %s1, 233
  %672 = vst.msk [vmem:[%s671] sm:$0x80] %vm656, %v655
  %s673 = scalar_lea.vmem %s0, 8
  %v674 = vld [vmem:[%s673] sm:$0xff]
  %675 = vrot.lane.b32.xlu0 %v674, 112
  %v676 = vpop.permute.xlu0 %675
  %vm677 = vcmask 7168
  %s678 = scalar_lea.vmem %s1, 272
  %679 = vst.msk [vmem:[%s678] sm:$0x1] %vm677, %v676
  %s680 = scalar_lea.vmem %s1, 303
  %681 = vst.msk [vmem:[%s680] sm:$0x2] %vm677, %v676
  %s682 = scalar_lea.vmem %s1, 334
  %683 = vst.msk [vmem:[%s682] sm:$0x4] %vm677, %v676
  %s684 = scalar_lea.vmem %s1, 365
  %685 = vst.msk [vmem:[%s684] sm:$0x8] %vm677, %v676
  %s686 = scalar_lea.vmem %s1, 396
  %687 = vst.msk [vmem:[%s686] sm:$0x10] %vm677, %v676
  %s688 = scalar_lea.vmem %s1, 427
  %689 = vst.msk [vmem:[%s688] sm:$0x20] %vm677, %v676
  %s690 = scalar_lea.vmem %s1, 458
  %691 = vst.msk [vmem:[%s690] sm:$0x40] %vm677, %v676
  %s692 = scalar_lea.vmem %s1, 489
  %693 = vst.msk [vmem:[%s692] sm:$0x80] %vm677, %v676
  %v694 = vld [vmem:[%s0] sm:$0xff]
  %695 = vrot.lane.b32.xlu0 %v694, 111
  %v696 = vpop.permute.xlu0 %695
  %vm697 = vcmask 7168
  %s698 = scalar_lea.vmem %s1, 17
  %699 = vst.msk [vmem:[%s698] sm:$0x1] %vm697, %v696
  %s700 = scalar_lea.vmem %s1, 48
  %701 = vst.msk [vmem:[%s700] sm:$0x2] %vm697, %v696
  %s702 = scalar_lea.vmem %s1, 79
  %703 = vst.msk [vmem:[%s702] sm:$0x4] %vm697, %v696
  %s704 = scalar_lea.vmem %s1, 110
  %705 = vst.msk [vmem:[%s704] sm:$0x8] %vm697, %v696
  %s706 = scalar_lea.vmem %s1, 141
  %707 = vst.msk [vmem:[%s706] sm:$0x10] %vm697, %v696
  %s708 = scalar_lea.vmem %s1, 172
  %709 = vst.msk [vmem:[%s708] sm:$0x20] %vm697, %v696
  %s710 = scalar_lea.vmem %s1, 203
  %711 = vst.msk [vmem:[%s710] sm:$0x40] %vm697, %v696
  %s712 = scalar_lea.vmem %s1, 234
  %713 = vst.msk [vmem:[%s712] sm:$0x80] %vm697, %v696
  %s714 = scalar_lea.vmem %s0, 8
  %v715 = vld [vmem:[%s714] sm:$0xff]
  %716 = vrot.lane.b32.xlu0 %v715, 111
  %v717 = vpop.permute.xlu0 %716
  %vm718 = vcmask 7168
  %s719 = scalar_lea.vmem %s1, 273
  %720 = vst.msk [vmem:[%s719] sm:$0x1] %vm718, %v717
  %s721 = scalar_lea.vmem %s1, 304
  %722 = vst.msk [vmem:[%s721] sm:$0x2] %vm718, %v717
  %s723 = scalar_lea.vmem %s1, 335
  %724 = vst.msk [vmem:[%s723] sm:$0x4] %vm718, %v717
  %s725 = scalar_lea.vmem %s1, 366
  %726 = vst.msk [vmem:[%s725] sm:$0x8] %vm718, %v717
  %s727 = scalar_lea.vmem %s1, 397
  %728 = vst.msk [vmem:[%s727] sm:$0x10] %vm718, %v717
  %s729 = scalar_lea.vmem %s1, 428
  %730 = vst.msk [vmem:[%s729] sm:$0x20] %vm718, %v717
  %s731 = scalar_lea.vmem %s1, 459
  %732 = vst.msk [vmem:[%s731] sm:$0x40] %vm718, %v717
  %s733 = scalar_lea.vmem %s1, 490
  %734 = vst.msk [vmem:[%s733] sm:$0x80] %vm718, %v717
  %v735 = vld [vmem:[%s0] sm:$0xff]
  %736 = vrot.lane.b32.xlu0 %v735, 110
  %v737 = vpop.permute.xlu0 %736
  %vm738 = vcmask 7168
  %s739 = scalar_lea.vmem %s1, 18
  %740 = vst.msk [vmem:[%s739] sm:$0x1] %vm738, %v737
  %s741 = scalar_lea.vmem %s1, 49
  %742 = vst.msk [vmem:[%s741] sm:$0x2] %vm738, %v737
  %s743 = scalar_lea.vmem %s1, 80
  %744 = vst.msk [vmem:[%s743] sm:$0x4] %vm738, %v737
  %s745 = scalar_lea.vmem %s1, 111
  %746 = vst.msk [vmem:[%s745] sm:$0x8] %vm738, %v737
  %s747 = scalar_lea.vmem %s1, 142
  %748 = vst.msk [vmem:[%s747] sm:$0x10] %vm738, %v737
  %s749 = scalar_lea.vmem %s1, 173
  %750 = vst.msk [vmem:[%s749] sm:$0x20] %vm738, %v737
  %s751 = scalar_lea.vmem %s1, 204
  %752 = vst.msk [vmem:[%s751] sm:$0x40] %vm738, %v737
  %s753 = scalar_lea.vmem %s1, 235
  %754 = vst.msk [vmem:[%s753] sm:$0x80] %vm738, %v737
  %s755 = scalar_lea.vmem %s0, 8
  %v756 = vld [vmem:[%s755] sm:$0xff]
  %757 = vrot.lane.b32.xlu0 %v756, 110
  %v758 = vpop.permute.xlu0 %757
  %vm759 = vcmask 7168
  %s760 = scalar_lea.vmem %s1, 274
  %761 = vst.msk [vmem:[%s760] sm:$0x1] %vm759, %v758
  %s762 = scalar_lea.vmem %s1, 305
  %763 = vst.msk [vmem:[%s762] sm:$0x2] %vm759, %v758
  %s764 = scalar_lea.vmem %s1, 336
  %765 = vst.msk [vmem:[%s764] sm:$0x4] %vm759, %v758
  %s766 = scalar_lea.vmem %s1, 367
  %767 = vst.msk [vmem:[%s766] sm:$0x8] %vm759, %v758
  %s768 = scalar_lea.vmem %s1, 398
  %769 = vst.msk [vmem:[%s768] sm:$0x10] %vm759, %v758
  %s770 = scalar_lea.vmem %s1, 429
  %771 = vst.msk [vmem:[%s770] sm:$0x20] %vm759, %v758
  %s772 = scalar_lea.vmem %s1, 460
  %773 = vst.msk [vmem:[%s772] sm:$0x40] %vm759, %v758
  %s774 = scalar_lea.vmem %s1, 491
  %775 = vst.msk [vmem:[%s774] sm:$0x80] %vm759, %v758
  %v776 = vld [vmem:[%s0] sm:$0xff]
  %777 = vrot.lane.b32.xlu0 %v776, 109
  %v778 = vpop.permute.xlu0 %777
  %vm779 = vcmask 7168
  %s780 = scalar_lea.vmem %s1, 19
  %781 = vst.msk [vmem:[%s780] sm:$0x1] %vm779, %v778
  %s782 = scalar_lea.vmem %s1, 50
  %783 = vst.msk [vmem:[%s782] sm:$0x2] %vm779, %v778
  %s784 = scalar_lea.vmem %s1, 81
  %785 = vst.msk [vmem:[%s784] sm:$0x4] %vm779, %v778
  %s786 = scalar_lea.vmem %s1, 112
  %787 = vst.msk [vmem:[%s786] sm:$0x8] %vm779, %v778
  %s788 = scalar_lea.vmem %s1, 143
  %789 = vst.msk [vmem:[%s788] sm:$0x10] %vm779, %v778
  %s790 = scalar_lea.vmem %s1, 174
  %791 = vst.msk [vmem:[%s790] sm:$0x20] %vm779, %v778
  %s792 = scalar_lea.vmem %s1, 205
  %793 = vst.msk [vmem:[%s792] sm:$0x40] %vm779, %v778
  %s794 = scalar_lea.vmem %s1, 236
  %795 = vst.msk [vmem:[%s794] sm:$0x80] %vm779, %v778
  %s796 = scalar_lea.vmem %s0, 8
  %v797 = vld [vmem:[%s796] sm:$0xff]
  %798 = vrot.lane.b32.xlu0 %v797, 109
  %v799 = vpop.permute.xlu0 %798
  %vm800 = vcmask 7168
  %s801 = scalar_lea.vmem %s1, 275
  %802 = vst.msk [vmem:[%s801] sm:$0x1] %vm800, %v799
  %s803 = scalar_lea.vmem %s1, 306
  %804 = vst.msk [vmem:[%s803] sm:$0x2] %vm800, %v799
  %s805 = scalar_lea.vmem %s1, 337
  %806 = vst.msk [vmem:[%s805] sm:$0x4] %vm800, %v799
  %s807 = scalar_lea.vmem %s1, 368
  %808 = vst.msk [vmem:[%s807] sm:$0x8] %vm800, %v799
  %s809 = scalar_lea.vmem %s1, 399
  %810 = vst.msk [vmem:[%s809] sm:$0x10] %vm800, %v799
  %s811 = scalar_lea.vmem %s1, 430
  %812 = vst.msk [vmem:[%s811] sm:$0x20] %vm800, %v799
  %s813 = scalar_lea.vmem %s1, 461
  %814 = vst.msk [vmem:[%s813] sm:$0x40] %vm800, %v799
  %s815 = scalar_lea.vmem %s1, 492
  %816 = vst.msk [vmem:[%s815] sm:$0x80] %vm800, %v799
  %v817 = vld [vmem:[%s0] sm:$0xff]
  %818 = vrot.lane.b32.xlu0 %v817, 108
  %v819 = vpop.permute.xlu0 %818
  %vm820 = vcmask 7168
  %s821 = scalar_lea.vmem %s1, 20
  %822 = vst.msk [vmem:[%s821] sm:$0x1] %vm820, %v819
  %s823 = scalar_lea.vmem %s1, 51
  %824 = vst.msk [vmem:[%s823] sm:$0x2] %vm820, %v819
  %s825 = scalar_lea.vmem %s1, 82
  %826 = vst.msk [vmem:[%s825] sm:$0x4] %vm820, %v819
  %s827 = scalar_lea.vmem %s1, 113
  %828 = vst.msk [vmem:[%s827] sm:$0x8] %vm820, %v819
  %s829 = scalar_lea.vmem %s1, 144
  %830 = vst.msk [vmem:[%s829] sm:$0x10] %vm820, %v819
  %s831 = scalar_lea.vmem %s1, 175
  %832 = vst.msk [vmem:[%s831] sm:$0x20] %vm820, %v819
  %s833 = scalar_lea.vmem %s1, 206
  %834 = vst.msk [vmem:[%s833] sm:$0x40] %vm820, %v819
  %s835 = scalar_lea.vmem %s1, 237
  %836 = vst.msk [vmem:[%s835] sm:$0x80] %vm820, %v819
  %s837 = scalar_lea.vmem %s0, 8
  %v838 = vld [vmem:[%s837] sm:$0xff]
  %839 = vrot.lane.b32.xlu0 %v838, 108
  %v840 = vpop.permute.xlu0 %839
  %vm841 = vcmask 7168
  %s842 = scalar_lea.vmem %s1, 276
  %843 = vst.msk [vmem:[%s842] sm:$0x1] %vm841, %v840
  %s844 = scalar_lea.vmem %s1, 307
  %845 = vst.msk [vmem:[%s844] sm:$0x2] %vm841, %v840
  %s846 = scalar_lea.vmem %s1, 338
  %847 = vst.msk [vmem:[%s846] sm:$0x4] %vm841, %v840
  %s848 = scalar_lea.vmem %s1, 369
  %849 = vst.msk [vmem:[%s848] sm:$0x8] %vm841, %v840
  %s850 = scalar_lea.vmem %s1, 400
  %851 = vst.msk [vmem:[%s850] sm:$0x10] %vm841, %v840
  %s852 = scalar_lea.vmem %s1, 431
  %853 = vst.msk [vmem:[%s852] sm:$0x20] %vm841, %v840
  %s854 = scalar_lea.vmem %s1, 462
  %855 = vst.msk [vmem:[%s854] sm:$0x40] %vm841, %v840
  %s856 = scalar_lea.vmem %s1, 493
  %857 = vst.msk [vmem:[%s856] sm:$0x80] %vm841, %v840
  %v858 = vld [vmem:[%s0] sm:$0xff]
  %859 = vrot.lane.b32.xlu0 %v858, 107
  %v860 = vpop.permute.xlu0 %859
  %vm861 = vcmask 7168
  %s862 = scalar_lea.vmem %s1, 21
  %863 = vst.msk [vmem:[%s862] sm:$0x1] %vm861, %v860
  %s864 = scalar_lea.vmem %s1, 52
  %865 = vst.msk [vmem:[%s864] sm:$0x2] %vm861, %v860
  %s866 = scalar_lea.vmem %s1, 83
  %867 = vst.msk [vmem:[%s866] sm:$0x4] %vm861, %v860
  %s868 = scalar_lea.vmem %s1, 114
  %869 = vst.msk [vmem:[%s868] sm:$0x8] %vm861, %v860
  %s870 = scalar_lea.vmem %s1, 145
  %871 = vst.msk [vmem:[%s870] sm:$0x10] %vm861, %v860
  %s872 = scalar_lea.vmem %s1, 176
  %873 = vst.msk [vmem:[%s872] sm:$0x20] %vm861, %v860
  %s874 = scalar_lea.vmem %s1, 207
  %875 = vst.msk [vmem:[%s874] sm:$0x40] %vm861, %v860
  %s876 = scalar_lea.vmem %s1, 238
  %877 = vst.msk [vmem:[%s876] sm:$0x80] %vm861, %v860
  %s878 = scalar_lea.vmem %s0, 8
  %v879 = vld [vmem:[%s878] sm:$0xff]
  %880 = vrot.lane.b32.xlu0 %v879, 107
  %v881 = vpop.permute.xlu0 %880
  %vm882 = vcmask 7168
  %s883 = scalar_lea.vmem %s1, 277
  %884 = vst.msk [vmem:[%s883] sm:$0x1] %vm882, %v881
  %s885 = scalar_lea.vmem %s1, 308
  %886 = vst.msk [vmem:[%s885] sm:$0x2] %vm882, %v881
  %s887 = scalar_lea.vmem %s1, 339
  %888 = vst.msk [vmem:[%s887] sm:$0x4] %vm882, %v881
  %s889 = scalar_lea.vmem %s1, 370
  %890 = vst.msk [vmem:[%s889] sm:$0x8] %vm882, %v881
  %s891 = scalar_lea.vmem %s1, 401
  %892 = vst.msk [vmem:[%s891] sm:$0x10] %vm882, %v881
  %s893 = scalar_lea.vmem %s1, 432
  %894 = vst.msk [vmem:[%s893] sm:$0x20] %vm882, %v881
  %s895 = scalar_lea.vmem %s1, 463
  %896 = vst.msk [vmem:[%s895] sm:$0x40] %vm882, %v881
  %s897 = scalar_lea.vmem %s1, 494
  %898 = vst.msk [vmem:[%s897] sm:$0x80] %vm882, %v881
  %v899 = vld [vmem:[%s0] sm:$0xff]
  %900 = vrot.lane.b32.xlu0 %v899, 106
  %v901 = vpop.permute.xlu0 %900
  %vm902 = vcmask 7168
  %s903 = scalar_lea.vmem %s1, 22
  %904 = vst.msk [vmem:[%s903] sm:$0x1] %vm902, %v901
  %s905 = scalar_lea.vmem %s1, 53
  %906 = vst.msk [vmem:[%s905] sm:$0x2] %vm902, %v901
  %s907 = scalar_lea.vmem %s1, 84
  %908 = vst.msk [vmem:[%s907] sm:$0x4] %vm902, %v901
  %s909 = scalar_lea.vmem %s1, 115
  %910 = vst.msk [vmem:[%s909] sm:$0x8] %vm902, %v901
  %s911 = scalar_lea.vmem %s1, 146
  %912 = vst.msk [vmem:[%s911] sm:$0x10] %vm902, %v901
  %s913 = scalar_lea.vmem %s1, 177
  %914 = vst.msk [vmem:[%s913] sm:$0x20] %vm902, %v901
  %s915 = scalar_lea.vmem %s1, 208
  %916 = vst.msk [vmem:[%s915] sm:$0x40] %vm902, %v901
  %s917 = scalar_lea.vmem %s1, 239
  %918 = vst.msk [vmem:[%s917] sm:$0x80] %vm902, %v901
  %s919 = scalar_lea.vmem %s0, 8
  %v920 = vld [vmem:[%s919] sm:$0xff]
  %921 = vrot.lane.b32.xlu0 %v920, 106
  %v922 = vpop.permute.xlu0 %921
  %vm923 = vcmask 7168
  %s924 = scalar_lea.vmem %s1, 278
  %925 = vst.msk [vmem:[%s924] sm:$0x1] %vm923, %v922
  %s926 = scalar_lea.vmem %s1, 309
  %927 = vst.msk [vmem:[%s926] sm:$0x2] %vm923, %v922
  %s928 = scalar_lea.vmem %s1, 340
  %929 = vst.msk [vmem:[%s928] sm:$0x4] %vm923, %v922
  %s930 = scalar_lea.vmem %s1, 371
  %931 = vst.msk [vmem:[%s930] sm:$0x8] %vm923, %v922
  %s932 = scalar_lea.vmem %s1, 402
  %933 = vst.msk [vmem:[%s932] sm:$0x10] %vm923, %v922
  %s934 = scalar_lea.vmem %s1, 433
  %935 = vst.msk [vmem:[%s934] sm:$0x20] %vm923, %v922
  %s936 = scalar_lea.vmem %s1, 464
  %937 = vst.msk [vmem:[%s936] sm:$0x40] %vm923, %v922
  %s938 = scalar_lea.vmem %s1, 495
  %939 = vst.msk [vmem:[%s938] sm:$0x80] %vm923, %v922
  %v940 = vld [vmem:[%s0] sm:$0xff]
  %941 = vrot.lane.b32.xlu0 %v940, 105
  %v942 = vpop.permute.xlu0 %941
  %vm943 = vcmask 7168
  %s944 = scalar_lea.vmem %s1, 23
  %945 = vst.msk [vmem:[%s944] sm:$0x1] %vm943, %v942
  %s946 = scalar_lea.vmem %s1, 54
  %947 = vst.msk [vmem:[%s946] sm:$0x2] %vm943, %v942
  %s948 = scalar_lea.vmem %s1, 85
  %949 = vst.msk [vmem:[%s948] sm:$0x4] %vm943, %v942
  %s950 = scalar_lea.vmem %s1, 116
  %951 = vst.msk [vmem:[%s950] sm:$0x8] %vm943, %v942
  %s952 = scalar_lea.vmem %s1, 147
  %953 = vst.msk [vmem:[%s952] sm:$0x10] %vm943, %v942
  %s954 = scalar_lea.vmem %s1, 178
  %955 = vst.msk [vmem:[%s954] sm:$0x20] %vm943, %v942
  %s956 = scalar_lea.vmem %s1, 209
  %957 = vst.msk [vmem:[%s956] sm:$0x40] %vm943, %v942
  %s958 = scalar_lea.vmem %s1, 240
  %959 = vst.msk [vmem:[%s958] sm:$0x80] %vm943, %v942
  %s960 = scalar_lea.vmem %s0, 8
  %v961 = vld [vmem:[%s960] sm:$0xff]
  %962 = vrot.lane.b32.xlu0 %v961, 105
  %v963 = vpop.permute.xlu0 %962
  %vm964 = vcmask 7168
  %s965 = scalar_lea.vmem %s1, 279
  %966 = vst.msk [vmem:[%s965] sm:$0x1] %vm964, %v963
  %s967 = scalar_lea.vmem %s1, 310
  %968 = vst.msk [vmem:[%s967] sm:$0x2] %vm964, %v963
  %s969 = scalar_lea.vmem %s1, 341
  %970 = vst.msk [vmem:[%s969] sm:$0x4] %vm964, %v963
  %s971 = scalar_lea.vmem %s1, 372
  %972 = vst.msk [vmem:[%s971] sm:$0x8] %vm964, %v963
  %s973 = scalar_lea.vmem %s1, 403
  %974 = vst.msk [vmem:[%s973] sm:$0x10] %vm964, %v963
  %s975 = scalar_lea.vmem %s1, 434
  %976 = vst.msk [vmem:[%s975] sm:$0x20] %vm964, %v963
  %s977 = scalar_lea.vmem %s1, 465
  %978 = vst.msk [vmem:[%s977] sm:$0x40] %vm964, %v963
  %s979 = scalar_lea.vmem %s1, 496
  %980 = vst.msk [vmem:[%s979] sm:$0x80] %vm964, %v963
  %v981 = vld [vmem:[%s0] sm:$0xff]
  %982 = vrot.lane.b32.xlu0 %v981, 104
  %v983 = vpop.permute.xlu0 %982
  %vm984 = vcmask 7168
  %s985 = scalar_lea.vmem %s1, 24
  %986 = vst.msk [vmem:[%s985] sm:$0x1] %vm984, %v983
  %s987 = scalar_lea.vmem %s1, 55
  %988 = vst.msk [vmem:[%s987] sm:$0x2] %vm984, %v983
  %s989 = scalar_lea.vmem %s1, 86
  %990 = vst.msk [vmem:[%s989] sm:$0x4] %vm984, %v983
  %s991 = scalar_lea.vmem %s1, 117
  %992 = vst.msk [vmem:[%s991] sm:$0x8] %vm984, %v983
  %s993 = scalar_lea.vmem %s1, 148
  %994 = vst.msk [vmem:[%s993] sm:$0x10] %vm984, %v983
  %s995 = scalar_lea.vmem %s1, 179
  %996 = vst.msk [vmem:[%s995] sm:$0x20] %vm984, %v983
  %s997 = scalar_lea.vmem %s1, 210
  %998 = vst.msk [vmem:[%s997] sm:$0x40] %vm984, %v983
  %s999 = scalar_lea.vmem %s1, 241
  %1000 = vst.msk [vmem:[%s999] sm:$0x80] %vm984, %v983
  %s1001 = scalar_lea.vmem %s0, 8
  %v1002 = vld [vmem:[%s1001] sm:$0xff]
  %1003 = vrot.lane.b32.xlu0 %v1002, 104
  %v1004 = vpop.permute.xlu0 %1003
  %vm1005 = vcmask 7168
  %s1006 = scalar_lea.vmem %s1, 280
  %1007 = vst.msk [vmem:[%s1006] sm:$0x1] %vm1005, %v1004
  %s1008 = scalar_lea.vmem %s1, 311
  %1009 = vst.msk [vmem:[%s1008] sm:$0x2] %vm1005, %v1004
  %s1010 = scalar_lea.vmem %s1, 342
  %1011 = vst.msk [vmem:[%s1010] sm:$0x4] %vm1005, %v1004
  %s1012 = scalar_lea.vmem %s1, 373
  %1013 = vst.msk [vmem:[%s1012] sm:$0x8] %vm1005, %v1004
  %s1014 = scalar_lea.vmem %s1, 404
  %1015 = vst.msk [vmem:[%s1014] sm:$0x10] %vm1005, %v1004
  %s1016 = scalar_lea.vmem %s1, 435
  %1017 = vst.msk [vmem:[%s1016] sm:$0x20] %vm1005, %v1004
  %s1018 = scalar_lea.vmem %s1, 466
  %1019 = vst.msk [vmem:[%s1018] sm:$0x40] %vm1005, %v1004
  %s1020 = scalar_lea.vmem %s1, 497
  %1021 = vst.msk [vmem:[%s1020] sm:$0x80] %vm1005, %v1004
  %v1022 = vld [vmem:[%s0] sm:$0xff]
  %1023 = vrot.lane.b32.xlu0 %v1022, 103
  %v1024 = vpop.permute.xlu0 %1023
  %vm1025 = vcmask 7168
  %s1026 = scalar_lea.vmem %s1, 25
  %1027 = vst.msk [vmem:[%s1026] sm:$0x1] %vm1025, %v1024
  %s1028 = scalar_lea.vmem %s1, 56
  %1029 = vst.msk [vmem:[%s1028] sm:$0x2] %vm1025, %v1024
  %s1030 = scalar_lea.vmem %s1, 87
  %1031 = vst.msk [vmem:[%s1030] sm:$0x4] %vm1025, %v1024
  %s1032 = scalar_lea.vmem %s1, 118
  %1033 = vst.msk [vmem:[%s1032] sm:$0x8] %vm1025, %v1024
  %s1034 = scalar_lea.vmem %s1, 149
  %1035 = vst.msk [vmem:[%s1034] sm:$0x10] %vm1025, %v1024
  %s1036 = scalar_lea.vmem %s1, 180
  %1037 = vst.msk [vmem:[%s1036] sm:$0x20] %vm1025, %v1024
  %s1038 = scalar_lea.vmem %s1, 211
  %1039 = vst.msk [vmem:[%s1038] sm:$0x40] %vm1025, %v1024
  %s1040 = scalar_lea.vmem %s1, 242
  %1041 = vst.msk [vmem:[%s1040] sm:$0x80] %vm1025, %v1024
  %s1042 = scalar_lea.vmem %s0, 8
  %v1043 = vld [vmem:[%s1042] sm:$0xff]
  %1044 = vrot.lane.b32.xlu0 %v1043, 103
  %v1045 = vpop.permute.xlu0 %1044
  %vm1046 = vcmask 7168
  %s1047 = scalar_lea.vmem %s1, 281
  %1048 = vst.msk [vmem:[%s1047] sm:$0x1] %vm1046, %v1045
  %s1049 = scalar_lea.vmem %s1, 312
  %1050 = vst.msk [vmem:[%s1049] sm:$0x2] %vm1046, %v1045
  %s1051 = scalar_lea.vmem %s1, 343
  %1052 = vst.msk [vmem:[%s1051] sm:$0x4] %vm1046, %v1045
  %s1053 = scalar_lea.vmem %s1, 374
  %1054 = vst.msk [vmem:[%s1053] sm:$0x8] %vm1046, %v1045
  %s1055 = scalar_lea.vmem %s1, 405
  %1056 = vst.msk [vmem:[%s1055] sm:$0x10] %vm1046, %v1045
  %s1057 = scalar_lea.vmem %s1, 436
  %1058 = vst.msk [vmem:[%s1057] sm:$0x20] %vm1046, %v1045
  %s1059 = scalar_lea.vmem %s1, 467
  %1060 = vst.msk [vmem:[%s1059] sm:$0x40] %vm1046, %v1045
  %s1061 = scalar_lea.vmem %s1, 498
  %1062 = vst.msk [vmem:[%s1061] sm:$0x80] %vm1046, %v1045
  %v1063 = vld [vmem:[%s0] sm:$0xff]
  %1064 = vrot.lane.b32.xlu0 %v1063, 102
  %v1065 = vpop.permute.xlu0 %1064
  %vm1066 = vcmask 7168
  %s1067 = scalar_lea.vmem %s1, 26
  %1068 = vst.msk [vmem:[%s1067] sm:$0x1] %vm1066, %v1065
  %s1069 = scalar_lea.vmem %s1, 57
  %1070 = vst.msk [vmem:[%s1069] sm:$0x2] %vm1066, %v1065
  %s1071 = scalar_lea.vmem %s1, 88
  %1072 = vst.msk [vmem:[%s1071] sm:$0x4] %vm1066, %v1065
  %s1073 = scalar_lea.vmem %s1, 119
  %1074 = vst.msk [vmem:[%s1073] sm:$0x8] %vm1066, %v1065
  %s1075 = scalar_lea.vmem %s1, 150
  %1076 = vst.msk [vmem:[%s1075] sm:$0x10] %vm1066, %v1065
  %s1077 = scalar_lea.vmem %s1, 181
  %1078 = vst.msk [vmem:[%s1077] sm:$0x20] %vm1066, %v1065
  %s1079 = scalar_lea.vmem %s1, 212
  %1080 = vst.msk [vmem:[%s1079] sm:$0x40] %vm1066, %v1065
  %s1081 = scalar_lea.vmem %s1, 243
  %1082 = vst.msk [vmem:[%s1081] sm:$0x80] %vm1066, %v1065
  %s1083 = scalar_lea.vmem %s0, 8
  %v1084 = vld [vmem:[%s1083] sm:$0xff]
  %1085 = vrot.lane.b32.xlu0 %v1084, 102
  %v1086 = vpop.permute.xlu0 %1085
  %vm1087 = vcmask 7168
  %s1088 = scalar_lea.vmem %s1, 282
  %1089 = vst.msk [vmem:[%s1088] sm:$0x1] %vm1087, %v1086
  %s1090 = scalar_lea.vmem %s1, 313
  %1091 = vst.msk [vmem:[%s1090] sm:$0x2] %vm1087, %v1086
  %s1092 = scalar_lea.vmem %s1, 344
  %1093 = vst.msk [vmem:[%s1092] sm:$0x4] %vm1087, %v1086
  %s1094 = scalar_lea.vmem %s1, 375
  %1095 = vst.msk [vmem:[%s1094] sm:$0x8] %vm1087, %v1086
  %s1096 = scalar_lea.vmem %s1, 406
  %1097 = vst.msk [vmem:[%s1096] sm:$0x10] %vm1087, %v1086
  %s1098 = scalar_lea.vmem %s1, 437
  %1099 = vst.msk [vmem:[%s1098] sm:$0x20] %vm1087, %v1086
  %s1100 = scalar_lea.vmem %s1, 468
  %1101 = vst.msk [vmem:[%s1100] sm:$0x40] %vm1087, %v1086
  %s1102 = scalar_lea.vmem %s1, 499
  %1103 = vst.msk [vmem:[%s1102] sm:$0x80] %vm1087, %v1086
  %v1104 = vld [vmem:[%s0] sm:$0xff]
  %1105 = vrot.lane.b32.xlu0 %v1104, 101
  %v1106 = vpop.permute.xlu0 %1105
  %vm1107 = vcmask 7168
  %s1108 = scalar_lea.vmem %s1, 27
  %1109 = vst.msk [vmem:[%s1108] sm:$0x1] %vm1107, %v1106
  %s1110 = scalar_lea.vmem %s1, 58
  %1111 = vst.msk [vmem:[%s1110] sm:$0x2] %vm1107, %v1106
  %s1112 = scalar_lea.vmem %s1, 89
  %1113 = vst.msk [vmem:[%s1112] sm:$0x4] %vm1107, %v1106
  %s1114 = scalar_lea.vmem %s1, 120
  %1115 = vst.msk [vmem:[%s1114] sm:$0x8] %vm1107, %v1106
  %s1116 = scalar_lea.vmem %s1, 151
  %1117 = vst.msk [vmem:[%s1116] sm:$0x10] %vm1107, %v1106
  %s1118 = scalar_lea.vmem %s1, 182
  %1119 = vst.msk [vmem:[%s1118] sm:$0x20] %vm1107, %v1106
  %s1120 = scalar_lea.vmem %s1, 213
  %1121 = vst.msk [vmem:[%s1120] sm:$0x40] %vm1107, %v1106
  %s1122 = scalar_lea.vmem %s1, 244
  %1123 = vst.msk [vmem:[%s1122] sm:$0x80] %vm1107, %v1106
  %s1124 = scalar_lea.vmem %s0, 8
  %v1125 = vld [vmem:[%s1124] sm:$0xff]
  %1126 = vrot.lane.b32.xlu0 %v1125, 101
  %v1127 = vpop.permute.xlu0 %1126
  %vm1128 = vcmask 7168
  %s1129 = scalar_lea.vmem %s1, 283
  %1130 = vst.msk [vmem:[%s1129] sm:$0x1] %vm1128, %v1127
  %s1131 = scalar_lea.vmem %s1, 314
  %1132 = vst.msk [vmem:[%s1131] sm:$0x2] %vm1128, %v1127
  %s1133 = scalar_lea.vmem %s1, 345
  %1134 = vst.msk [vmem:[%s1133] sm:$0x4] %vm1128, %v1127
  %s1135 = scalar_lea.vmem %s1, 376
  %1136 = vst.msk [vmem:[%s1135] sm:$0x8] %vm1128, %v1127
  %s1137 = scalar_lea.vmem %s1, 407
  %1138 = vst.msk [vmem:[%s1137] sm:$0x10] %vm1128, %v1127
  %s1139 = scalar_lea.vmem %s1, 438
  %1140 = vst.msk [vmem:[%s1139] sm:$0x20] %vm1128, %v1127
  %s1141 = scalar_lea.vmem %s1, 469
  %1142 = vst.msk [vmem:[%s1141] sm:$0x40] %vm1128, %v1127
  %s1143 = scalar_lea.vmem %s1, 500
  %1144 = vst.msk [vmem:[%s1143] sm:$0x80] %vm1128, %v1127
  %v1145 = vld [vmem:[%s0] sm:$0xff]
  %1146 = vrot.lane.b32.xlu0 %v1145, 100
  %v1147 = vpop.permute.xlu0 %1146
  %vm1148 = vcmask 7168
  %s1149 = scalar_lea.vmem %s1, 28
  %1150 = vst.msk [vmem:[%s1149] sm:$0x1] %vm1148, %v1147
  %s1151 = scalar_lea.vmem %s1, 59
  %1152 = vst.msk [vmem:[%s1151] sm:$0x2] %vm1148, %v1147
  %s1153 = scalar_lea.vmem %s1, 90
  %1154 = vst.msk [vmem:[%s1153] sm:$0x4] %vm1148, %v1147
  %s1155 = scalar_lea.vmem %s1, 121
  %1156 = vst.msk [vmem:[%s1155] sm:$0x8] %vm1148, %v1147
  %s1157 = scalar_lea.vmem %s1, 152
  %1158 = vst.msk [vmem:[%s1157] sm:$0x10] %vm1148, %v1147
  %s1159 = scalar_lea.vmem %s1, 183
  %1160 = vst.msk [vmem:[%s1159] sm:$0x20] %vm1148, %v1147
  %s1161 = scalar_lea.vmem %s1, 214
  %1162 = vst.msk [vmem:[%s1161] sm:$0x40] %vm1148, %v1147
  %s1163 = scalar_lea.vmem %s1, 245
  %1164 = vst.msk [vmem:[%s1163] sm:$0x80] %vm1148, %v1147
  %s1165 = scalar_lea.vmem %s0, 8
  %v1166 = vld [vmem:[%s1165] sm:$0xff]
  %1167 = vrot.lane.b32.xlu0 %v1166, 100
  %v1168 = vpop.permute.xlu0 %1167
  %vm1169 = vcmask 7168
  %s1170 = scalar_lea.vmem %s1, 284
  %1171 = vst.msk [vmem:[%s1170] sm:$0x1] %vm1169, %v1168
  %s1172 = scalar_lea.vmem %s1, 315
  %1173 = vst.msk [vmem:[%s1172] sm:$0x2] %vm1169, %v1168
  %s1174 = scalar_lea.vmem %s1, 346
  %1175 = vst.msk [vmem:[%s1174] sm:$0x4] %vm1169, %v1168
  %s1176 = scalar_lea.vmem %s1, 377
  %1177 = vst.msk [vmem:[%s1176] sm:$0x8] %vm1169, %v1168
  %s1178 = scalar_lea.vmem %s1, 408
  %1179 = vst.msk [vmem:[%s1178] sm:$0x10] %vm1169, %v1168
  %s1180 = scalar_lea.vmem %s1, 439
  %1181 = vst.msk [vmem:[%s1180] sm:$0x20] %vm1169, %v1168
  %s1182 = scalar_lea.vmem %s1, 470
  %1183 = vst.msk [vmem:[%s1182] sm:$0x40] %vm1169, %v1168
  %s1184 = scalar_lea.vmem %s1, 501
  %1185 = vst.msk [vmem:[%s1184] sm:$0x80] %vm1169, %v1168
  %v1186 = vld [vmem:[%s0] sm:$0xff]
  %1187 = vrot.lane.b32.xlu0 %v1186, 99
  %v1188 = vpop.permute.xlu0 %1187
  %vm1189 = vcmask 7168
  %s1190 = scalar_lea.vmem %s1, 29
  %1191 = vst.msk [vmem:[%s1190] sm:$0x1] %vm1189, %v1188
  %s1192 = scalar_lea.vmem %s1, 60
  %1193 = vst.msk [vmem:[%s1192] sm:$0x2] %vm1189, %v1188
  %s1194 = scalar_lea.vmem %s1, 91
  %1195 = vst.msk [vmem:[%s1194] sm:$0x4] %vm1189, %v1188
  %s1196 = scalar_lea.vmem %s1, 122
  %1197 = vst.msk [vmem:[%s1196] sm:$0x8] %vm1189, %v1188
  %s1198 = scalar_lea.vmem %s1, 153
  %1199 = vst.msk [vmem:[%s1198] sm:$0x10] %vm1189, %v1188
  %s1200 = scalar_lea.vmem %s1, 184
  %1201 = vst.msk [vmem:[%s1200] sm:$0x20] %vm1189, %v1188
  %s1202 = scalar_lea.vmem %s1, 215
  %1203 = vst.msk [vmem:[%s1202] sm:$0x40] %vm1189, %v1188
  %s1204 = scalar_lea.vmem %s1, 246
  %1205 = vst.msk [vmem:[%s1204] sm:$0x80] %vm1189, %v1188
  %s1206 = scalar_lea.vmem %s0, 8
  %v1207 = vld [vmem:[%s1206] sm:$0xff]
  %1208 = vrot.lane.b32.xlu0 %v1207, 99
  %v1209 = vpop.permute.xlu0 %1208
  %vm1210 = vcmask 7168
  %s1211 = scalar_lea.vmem %s1, 285
  %1212 = vst.msk [vmem:[%s1211] sm:$0x1] %vm1210, %v1209
  %s1213 = scalar_lea.vmem %s1, 316
  %1214 = vst.msk [vmem:[%s1213] sm:$0x2] %vm1210, %v1209
  %s1215 = scalar_lea.vmem %s1, 347
  %1216 = vst.msk [vmem:[%s1215] sm:$0x4] %vm1210, %v1209
  %s1217 = scalar_lea.vmem %s1, 378
  %1218 = vst.msk [vmem:[%s1217] sm:$0x8] %vm1210, %v1209
  %s1219 = scalar_lea.vmem %s1, 409
  %1220 = vst.msk [vmem:[%s1219] sm:$0x10] %vm1210, %v1209
  %s1221 = scalar_lea.vmem %s1, 440
  %1222 = vst.msk [vmem:[%s1221] sm:$0x20] %vm1210, %v1209
  %s1223 = scalar_lea.vmem %s1, 471
  %1224 = vst.msk [vmem:[%s1223] sm:$0x40] %vm1210, %v1209
  %s1225 = scalar_lea.vmem %s1, 502
  %1226 = vst.msk [vmem:[%s1225] sm:$0x80] %vm1210, %v1209
  %v1227 = vld [vmem:[%s0] sm:$0xff]
  %1228 = vrot.lane.b32.xlu0 %v1227, 98
  %v1229 = vpop.permute.xlu0 %1228
  %vm1230 = vcmask 7168
  %s1231 = scalar_lea.vmem %s1, 30
  %1232 = vst.msk [vmem:[%s1231] sm:$0x1] %vm1230, %v1229
  %s1233 = scalar_lea.vmem %s1, 61
  %1234 = vst.msk [vmem:[%s1233] sm:$0x2] %vm1230, %v1229
  %s1235 = scalar_lea.vmem %s1, 92
  %1236 = vst.msk [vmem:[%s1235] sm:$0x4] %vm1230, %v1229
  %s1237 = scalar_lea.vmem %s1, 123
  %1238 = vst.msk [vmem:[%s1237] sm:$0x8] %vm1230, %v1229
  %s1239 = scalar_lea.vmem %s1, 154
  %1240 = vst.msk [vmem:[%s1239] sm:$0x10] %vm1230, %v1229
  %s1241 = scalar_lea.vmem %s1, 185
  %1242 = vst.msk [vmem:[%s1241] sm:$0x20] %vm1230, %v1229
  %s1243 = scalar_lea.vmem %s1, 216
  %1244 = vst.msk [vmem:[%s1243] sm:$0x40] %vm1230, %v1229
  %s1245 = scalar_lea.vmem %s1, 247
  %1246 = vst.msk [vmem:[%s1245] sm:$0x80] %vm1230, %v1229
  %s1247 = scalar_lea.vmem %s0, 8
  %v1248 = vld [vmem:[%s1247] sm:$0xff]
  %1249 = vrot.lane.b32.xlu0 %v1248, 98
  %v1250 = vpop.permute.xlu0 %1249
  %vm1251 = vcmask 7168
  %s1252 = scalar_lea.vmem %s1, 286
  %1253 = vst.msk [vmem:[%s1252] sm:$0x1] %vm1251, %v1250
  %s1254 = scalar_lea.vmem %s1, 317
  %1255 = vst.msk [vmem:[%s1254] sm:$0x2] %vm1251, %v1250
  %s1256 = scalar_lea.vmem %s1, 348
  %1257 = vst.msk [vmem:[%s1256] sm:$0x4] %vm1251, %v1250
  %s1258 = scalar_lea.vmem %s1, 379
  %1259 = vst.msk [vmem:[%s1258] sm:$0x8] %vm1251, %v1250
  %s1260 = scalar_lea.vmem %s1, 410
  %1261 = vst.msk [vmem:[%s1260] sm:$0x10] %vm1251, %v1250
  %s1262 = scalar_lea.vmem %s1, 441
  %1263 = vst.msk [vmem:[%s1262] sm:$0x20] %vm1251, %v1250
  %s1264 = scalar_lea.vmem %s1, 472
  %1265 = vst.msk [vmem:[%s1264] sm:$0x40] %vm1251, %v1250
  %s1266 = scalar_lea.vmem %s1, 503
  %1267 = vst.msk [vmem:[%s1266] sm:$0x80] %vm1251, %v1250
  %v1268 = vld [vmem:[%s0] sm:$0xff]
  %1269 = vrot.lane.b32.xlu0 %v1268, 97
  %v1270 = vpop.permute.xlu0 %1269
  %vm1271 = vcmask 7168
  %s1272 = scalar_lea.vmem %s1, 31
  %1273 = vst.msk [vmem:[%s1272] sm:$0x1] %vm1271, %v1270
  %s1274 = scalar_lea.vmem %s1, 62
  %1275 = vst.msk [vmem:[%s1274] sm:$0x2] %vm1271, %v1270
  %s1276 = scalar_lea.vmem %s1, 93
  %1277 = vst.msk [vmem:[%s1276] sm:$0x4] %vm1271, %v1270
  %s1278 = scalar_lea.vmem %s1, 124
  %1279 = vst.msk [vmem:[%s1278] sm:$0x8] %vm1271, %v1270
  %s1280 = scalar_lea.vmem %s1, 155
  %1281 = vst.msk [vmem:[%s1280] sm:$0x10] %vm1271, %v1270
  %s1282 = scalar_lea.vmem %s1, 186
  %1283 = vst.msk [vmem:[%s1282] sm:$0x20] %vm1271, %v1270
  %s1284 = scalar_lea.vmem %s1, 217
  %1285 = vst.msk [vmem:[%s1284] sm:$0x40] %vm1271, %v1270
  %s1286 = scalar_lea.vmem %s1, 248
  %1287 = vst.msk [vmem:[%s1286] sm:$0x80] %vm1271, %v1270
  %s1288 = scalar_lea.vmem %s0, 8
  %v1289 = vld [vmem:[%s1288] sm:$0xff]
  %1290 = vrot.lane.b32.xlu0 %v1289, 97
  %v1291 = vpop.permute.xlu0 %1290
  %vm1292 = vcmask 7168
  %s1293 = scalar_lea.vmem %s1, 287
  %1294 = vst.msk [vmem:[%s1293] sm:$0x1] %vm1292, %v1291
  %s1295 = scalar_lea.vmem %s1, 318
  %1296 = vst.msk [vmem:[%s1295] sm:$0x2] %vm1292, %v1291
  %s1297 = scalar_lea.vmem %s1, 349
  %1298 = vst.msk [vmem:[%s1297] sm:$0x4] %vm1292, %v1291
  %s1299 = scalar_lea.vmem %s1, 380
  %1300 = vst.msk [vmem:[%s1299] sm:$0x8] %vm1292, %v1291
  %s1301 = scalar_lea.vmem %s1, 411
  %1302 = vst.msk [vmem:[%s1301] sm:$0x10] %vm1292, %v1291
  %s1303 = scalar_lea.vmem %s1, 442
  %1304 = vst.msk [vmem:[%s1303] sm:$0x20] %vm1292, %v1291
  %s1305 = scalar_lea.vmem %s1, 473
  %1306 = vst.msk [vmem:[%s1305] sm:$0x40] %vm1292, %v1291
  %s1307 = scalar_lea.vmem %s1, 504
  %1308 = vst.msk [vmem:[%s1307] sm:$0x80] %vm1292, %v1291

// kernel: _lambda_.7
$region0: #{_lambda_.7}
  #allocation0 [shape = 'u32[]', space=smem, size = 0x4, offset = 0x4, fixed_abs, tag = 'smem constant byte address 0x4 - core index']
  #allocation1 [shape = 'u32[144,128]{1,0:T(1,128)}', space=vmem, size = 0x12000, scoped, tag = 'internal scratch']
  %s0 = inlined_call_operand.vmem [shape: bf16[256,128], index: 0, kind: input, shape index: {}]
  %s1 = inlined_call_operand.vmem [shape: bf16[32,256], index: 1, kind: input, shape index: {}]
  %s2 = inlined_call_operand.vmem [shape: f32[256,1], index: 2, kind: input, shape index: {}]
  %s3 = inlined_call_operand.vmem [shape: f32[256,1], index: 3, kind: input, shape index: {}]
  %s4 = inlined_call_operand.vmem [shape: f32[32,1], index: 4, kind: input, shape index: {}]
  %s5 = inlined_call_operand.vmem [shape: bf16[32,128], index: 5, kind: output, shape index: {0}]
  %s6 = inlined_call_operand.vmem [shape: f32[1,32,1], index: 6, kind: output, shape index: {1}]
  %s7 = inlined_call_operand.vmem [shape: f32[1,32,1], index: 7, kind: output, shape index: {2}]
  %8 = xla_tuple %s5, %s6, %s7
  %s9 = sld [smem:[#allocation0]]
  $region46: #{_lambda_.7} parent=0
    _
  %s11 = ssub.s32 1, %s9
  %s12 = scalar_select 0, %s11, %s9
  // Predicated region
  $region2: #{_lambda_.7} parent=0 // pred_check
    _
  $region3: #{_lambda_.7} parent=0 // pred_check_branch
    %14 = sbr.rel (0) target = $region5
  $region4: #{_lambda_.7} parent=0 // pred_region
    _
  $region5: #{_lambda_.7} parent=0 // pred_fallthru
    _
  // Predicated region
  $region6: #{_lambda_.7} parent=0 // pred_check
    _
  $region7: #{_lambda_.7} parent=0 // pred_check_branch
    %16 = sbr.rel (0) target = $region9
  $region8: #{_lambda_.7} parent=0 // pred_region
    _
  $region9: #{_lambda_.7} parent=0 // pred_fallthru
    _
  // Predicated region
  $region10: #{_lambda_.7} parent=0 // pred_check
    _
  $region11: #{_lambda_.7} parent=0 // pred_check_branch
    %18 = sbr.rel (0) target = $region13
  $region12: #{_lambda_.7} parent=0 // pred_region
    _
  $region13: #{_lambda_.7} parent=0 // pred_fallthru
    _
  // Predicated region
  $region14: #{_lambda_.7} parent=0 // pred_check
    _
  $region15: #{_lambda_.7} parent=0 // pred_check_branch
    %20 = sbr.rel (0) target = $region17
  $region16: #{_lambda_.7} parent=0 // pred_region
    _
  $region17: #{_lambda_.7} parent=0 // pred_fallthru
    _
  // Predicated region
  $region18: #{_lambda_.7} parent=0 // pred_check
    _
  $region19: #{_lambda_.7} parent=0 // pred_check_branch
    %22 = sbr.rel (0) target = $region21
  $region20: #{_lambda_.7} parent=0 // pred_region
    _
  $region21: #{_lambda_.7} parent=0 // pred_fallthru
    _
  %v24 = vld [vmem:[%s0] sm:$0xf]
  %v25 = vld [vmem:[%s0 + $0x4] sm:$0xf]
  %v26 = vld [vmem:[%s0 + $0x8] sm:$0xf]
  %v27 = vld [vmem:[%s0 + $0xc] sm:$0xf]
  %v28 = vld [vmem:[%s0 + $0x10] sm:$0xf]
  %v29 = vld [vmem:[%s0 + $0x14] sm:$0xf]
  %v30 = vld [vmem:[%s0 + $0x18] sm:$0xf]
  %v31 = vld [vmem:[%s0 + $0x1c] sm:$0xf]
  %v32 = vld [vmem:[%s0 + $0x20] sm:$0xf]
  %v33 = vld [vmem:[%s0 + $0x24] sm:$0xf]
  %v34 = vld [vmem:[%s0 + $0x28] sm:$0xf]
  %v35 = vld [vmem:[%s0 + $0x2c] sm:$0xf]
  %v36 = vld [vmem:[%s0 + $0x30] sm:$0xf]
  %v37 = vld [vmem:[%s0 + $0x34] sm:$0xf]
  %v38 = vld [vmem:[%s0 + $0x38] sm:$0xf]
  %v39 = vld [vmem:[%s0 + $0x3c] sm:$0xf]
  %v40 = vld [vmem:[%s0 + $0x40] sm:$0xf]
  %v41 = vld [vmem:[%s0 + $0x44] sm:$0xf]
  %v42 = vld [vmem:[%s0 + $0x48] sm:$0xf]
  %v43 = vld [vmem:[%s0 + $0x4c] sm:$0xf]
  %v44 = vld [vmem:[%s0 + $0x50] sm:$0xf]
  %v45 = vld [vmem:[%s0 + $0x54] sm:$0xf]
  %v46 = vld [vmem:[%s0 + $0x58] sm:$0xf]
  %v47 = vld [vmem:[%s0 + $0x5c] sm:$0xf]
  %v48 = vld [vmem:[%s0 + $0x60] sm:$0xf]
  %v49 = vld [vmem:[%s0 + $0x64] sm:$0xf]
  %v50 = vld [vmem:[%s0 + $0x68] sm:$0xf]
  %v51 = vld [vmem:[%s0 + $0x6c] sm:$0xf]
  %v52 = vld [vmem:[%s0 + $0x70] sm:$0xf]
  %v53 = vld [vmem:[%s0 + $0x74] sm:$0xf]
  %v54 = vld [vmem:[%s0 + $0x78] sm:$0xf]
  %v55 = vld [vmem:[%s0 + $0x7c] sm:$0xf]
  %v56 = vunpack.c.l.bf16 %v24
  %v57 = vunpack.c.l.bf16 %v25
  %v58 = vunpack.c.l.bf16 %v26
  %v59 = vunpack.c.l.bf16 %v27
  %v60 = vunpack.c.l.bf16 %v28
  %v61 = vunpack.c.l.bf16 %v29
  %v62 = vunpack.c.l.bf16 %v30
  %v63 = vunpack.c.l.bf16 %v31
  %v64 = vunpack.c.l.bf16 %v32
  %v65 = vunpack.c.l.bf16 %v33
  %v66 = vunpack.c.l.bf16 %v34
  %v67 = vunpack.c.l.bf16 %v35
  %v68 = vunpack.c.l.bf16 %v36
  %v69 = vunpack.c.l.bf16 %v37
  %v70 = vunpack.c.l.bf16 %v38
  %v71 = vunpack.c.l.bf16 %v39
  %v72 = vunpack.c.l.bf16 %v40
  %v73 = vunpack.c.l.bf16 %v41
  %v74 = vunpack.c.l.bf16 %v42
  %v75 = vunpack.c.l.bf16 %v43
  %v76 = vunpack.c.l.bf16 %v44
  %v77 = vunpack.c.l.bf16 %v45
  %v78 = vunpack.c.l.bf16 %v46
  %v79 = vunpack.c.l.bf16 %v47
  %v80 = vunpack.c.l.bf16 %v48
  %v81 = vunpack.c.l.bf16 %v49
  %v82 = vunpack.c.l.bf16 %v50
  %v83 = vunpack.c.l.bf16 %v51
  %v84 = vunpack.c.l.bf16 %v52
  %v85 = vunpack.c.l.bf16 %v53
  %v86 = vunpack.c.l.bf16 %v54
  %v87 = vunpack.c.l.bf16 %v55
  %v88 = vld [vmem:[%s2] sm:$0xff]
  %v89 = vld [vmem:[%s2 + $0x8] sm:$0xff]
  %v90 = vld [vmem:[%s2 + $0x10] sm:$0xff]
  %v91 = vld [vmem:[%s2 + $0x18] sm:$0xff]
  %v92 = vld [vmem:[%s2 + $0x20] sm:$0xff]
  %v93 = vld [vmem:[%s2 + $0x28] sm:$0xff]
  %v94 = vld [vmem:[%s2 + $0x30] sm:$0xff]
  %v95 = vld [vmem:[%s2 + $0x38] sm:$0xff]
  %v96 = vld [vmem:[%s2 + $0x40] sm:$0xff]
  %v97 = vld [vmem:[%s2 + $0x48] sm:$0xff]
  %v98 = vld [vmem:[%s2 + $0x50] sm:$0xff]
  %v99 = vld [vmem:[%s2 + $0x58] sm:$0xff]
  %v100 = vld [vmem:[%s2 + $0x60] sm:$0xff]
  %v101 = vld [vmem:[%s2 + $0x68] sm:$0xff]
  %v102 = vld [vmem:[%s2 + $0x70] sm:$0xff]
  %v103 = vld [vmem:[%s2 + $0x78] sm:$0xff]
  %v104 = vld [vmem:[%s2 + $0x80] sm:$0xff]
  %v105 = vld [vmem:[%s2 + $0x88] sm:$0xff]
  %v106 = vld [vmem:[%s2 + $0x90] sm:$0xff]
  %v107 = vld [vmem:[%s2 + $0x98] sm:$0xff]
  %v108 = vld [vmem:[%s2 + $0xa0] sm:$0xff]
  %v109 = vld [vmem:[%s2 + $0xa8] sm:$0xff]
  %v110 = vld [vmem:[%s2 + $0xb0] sm:$0xff]
  %v111 = vld [vmem:[%s2 + $0xb8] sm:$0xff]
  %v112 = vld [vmem:[%s2 + $0xc0] sm:$0xff]
  %v113 = vld [vmem:[%s2 + $0xc8] sm:$0xff]
  %v114 = vld [vmem:[%s2 + $0xd0] sm:$0xff]
  %v115 = vld [vmem:[%s2 + $0xd8] sm:$0xff]
  %v116 = vld [vmem:[%s2 + $0xe0] sm:$0xff]
  %v117 = vld [vmem:[%s2 + $0xe8] sm:$0xff]
  %v118 = vld [vmem:[%s2 + $0xf0] sm:$0xff]
  %v119 = vld [vmem:[%s2 + $0xf8] sm:$0xff]
  %121 = vset.pattern.permute.xlu0 0
  %122 = vperm.xlu0 %121, %v88
  %v123 = vpop.permute.xlu0 %122
  %126 = vset.pattern.permute.xlu0 0
  %127 = vperm.xlu0 %126, %v89
  %v128 = vpop.permute.xlu0 %127
  %131 = vset.pattern.permute.xlu0 0
  %132 = vperm.xlu0 %131, %v90
  %v133 = vpop.permute.xlu0 %132
  %136 = vset.pattern.permute.xlu0 0
  %137 = vperm.xlu0 %136, %v91
  %v138 = vpop.permute.xlu0 %137
  %141 = vset.pattern.permute.xlu0 0
  %142 = vperm.xlu0 %141, %v92
  %v143 = vpop.permute.xlu0 %142
  %146 = vset.pattern.permute.xlu0 0
  %147 = vperm.xlu0 %146, %v93
  %v148 = vpop.permute.xlu0 %147
  %151 = vset.pattern.permute.xlu0 0
  %152 = vperm.xlu0 %151, %v94
  %v153 = vpop.permute.xlu0 %152
  %156 = vset.pattern.permute.xlu0 0
  %157 = vperm.xlu0 %156, %v95
  %v158 = vpop.permute.xlu0 %157
  %161 = vset.pattern.permute.xlu0 0
  %162 = vperm.xlu0 %161, %v96
  %v163 = vpop.permute.xlu0 %162
  %166 = vset.pattern.permute.xlu0 0
  %167 = vperm.xlu0 %166, %v97
  %v168 = vpop.permute.xlu0 %167
  %171 = vset.pattern.permute.xlu0 0
  %172 = vperm.xlu0 %171, %v98
  %v173 = vpop.permute.xlu0 %172
  %176 = vset.pattern.permute.xlu0 0
  %177 = vperm.xlu0 %176, %v99
  %v178 = vpop.permute.xlu0 %177
  %181 = vset.pattern.permute.xlu0 0
  %182 = vperm.xlu0 %181, %v100
  %v183 = vpop.permute.xlu0 %182
  %186 = vset.pattern.permute.xlu0 0
  %187 = vperm.xlu0 %186, %v101
  %v188 = vpop.permute.xlu0 %187
  %191 = vset.pattern.permute.xlu0 0
  %192 = vperm.xlu0 %191, %v102
  %v193 = vpop.permute.xlu0 %192
  %196 = vset.pattern.permute.xlu0 0
  %197 = vperm.xlu0 %196, %v103
  %v198 = vpop.permute.xlu0 %197
  %201 = vset.pattern.permute.xlu0 0
  %202 = vperm.xlu0 %201, %v104
  %v203 = vpop.permute.xlu0 %202
  %206 = vset.pattern.permute.xlu0 0
  %207 = vperm.xlu0 %206, %v105
  %v208 = vpop.permute.xlu0 %207
  %211 = vset.pattern.permute.xlu0 0
  %212 = vperm.xlu0 %211, %v106
  %v213 = vpop.permute.xlu0 %212
  %216 = vset.pattern.permute.xlu0 0
  %217 = vperm.xlu0 %216, %v107
  %v218 = vpop.permute.xlu0 %217
  %221 = vset.pattern.permute.xlu0 0
  %222 = vperm.xlu0 %221, %v108
  %v223 = vpop.permute.xlu0 %222
  %226 = vset.pattern.permute.xlu0 0
  %227 = vperm.xlu0 %226, %v109
  %v228 = vpop.permute.xlu0 %227
  %231 = vset.pattern.permute.xlu0 0
  %232 = vperm.xlu0 %231, %v110
  %v233 = vpop.permute.xlu0 %232
  %236 = vset.pattern.permute.xlu0 0
  %237 = vperm.xlu0 %236, %v111
  %v238 = vpop.permute.xlu0 %237
  %241 = vset.pattern.permute.xlu0 0
  %242 = vperm.xlu0 %241, %v112
  %v243 = vpop.permute.xlu0 %242
  %246 = vset.pattern.permute.xlu0 0
  %247 = vperm.xlu0 %246, %v113
  %v248 = vpop.permute.xlu0 %247
  %251 = vset.pattern.permute.xlu0 0
  %252 = vperm.xlu0 %251, %v114
  %v253 = vpop.permute.xlu0 %252
  %256 = vset.pattern.permute.xlu0 0
  %257 = vperm.xlu0 %256, %v115
  %v258 = vpop.permute.xlu0 %257
  %261 = vset.pattern.permute.xlu0 0
  %262 = vperm.xlu0 %261, %v116
  %v263 = vpop.permute.xlu0 %262
  %266 = vset.pattern.permute.xlu0 0
  %267 = vperm.xlu0 %266, %v117
  %v268 = vpop.permute.xlu0 %267
  %271 = vset.pattern.permute.xlu0 0
  %272 = vperm.xlu0 %271, %v118
  %v273 = vpop.permute.xlu0 %272
  %276 = vset.pattern.permute.xlu0 0
  %277 = vperm.xlu0 %276, %v119
  %v278 = vpop.permute.xlu0 %277
  %v280 = vmul.f32 %v56, %v123
  %v281 = vmul.f32 %v57, %v128
  %v282 = vmul.f32 %v58, %v133
  %v283 = vmul.f32 %v59, %v138
  %v284 = vmul.f32 %v60, %v143
  %v285 = vmul.f32 %v61, %v148
  %v286 = vmul.f32 %v62, %v153
  %v287 = vmul.f32 %v63, %v158
  %v288 = vmul.f32 %v64, %v163
  %v289 = vmul.f32 %v65, %v168
  %v290 = vmul.f32 %v66, %v173
  %v291 = vmul.f32 %v67, %v178
  %v292 = vmul.f32 %v68, %v183
  %v293 = vmul.f32 %v69, %v188
  %v294 = vmul.f32 %v70, %v193
  %v295 = vmul.f32 %v71, %v198
  %v296 = vmul.f32 %v72, %v203
  %v297 = vmul.f32 %v73, %v208
  %v298 = vmul.f32 %v74, %v213
  %v299 = vmul.f32 %v75, %v218
  %v300 = vmul.f32 %v76, %v223
  %v301 = vmul.f32 %v77, %v228
  %v302 = vmul.f32 %v78, %v233
  %v303 = vmul.f32 %v79, %v238
  %v304 = vmul.f32 %v80, %v243
  %v305 = vmul.f32 %v81, %v248
  %v306 = vmul.f32 %v82, %v253
  %v307 = vmul.f32 %v83, %v258
  %v308 = vmul.f32 %v84, %v263
  %v309 = vmul.f32 %v85, %v268
  %v310 = vmul.f32 %v86, %v273
  %v311 = vmul.f32 %v87, %v278
  %v312 = vld [vmem:[%s3] sm:$0xff]
  %v313 = vld [vmem:[%s3 + $0x8] sm:$0xff]
  %v314 = vld [vmem:[%s3 + $0x10] sm:$0xff]
  %v315 = vld [vmem:[%s3 + $0x18] sm:$0xff]
  %v316 = vld [vmem:[%s3 + $0x20] sm:$0xff]
  %v317 = vld [vmem:[%s3 + $0x28] sm:$0xff]
  %v318 = vld [vmem:[%s3 + $0x30] sm:$0xff]
  %v319 = vld [vmem:[%s3 + $0x38] sm:$0xff]
  %v320 = vld [vmem:[%s3 + $0x40] sm:$0xff]
  %v321 = vld [vmem:[%s3 + $0x48] sm:$0xff]
  %v322 = vld [vmem:[%s3 + $0x50] sm:$0xff]
  %v323 = vld [vmem:[%s3 + $0x58] sm:$0xff]
  %v324 = vld [vmem:[%s3 + $0x60] sm:$0xff]
  %v325 = vld [vmem:[%s3 + $0x68] sm:$0xff]
  %v326 = vld [vmem:[%s3 + $0x70] sm:$0xff]
  %v327 = vld [vmem:[%s3 + $0x78] sm:$0xff]
  %v328 = vld [vmem:[%s3 + $0x80] sm:$0xff]
  %v329 = vld [vmem:[%s3 + $0x88] sm:$0xff]
  %v330 = vld [vmem:[%s3 + $0x90] sm:$0xff]
  %v331 = vld [vmem:[%s3 + $0x98] sm:$0xff]
  %v332 = vld [vmem:[%s3 + $0xa0] sm:$0xff]
  %v333 = vld [vmem:[%s3 + $0xa8] sm:$0xff]
  %v334 = vld [vmem:[%s3 + $0xb0] sm:$0xff]
  %v335 = vld [vmem:[%s3 + $0xb8] sm:$0xff]
  %v336 = vld [vmem:[%s3 + $0xc0] sm:$0xff]
  %v337 = vld [vmem:[%s3 + $0xc8] sm:$0xff]
  %v338 = vld [vmem:[%s3 + $0xd0] sm:$0xff]
  %v339 = vld [vmem:[%s3 + $0xd8] sm:$0xff]
  %v340 = vld [vmem:[%s3 + $0xe0] sm:$0xff]
  %v341 = vld [vmem:[%s3 + $0xe8] sm:$0xff]
  %v342 = vld [vmem:[%s3 + $0xf0] sm:$0xff]
  %v343 = vld [vmem:[%s3 + $0xf8] sm:$0xff]
  %345 = vset.pattern.permute.xlu0 0
  %346 = vperm.xlu0 %345, %v312
  %v347 = vpop.permute.xlu0 %346
  %350 = vset.pattern.permute.xlu0 0
  %351 = vperm.xlu0 %350, %v313
  %v352 = vpop.permute.xlu0 %351
  %355 = vset.pattern.permute.xlu0 0
  %356 = vperm.xlu0 %355, %v314
  %v357 = vpop.permute.xlu0 %356
  %360 = vset.pattern.permute.xlu0 0
  %361 = vperm.xlu0 %360, %v315
  %v362 = vpop.permute.xlu0 %361
  %365 = vset.pattern.permute.xlu0 0
  %366 = vperm.xlu0 %365, %v316
  %v367 = vpop.permute.xlu0 %366
  %370 = vset.pattern.permute.xlu0 0
  %371 = vperm.xlu0 %370, %v317
  %v372 = vpop.permute.xlu0 %371
  %375 = vset.pattern.permute.xlu0 0
  %376 = vperm.xlu0 %375, %v318
  %v377 = vpop.permute.xlu0 %376
  %380 = vset.pattern.permute.xlu0 0
  %381 = vperm.xlu0 %380, %v319
  %v382 = vpop.permute.xlu0 %381
  %385 = vset.pattern.permute.xlu0 0
  %386 = vperm.xlu0 %385, %v320
  %v387 = vpop.permute.xlu0 %386
  %390 = vset.pattern.permute.xlu0 0
  %391 = vperm.xlu0 %390, %v321
  %v392 = vpop.permute.xlu0 %391
  %395 = vset.pattern.permute.xlu0 0
  %396 = vperm.xlu0 %395, %v322
  %v397 = vpop.permute.xlu0 %396
  %400 = vset.pattern.permute.xlu0 0
  %401 = vperm.xlu0 %400, %v323
  %v402 = vpop.permute.xlu0 %401
  %405 = vset.pattern.permute.xlu0 0
  %406 = vperm.xlu0 %405, %v324
  %v407 = vpop.permute.xlu0 %406
  %410 = vset.pattern.permute.xlu0 0
  %411 = vperm.xlu0 %410, %v325
  %v412 = vpop.permute.xlu0 %411
  %415 = vset.pattern.permute.xlu0 0
  %416 = vperm.xlu0 %415, %v326
  %v417 = vpop.permute.xlu0 %416
  %420 = vset.pattern.permute.xlu0 0
  %421 = vperm.xlu0 %420, %v327
  %v422 = vpop.permute.xlu0 %421
  %425 = vset.pattern.permute.xlu0 0
  %426 = vperm.xlu0 %425, %v328
  %v427 = vpop.permute.xlu0 %426
  %430 = vset.pattern.permute.xlu0 0
  %431 = vperm.xlu0 %430, %v329
  %v432 = vpop.permute.xlu0 %431
  %435 = vset.pattern.permute.xlu0 0
  %436 = vperm.xlu0 %435, %v330
  %v437 = vpop.permute.xlu0 %436
  %440 = vset.pattern.permute.xlu0 0
  %441 = vperm.xlu0 %440, %v331
  %v442 = vpop.permute.xlu0 %441
  %445 = vset.pattern.permute.xlu0 0
  %446 = vperm.xlu0 %445, %v332
  %v447 = vpop.permute.xlu0 %446
  %450 = vset.pattern.permute.xlu0 0
  %451 = vperm.xlu0 %450, %v333
  %v452 = vpop.permute.xlu0 %451
  %455 = vset.pattern.permute.xlu0 0
  %456 = vperm.xlu0 %455, %v334
  %v457 = vpop.permute.xlu0 %456
  %460 = vset.pattern.permute.xlu0 0
  %461 = vperm.xlu0 %460, %v335
  %v462 = vpop.permute.xlu0 %461
  %465 = vset.pattern.permute.xlu0 0
  %466 = vperm.xlu0 %465, %v336
  %v467 = vpop.permute.xlu0 %466
  %470 = vset.pattern.permute.xlu0 0
  %471 = vperm.xlu0 %470, %v337
  %v472 = vpop.permute.xlu0 %471
  %475 = vset.pattern.permute.xlu0 0
  %476 = vperm.xlu0 %475, %v338
  %v477 = vpop.permute.xlu0 %476
  %480 = vset.pattern.permute.xlu0 0
  %481 = vperm.xlu0 %480, %v339
  %v482 = vpop.permute.xlu0 %481
  %485 = vset.pattern.permute.xlu0 0
  %486 = vperm.xlu0 %485, %v340
  %v487 = vpop.permute.xlu0 %486
  %490 = vset.pattern.permute.xlu0 0
  %491 = vperm.xlu0 %490, %v341
  %v492 = vpop.permute.xlu0 %491
  %495 = vset.pattern.permute.xlu0 0
  %496 = vperm.xlu0 %495, %v342
  %v497 = vpop.permute.xlu0 %496
  %500 = vset.pattern.permute.xlu0 0
  %501 = vperm.xlu0 %500, %v343
  %v502 = vpop.permute.xlu0 %501
  %v504 = vadd.f32 %v280, %v347
  %v505 = vadd.f32 %v281, %v352
  %v506 = vadd.f32 %v282, %v357
  %v507 = vadd.f32 %v283, %v362
  %v508 = vadd.f32 %v284, %v367
  %v509 = vadd.f32 %v285, %v372
  %v510 = vadd.f32 %v286, %v377
  %v511 = vadd.f32 %v287, %v382
  %v512 = vadd.f32 %v288, %v387
  %v513 = vadd.f32 %v289, %v392
  %v514 = vadd.f32 %v290, %v397
  %v515 = vadd.f32 %v291, %v402
  %v516 = vadd.f32 %v292, %v407
  %v517 = vadd.f32 %v293, %v412
  %v518 = vadd.f32 %v294, %v417
  %v519 = vadd.f32 %v295, %v422
  %v520 = vadd.f32 %v296, %v427
  %v521 = vadd.f32 %v297, %v432
  %v522 = vadd.f32 %v298, %v437
  %v523 = vadd.f32 %v299, %v442
  %v524 = vadd.f32 %v300, %v447
  %v525 = vadd.f32 %v301, %v452
  %v526 = vadd.f32 %v302, %v457
  %v527 = vadd.f32 %v303, %v462
  %v528 = vadd.f32 %v304, %v467
  %v529 = vadd.f32 %v305, %v472
  %v530 = vadd.f32 %v306, %v477
  %v531 = vadd.f32 %v307, %v482
  %v532 = vadd.f32 %v308, %v487
  %v533 = vadd.f32 %v309, %v492
  %v534 = vadd.f32 %v310, %v497
  %v535 = vadd.f32 %v311, %v502
  %vm536 = vcmp.ge.f32.partialorder %v504, 0.0
  %vm537 = vcmp.ge.f32.partialorder %v505, 0.0
  %vm538 = vcmp.ge.f32.partialorder %v506, 0.0
  %vm539 = vcmp.ge.f32.partialorder %v507, 0.0
  %vm540 = vcmp.ge.f32.partialorder %v508, 0.0
  %vm541 = vcmp.ge.f32.partialorder %v509, 0.0
  %vm542 = vcmp.ge.f32.partialorder %v510, 0.0
  %vm543 = vcmp.ge.f32.partialorder %v511, 0.0
  %vm544 = vcmp.ge.f32.partialorder %v512, 0.0
  %vm545 = vcmp.ge.f32.partialorder %v513, 0.0
  %vm546 = vcmp.ge.f32.partialorder %v514, 0.0
  %vm547 = vcmp.ge.f32.partialorder %v515, 0.0
  %vm548 = vcmp.ge.f32.partialorder %v516, 0.0
  %vm549 = vcmp.ge.f32.partialorder %v517, 0.0
  %vm550 = vcmp.ge.f32.partialorder %v518, 0.0
  %vm551 = vcmp.ge.f32.partialorder %v519, 0.0
  %vm552 = vcmp.ge.f32.partialorder %v520, 0.0
  %vm553 = vcmp.ge.f32.partialorder %v521, 0.0
  %vm554 = vcmp.ge.f32.partialorder %v522, 0.0
  %vm555 = vcmp.ge.f32.partialorder %v523, 0.0
  %vm556 = vcmp.ge.f32.partialorder %v524, 0.0
  %vm557 = vcmp.ge.f32.partialorder %v525, 0.0
  %vm558 = vcmp.ge.f32.partialorder %v526, 0.0
  %vm559 = vcmp.ge.f32.partialorder %v527, 0.0
  %vm560 = vcmp.ge.f32.partialorder %v528, 0.0
  %vm561 = vcmp.ge.f32.partialorder %v529, 0.0
  %vm562 = vcmp.ge.f32.partialorder %v530, 0.0
  %vm563 = vcmp.ge.f32.partialorder %v531, 0.0
  %vm564 = vcmp.ge.f32.partialorder %v532, 0.0
  %vm565 = vcmp.ge.f32.partialorder %v533, 0.0
  %vm566 = vcmp.ge.f32.partialorder %v534, 0.0
  %vm567 = vcmp.ge.f32.partialorder %v535, 0.0
  %v568 = vmul.f32 %v504, 0.2
  %v569 = vmul.f32 %v505, 0.2
  %v570 = vmul.f32 %v506, 0.2
  %v571 = vmul.f32 %v507, 0.2
  %v572 = vmul.f32 %v508, 0.2
  %v573 = vmul.f32 %v509, 0.2
  %v574 = vmul.f32 %v510, 0.2
  %v575 = vmul.f32 %v511, 0.2
  %v576 = vmul.f32 %v512, 0.2
  %v577 = vmul.f32 %v513, 0.2
  %v578 = vmul.f32 %v514, 0.2
  %v579 = vmul.f32 %v515, 0.2
  %v580 = vmul.f32 %v516, 0.2
  %v581 = vmul.f32 %v517, 0.2
  %v582 = vmul.f32 %v518, 0.2
  %v583 = vmul.f32 %v519, 0.2
  %v584 = vmul.f32 %v520, 0.2
  %v585 = vmul.f32 %v521, 0.2
  %v586 = vmul.f32 %v522, 0.2
  %v587 = vmul.f32 %v523, 0.2
  %v588 = vmul.f32 %v524, 0.2
  %v589 = vmul.f32 %v525, 0.2
  %v590 = vmul.f32 %v526, 0.2
  %v591 = vmul.f32 %v527, 0.2
  %v592 = vmul.f32 %v528, 0.2
  %v593 = vmul.f32 %v529, 0.2
  %v594 = vmul.f32 %v530, 0.2
  %v595 = vmul.f32 %v531, 0.2
  %v596 = vmul.f32 %v532, 0.2
  %v597 = vmul.f32 %v533, 0.2
  %v598 = vmul.f32 %v534, 0.2
  %v599 = vmul.f32 %v535, 0.2
  %v600 = vsel %vm536, %v504, %v568
  %v601 = vsel %vm537, %v505, %v569
  %v602 = vsel %vm538, %v506, %v570
  %v603 = vsel %vm539, %v507, %v571
  %v604 = vsel %vm540, %v508, %v572
  %v605 = vsel %vm541, %v509, %v573
  %v606 = vsel %vm542, %v510, %v574
  %v607 = vsel %vm543, %v511, %v575
  %v608 = vsel %vm544, %v512, %v576
  %v609 = vsel %vm545, %v513, %v577
  %v610 = vsel %vm546, %v514, %v578
  %v611 = vsel %vm547, %v515, %v579
  %v612 = vsel %vm548, %v516, %v580
  %v613 = vsel %vm549, %v517, %v581
  %v614 = vsel %vm550, %v518, %v582
  %v615 = vsel %vm551, %v519, %v583
  %v616 = vsel %vm552, %v520, %v584
  %v617 = vsel %vm553, %v521, %v585
  %v618 = vsel %vm554, %v522, %v586
  %v619 = vsel %vm555, %v523, %v587
  %v620 = vsel %vm556, %v524, %v588
  %v621 = vsel %vm557, %v525, %v589
  %v622 = vsel %vm558, %v526, %v590
  %v623 = vsel %vm559, %v527, %v591
  %v624 = vsel %vm560, %v528, %v592
  %v625 = vsel %vm561, %v529, %v593
  %v626 = vsel %vm562, %v530, %v594
  %v627 = vsel %vm563, %v531, %v595
  %v628 = vsel %vm564, %v532, %v596
  %v629 = vsel %vm565, %v533, %v597
  %v630 = vsel %vm566, %v534, %v598
  %v631 = vsel %vm567, %v535, %v599
  %v632 = vpack.c.bf16 %v601, %v600
  %v633 = vpack.c.bf16 %v603, %v602
  %v634 = vpack.c.bf16 %v605, %v604
  %v635 = vpack.c.bf16 %v607, %v606
  %v636 = vpack.c.bf16 %v609, %v608
  %v637 = vpack.c.bf16 %v611, %v610
  %v638 = vpack.c.bf16 %v613, %v612
  %v639 = vpack.c.bf16 %v615, %v614
  %v640 = vpack.c.bf16 %v617, %v616
  %v641 = vpack.c.bf16 %v619, %v618
  %v642 = vpack.c.bf16 %v621, %v620
  %v643 = vpack.c.bf16 %v623, %v622
  %v644 = vpack.c.bf16 %v625, %v624
  %v645 = vpack.c.bf16 %v627, %v626
  %v646 = vpack.c.bf16 %v629, %v628
  %v647 = vpack.c.bf16 %v631, %v630
  %v648 = vld [vmem:[%s1] sm:$0xff]
  %v649 = vld [vmem:[%s1 + $0x8] sm:$0xff]
  %v650 = vld [vmem:[%s1 + $0x10] sm:$0xff]
  %v651 = vld [vmem:[%s1 + $0x18] sm:$0xff]
  %v656 = vunpack.c.l.b16 %v648
  %v657 = vunpack.c.h.b16 %v648
  %v658 = vunpack.c.l.b16 %v649
  %v659 = vunpack.c.h.b16 %v649
  %v660 = vunpack.c.l.b16 %v650
  %v661 = vunpack.c.h.b16 %v650
  %v662 = vunpack.c.l.b16 %v651
  %v663 = vunpack.c.h.b16 %v651
  %v664 = vpack.c.b16 %v658, %v656
  %v665 = vpack.c.b16 %v659, %v657
  %v666 = vpack.c.b16 %v662, %v660
  %v667 = vpack.c.b16 %v663, %v661
  %672 = vmatprep.subr.bf16.mxu0 0
  %673 = vmatpush1.bf16.msra.mxu0 %v632
  %674 = vmatprep.subr.bf16.mxu0 0
  %675 = vmatpush1.bf16.msra.mxu0 %v633
  %676 = vmatprep.subr.bf16.mxu0 0
  %677 = vmatpush1.bf16.msra.mxu0 %v634
  %678 = vmatprep.subr.bf16.mxu0 0
  %679 = vmatpush1.bf16.msra.mxu0 %v635
  %680 = vmatprep.subr.bf16.mxu0 0
  %681 = vmatpush1.bf16.msra.mxu0 %v636
  %682 = vmatprep.subr.bf16.mxu0 0
  %683 = vmatpush1.bf16.msra.mxu0 %v637
  %684 = vmatprep.subr.bf16.mxu0 0
  %685 = vmatpush1.bf16.msra.mxu0 %v638
  %686 = vmatprep.subr.bf16.mxu0 0
  %687 = vmatpush1.bf16.msra.mxu0 %v639
  %688 = vmatprep.subr.bf16.mxu0 0
  %689 = vmatpush1.bf16.msra.mxu0 %v640
  %690 = vmatprep.subr.bf16.mxu0 0
  %691 = vmatpush1.bf16.msra.mxu0 %v641
  %692 = vmatprep.subr.bf16.mxu0 0
  %693 = vmatpush1.bf16.msra.mxu0 %v642
  %694 = vmatprep.subr.bf16.mxu0 0
  %695 = vmatpush1.bf16.msra.mxu0 %v643
  %696 = vmatprep.subr.bf16.mxu0 0
  %697 = vmatpush1.bf16.msra.mxu0 %v644
  %698 = vmatprep.subr.bf16.mxu0 0
  %699 = vmatpush1.bf16.msra.mxu0 %v645
  %700 = vmatprep.subr.bf16.mxu0 0
  %701 = vmatpush1.bf16.msra.mxu0 %v646
  %702 = vmatprep.subr.bf16.mxu0 0
  %703 = vmatpush1.bf16.msra.mxu0 %v647
  %704 = vmatprep.mubr.bf16.mxu0 %v665
  %705 = vmatmul.mubr.bf16.gmra.mrb[0].mxu0 %v664
  %v706 = vpop.f32.mrb[0].mxu0
  %v707 = vadd.f32 0.0, %v706
  %v708 = vpop.f32.mrb[0].mxu0
  %v709 = vpop.f32.mrb[0].mxu0
  %v710 = vadd.f32 0.0, %v709
  %v711 = vpop.f32.mrb[0].mxu0
  %712 = vmatprep.mubr.bf16.mxu0 %v667
  %713 = vmatmul.mubr.bf16.gmra.mrb[0].mxu0 %v666
  %v714 = vpop.f32.mrb[0].mxu0
  %v715 = vadd.f32 0.0, %v714
  %v716 = vpop.f32.mrb[0].mxu0
  %v717 = vpop.f32.mrb[0].mxu0
  %v718 = vadd.f32 0.0, %v717
  %v719 = vpop.f32.mrb[0].mxu0
  %720 = vdwg.mxu0
  %s721 = smul.u32 0, 128
  %v722 = vlaneseq
  %v723 = vand.u32 %v722, 127
  %v724 = vstv %s721
  %v725 = vadd.s32 %v724, %v723
  %vm726 = vcmp.lt.s32.totalorder %v725, 72
  %v727 = vsel %vm726, 1, 0
  %vm728 = vcmp.eq.s32.totalorder %v727, 1
  %v729 = vsel %vm728, %v707, 0.0
  %v730 = vsel %vm728, %v710, 0.0
  %v731 = vsel %vm728, %v715, 0.0
  %v732 = vsel %vm728, %v718, 0.0
  %733 = vadd.xlane.f32.xlu0 %v729
  %v734 = vpop.xlane.xlu0 %733
  %735 = vadd.xlane.f32.xlu0 %v730
  %v736 = vpop.xlane.xlu0 %735
  %737 = vadd.xlane.f32.xlu0 %v731
  %v738 = vpop.xlane.xlu0 %737
  %739 = vadd.xlane.f32.xlu0 %v732
  %v740 = vpop.xlane.xlu0 %739
  %vm741 = vcmask 7168
  %742 = vst.msk [vmem:[%s6] sm:$0xff] %vm741, %v734
  %743 = vst.msk [vmem:[%s6 + $0x8] sm:$0xff] %vm741, %v736
  %744 = vst.msk [vmem:[%s6 + $0x10] sm:$0xff] %vm741, %v738
  %745 = vst.msk [vmem:[%s6 + $0x18] sm:$0xff] %vm741, %v740
  %v746 = vmul.f32 %v729, %v729
  %v747 = vmul.f32 %v730, %v730
  %v748 = vmul.f32 %v731, %v731
  %v749 = vmul.f32 %v732, %v732
  %750 = vadd.xlane.f32.xlu0 %v746
  %v751 = vpop.xlane.xlu0 %750
  %752 = vadd.xlane.f32.xlu0 %v747
  %v753 = vpop.xlane.xlu0 %752
  %754 = vadd.xlane.f32.xlu0 %v748
  %v755 = vpop.xlane.xlu0 %754
  %756 = vadd.xlane.f32.xlu0 %v749
  %v757 = vpop.xlane.xlu0 %756
  %758 = vst.msk [vmem:[%s7] sm:$0xff] %vm741, %v751
  %759 = vst.msk [vmem:[%s7 + $0x8] sm:$0xff] %vm741, %v753
  %760 = vst.msk [vmem:[%s7 + $0x10] sm:$0xff] %vm741, %v755
  %761 = vst.msk [vmem:[%s7 + $0x18] sm:$0xff] %vm741, %v757
  %v762 = vpack.c.bf16 %v710, %v707
  %v763 = vpack.c.bf16 %v718, %v715
  %v766 = vunpack.c.l.b16 %v762
  %v767 = vunpack.c.h.b16 %v762
  %v768 = vunpack.c.l.b16 %v763
  %v769 = vunpack.c.h.b16 %v763
  %v770 = vpack.c.b16 %v766, %v766
  %v771 = vpack.c.b16 %v767, %v767
  %v772 = vpack.c.b16 %v768, %v768
  %v773 = vpack.c.b16 %v769, %v769
  %778 = vst [vmem:[%s5] sm:$0xf] %v770
  %779 = vst [vmem:[%s5 + $0x4] sm:$0xf] %v771
  %780 = vst [vmem:[%s5 + $0x8] sm:$0xf] %v772
  %781 = vst [vmem:[%s5 + $0xc] sm:$0xf] %v773
  // Predicated region
  $region22: #{_lambda_.7} parent=0 // pred_check
    _
  $region23: #{_lambda_.7} parent=0 // pred_check_branch
    %783 = sbr.rel (0) target = $region25
  $region24: #{_lambda_.7} parent=0 // pred_region
    _
  $region25: #{_lambda_.7} parent=0 // pred_fallthru
    _
  // Predicated region
  $region26: #{_lambda_.7} parent=0 // pred_check
    _
  $region27: #{_lambda_.7} parent=0 // pred_check_branch
    %785 = sbr.rel (0) target = $region29
  $region28: #{_lambda_.7} parent=0 // pred_region
    _
  $region29: #{_lambda_.7} parent=0 // pred_fallthru
    _
  // Predicated region
  $region30: #{_lambda_.7} parent=0 // pred_check
    _
  $region31: #{_lambda_.7} parent=0 // pred_check_branch
    %787 = sbr.rel (0) target = $region33
  $region32: #{_lambda_.7} parent=0 // pred_region
    _
  $region33: #{_lambda_.7} parent=0 // pred_fallthru
    _
  // Predicated region
  $region34: #{_lambda_.7} parent=0 // pred_check
    _
  $region35: #{_lambda_.7} parent=0 // pred_check_branch
    %789 = sbr.rel (0) target = $region37
  $region36: #{_lambda_.7} parent=0 // pred_region
    _
  $region37: #{_lambda_.7} parent=0 // pred_fallthru
    _
  // Predicated region
  $region38: #{_lambda_.7} parent=0 // pred_check
    _
  $region39: #{_lambda_.7} parent=0 // pred_check_branch
    %791 = sbr.rel (0) target = $region41
  $region40: #{_lambda_.7} parent=0 // pred_region
    _
  $region41: #{_lambda_.7} parent=0 // pred_fallthru
    _
  // Predicated region
  $region42: #{_lambda_.7} parent=0 // pred_check
    _
  $region43: #{_lambda_.7} parent=0 // pred_check_branch
    %793 = sbr.rel (0) target = $region45
  $region44: #{_lambda_.7} parent=0 // pred_region
    _
  $region45: #{_lambda_.7} parent=0 // pred_fallthru
    _

// kernel: tile.53
$region0: #{tile.53}
  #allocation0 [shape = 's32[1]{0}', space=sflag, size = 0x4, scoped, tag = 'scoped memory for tile.53']
  %s0 = inlined_call_operand.vmem [shape: f32[64], index: 0, kind: input, shape index: {}]
  %s1 = inlined_call_operand.vmem [shape: f32[16,64], index: 1, kind: output, shape index: {}]
  // Predicated region
  $region2: #{tile.53} parent=0 // pred_check
    _
  $region3: #{tile.53} parent=0 // pred_check_branch
    %3 = sbr.rel (0) target = $region5
  $region4: #{tile.53} parent=0 // pred_region
    _
  $region5: #{tile.53} parent=0 // pred_fallthru
    _
  %v4 = vld [vmem:[%s0] ss:$0 sm:$0xff]
  %5 = vst [vmem:[%s1] sm:$0xff] %v4
  %s6 = scalar_lea.vmem %s1, 8
  %7 = vst [vmem:[%s6] sm:$0xff] %v4

// kernel: tile.4
$region0: #{tile.4}
  %s0 = inlined_call_operand.vmem [shape: f32[16,64], index: 0, kind: input, shape index: {}]
  %s1 = inlined_call_operand.vmem [shape: f32[1024,1], index: 1, kind: output, shape index: {}]
  %v2 = vld [vmem:[%s0] sm:$0xff]
  %vm3 = vcmask 7168
  %4 = vst.msk [vmem:[%s1] sm:$0x1] %vm3, %v2
  %s5 = scalar_lea.vmem %s1, 63
  %6 = vst.msk [vmem:[%s5] sm:$0x2] %vm3, %v2
  %s7 = scalar_lea.vmem %s1, 126
  %8 = vst.msk [vmem:[%s7] sm:$0x4] %vm3, %v2
  %s9 = scalar_lea.vmem %s1, 189
  %10 = vst.msk [vmem:[%s9] sm:$0x8] %vm3, %v2
  %s11 = scalar_lea.vmem %s1, 252
  %12 = vst.msk [vmem:[%s11] sm:$0x10] %vm3, %v2
  %s13 = scalar_lea.vmem %s1, 315
  %14 = vst.msk [vmem:[%s13] sm:$0x20] %vm3, %v2
  %s15 = scalar_lea.vmem %s1, 378
  %16 = vst.msk [vmem:[%s15] sm:$0x40] %vm3, %v2
  %s17 = scalar_lea.vmem %s1, 441
  %18 = vst.msk [vmem:[%s17] sm:$0x80] %vm3, %v2
  %s19 = scalar_lea.vmem %s0, 8
  %v20 = vld [vmem:[%s19] sm:$0xff]
  %vm21 = vcmask 7168
  %s22 = scalar_lea.vmem %s1, 512
  %23 = vst.msk [vmem:[%s22] sm:$0x1] %vm21, %v20
  %s24 = scalar_lea.vmem %s1, 575
  %25 = vst.msk [vmem:[%s24] sm:$0x2] %vm21, %v20
  %s26 = scalar_lea.vmem %s1, 638
  %27 = vst.msk [vmem:[%s26] sm:$0x4] %vm21, %v20
  %s28 = scalar_lea.vmem %s1, 701
  %29 = vst.msk [vmem:[%s28] sm:$0x8] %vm21, %v20
  %s30 = scalar_lea.vmem %s1, 764
  %31 = vst.msk [vmem:[%s30] sm:$0x10] %vm21, %v20
  %s32 = scalar_lea.vmem %s1, 827
  %33 = vst.msk [vmem:[%s32] sm:$0x20] %vm21, %v20
  %s34 = scalar_lea.vmem %s1, 890
  %35 = vst.msk [vmem:[%s34] sm:$0x40] %vm21, %v20
  %s36 = scalar_lea.vmem %s1, 953
  %37 = vst.msk [vmem:[%s36] sm:$0x80] %vm21, %v20
  %v38 = vld [vmem:[%s0] sm:$0xff]
  %39 = vrot.lane.b32.xlu0 %v38, 127
  %v40 = vpop.permute.xlu0 %39
  %vm41 = vcmask 7168
  %s42 = scalar_lea.vmem %s1, 1
  %43 = vst.msk [vmem:[%s42] sm:$0x1] %vm41, %v40
  %s44 = scalar_lea.vmem %s1, 64
  %45 = vst.msk [vmem:[%s44] sm:$0x2] %vm41, %v40
  %s46 = scalar_lea.vmem %s1, 127
  %47 = vst.msk [vmem:[%s46] sm:$0x4] %vm41, %v40
  %s48 = scalar_lea.vmem %s1, 190
  %49 = vst.msk [vmem:[%s48] sm:$0x8] %vm41, %v40
  %s50 = scalar_lea.vmem %s1, 253
  %51 = vst.msk [vmem:[%s50] sm:$0x10] %vm41, %v40
  %s52 = scalar_lea.vmem %s1, 316
  %53 = vst.msk [vmem:[%s52] sm:$0x20] %vm41, %v40
  %s54 = scalar_lea.vmem %s1, 379
  %55 = vst.msk [vmem:[%s54] sm:$0x40] %vm41, %v40
  %s56 = scalar_lea.vmem %s1, 442
  %57 = vst.msk [vmem:[%s56] sm:$0x80] %vm41, %v40
  %s58 = scalar_lea.vmem %s0, 8
  %v59 = vld [vmem:[%s58] sm:$0xff]
  %60 = vrot.lane.b32.xlu0 %v59, 127
  %v61 = vpop.permute.xlu0 %60
  %vm62 = vcmask 7168
  %s63 = scalar_lea.vmem %s1, 513
  %64 = vst.msk [vmem:[%s63] sm:$0x1] %vm62, %v61
  %s65 = scalar_lea.vmem %s1, 576
  %66 = vst.msk [vmem:[%s65] sm:$0x2] %vm62, %v61
  %s67 = scalar_lea.vmem %s1, 639
  %68 = vst.msk [vmem:[%s67] sm:$0x4] %vm62, %v61
  %s69 = scalar_lea.vmem %s1, 702
  %70 = vst.msk [vmem:[%s69] sm:$0x8] %vm62, %v61
  %s71 = scalar_lea.vmem %s1, 765
  %72 = vst.msk [vmem:[%s71] sm:$0x10] %vm62, %v61
  %s73 = scalar_lea.vmem %s1, 828
  %74 = vst.msk [vmem:[%s73] sm:$0x20] %vm62, %v61
  %s75 = scalar_lea.vmem %s1, 891
  %76 = vst.msk [vmem:[%s75] sm:$0x40] %vm62, %v61
  %s77 = scalar_lea.vmem %s1, 954
  %78 = vst.msk [vmem:[%s77] sm:$0x80] %vm62, %v61
  %v79 = vld [vmem:[%s0] sm:$0xff]
  %80 = vrot.lane.b32.xlu0 %v79, 126
  %v81 = vpop.permute.xlu0 %80
  %vm82 = vcmask 7168
  %s83 = scalar_lea.vmem %s1, 2
  %84 = vst.msk [vmem:[%s83] sm:$0x1] %vm82, %v81
  %s85 = scalar_lea.vmem %s1, 65
  %86 = vst.msk [vmem:[%s85] sm:$0x2] %vm82, %v81
  %s87 = scalar_lea.vmem %s1, 128
  %88 = vst.msk [vmem:[%s87] sm:$0x4] %vm82, %v81
  %s89 = scalar_lea.vmem %s1, 191
  %90 = vst.msk [vmem:[%s89] sm:$0x8] %vm82, %v81
  %s91 = scalar_lea.vmem %s1, 254
  %92 = vst.msk [vmem:[%s91] sm:$0x10] %vm82, %v81
  %s93 = scalar_lea.vmem %s1, 317
  %94 = vst.msk [vmem:[%s93] sm:$0x20] %vm82, %v81
  %s95 = scalar_lea.vmem %s1, 380
  %96 = vst.msk [vmem:[%s95] sm:$0x40] %vm82, %v81
  %s97 = scalar_lea.vmem %s1, 443
  %98 = vst.msk [vmem:[%s97] sm:$0x80] %vm82, %v81
  %s99 = scalar_lea.vmem %s0, 8
  %v100 = vld [vmem:[%s99] sm:$0xff]
  %101 = vrot.lane.b32.xlu0 %v100, 126
  %v102 = vpop.permute.xlu0 %101
  %vm103 = vcmask 7168
  %s104 = scalar_lea.vmem %s1, 514
  %105 = vst.msk [vmem:[%s104] sm:$0x1] %vm103, %v102
  %s106 = scalar_lea.vmem %s1, 577
  %107 = vst.msk [vmem:[%s106] sm:$0x2] %vm103, %v102
  %s108 = scalar_lea.vmem %s1, 640
  %109 = vst.msk [vmem:[%s108] sm:$0x4] %vm103, %v102
  %s110 = scalar_lea.vmem %s1, 703
  %111 = vst.msk [vmem:[%s110] sm:$0x8] %vm103, %v102
  %s112 = scalar_lea.vmem %s1, 766
  %113 = vst.msk [vmem:[%s112] sm:$0x10] %vm103, %v102
  %s114 = scalar_lea.vmem %s1, 829
  %115 = vst.msk [vmem:[%s114] sm:$0x20] %vm103, %v102
  %s116 = scalar_lea.vmem %s1, 892
  %117 = vst.msk [vmem:[%s116] sm:$0x40] %vm103, %v102
  %s118 = scalar_lea.vmem %s1, 955
  %119 = vst.msk [vmem:[%s118] sm:$0x80] %vm103, %v102
  %v120 = vld [vmem:[%s0] sm:$0xff]
  %121 = vrot.lane.b32.xlu0 %v120, 125
  %v122 = vpop.permute.xlu0 %121
  %vm123 = vcmask 7168
  %s124 = scalar_lea.vmem %s1, 3
  %125 = vst.msk [vmem:[%s124] sm:$0x1] %vm123, %v122
  %s126 = scalar_lea.vmem %s1, 66
  %127 = vst.msk [vmem:[%s126] sm:$0x2] %vm123, %v122
  %s128 = scalar_lea.vmem %s1, 129
  %129 = vst.msk [vmem:[%s128] sm:$0x4] %vm123, %v122
  %s130 = scalar_lea.vmem %s1, 192
  %131 = vst.msk [vmem:[%s130] sm:$0x8] %vm123, %v122
  %s132 = scalar_lea.vmem %s1, 255
  %133 = vst.msk [vmem:[%s132] sm:$0x10] %vm123, %v122
  %s134 = scalar_lea.vmem %s1, 318
  %135 = vst.msk [vmem:[%s134] sm:$0x20] %vm123, %v122
  %s136 = scalar_lea.vmem %s1, 381
  %137 = vst.msk [vmem:[%s136] sm:$0x40] %vm123, %v122
  %s138 = scalar_lea.vmem %s1, 444
  %139 = vst.msk [vmem:[%s138] sm:$0x80] %vm123, %v122
  %s140 = scalar_lea.vmem %s0, 8
  %v141 = vld [vmem:[%s140] sm:$0xff]
  %142 = vrot.lane.b32.xlu0 %v141, 125
  %v143 = vpop.permute.xlu0 %142
  %vm144 = vcmask 7168
  %s145 = scalar_lea.vmem %s1, 515
  %146 = vst.msk [vmem:[%s145] sm:$0x1] %vm144, %v143
  %s147 = scalar_lea.vmem %s1, 578
  %148 = vst.msk [vmem:[%s147] sm:$0x2] %vm144, %v143
  %s149 = scalar_lea.vmem %s1, 641
  %150 = vst.msk [vmem:[%s149] sm:$0x4] %vm144, %v143
  %s151 = scalar_lea.vmem %s1, 704
  %152 = vst.msk [vmem:[%s151] sm:$0x8] %vm144, %v143
  %s153 = scalar_lea.vmem %s1, 767
  %154 = vst.msk [vmem:[%s153] sm:$0x10] %vm144, %v143
  %s155 = scalar_lea.vmem %s1, 830
  %156 = vst.msk [vmem:[%s155] sm:$0x20] %vm144, %v143
  %s157 = scalar_lea.vmem %s1, 893
  %158 = vst.msk [vmem:[%s157] sm:$0x40] %vm144, %v143
  %s159 = scalar_lea.vmem %s1, 956
  %160 = vst.msk [vmem:[%s159] sm:$0x80] %vm144, %v143
  %v161 = vld [vmem:[%s0] sm:$0xff]
  %162 = vrot.lane.b32.xlu0 %v161, 124
  %v163 = vpop.permute.xlu0 %162
  %vm164 = vcmask 7168
  %s165 = scalar_lea.vmem %s1, 4
  %166 = vst.msk [vmem:[%s165] sm:$0x1] %vm164, %v163
  %s167 = scalar_lea.vmem %s1, 67
  %168 = vst.msk [vmem:[%s167] sm:$0x2] %vm164, %v163
  %s169 = scalar_lea.vmem %s1, 130
  %170 = vst.msk [vmem:[%s169] sm:$0x4] %vm164, %v163
  %s171 = scalar_lea.vmem %s1, 193
  %172 = vst.msk [vmem:[%s171] sm:$0x8] %vm164, %v163
  %s173 = scalar_lea.vmem %s1, 256
  %174 = vst.msk [vmem:[%s173] sm:$0x10] %vm164, %v163
  %s175 = scalar_lea.vmem %s1, 319
  %176 = vst.msk [vmem:[%s175] sm:$0x20] %vm164, %v163
  %s177 = scalar_lea.vmem %s1, 382
  %178 = vst.msk [vmem:[%s177] sm:$0x40] %vm164, %v163
  %s179 = scalar_lea.vmem %s1, 445
  %180 = vst.msk [vmem:[%s179] sm:$0x80] %vm164, %v163
  %s181 = scalar_lea.vmem %s0, 8
  %v182 = vld [vmem:[%s181] sm:$0xff]
  %183 = vrot.lane.b32.xlu0 %v182, 124
  %v184 = vpop.permute.xlu0 %183
  %vm185 = vcmask 7168
  %s186 = scalar_lea.vmem %s1, 516
  %187 = vst.msk [vmem:[%s186] sm:$0x1] %vm185, %v184
  %s188 = scalar_lea.vmem %s1, 579
  %189 = vst.msk [vmem:[%s188] sm:$0x2] %vm185, %v184
  %s190 = scalar_lea.vmem %s1, 642
  %191 = vst.msk [vmem:[%s190] sm:$0x4] %vm185, %v184
  %s192 = scalar_lea.vmem %s1, 705
  %193 = vst.msk [vmem:[%s192] sm:$0x8] %vm185, %v184
  %s194 = scalar_lea.vmem %s1, 768
  %195 = vst.msk [vmem:[%s194] sm:$0x10] %vm185, %v184
  %s196 = scalar_lea.vmem %s1, 831
  %197 = vst.msk [vmem:[%s196] sm:$0x20] %vm185, %v184
  %s198 = scalar_lea.vmem %s1, 894
  %199 = vst.msk [vmem:[%s198] sm:$0x40] %vm185, %v184
  %s200 = scalar_lea.vmem %s1, 957
  %201 = vst.msk [vmem:[%s200] sm:$0x80] %vm185, %v184
  %v202 = vld [vmem:[%s0] sm:$0xff]
  %203 = vrot.lane.b32.xlu0 %v202, 123
  %v204 = vpop.permute.xlu0 %203
  %vm205 = vcmask 7168
  %s206 = scalar_lea.vmem %s1, 5
  %207 = vst.msk [vmem:[%s206] sm:$0x1] %vm205, %v204
  %s208 = scalar_lea.vmem %s1, 68
  %209 = vst.msk [vmem:[%s208] sm:$0x2] %vm205, %v204
  %s210 = scalar_lea.vmem %s1, 131
  %211 = vst.msk [vmem:[%s210] sm:$0x4] %vm205, %v204
  %s212 = scalar_lea.vmem %s1, 194
  %213 = vst.msk [vmem:[%s212] sm:$0x8] %vm205, %v204
  %s214 = scalar_lea.vmem %s1, 257
  %215 = vst.msk [vmem:[%s214] sm:$0x10] %vm205, %v204
  %s216 = scalar_lea.vmem %s1, 320
  %217 = vst.msk [vmem:[%s216] sm:$0x20] %vm205, %v204
  %s218 = scalar_lea.vmem %s1, 383
  %219 = vst.msk [vmem:[%s218] sm:$0x40] %vm205, %v204
  %s220 = scalar_lea.vmem %s1, 446
  %221 = vst.msk [vmem:[%s220] sm:$0x80] %vm205, %v204
  %s222 = scalar_lea.vmem %s0, 8
  %v223 = vld [vmem:[%s222] sm:$0xff]
  %224 = vrot.lane.b32.xlu0 %v223, 123
  %v225 = vpop.permute.xlu0 %224
  %vm226 = vcmask 7168
  %s227 = scalar_lea.vmem %s1, 517
  %228 = vst.msk [vmem:[%s227] sm:$0x1] %vm226, %v225
  %s229 = scalar_lea.vmem %s1, 580
  %230 = vst.msk [vmem:[%s229] sm:$0x2] %vm226, %v225
  %s231 = scalar_lea.vmem %s1, 643
  %232 = vst.msk [vmem:[%s231] sm:$0x4] %vm226, %v225
  %s233 = scalar_lea.vmem %s1, 706
  %234 = vst.msk [vmem:[%s233] sm:$0x8] %vm226, %v225
  %s235 = scalar_lea.vmem %s1, 769
  %236 = vst.msk [vmem:[%s235] sm:$0x10] %vm226, %v225
  %s237 = scalar_lea.vmem %s1, 832
  %238 = vst.msk [vmem:[%s237] sm:$0x20] %vm226, %v225
  %s239 = scalar_lea.vmem %s1, 895
  %240 = vst.msk [vmem:[%s239] sm:$0x40] %vm226, %v225
  %s241 = scalar_lea.vmem %s1, 958
  %242 = vst.msk [vmem:[%s241] sm:$0x80] %vm226, %v225
  %v243 = vld [vmem:[%s0] sm:$0xff]
  %244 = vrot.lane.b32.xlu0 %v243, 122
  %v245 = vpop.permute.xlu0 %244
  %vm246 = vcmask 7168
  %s247 = scalar_lea.vmem %s1, 6
  %248 = vst.msk [vmem:[%s247] sm:$0x1] %vm246, %v245
  %s249 = scalar_lea.vmem %s1, 69
  %250 = vst.msk [vmem:[%s249] sm:$0x2] %vm246, %v245
  %s251 = scalar_lea.vmem %s1, 132
  %252 = vst.msk [vmem:[%s251] sm:$0x4] %vm246, %v245
  %s253 = scalar_lea.vmem %s1, 195
  %254 = vst.msk [vmem:[%s253] sm:$0x8] %vm246, %v245
  %s255 = scalar_lea.vmem %s1, 258
  %256 = vst.msk [vmem:[%s255] sm:$0x10] %vm246, %v245
  %s257 = scalar_lea.vmem %s1, 321
  %258 = vst.msk [vmem:[%s257] sm:$0x20] %vm246, %v245
  %s259 = scalar_lea.vmem %s1, 384
  %260 = vst.msk [vmem:[%s259] sm:$0x40] %vm246, %v245
  %s261 = scalar_lea.vmem %s1, 447
  %262 = vst.msk [vmem:[%s261] sm:$0x80] %vm246, %v245
  %s263 = scalar_lea.vmem %s0, 8
  %v264 = vld [vmem:[%s263] sm:$0xff]
  %265 = vrot.lane.b32.xlu0 %v264, 122
  %v266 = vpop.permute.xlu0 %265
  %vm267 = vcmask 7168
  %s268 = scalar_lea.vmem %s1, 518
  %269 = vst.msk [vmem:[%s268] sm:$0x1] %vm267, %v266
  %s270 = scalar_lea.vmem %s1, 581
  %271 = vst.msk [vmem:[%s270] sm:$0x2] %vm267, %v266
  %s272 = scalar_lea.vmem %s1, 644
  %273 = vst.msk [vmem:[%s272] sm:$0x4] %vm267, %v266
  %s274 = scalar_lea.vmem %s1, 707
  %275 = vst.msk [vmem:[%s274] sm:$0x8] %vm267, %v266
  %s276 = scalar_lea.vmem %s1, 770
  %277 = vst.msk [vmem:[%s276] sm:$0x10] %vm267, %v266
  %s278 = scalar_lea.vmem %s1, 833
  %279 = vst.msk [vmem:[%s278] sm:$0x20] %vm267, %v266
  %s280 = scalar_lea.vmem %s1, 896
  %281 = vst.msk [vmem:[%s280] sm:$0x40] %vm267, %v266
  %s282 = scalar_lea.vmem %s1, 959
  %283 = vst.msk [vmem:[%s282] sm:$0x80] %vm267, %v266
  %v284 = vld [vmem:[%s0] sm:$0xff]
  %285 = vrot.lane.b32.xlu0 %v284, 121
  %v286 = vpop.permute.xlu0 %285
  %vm287 = vcmask 7168
  %s288 = scalar_lea.vmem %s1, 7
  %289 = vst.msk [vmem:[%s288] sm:$0x1] %vm287, %v286
  %s290 = scalar_lea.vmem %s1, 70
  %291 = vst.msk [vmem:[%s290] sm:$0x2] %vm287, %v286
  %s292 = scalar_lea.vmem %s1, 133
  %293 = vst.msk [vmem:[%s292] sm:$0x4] %vm287, %v286
  %s294 = scalar_lea.vmem %s1, 196
  %295 = vst.msk [vmem:[%s294] sm:$0x8] %vm287, %v286
  %s296 = scalar_lea.vmem %s1, 259
  %297 = vst.msk [vmem:[%s296] sm:$0x10] %vm287, %v286
  %s298 = scalar_lea.vmem %s1, 322
  %299 = vst.msk [vmem:[%s298] sm:$0x20] %vm287, %v286
  %s300 = scalar_lea.vmem %s1, 385
  %301 = vst.msk [vmem:[%s300] sm:$0x40] %vm287, %v286
  %s302 = scalar_lea.vmem %s1, 448
  %303 = vst.msk [vmem:[%s302] sm:$0x80] %vm287, %v286
  %s304 = scalar_lea.vmem %s0, 8
  %v305 = vld [vmem:[%s304] sm:$0xff]
  %306 = vrot.lane.b32.xlu0 %v305, 121
  %v307 = vpop.permute.xlu0 %306
  %vm308 = vcmask 7168
  %s309 = scalar_lea.vmem %s1, 519
  %310 = vst.msk [vmem:[%s309] sm:$0x1] %vm308, %v307
  %s311 = scalar_lea.vmem %s1, 582
  %312 = vst.msk [vmem:[%s311] sm:$0x2] %vm308, %v307
  %s313 = scalar_lea.vmem %s1, 645
  %314 = vst.msk [vmem:[%s313] sm:$0x4] %vm308, %v307
  %s315 = scalar_lea.vmem %s1, 708
  %316 = vst.msk [vmem:[%s315] sm:$0x8] %vm308, %v307
  %s317 = scalar_lea.vmem %s1, 771
  %318 = vst.msk [vmem:[%s317] sm:$0x10] %vm308, %v307
  %s319 = scalar_lea.vmem %s1, 834
  %320 = vst.msk [vmem:[%s319] sm:$0x20] %vm308, %v307
  %s321 = scalar_lea.vmem %s1, 897
  %322 = vst.msk [vmem:[%s321] sm:$0x40] %vm308, %v307
  %s323 = scalar_lea.vmem %s1, 960
  %324 = vst.msk [vmem:[%s323] sm:$0x80] %vm308, %v307
  %v325 = vld [vmem:[%s0] sm:$0xff]
  %326 = vrot.lane.b32.xlu0 %v325, 120
  %v327 = vpop.permute.xlu0 %326
  %vm328 = vcmask 7168
  %s329 = scalar_lea.vmem %s1, 8
  %330 = vst.msk [vmem:[%s329] sm:$0x1] %vm328, %v327
  %s331 = scalar_lea.vmem %s1, 71
  %332 = vst.msk [vmem:[%s331] sm:$0x2] %vm328, %v327
  %s333 = scalar_lea.vmem %s1, 134
  %334 = vst.msk [vmem:[%s333] sm:$0x4] %vm328, %v327
  %s335 = scalar_lea.vmem %s1, 197
  %336 = vst.msk [vmem:[%s335] sm:$0x8] %vm328, %v327
  %s337 = scalar_lea.vmem %s1, 260
  %338 = vst.msk [vmem:[%s337] sm:$0x10] %vm328, %v327
  %s339 = scalar_lea.vmem %s1, 323
  %340 = vst.msk [vmem:[%s339] sm:$0x20] %vm328, %v327
  %s341 = scalar_lea.vmem %s1, 386
  %342 = vst.msk [vmem:[%s341] sm:$0x40] %vm328, %v327
  %s343 = scalar_lea.vmem %s1, 449
  %344 = vst.msk [vmem:[%s343] sm:$0x80] %vm328, %v327
  %s345 = scalar_lea.vmem %s0, 8
  %v346 = vld [vmem:[%s345] sm:$0xff]
  %347 = vrot.lane.b32.xlu0 %v346, 120
  %v348 = vpop.permute.xlu0 %347
  %vm349 = vcmask 7168
  %s350 = scalar_lea.vmem %s1, 520
  %351 = vst.msk [vmem:[%s350] sm:$0x1] %vm349, %v348
  %s352 = scalar_lea.vmem %s1, 583
  %353 = vst.msk [vmem:[%s352] sm:$0x2] %vm349, %v348
  %s354 = scalar_lea.vmem %s1, 646
  %355 = vst.msk [vmem:[%s354] sm:$0x4] %vm349, %v348
  %s356 = scalar_lea.vmem %s1, 709
  %357 = vst.msk [vmem:[%s356] sm:$0x8] %vm349, %v348
  %s358 = scalar_lea.vmem %s1, 772
  %359 = vst.msk [vmem:[%s358] sm:$0x10] %vm349, %v348
  %s360 = scalar_lea.vmem %s1, 835
  %361 = vst.msk [vmem:[%s360] sm:$0x20] %vm349, %v348
  %s362 = scalar_lea.vmem %s1, 898
  %363 = vst.msk [vmem:[%s362] sm:$0x40] %vm349, %v348
  %s364 = scalar_lea.vmem %s1, 961
  %365 = vst.msk [vmem:[%s364] sm:$0x80] %vm349, %v348
  %v366 = vld [vmem:[%s0] sm:$0xff]
  %367 = vrot.lane.b32.xlu0 %v366, 119
  %v368 = vpop.permute.xlu0 %367
  %vm369 = vcmask 7168
  %s370 = scalar_lea.vmem %s1, 9
  %371 = vst.msk [vmem:[%s370] sm:$0x1] %vm369, %v368
  %s372 = scalar_lea.vmem %s1, 72
  %373 = vst.msk [vmem:[%s372] sm:$0x2] %vm369, %v368
  %s374 = scalar_lea.vmem %s1, 135
  %375 = vst.msk [vmem:[%s374] sm:$0x4] %vm369, %v368
  %s376 = scalar_lea.vmem %s1, 198
  %377 = vst.msk [vmem:[%s376] sm:$0x8] %vm369, %v368
  %s378 = scalar_lea.vmem %s1, 261
  %379 = vst.msk [vmem:[%s378] sm:$0x10] %vm369, %v368
  %s380 = scalar_lea.vmem %s1, 324
  %381 = vst.msk [vmem:[%s380] sm:$0x20] %vm369, %v368
  %s382 = scalar_lea.vmem %s1, 387
  %383 = vst.msk [vmem:[%s382] sm:$0x40] %vm369, %v368
  %s384 = scalar_lea.vmem %s1, 450
  %385 = vst.msk [vmem:[%s384] sm:$0x80] %vm369, %v368
  %s386 = scalar_lea.vmem %s0, 8
  %v387 = vld [vmem:[%s386] sm:$0xff]
  %388 = vrot.lane.b32.xlu0 %v387, 119
  %v389 = vpop.permute.xlu0 %388
  %vm390 = vcmask 7168
  %s391 = scalar_lea.vmem %s1, 521
  %392 = vst.msk [vmem:[%s391] sm:$0x1] %vm390, %v389
  %s393 = scalar_lea.vmem %s1, 584
  %394 = vst.msk [vmem:[%s393] sm:$0x2] %vm390, %v389
  %s395 = scalar_lea.vmem %s1, 647
  %396 = vst.msk [vmem:[%s395] sm:$0x4] %vm390, %v389
  %s397 = scalar_lea.vmem %s1, 710
  %398 = vst.msk [vmem:[%s397] sm:$0x8] %vm390, %v389
  %s399 = scalar_lea.vmem %s1, 773
  %400 = vst.msk [vmem:[%s399] sm:$0x10] %vm390, %v389
  %s401 = scalar_lea.vmem %s1, 836
  %402 = vst.msk [vmem:[%s401] sm:$0x20] %vm390, %v389
  %s403 = scalar_lea.vmem %s1, 899
  %404 = vst.msk [vmem:[%s403] sm:$0x40] %vm390, %v389
  %s405 = scalar_lea.vmem %s1, 962
  %406 = vst.msk [vmem:[%s405] sm:$0x80] %vm390, %v389
  %v407 = vld [vmem:[%s0] sm:$0xff]
  %408 = vrot.lane.b32.xlu0 %v407, 118
  %v409 = vpop.permute.xlu0 %408
  %vm410 = vcmask 7168
  %s411 = scalar_lea.vmem %s1, 10
  %412 = vst.msk [vmem:[%s411] sm:$0x1] %vm410, %v409
  %s413 = scalar_lea.vmem %s1, 73
  %414 = vst.msk [vmem:[%s413] sm:$0x2] %vm410, %v409
  %s415 = scalar_lea.vmem %s1, 136
  %416 = vst.msk [vmem:[%s415] sm:$0x4] %vm410, %v409
  %s417 = scalar_lea.vmem %s1, 199
  %418 = vst.msk [vmem:[%s417] sm:$0x8] %vm410, %v409
  %s419 = scalar_lea.vmem %s1, 262
  %420 = vst.msk [vmem:[%s419] sm:$0x10] %vm410, %v409
  %s421 = scalar_lea.vmem %s1, 325
  %422 = vst.msk [vmem:[%s421] sm:$0x20] %vm410, %v409
  %s423 = scalar_lea.vmem %s1, 388
  %424 = vst.msk [vmem:[%s423] sm:$0x40] %vm410, %v409
  %s425 = scalar_lea.vmem %s1, 451
  %426 = vst.msk [vmem:[%s425] sm:$0x80] %vm410, %v409
  %s427 = scalar_lea.vmem %s0, 8
  %v428 = vld [vmem:[%s427] sm:$0xff]
  %429 = vrot.lane.b32.xlu0 %v428, 118
  %v430 = vpop.permute.xlu0 %429
  %vm431 = vcmask 7168
  %s432 = scalar_lea.vmem %s1, 522
  %433 = vst.msk [vmem:[%s432] sm:$0x1] %vm431, %v430
  %s434 = scalar_lea.vmem %s1, 585
  %435 = vst.msk [vmem:[%s434] sm:$0x2] %vm431, %v430
  %s436 = scalar_lea.vmem %s1, 648
  %437 = vst.msk [vmem:[%s436] sm:$0x4] %vm431, %v430
  %s438 = scalar_lea.vmem %s1, 711
  %439 = vst.msk [vmem:[%s438] sm:$0x8] %vm431, %v430
  %s440 = scalar_lea.vmem %s1, 774
  %441 = vst.msk [vmem:[%s440] sm:$0x10] %vm431, %v430
  %s442 = scalar_lea.vmem %s1, 837
  %443 = vst.msk [vmem:[%s442] sm:$0x20] %vm431, %v430
  %s444 = scalar_lea.vmem %s1, 900
  %445 = vst.msk [vmem:[%s444] sm:$0x40] %vm431, %v430
  %s446 = scalar_lea.vmem %s1, 963
  %447 = vst.msk [vmem:[%s446] sm:$0x80] %vm431, %v430
  %v448 = vld [vmem:[%s0] sm:$0xff]
  %449 = vrot.lane.b32.xlu0 %v448, 117
  %v450 = vpop.permute.xlu0 %449
  %vm451 = vcmask 7168
  %s452 = scalar_lea.vmem %s1, 11
  %453 = vst.msk [vmem:[%s452] sm:$0x1] %vm451, %v450
  %s454 = scalar_lea.vmem %s1, 74
  %455 = vst.msk [vmem:[%s454] sm:$0x2] %vm451, %v450
  %s456 = scalar_lea.vmem %s1, 137
  %457 = vst.msk [vmem:[%s456] sm:$0x4] %vm451, %v450
  %s458 = scalar_lea.vmem %s1, 200
  %459 = vst.msk [vmem:[%s458] sm:$0x8] %vm451, %v450
  %s460 = scalar_lea.vmem %s1, 263
  %461 = vst.msk [vmem:[%s460] sm:$0x10] %vm451, %v450
  %s462 = scalar_lea.vmem %s1, 326
  %463 = vst.msk [vmem:[%s462] sm:$0x20] %vm451, %v450
  %s464 = scalar_lea.vmem %s1, 389
  %465 = vst.msk [vmem:[%s464] sm:$0x40] %vm451, %v450
  %s466 = scalar_lea.vmem %s1, 452
  %467 = vst.msk [vmem:[%s466] sm:$0x80] %vm451, %v450
  %s468 = scalar_lea.vmem %s0, 8
  %v469 = vld [vmem:[%s468] sm:$0xff]
  %470 = vrot.lane.b32.xlu0 %v469, 117
  %v471 = vpop.permute.xlu0 %470
  %vm472 = vcmask 7168
  %s473 = scalar_lea.vmem %s1, 523
  %474 = vst.msk [vmem:[%s473] sm:$0x1] %vm472, %v471
  %s475 = scalar_lea.vmem %s1, 586
  %476 = vst.msk [vmem:[%s475] sm:$0x2] %vm472, %v471
  %s477 = scalar_lea.vmem %s1, 649
  %478 = vst.msk [vmem:[%s477] sm:$0x4] %vm472, %v471
  %s479 = scalar_lea.vmem %s1, 712
  %480 = vst.msk [vmem:[%s479] sm:$0x8] %vm472, %v471
  %s481 = scalar_lea.vmem %s1, 775
  %482 = vst.msk [vmem:[%s481] sm:$0x10] %vm472, %v471
  %s483 = scalar_lea.vmem %s1, 838
  %484 = vst.msk [vmem:[%s483] sm:$0x20] %vm472, %v471
  %s485 = scalar_lea.vmem %s1, 901
  %486 = vst.msk [vmem:[%s485] sm:$0x40] %vm472, %v471
  %s487 = scalar_lea.vmem %s1, 964
  %488 = vst.msk [vmem:[%s487] sm:$0x80] %vm472, %v471
  %v489 = vld [vmem:[%s0] sm:$0xff]
  %490 = vrot.lane.b32.xlu0 %v489, 116
  %v491 = vpop.permute.xlu0 %490
  %vm492 = vcmask 7168
  %s493 = scalar_lea.vmem %s1, 12
  %494 = vst.msk [vmem:[%s493] sm:$0x1] %vm492, %v491
  %s495 = scalar_lea.vmem %s1, 75
  %496 = vst.msk [vmem:[%s495] sm:$0x2] %vm492, %v491
  %s497 = scalar_lea.vmem %s1, 138
  %498 = vst.msk [vmem:[%s497] sm:$0x4] %vm492, %v491
  %s499 = scalar_lea.vmem %s1, 201
  %500 = vst.msk [vmem:[%s499] sm:$0x8] %vm492, %v491
  %s501 = scalar_lea.vmem %s1, 264
  %502 = vst.msk [vmem:[%s501] sm:$0x10] %vm492, %v491
  %s503 = scalar_lea.vmem %s1, 327
  %504 = vst.msk [vmem:[%s503] sm:$0x20] %vm492, %v491
  %s505 = scalar_lea.vmem %s1, 390
  %506 = vst.msk [vmem:[%s505] sm:$0x40] %vm492, %v491
  %s507 = scalar_lea.vmem %s1, 453
  %508 = vst.msk [vmem:[%s507] sm:$0x80] %vm492, %v491
  %s509 = scalar_lea.vmem %s0, 8
  %v510 = vld [vmem:[%s509] sm:$0xff]
  %511 = vrot.lane.b32.xlu0 %v510, 116
  %v512 = vpop.permute.xlu0 %511
  %vm513 = vcmask 7168
  %s514 = scalar_lea.vmem %s1, 524
  %515 = vst.msk [vmem:[%s514] sm:$0x1] %vm513, %v512
  %s516 = scalar_lea.vmem %s1, 587
  %517 = vst.msk [vmem:[%s516] sm:$0x2] %vm513, %v512
  %s518 = scalar_lea.vmem %s1, 650
  %519 = vst.msk [vmem:[%s518] sm:$0x4] %vm513, %v512
  %s520 = scalar_lea.vmem %s1, 713
  %521 = vst.msk [vmem:[%s520] sm:$0x8] %vm513, %v512
  %s522 = scalar_lea.vmem %s1, 776
  %523 = vst.msk [vmem:[%s522] sm:$0x10] %vm513, %v512
  %s524 = scalar_lea.vmem %s1, 839
  %525 = vst.msk [vmem:[%s524] sm:$0x20] %vm513, %v512
  %s526 = scalar_lea.vmem %s1, 902
  %527 = vst.msk [vmem:[%s526] sm:$0x40] %vm513, %v512
  %s528 = scalar_lea.vmem %s1, 965
  %529 = vst.msk [vmem:[%s528] sm:$0x80] %vm513, %v512
  %v530 = vld [vmem:[%s0] sm:$0xff]
  %531 = vrot.lane.b32.xlu0 %v530, 115
  %v532 = vpop.permute.xlu0 %531
  %vm533 = vcmask 7168
  %s534 = scalar_lea.vmem %s1, 13
  %535 = vst.msk [vmem:[%s534] sm:$0x1] %vm533, %v532
  %s536 = scalar_lea.vmem %s1, 76
  %537 = vst.msk [vmem:[%s536] sm:$0x2] %vm533, %v532
  %s538 = scalar_lea.vmem %s1, 139
  %539 = vst.msk [vmem:[%s538] sm:$0x4] %vm533, %v532
  %s540 = scalar_lea.vmem %s1, 202
  %541 = vst.msk [vmem:[%s540] sm:$0x8] %vm533, %v532
  %s542 = scalar_lea.vmem %s1, 265
  %543 = vst.msk [vmem:[%s542] sm:$0x10] %vm533, %v532
  %s544 = scalar_lea.vmem %s1, 328
  %545 = vst.msk [vmem:[%s544] sm:$0x20] %vm533, %v532
  %s546 = scalar_lea.vmem %s1, 391
  %547 = vst.msk [vmem:[%s546] sm:$0x40] %vm533, %v532
  %s548 = scalar_lea.vmem %s1, 454
  %549 = vst.msk [vmem:[%s548] sm:$0x80] %vm533, %v532
  %s550 = scalar_lea.vmem %s0, 8
  %v551 = vld [vmem:[%s550] sm:$0xff]
  %552 = vrot.lane.b32.xlu0 %v551, 115
  %v553 = vpop.permute.xlu0 %552
  %vm554 = vcmask 7168
  %s555 = scalar_lea.vmem %s1, 525
  %556 = vst.msk [vmem:[%s555] sm:$0x1] %vm554, %v553
  %s557 = scalar_lea.vmem %s1, 588
  %558 = vst.msk [vmem:[%s557] sm:$0x2] %vm554, %v553
  %s559 = scalar_lea.vmem %s1, 651
  %560 = vst.msk [vmem:[%s559] sm:$0x4] %vm554, %v553
  %s561 = scalar_lea.vmem %s1, 714
  %562 = vst.msk [vmem:[%s561] sm:$0x8] %vm554, %v553
  %s563 = scalar_lea.vmem %s1, 777
  %564 = vst.msk [vmem:[%s563] sm:$0x10] %vm554, %v553
  %s565 = scalar_lea.vmem %s1, 840
  %566 = vst.msk [vmem:[%s565] sm:$0x20] %vm554, %v553
  %s567 = scalar_lea.vmem %s1, 903
  %568 = vst.msk [vmem:[%s567] sm:$0x40] %vm554, %v553
  %s569 = scalar_lea.vmem %s1, 966
  %570 = vst.msk [vmem:[%s569] sm:$0x80] %vm554, %v553
  %v571 = vld [vmem:[%s0] sm:$0xff]
  %572 = vrot.lane.b32.xlu0 %v571, 114
  %v573 = vpop.permute.xlu0 %572
  %vm574 = vcmask 7168
  %s575 = scalar_lea.vmem %s1, 14
  %576 = vst.msk [vmem:[%s575] sm:$0x1] %vm574, %v573
  %s577 = scalar_lea.vmem %s1, 77
  %578 = vst.msk [vmem:[%s577] sm:$0x2] %vm574, %v573
  %s579 = scalar_lea.vmem %s1, 140
  %580 = vst.msk [vmem:[%s579] sm:$0x4] %vm574, %v573
  %s581 = scalar_lea.vmem %s1, 203
  %582 = vst.msk [vmem:[%s581] sm:$0x8] %vm574, %v573
  %s583 = scalar_lea.vmem %s1, 266
  %584 = vst.msk [vmem:[%s583] sm:$0x10] %vm574, %v573
  %s585 = scalar_lea.vmem %s1, 329
  %586 = vst.msk [vmem:[%s585] sm:$0x20] %vm574, %v573
  %s587 = scalar_lea.vmem %s1, 392
  %588 = vst.msk [vmem:[%s587] sm:$0x40] %vm574, %v573
  %s589 = scalar_lea.vmem %s1, 455
  %590 = vst.msk [vmem:[%s589] sm:$0x80] %vm574, %v573
  %s591 = scalar_lea.vmem %s0, 8
  %v592 = vld [vmem:[%s591] sm:$0xff]
  %593 = vrot.lane.b32.xlu0 %v592, 114
  %v594 = vpop.permute.xlu0 %593
  %vm595 = vcmask 7168
  %s596 = scalar_lea.vmem %s1, 526
  %597 = vst.msk [vmem:[%s596] sm:$0x1] %vm595, %v594
  %s598 = scalar_lea.vmem %s1, 589
  %599 = vst.msk [vmem:[%s598] sm:$0x2] %vm595, %v594
  %s600 = scalar_lea.vmem %s1, 652
  %601 = vst.msk [vmem:[%s600] sm:$0x4] %vm595, %v594
  %s602 = scalar_lea.vmem %s1, 715
  %603 = vst.msk [vmem:[%s602] sm:$0x8] %vm595, %v594
  %s604 = scalar_lea.vmem %s1, 778
  %605 = vst.msk [vmem:[%s604] sm:$0x10] %vm595, %v594
  %s606 = scalar_lea.vmem %s1, 841
  %607 = vst.msk [vmem:[%s606] sm:$0x20] %vm595, %v594
  %s608 = scalar_lea.vmem %s1, 904
  %609 = vst.msk [vmem:[%s608] sm:$0x40] %vm595, %v594
  %s610 = scalar_lea.vmem %s1, 967
  %611 = vst.msk [vmem:[%s610] sm:$0x80] %vm595, %v594
  %v612 = vld [vmem:[%s0] sm:$0xff]
  %613 = vrot.lane.b32.xlu0 %v612, 113
  %v614 = vpop.permute.xlu0 %613
  %vm615 = vcmask 7168
  %s616 = scalar_lea.vmem %s1, 15
  %617 = vst.msk [vmem:[%s616] sm:$0x1] %vm615, %v614
  %s618 = scalar_lea.vmem %s1, 78
  %619 = vst.msk [vmem:[%s618] sm:$0x2] %vm615, %v614
  %s620 = scalar_lea.vmem %s1, 141
  %621 = vst.msk [vmem:[%s620] sm:$0x4] %vm615, %v614
  %s622 = scalar_lea.vmem %s1, 204
  %623 = vst.msk [vmem:[%s622] sm:$0x8] %vm615, %v614
  %s624 = scalar_lea.vmem %s1, 267
  %625 = vst.msk [vmem:[%s624] sm:$0x10] %vm615, %v614
  %s626 = scalar_lea.vmem %s1, 330
  %627 = vst.msk [vmem:[%s626] sm:$0x20] %vm615, %v614
  %s628 = scalar_lea.vmem %s1, 393
  %629 = vst.msk [vmem:[%s628] sm:$0x40] %vm615, %v614
  %s630 = scalar_lea.vmem %s1, 456
  %631 = vst.msk [vmem:[%s630] sm:$0x80] %vm615, %v614
  %s632 = scalar_lea.vmem %s0, 8
  %v633 = vld [vmem:[%s632] sm:$0xff]
  %634 = vrot.lane.b32.xlu0 %v633, 113
  %v635 = vpop.permute.xlu0 %634
  %vm636 = vcmask 7168
  %s637 = scalar_lea.vmem %s1, 527
  %638 = vst.msk [vmem:[%s637] sm:$0x1] %vm636, %v635
  %s639 = scalar_lea.vmem %s1, 590
  %640 = vst.msk [vmem:[%s639] sm:$0x2] %vm636, %v635
  %s641 = scalar_lea.vmem %s1, 653
  %642 = vst.msk [vmem:[%s641] sm:$0x4] %vm636, %v635
  %s643 = scalar_lea.vmem %s1, 716
  %644 = vst.msk [vmem:[%s643] sm:$0x8] %vm636, %v635
  %s645 = scalar_lea.vmem %s1, 779
  %646 = vst.msk [vmem:[%s645] sm:$0x10] %vm636, %v635
  %s647 = scalar_lea.vmem %s1, 842
  %648 = vst.msk [vmem:[%s647] sm:$0x20] %vm636, %v635
  %s649 = scalar_lea.vmem %s1, 905
  %650 = vst.msk [vmem:[%s649] sm:$0x40] %vm636, %v635
  %s651 = scalar_lea.vmem %s1, 968
  %652 = vst.msk [vmem:[%s651] sm:$0x80] %vm636, %v635
  %v653 = vld [vmem:[%s0] sm:$0xff]
  %654 = vrot.lane.b32.xlu0 %v653, 112
  %v655 = vpop.permute.xlu0 %654
  %vm656 = vcmask 7168
  %s657 = scalar_lea.vmem %s1, 16
  %658 = vst.msk [vmem:[%s657] sm:$0x1] %vm656, %v655
  %s659 = scalar_lea.vmem %s1, 79
  %660 = vst.msk [vmem:[%s659] sm:$0x2] %vm656, %v655
  %s661 = scalar_lea.vmem %s1, 142
  %662 = vst.msk [vmem:[%s661] sm:$0x4] %vm656, %v655
  %s663 = scalar_lea.vmem %s1, 205
  %664 = vst.msk [vmem:[%s663] sm:$0x8] %vm656, %v655
  %s665 = scalar_lea.vmem %s1, 268
  %666 = vst.msk [vmem:[%s665] sm:$0x10] %vm656, %v655
  %s667 = scalar_lea.vmem %s1, 331
  %668 = vst.msk [vmem:[%s667] sm:$0x20] %vm656, %v655
  %s669 = scalar_lea.vmem %s1, 394
  %670 = vst.msk [vmem:[%s669] sm:$0x40] %vm656, %v655
  %s671 = scalar_lea.vmem %s1, 457
  %672 = vst.msk [vmem:[%s671] sm:$0x80] %vm656, %v655
  %s673 = scalar_lea.vmem %s0, 8
  %v674 = vld [vmem:[%s673] sm:$0xff]
  %675 = vrot.lane.b32.xlu0 %v674, 112
  %v676 = vpop.permute.xlu0 %675
  %vm677 = vcmask 7168
  %s678 = scalar_lea.vmem %s1, 528
  %679 = vst.msk [vmem:[%s678] sm:$0x1] %vm677, %v676
  %s680 = scalar_lea.vmem %s1, 591
  %681 = vst.msk [vmem:[%s680] sm:$0x2] %vm677, %v676
  %s682 = scalar_lea.vmem %s1, 654
  %683 = vst.msk [vmem:[%s682] sm:$0x4] %vm677, %v676
  %s684 = scalar_lea.vmem %s1, 717
  %685 = vst.msk [vmem:[%s684] sm:$0x8] %vm677, %v676
  %s686 = scalar_lea.vmem %s1, 780
  %687 = vst.msk [vmem:[%s686] sm:$0x10] %vm677, %v676
  %s688 = scalar_lea.vmem %s1, 843
  %689 = vst.msk [vmem:[%s688] sm:$0x20] %vm677, %v676
  %s690 = scalar_lea.vmem %s1, 906
  %691 = vst.msk [vmem:[%s690] sm:$0x40] %vm677, %v676
  %s692 = scalar_lea.vmem %s1, 969
  %693 = vst.msk [vmem:[%s692] sm:$0x80] %vm677, %v676
  %v694 = vld [vmem:[%s0] sm:$0xff]
  %695 = vrot.lane.b32.xlu0 %v694, 111
  %v696 = vpop.permute.xlu0 %695
  %vm697 = vcmask 7168
  %s698 = scalar_lea.vmem %s1, 17
  %699 = vst.msk [vmem:[%s698] sm:$0x1] %vm697, %v696
  %s700 = scalar_lea.vmem %s1, 80
  %701 = vst.msk [vmem:[%s700] sm:$0x2] %vm697, %v696
  %s702 = scalar_lea.vmem %s1, 143
  %703 = vst.msk [vmem:[%s702] sm:$0x4] %vm697, %v696
  %s704 = scalar_lea.vmem %s1, 206
  %705 = vst.msk [vmem:[%s704] sm:$0x8] %vm697, %v696
  %s706 = scalar_lea.vmem %s1, 269
  %707 = vst.msk [vmem:[%s706] sm:$0x10] %vm697, %v696
  %s708 = scalar_lea.vmem %s1, 332
  %709 = vst.msk [vmem:[%s708] sm:$0x20] %vm697, %v696
  %s710 = scalar_lea.vmem %s1, 395
  %711 = vst.msk [vmem:[%s710] sm:$0x40] %vm697, %v696
  %s712 = scalar_lea.vmem %s1, 458
  %713 = vst.msk [vmem:[%s712] sm:$0x80] %vm697, %v696
  %s714 = scalar_lea.vmem %s0, 8
  %v715 = vld [vmem:[%s714] sm:$0xff]
  %716 = vrot.lane.b32.xlu0 %v715, 111
  %v717 = vpop.permute.xlu0 %716
  %vm718 = vcmask 7168
  %s719 = scalar_lea.vmem %s1, 529
  %720 = vst.msk [vmem:[%s719] sm:$0x1] %vm718, %v717
  %s721 = scalar_lea.vmem %s1, 592
  %722 = vst.msk [vmem:[%s721] sm:$0x2] %vm718, %v717
  %s723 = scalar_lea.vmem %s1, 655
  %724 = vst.msk [vmem:[%s723] sm:$0x4] %vm718, %v717
  %s725 = scalar_lea.vmem %s1, 718
  %726 = vst.msk [vmem:[%s725] sm:$0x8] %vm718, %v717
  %s727 = scalar_lea.vmem %s1, 781
  %728 = vst.msk [vmem:[%s727] sm:$0x10] %vm718, %v717
  %s729 = scalar_lea.vmem %s1, 844
  %730 = vst.msk [vmem:[%s729] sm:$0x20] %vm718, %v717
  %s731 = scalar_lea.vmem %s1, 907
  %732 = vst.msk [vmem:[%s731] sm:$0x40] %vm718, %v717
  %s733 = scalar_lea.vmem %s1, 970
  %734 = vst.msk [vmem:[%s733] sm:$0x80] %vm718, %v717
  %v735 = vld [vmem:[%s0] sm:$0xff]
  %736 = vrot.lane.b32.xlu0 %v735, 110
  %v737 = vpop.permute.xlu0 %736
  %vm738 = vcmask 7168
  %s739 = scalar_lea.vmem %s1, 18
  %740 = vst.msk [vmem:[%s739] sm:$0x1] %vm738, %v737
  %s741 = scalar_lea.vmem %s1, 81
  %742 = vst.msk [vmem:[%s741] sm:$0x2] %vm738, %v737
  %s743 = scalar_lea.vmem %s1, 144
  %744 = vst.msk [vmem:[%s743] sm:$0x4] %vm738, %v737
  %s745 = scalar_lea.vmem %s1, 207
  %746 = vst.msk [vmem:[%s745] sm:$0x8] %vm738, %v737
  %s747 = scalar_lea.vmem %s1, 270
  %748 = vst.msk [vmem:[%s747] sm:$0x10] %vm738, %v737
  %s749 = scalar_lea.vmem %s1, 333
  %750 = vst.msk [vmem:[%s749] sm:$0x20] %vm738, %v737
  %s751 = scalar_lea.vmem %s1, 396
  %752 = vst.msk [vmem:[%s751] sm:$0x40] %vm738, %v737
  %s753 = scalar_lea.vmem %s1, 459
  %754 = vst.msk [vmem:[%s753] sm:$0x80] %vm738, %v737
  %s755 = scalar_lea.vmem %s0, 8
  %v756 = vld [vmem:[%s755] sm:$0xff]
  %757 = vrot.lane.b32.xlu0 %v756, 110
  %v758 = vpop.permute.xlu0 %757
  %vm759 = vcmask 7168
  %s760 = scalar_lea.vmem %s1, 530
  %761 = vst.msk [vmem:[%s760] sm:$0x1] %vm759, %v758
  %s762 = scalar_lea.vmem %s1, 593
  %763 = vst.msk [vmem:[%s762] sm:$0x2] %vm759, %v758
  %s764 = scalar_lea.vmem %s1, 656
  %765 = vst.msk [vmem:[%s764] sm:$0x4] %vm759, %v758
  %s766 = scalar_lea.vmem %s1, 719
  %767 = vst.msk [vmem:[%s766] sm:$0x8] %vm759, %v758
  %s768 = scalar_lea.vmem %s1, 782
  %769 = vst.msk [vmem:[%s768] sm:$0x10] %vm759, %v758
  %s770 = scalar_lea.vmem %s1, 845
  %771 = vst.msk [vmem:[%s770] sm:$0x20] %vm759, %v758
  %s772 = scalar_lea.vmem %s1, 908
  %773 = vst.msk [vmem:[%s772] sm:$0x40] %vm759, %v758
  %s774 = scalar_lea.vmem %s1, 971
  %775 = vst.msk [vmem:[%s774] sm:$0x80] %vm759, %v758
  %v776 = vld [vmem:[%s0] sm:$0xff]
  %777 = vrot.lane.b32.xlu0 %v776, 109
  %v778 = vpop.permute.xlu0 %777
  %vm779 = vcmask 7168
  %s780 = scalar_lea.vmem %s1, 19
  %781 = vst.msk [vmem:[%s780] sm:$0x1] %vm779, %v778
  %s782 = scalar_lea.vmem %s1, 82
  %783 = vst.msk [vmem:[%s782] sm:$0x2] %vm779, %v778
  %s784 = scalar_lea.vmem %s1, 145
  %785 = vst.msk [vmem:[%s784] sm:$0x4] %vm779, %v778
  %s786 = scalar_lea.vmem %s1, 208
  %787 = vst.msk [vmem:[%s786] sm:$0x8] %vm779, %v778
  %s788 = scalar_lea.vmem %s1, 271
  %789 = vst.msk [vmem:[%s788] sm:$0x10] %vm779, %v778
  %s790 = scalar_lea.vmem %s1, 334
  %791 = vst.msk [vmem:[%s790] sm:$0x20] %vm779, %v778
  %s792 = scalar_lea.vmem %s1, 397
  %793 = vst.msk [vmem:[%s792] sm:$0x40] %vm779, %v778
  %s794 = scalar_lea.vmem %s1, 460
  %795 = vst.msk [vmem:[%s794] sm:$0x80] %vm779, %v778
  %s796 = scalar_lea.vmem %s0, 8
  %v797 = vld [vmem:[%s796] sm:$0xff]
  %798 = vrot.lane.b32.xlu0 %v797, 109
  %v799 = vpop.permute.xlu0 %798
  %vm800 = vcmask 7168
  %s801 = scalar_lea.vmem %s1, 531
  %802 = vst.msk [vmem:[%s801] sm:$0x1] %vm800, %v799
  %s803 = scalar_lea.vmem %s1, 594
  %804 = vst.msk [vmem:[%s803] sm:$0x2] %vm800, %v799
  %s805 = scalar_lea.vmem %s1, 657
  %806 = vst.msk [vmem:[%s805] sm:$0x4] %vm800, %v799
  %s807 = scalar_lea.vmem %s1, 720
  %808 = vst.msk [vmem:[%s807] sm:$0x8] %vm800, %v799
  %s809 = scalar_lea.vmem %s1, 783
  %810 = vst.msk [vmem:[%s809] sm:$0x10] %vm800, %v799
  %s811 = scalar_lea.vmem %s1, 846
  %812 = vst.msk [vmem:[%s811] sm:$0x20] %vm800, %v799
  %s813 = scalar_lea.vmem %s1, 909
  %814 = vst.msk [vmem:[%s813] sm:$0x40] %vm800, %v799
  %s815 = scalar_lea.vmem %s1, 972
  %816 = vst.msk [vmem:[%s815] sm:$0x80] %vm800, %v799
  %v817 = vld [vmem:[%s0] sm:$0xff]
  %818 = vrot.lane.b32.xlu0 %v817, 108
  %v819 = vpop.permute.xlu0 %818
  %vm820 = vcmask 7168
  %s821 = scalar_lea.vmem %s1, 20
  %822 = vst.msk [vmem:[%s821] sm:$0x1] %vm820, %v819
  %s823 = scalar_lea.vmem %s1, 83
  %824 = vst.msk [vmem:[%s823] sm:$0x2] %vm820, %v819
  %s825 = scalar_lea.vmem %s1, 146
  %826 = vst.msk [vmem:[%s825] sm:$0x4] %vm820, %v819
  %s827 = scalar_lea.vmem %s1, 209
  %828 = vst.msk [vmem:[%s827] sm:$0x8] %vm820, %v819
  %s829 = scalar_lea.vmem %s1, 272
  %830 = vst.msk [vmem:[%s829] sm:$0x10] %vm820, %v819
  %s831 = scalar_lea.vmem %s1, 335
  %832 = vst.msk [vmem:[%s831] sm:$0x20] %vm820, %v819
  %s833 = scalar_lea.vmem %s1, 398
  %834 = vst.msk [vmem:[%s833] sm:$0x40] %vm820, %v819
  %s835 = scalar_lea.vmem %s1, 461
  %836 = vst.msk [vmem:[%s835] sm:$0x80] %vm820, %v819
  %s837 = scalar_lea.vmem %s0, 8
  %v838 = vld [vmem:[%s837] sm:$0xff]
  %839 = vrot.lane.b32.xlu0 %v838, 108
  %v840 = vpop.permute.xlu0 %839
  %vm841 = vcmask 7168
  %s842 = scalar_lea.vmem %s1, 532
  %843 = vst.msk [vmem:[%s842] sm:$0x1] %vm841, %v840
  %s844 = scalar_lea.vmem %s1, 595
  %845 = vst.msk [vmem:[%s844] sm:$0x2] %vm841, %v840
  %s846 = scalar_lea.vmem %s1, 658
  %847 = vst.msk [vmem:[%s846] sm:$0x4] %vm841, %v840
  %s848 = scalar_lea.vmem %s1, 721
  %849 = vst.msk [vmem:[%s848] sm:$0x8] %vm841, %v840
  %s850 = scalar_lea.vmem %s1, 784
  %851 = vst.msk [vmem:[%s850] sm:$0x10] %vm841, %v840
  %s852 = scalar_lea.vmem %s1, 847
  %853 = vst.msk [vmem:[%s852] sm:$0x20] %vm841, %v840
  %s854 = scalar_lea.vmem %s1, 910
  %855 = vst.msk [vmem:[%s854] sm:$0x40] %vm841, %v840
  %s856 = scalar_lea.vmem %s1, 973
  %857 = vst.msk [vmem:[%s856] sm:$0x80] %vm841, %v840
  %v858 = vld [vmem:[%s0] sm:$0xff]
  %859 = vrot.lane.b32.xlu0 %v858, 107
  %v860 = vpop.permute.xlu0 %859
  %vm861 = vcmask 7168
  %s862 = scalar_lea.vmem %s1, 21
  %863 = vst.msk [vmem:[%s862] sm:$0x1] %vm861, %v860
  %s864 = scalar_lea.vmem %s1, 84
  %865 = vst.msk [vmem:[%s864] sm:$0x2] %vm861, %v860
  %s866 = scalar_lea.vmem %s1, 147
  %867 = vst.msk [vmem:[%s866] sm:$0x4] %vm861, %v860
  %s868 = scalar_lea.vmem %s1, 210
  %869 = vst.msk [vmem:[%s868] sm:$0x8] %vm861, %v860
  %s870 = scalar_lea.vmem %s1, 273
  %871 = vst.msk [vmem:[%s870] sm:$0x10] %vm861, %v860
  %s872 = scalar_lea.vmem %s1, 336
  %873 = vst.msk [vmem:[%s872] sm:$0x20] %vm861, %v860
  %s874 = scalar_lea.vmem %s1, 399
  %875 = vst.msk [vmem:[%s874] sm:$0x40] %vm861, %v860
  %s876 = scalar_lea.vmem %s1, 462
  %877 = vst.msk [vmem:[%s876] sm:$0x80] %vm861, %v860
  %s878 = scalar_lea.vmem %s0, 8
  %v879 = vld [vmem:[%s878] sm:$0xff]
  %880 = vrot.lane.b32.xlu0 %v879, 107
  %v881 = vpop.permute.xlu0 %880
  %vm882 = vcmask 7168
  %s883 = scalar_lea.vmem %s1, 533
  %884 = vst.msk [vmem:[%s883] sm:$0x1] %vm882, %v881
  %s885 = scalar_lea.vmem %s1, 596
  %886 = vst.msk [vmem:[%s885] sm:$0x2] %vm882, %v881
  %s887 = scalar_lea.vmem %s1, 659
  %888 = vst.msk [vmem:[%s887] sm:$0x4] %vm882, %v881
  %s889 = scalar_lea.vmem %s1, 722
  %890 = vst.msk [vmem:[%s889] sm:$0x8] %vm882, %v881
  %s891 = scalar_lea.vmem %s1, 785
  %892 = vst.msk [vmem:[%s891] sm:$0x10] %vm882, %v881
  %s893 = scalar_lea.vmem %s1, 848
  %894 = vst.msk [vmem:[%s893] sm:$0x20] %vm882, %v881
  %s895 = scalar_lea.vmem %s1, 911
  %896 = vst.msk [vmem:[%s895] sm:$0x40] %vm882, %v881
  %s897 = scalar_lea.vmem %s1, 974
  %898 = vst.msk [vmem:[%s897] sm:$0x80] %vm882, %v881
  %v899 = vld [vmem:[%s0] sm:$0xff]
  %900 = vrot.lane.b32.xlu0 %v899, 106
  %v901 = vpop.permute.xlu0 %900
  %vm902 = vcmask 7168
  %s903 = scalar_lea.vmem %s1, 22
  %904 = vst.msk [vmem:[%s903] sm:$0x1] %vm902, %v901
  %s905 = scalar_lea.vmem %s1, 85
  %906 = vst.msk [vmem:[%s905] sm:$0x2] %vm902, %v901
  %s907 = scalar_lea.vmem %s1, 148
  %908 = vst.msk [vmem:[%s907] sm:$0x4] %vm902, %v901
  %s909 = scalar_lea.vmem %s1, 211
  %910 = vst.msk [vmem:[%s909] sm:$0x8] %vm902, %v901
  %s911 = scalar_lea.vmem %s1, 274
  %912 = vst.msk [vmem:[%s911] sm:$0x10] %vm902, %v901
  %s913 = scalar_lea.vmem %s1, 337
  %914 = vst.msk [vmem:[%s913] sm:$0x20] %vm902, %v901
  %s915 = scalar_lea.vmem %s1, 400
  %916 = vst.msk [vmem:[%s915] sm:$0x40] %vm902, %v901
  %s917 = scalar_lea.vmem %s1, 463
  %918 = vst.msk [vmem:[%s917] sm:$0x80] %vm902, %v901
  %s919 = scalar_lea.vmem %s0, 8
  %v920 = vld [vmem:[%s919] sm:$0xff]
  %921 = vrot.lane.b32.xlu0 %v920, 106
  %v922 = vpop.permute.xlu0 %921
  %vm923 = vcmask 7168
  %s924 = scalar_lea.vmem %s1, 534
  %925 = vst.msk [vmem:[%s924] sm:$0x1] %vm923, %v922
  %s926 = scalar_lea.vmem %s1, 597
  %927 = vst.msk [vmem:[%s926] sm:$0x2] %vm923, %v922
  %s928 = scalar_lea.vmem %s1, 660
  %929 = vst.msk [vmem:[%s928] sm:$0x4] %vm923, %v922
  %s930 = scalar_lea.vmem %s1, 723
  %931 = vst.msk [vmem:[%s930] sm:$0x8] %vm923, %v922
  %s932 = scalar_lea.vmem %s1, 786
  %933 = vst.msk [vmem:[%s932] sm:$0x10] %vm923, %v922
  %s934 = scalar_lea.vmem %s1, 849
  %935 = vst.msk [vmem:[%s934] sm:$0x20] %vm923, %v922
  %s936 = scalar_lea.vmem %s1, 912
  %937 = vst.msk [vmem:[%s936] sm:$0x40] %vm923, %v922
  %s938 = scalar_lea.vmem %s1, 975
  %939 = vst.msk [vmem:[%s938] sm:$0x80] %vm923, %v922
  %v940 = vld [vmem:[%s0] sm:$0xff]
  %941 = vrot.lane.b32.xlu0 %v940, 105
  %v942 = vpop.permute.xlu0 %941
  %vm943 = vcmask 7168
  %s944 = scalar_lea.vmem %s1, 23
  %945 = vst.msk [vmem:[%s944] sm:$0x1] %vm943, %v942
  %s946 = scalar_lea.vmem %s1, 86
  %947 = vst.msk [vmem:[%s946] sm:$0x2] %vm943, %v942
  %s948 = scalar_lea.vmem %s1, 149
  %949 = vst.msk [vmem:[%s948] sm:$0x4] %vm943, %v942
  %s950 = scalar_lea.vmem %s1, 212
  %951 = vst.msk [vmem:[%s950] sm:$0x8] %vm943, %v942
  %s952 = scalar_lea.vmem %s1, 275
  %953 = vst.msk [vmem:[%s952] sm:$0x10] %vm943, %v942
  %s954 = scalar_lea.vmem %s1, 338
  %955 = vst.msk [vmem:[%s954] sm:$0x20] %vm943, %v942
  %s956 = scalar_lea.vmem %s1, 401
  %957 = vst.msk [vmem:[%s956] sm:$0x40] %vm943, %v942
  %s958 = scalar_lea.vmem %s1, 464
  %959 = vst.msk [vmem:[%s958] sm:$0x80] %vm943, %v942
  %s960 = scalar_lea.vmem %s0, 8
  %v961 = vld [vmem:[%s960] sm:$0xff]
  %962 = vrot.lane.b32.xlu0 %v961, 105
  %v963 = vpop.permute.xlu0 %962
  %vm964 = vcmask 7168
  %s965 = scalar_lea.vmem %s1, 535
  %966 = vst.msk [vmem:[%s965] sm:$0x1] %vm964, %v963
  %s967 = scalar_lea.vmem %s1, 598
  %968 = vst.msk [vmem:[%s967] sm:$0x2] %vm964, %v963
  %s969 = scalar_lea.vmem %s1, 661
  %970 = vst.msk [vmem:[%s969] sm:$0x4] %vm964, %v963
  %s971 = scalar_lea.vmem %s1, 724
  %972 = vst.msk [vmem:[%s971] sm:$0x8] %vm964, %v963
  %s973 = scalar_lea.vmem %s1, 787
  %974 = vst.msk [vmem:[%s973] sm:$0x10] %vm964, %v963
  %s975 = scalar_lea.vmem %s1, 850
  %976 = vst.msk [vmem:[%s975] sm:$0x20] %vm964, %v963
  %s977 = scalar_lea.vmem %s1, 913
  %978 = vst.msk [vmem:[%s977] sm:$0x40] %vm964, %v963
  %s979 = scalar_lea.vmem %s1, 976
  %980 = vst.msk [vmem:[%s979] sm:$0x80] %vm964, %v963
  %v981 = vld [vmem:[%s0] sm:$0xff]
  %982 = vrot.lane.b32.xlu0 %v981, 104
  %v983 = vpop.permute.xlu0 %982
  %vm984 = vcmask 7168
  %s985 = scalar_lea.vmem %s1, 24
  %986 = vst.msk [vmem:[%s985] sm:$0x1] %vm984, %v983
  %s987 = scalar_lea.vmem %s1, 87
  %988 = vst.msk [vmem:[%s987] sm:$0x2] %vm984, %v983
  %s989 = scalar_lea.vmem %s1, 150
  %990 = vst.msk [vmem:[%s989] sm:$0x4] %vm984, %v983
  %s991 = scalar_lea.vmem %s1, 213
  %992 = vst.msk [vmem:[%s991] sm:$0x8] %vm984, %v983
  %s993 = scalar_lea.vmem %s1, 276
  %994 = vst.msk [vmem:[%s993] sm:$0x10] %vm984, %v983
  %s995 = scalar_lea.vmem %s1, 339
  %996 = vst.msk [vmem:[%s995] sm:$0x20] %vm984, %v983
  %s997 = scalar_lea.vmem %s1, 402
  %998 = vst.msk [vmem:[%s997] sm:$0x40] %vm984, %v983
  %s999 = scalar_lea.vmem %s1, 465
  %1000 = vst.msk [vmem:[%s999] sm:$0x80] %vm984, %v983
  %s1001 = scalar_lea.vmem %s0, 8
  %v1002 = vld [vmem:[%s1001] sm:$0xff]
  %1003 = vrot.lane.b32.xlu0 %v1002, 104
  %v1004 = vpop.permute.xlu0 %1003
  %vm1005 = vcmask 7168
  %s1006 = scalar_lea.vmem %s1, 536
  %1007 = vst.msk [vmem:[%s1006] sm:$0x1] %vm1005, %v1004
  %s1008 = scalar_lea.vmem %s1, 599
  %1009 = vst.msk [vmem:[%s1008] sm:$0x2] %vm1005, %v1004
  %s1010 = scalar_lea.vmem %s1, 662
  %1011 = vst.msk [vmem:[%s1010] sm:$0x4] %vm1005, %v1004
  %s1012 = scalar_lea.vmem %s1, 725
  %1013 = vst.msk [vmem:[%s1012] sm:$0x8] %vm1005, %v1004
  %s1014 = scalar_lea.vmem %s1, 788
  %1015 = vst.msk [vmem:[%s1014] sm:$0x10] %vm1005, %v1004
  %s1016 = scalar_lea.vmem %s1, 851
  %1017 = vst.msk [vmem:[%s1016] sm:$0x20] %vm1005, %v1004
  %s1018 = scalar_lea.vmem %s1, 914
  %1019 = vst.msk [vmem:[%s1018] sm:$0x40] %vm1005, %v1004
  %s1020 = scalar_lea.vmem %s1, 977
  %1021 = vst.msk [vmem:[%s1020] sm:$0x80] %vm1005, %v1004
  %v1022 = vld [vmem:[%s0] sm:$0xff]
  %1023 = vrot.lane.b32.xlu0 %v1022, 103
  %v1024 = vpop.permute.xlu0 %1023
  %vm1025 = vcmask 7168
  %s1026 = scalar_lea.vmem %s1, 25
  %1027 = vst.msk [vmem:[%s1026] sm:$0x1] %vm1025, %v1024
  %s1028 = scalar_lea.vmem %s1, 88
  %1029 = vst.msk [vmem:[%s1028] sm:$0x2] %vm1025, %v1024
  %s1030 = scalar_lea.vmem %s1, 151
  %1031 = vst.msk [vmem:[%s1030] sm:$0x4] %vm1025, %v1024
  %s1032 = scalar_lea.vmem %s1, 214
  %1033 = vst.msk [vmem:[%s1032] sm:$0x8] %vm1025, %v1024
  %s1034 = scalar_lea.vmem %s1, 277
  %1035 = vst.msk [vmem:[%s1034] sm:$0x10] %vm1025, %v1024
  %s1036 = scalar_lea.vmem %s1, 340
  %1037 = vst.msk [vmem:[%s1036] sm:$0x20] %vm1025, %v1024
  %s1038 = scalar_lea.vmem %s1, 403
  %1039 = vst.msk [vmem:[%s1038] sm:$0x40] %vm1025, %v1024
  %s1040 = scalar_lea.vmem %s1, 466
  %1041 = vst.msk [vmem:[%s1040] sm:$0x80] %vm1025, %v1024
  %s1042 = scalar_lea.vmem %s0, 8
  %v1043 = vld [vmem:[%s1042] sm:$0xff]
  %1044 = vrot.lane.b32.xlu0 %v1043, 103
  %v1045 = vpop.permute.xlu0 %1044
  %vm1046 = vcmask 7168
  %s1047 = scalar_lea.vmem %s1, 537
  %1048 = vst.msk [vmem:[%s1047] sm:$0x1] %vm1046, %v1045
  %s1049 = scalar_lea.vmem %s1, 600
  %1050 = vst.msk [vmem:[%s1049] sm:$0x2] %vm1046, %v1045
  %s1051 = scalar_lea.vmem %s1, 663
  %1052 = vst.msk [vmem:[%s1051] sm:$0x4] %vm1046, %v1045
  %s1053 = scalar_lea.vmem %s1, 726
  %1054 = vst.msk [vmem:[%s1053] sm:$0x8] %vm1046, %v1045
  %s1055 = scalar_lea.vmem %s1, 789
  %1056 = vst.msk [vmem:[%s1055] sm:$0x10] %vm1046, %v1045
  %s1057 = scalar_lea.vmem %s1, 852
  %1058 = vst.msk [vmem:[%s1057] sm:$0x20] %vm1046, %v1045
  %s1059 = scalar_lea.vmem %s1, 915
  %1060 = vst.msk [vmem:[%s1059] sm:$0x40] %vm1046, %v1045
  %s1061 = scalar_lea.vmem %s1, 978
  %1062 = vst.msk [vmem:[%s1061] sm:$0x80] %vm1046, %v1045
  %v1063 = vld [vmem:[%s0] sm:$0xff]
  %1064 = vrot.lane.b32.xlu0 %v1063, 102
  %v1065 = vpop.permute.xlu0 %1064
  %vm1066 = vcmask 7168
  %s1067 = scalar_lea.vmem %s1, 26
  %1068 = vst.msk [vmem:[%s1067] sm:$0x1] %vm1066, %v1065
  %s1069 = scalar_lea.vmem %s1, 89
  %1070 = vst.msk [vmem:[%s1069] sm:$0x2] %vm1066, %v1065
  %s1071 = scalar_lea.vmem %s1, 152
  %1072 = vst.msk [vmem:[%s1071] sm:$0x4] %vm1066, %v1065
  %s1073 = scalar_lea.vmem %s1, 215
  %1074 = vst.msk [vmem:[%s1073] sm:$0x8] %vm1066, %v1065
  %s1075 = scalar_lea.vmem %s1, 278
  %1076 = vst.msk [vmem:[%s1075] sm:$0x10] %vm1066, %v1065
  %s1077 = scalar_lea.vmem %s1, 341
  %1078 = vst.msk [vmem:[%s1077] sm:$0x20] %vm1066, %v1065
  %s1079 = scalar_lea.vmem %s1, 404
  %1080 = vst.msk [vmem:[%s1079] sm:$0x40] %vm1066, %v1065
  %s1081 = scalar_lea.vmem %s1, 467
  %1082 = vst.msk [vmem:[%s1081] sm:$0x80] %vm1066, %v1065
  %s1083 = scalar_lea.vmem %s0, 8
  %v1084 = vld [vmem:[%s1083] sm:$0xff]
  %1085 = vrot.lane.b32.xlu0 %v1084, 102
  %v1086 = vpop.permute.xlu0 %1085
  %vm1087 = vcmask 7168
  %s1088 = scalar_lea.vmem %s1, 538
  %1089 = vst.msk [vmem:[%s1088] sm:$0x1] %vm1087, %v1086
  %s1090 = scalar_lea.vmem %s1, 601
  %1091 = vst.msk [vmem:[%s1090] sm:$0x2] %vm1087, %v1086
  %s1092 = scalar_lea.vmem %s1, 664
  %1093 = vst.msk [vmem:[%s1092] sm:$0x4] %vm1087, %v1086
  %s1094 = scalar_lea.vmem %s1, 727
  %1095 = vst.msk [vmem:[%s1094] sm:$0x8] %vm1087, %v1086
  %s1096 = scalar_lea.vmem %s1, 790
  %1097 = vst.msk [vmem:[%s1096] sm:$0x10] %vm1087, %v1086
  %s1098 = scalar_lea.vmem %s1, 853
  %1099 = vst.msk [vmem:[%s1098] sm:$0x20] %vm1087, %v1086
  %s1100 = scalar_lea.vmem %s1, 916
  %1101 = vst.msk [vmem:[%s1100] sm:$0x40] %vm1087, %v1086
  %s1102 = scalar_lea.vmem %s1, 979
  %1103 = vst.msk [vmem:[%s1102] sm:$0x80] %vm1087, %v1086
  %v1104 = vld [vmem:[%s0] sm:$0xff]
  %1105 = vrot.lane.b32.xlu0 %v1104, 101
  %v1106 = vpop.permute.xlu0 %1105
  %vm1107 = vcmask 7168
  %s1108 = scalar_lea.vmem %s1, 27
  %1109 = vst.msk [vmem:[%s1108] sm:$0x1] %vm1107, %v1106
  %s1110 = scalar_lea.vmem %s1, 90
  %1111 = vst.msk [vmem:[%s1110] sm:$0x2] %vm1107, %v1106
  %s1112 = scalar_lea.vmem %s1, 153
  %1113 = vst.msk [vmem:[%s1112] sm:$0x4] %vm1107, %v1106
  %s1114 = scalar_lea.vmem %s1, 216
  %1115 = vst.msk [vmem:[%s1114] sm:$0x8] %vm1107, %v1106
  %s1116 = scalar_lea.vmem %s1, 279
  %1117 = vst.msk [vmem:[%s1116] sm:$0x10] %vm1107, %v1106
  %s1118 = scalar_lea.vmem %s1, 342
  %1119 = vst.msk [vmem:[%s1118] sm:$0x20] %vm1107, %v1106
  %s1120 = scalar_lea.vmem %s1, 405
  %1121 = vst.msk [vmem:[%s1120] sm:$0x40] %vm1107, %v1106
  %s1122 = scalar_lea.vmem %s1, 468
  %1123 = vst.msk [vmem:[%s1122] sm:$0x80] %vm1107, %v1106
  %s1124 = scalar_lea.vmem %s0, 8
  %v1125 = vld [vmem:[%s1124] sm:$0xff]
  %1126 = vrot.lane.b32.xlu0 %v1125, 101
  %v1127 = vpop.permute.xlu0 %1126
  %vm1128 = vcmask 7168
  %s1129 = scalar_lea.vmem %s1, 539
  %1130 = vst.msk [vmem:[%s1129] sm:$0x1] %vm1128, %v1127
  %s1131 = scalar_lea.vmem %s1, 602
  %1132 = vst.msk [vmem:[%s1131] sm:$0x2] %vm1128, %v1127
  %s1133 = scalar_lea.vmem %s1, 665
  %1134 = vst.msk [vmem:[%s1133] sm:$0x4] %vm1128, %v1127
  %s1135 = scalar_lea.vmem %s1, 728
  %1136 = vst.msk [vmem:[%s1135] sm:$0x8] %vm1128, %v1127
  %s1137 = scalar_lea.vmem %s1, 791
  %1138 = vst.msk [vmem:[%s1137] sm:$0x10] %vm1128, %v1127
  %s1139 = scalar_lea.vmem %s1, 854
  %1140 = vst.msk [vmem:[%s1139] sm:$0x20] %vm1128, %v1127
  %s1141 = scalar_lea.vmem %s1, 917
  %1142 = vst.msk [vmem:[%s1141] sm:$0x40] %vm1128, %v1127
  %s1143 = scalar_lea.vmem %s1, 980
  %1144 = vst.msk [vmem:[%s1143] sm:$0x80] %vm1128, %v1127
  %v1145 = vld [vmem:[%s0] sm:$0xff]
  %1146 = vrot.lane.b32.xlu0 %v1145, 100
  %v1147 = vpop.permute.xlu0 %1146
  %vm1148 = vcmask 7168
  %s1149 = scalar_lea.vmem %s1, 28
  %1150 = vst.msk [vmem:[%s1149] sm:$0x1] %vm1148, %v1147
  %s1151 = scalar_lea.vmem %s1, 91
  %1152 = vst.msk [vmem:[%s1151] sm:$0x2] %vm1148, %v1147
  %s1153 = scalar_lea.vmem %s1, 154
  %1154 = vst.msk [vmem:[%s1153] sm:$0x4] %vm1148, %v1147
  %s1155 = scalar_lea.vmem %s1, 217
  %1156 = vst.msk [vmem:[%s1155] sm:$0x8] %vm1148, %v1147
  %s1157 = scalar_lea.vmem %s1, 280
  %1158 = vst.msk [vmem:[%s1157] sm:$0x10] %vm1148, %v1147
  %s1159 = scalar_lea.vmem %s1, 343
  %1160 = vst.msk [vmem:[%s1159] sm:$0x20] %vm1148, %v1147
  %s1161 = scalar_lea.vmem %s1, 406
  %1162 = vst.msk [vmem:[%s1161] sm:$0x40] %vm1148, %v1147
  %s1163 = scalar_lea.vmem %s1, 469
  %1164 = vst.msk [vmem:[%s1163] sm:$0x80] %vm1148, %v1147
  %s1165 = scalar_lea.vmem %s0, 8
  %v1166 = vld [vmem:[%s1165] sm:$0xff]
  %1167 = vrot.lane.b32.xlu0 %v1166, 100
  %v1168 = vpop.permute.xlu0 %1167
  %vm1169 = vcmask 7168
  %s1170 = scalar_lea.vmem %s1, 540
  %1171 = vst.msk [vmem:[%s1170] sm:$0x1] %vm1169, %v1168
  %s1172 = scalar_lea.vmem %s1, 603
  %1173 = vst.msk [vmem:[%s1172] sm:$0x2] %vm1169, %v1168
  %s1174 = scalar_lea.vmem %s1, 666
  %1175 = vst.msk [vmem:[%s1174] sm:$0x4] %vm1169, %v1168
  %s1176 = scalar_lea.vmem %s1, 729
  %1177 = vst.msk [vmem:[%s1176] sm:$0x8] %vm1169, %v1168
  %s1178 = scalar_lea.vmem %s1, 792
  %1179 = vst.msk [vmem:[%s1178] sm:$0x10] %vm1169, %v1168
  %s1180 = scalar_lea.vmem %s1, 855
  %1181 = vst.msk [vmem:[%s1180] sm:$0x20] %vm1169, %v1168
  %s1182 = scalar_lea.vmem %s1, 918
  %1183 = vst.msk [vmem:[%s1182] sm:$0x40] %vm1169, %v1168
  %s1184 = scalar_lea.vmem %s1, 981
  %1185 = vst.msk [vmem:[%s1184] sm:$0x80] %vm1169, %v1168
  %v1186 = vld [vmem:[%s0] sm:$0xff]
  %1187 = vrot.lane.b32.xlu0 %v1186, 99
  %v1188 = vpop.permute.xlu0 %1187
  %vm1189 = vcmask 7168
  %s1190 = scalar_lea.vmem %s1, 29
  %1191 = vst.msk [vmem:[%s1190] sm:$0x1] %vm1189, %v1188
  %s1192 = scalar_lea.vmem %s1, 92
  %1193 = vst.msk [vmem:[%s1192] sm:$0x2] %vm1189, %v1188
  %s1194 = scalar_lea.vmem %s1, 155
  %1195 = vst.msk [vmem:[%s1194] sm:$0x4] %vm1189, %v1188
  %s1196 = scalar_lea.vmem %s1, 218
  %1197 = vst.msk [vmem:[%s1196] sm:$0x8] %vm1189, %v1188
  %s1198 = scalar_lea.vmem %s1, 281
  %1199 = vst.msk [vmem:[%s1198] sm:$0x10] %vm1189, %v1188
  %s1200 = scalar_lea.vmem %s1, 344
  %1201 = vst.msk [vmem:[%s1200] sm:$0x20] %vm1189, %v1188
  %s1202 = scalar_lea.vmem %s1, 407
  %1203 = vst.msk [vmem:[%s1202] sm:$0x40] %vm1189, %v1188
  %s1204 = scalar_lea.vmem %s1, 470
  %1205 = vst.msk [vmem:[%s1204] sm:$0x80] %vm1189, %v1188
  %s1206 = scalar_lea.vmem %s0, 8
  %v1207 = vld [vmem:[%s1206] sm:$0xff]
  %1208 = vrot.lane.b32.xlu0 %v1207, 99
  %v1209 = vpop.permute.xlu0 %1208
  %vm1210 = vcmask 7168
  %s1211 = scalar_lea.vmem %s1, 541
  %1212 = vst.msk [vmem:[%s1211] sm:$0x1] %vm1210, %v1209
  %s1213 = scalar_lea.vmem %s1, 604
  %1214 = vst.msk [vmem:[%s1213] sm:$0x2] %vm1210, %v1209
  %s1215 = scalar_lea.vmem %s1, 667
  %1216 = vst.msk [vmem:[%s1215] sm:$0x4] %vm1210, %v1209
  %s1217 = scalar_lea.vmem %s1, 730
  %1218 = vst.msk [vmem:[%s1217] sm:$0x8] %vm1210, %v1209
  %s1219 = scalar_lea.vmem %s1, 793
  %1220 = vst.msk [vmem:[%s1219] sm:$0x10] %vm1210, %v1209
  %s1221 = scalar_lea.vmem %s1, 856
  %1222 = vst.msk [vmem:[%s1221] sm:$0x20] %vm1210, %v1209
  %s1223 = scalar_lea.vmem %s1, 919
  %1224 = vst.msk [vmem:[%s1223] sm:$0x40] %vm1210, %v1209
  %s1225 = scalar_lea.vmem %s1, 982
  %1226 = vst.msk [vmem:[%s1225] sm:$0x80] %vm1210, %v1209
  %v1227 = vld [vmem:[%s0] sm:$0xff]
  %1228 = vrot.lane.b32.xlu0 %v1227, 98
  %v1229 = vpop.permute.xlu0 %1228
  %vm1230 = vcmask 7168
  %s1231 = scalar_lea.vmem %s1, 30
  %1232 = vst.msk [vmem:[%s1231] sm:$0x1] %vm1230, %v1229
  %s1233 = scalar_lea.vmem %s1, 93
  %1234 = vst.msk [vmem:[%s1233] sm:$0x2] %vm1230, %v1229
  %s1235 = scalar_lea.vmem %s1, 156
  %1236 = vst.msk [vmem:[%s1235] sm:$0x4] %vm1230, %v1229
  %s1237 = scalar_lea.vmem %s1, 219
  %1238 = vst.msk [vmem:[%s1237] sm:$0x8] %vm1230, %v1229
  %s1239 = scalar_lea.vmem %s1, 282
  %1240 = vst.msk [vmem:[%s1239] sm:$0x10] %vm1230, %v1229
  %s1241 = scalar_lea.vmem %s1, 345
  %1242 = vst.msk [vmem:[%s1241] sm:$0x20] %vm1230, %v1229
  %s1243 = scalar_lea.vmem %s1, 408
  %1244 = vst.msk [vmem:[%s1243] sm:$0x40] %vm1230, %v1229
  %s1245 = scalar_lea.vmem %s1, 471
  %1246 = vst.msk [vmem:[%s1245] sm:$0x80] %vm1230, %v1229
  %s1247 = scalar_lea.vmem %s0, 8
  %v1248 = vld [vmem:[%s1247] sm:$0xff]
  %1249 = vrot.lane.b32.xlu0 %v1248, 98
  %v1250 = vpop.permute.xlu0 %1249
  %vm1251 = vcmask 7168
  %s1252 = scalar_lea.vmem %s1, 542
  %1253 = vst.msk [vmem:[%s1252] sm:$0x1] %vm1251, %v1250
  %s1254 = scalar_lea.vmem %s1, 605
  %1255 = vst.msk [vmem:[%s1254] sm:$0x2] %vm1251, %v1250
  %s1256 = scalar_lea.vmem %s1, 668
  %1257 = vst.msk [vmem:[%s1256] sm:$0x4] %vm1251, %v1250
  %s1258 = scalar_lea.vmem %s1, 731
  %1259 = vst.msk [vmem:[%s1258] sm:$0x8] %vm1251, %v1250
  %s1260 = scalar_lea.vmem %s1, 794
  %1261 = vst.msk [vmem:[%s1260] sm:$0x10] %vm1251, %v1250
  %s1262 = scalar_lea.vmem %s1, 857
  %1263 = vst.msk [vmem:[%s1262] sm:$0x20] %vm1251, %v1250
  %s1264 = scalar_lea.vmem %s1, 920
  %1265 = vst.msk [vmem:[%s1264] sm:$0x40] %vm1251, %v1250
  %s1266 = scalar_lea.vmem %s1, 983
  %1267 = vst.msk [vmem:[%s1266] sm:$0x80] %vm1251, %v1250
  %v1268 = vld [vmem:[%s0] sm:$0xff]
  %1269 = vrot.lane.b32.xlu0 %v1268, 97
  %v1270 = vpop.permute.xlu0 %1269
  %vm1271 = vcmask 7168
  %s1272 = scalar_lea.vmem %s1, 31
  %1273 = vst.msk [vmem:[%s1272] sm:$0x1] %vm1271, %v1270
  %s1274 = scalar_lea.vmem %s1, 94
  %1275 = vst.msk [vmem:[%s1274] sm:$0x2] %vm1271, %v1270
  %s1276 = scalar_lea.vmem %s1, 157
  %1277 = vst.msk [vmem:[%s1276] sm:$0x4] %vm1271, %v1270
  %s1278 = scalar_lea.vmem %s1, 220
  %1279 = vst.msk [vmem:[%s1278] sm:$0x8] %vm1271, %v1270
  %s1280 = scalar_lea.vmem %s1, 283
  %1281 = vst.msk [vmem:[%s1280] sm:$0x10] %vm1271, %v1270
  %s1282 = scalar_lea.vmem %s1, 346
  %1283 = vst.msk [vmem:[%s1282] sm:$0x20] %vm1271, %v1270
  %s1284 = scalar_lea.vmem %s1, 409
  %1285 = vst.msk [vmem:[%s1284] sm:$0x40] %vm1271, %v1270
  %s1286 = scalar_lea.vmem %s1, 472
  %1287 = vst.msk [vmem:[%s1286] sm:$0x80] %vm1271, %v1270
  %s1288 = scalar_lea.vmem %s0, 8
  %v1289 = vld [vmem:[%s1288] sm:$0xff]
  %1290 = vrot.lane.b32.xlu0 %v1289, 97
  %v1291 = vpop.permute.xlu0 %1290
  %vm1292 = vcmask 7168
  %s1293 = scalar_lea.vmem %s1, 543
  %1294 = vst.msk [vmem:[%s1293] sm:$0x1] %vm1292, %v1291
  %s1295 = scalar_lea.vmem %s1, 606
  %1296 = vst.msk [vmem:[%s1295] sm:$0x2] %vm1292, %v1291
  %s1297 = scalar_lea.vmem %s1, 669
  %1298 = vst.msk [vmem:[%s1297] sm:$0x4] %vm1292, %v1291
  %s1299 = scalar_lea.vmem %s1, 732
  %1300 = vst.msk [vmem:[%s1299] sm:$0x8] %vm1292, %v1291
  %s1301 = scalar_lea.vmem %s1, 795
  %1302 = vst.msk [vmem:[%s1301] sm:$0x10] %vm1292, %v1291
  %s1303 = scalar_lea.vmem %s1, 858
  %1304 = vst.msk [vmem:[%s1303] sm:$0x20] %vm1292, %v1291
  %s1305 = scalar_lea.vmem %s1, 921
  %1306 = vst.msk [vmem:[%s1305] sm:$0x40] %vm1292, %v1291
  %s1307 = scalar_lea.vmem %s1, 984
  %1308 = vst.msk [vmem:[%s1307] sm:$0x80] %vm1292, %v1291
  %v1309 = vld [vmem:[%s0] sm:$0xff]
  %1310 = vrot.lane.b32.xlu0 %v1309, 96
  %v1311 = vpop.permute.xlu0 %1310
  %vm1312 = vcmask 7168
  %s1313 = scalar_lea.vmem %s1, 32
  %1314 = vst.msk [vmem:[%s1313] sm:$0x1] %vm1312, %v1311
  %s1315 = scalar_lea.vmem %s1, 95
  %1316 = vst.msk [vmem:[%s1315] sm:$0x2] %vm1312, %v1311
  %s1317 = scalar_lea.vmem %s1, 158
  %1318 = vst.msk [vmem:[%s1317] sm:$0x4] %vm1312, %v1311
  %s1319 = scalar_lea.vmem %s1, 221
  %1320 = vst.msk [vmem:[%s1319] sm:$0x8] %vm1312, %v1311
  %s1321 = scalar_lea.vmem %s1, 284
  %1322 = vst.msk [vmem:[%s1321] sm:$0x10] %vm1312, %v1311
  %s1323 = scalar_lea.vmem %s1, 347
  %1324 = vst.msk [vmem:[%s1323] sm:$0x20] %vm1312, %v1311
  %s1325 = scalar_lea.vmem %s1, 410
  %1326 = vst.msk [vmem:[%s1325] sm:$0x40] %vm1312, %v1311
  %s1327 = scalar_lea.vmem %s1, 473
  %1328 = vst.msk [vmem:[%s1327] sm:$0x80] %vm1312, %v1311
  %s1329 = scalar_lea.vmem %s0, 8
  %v1330 = vld [vmem:[%s1329] sm:$0xff]
  %1331 = vrot.lane.b32.xlu0 %v1330, 96
  %v1332 = vpop.permute.xlu0 %1331
  %vm1333 = vcmask 7168
  %s1334 = scalar_lea.vmem %s1, 544
  %1335 = vst.msk [vmem:[%s1334] sm:$0x1] %vm1333, %v1332
  %s1336 = scalar_lea.vmem %s1, 607
  %1337 = vst.msk [vmem:[%s1336] sm:$0x2] %vm1333, %v1332
  %s1338 = scalar_lea.vmem %s1, 670
  %1339 = vst.msk [vmem:[%s1338] sm:$0x4] %vm1333, %v1332
  %s1340 = scalar_lea.vmem %s1, 733
  %1341 = vst.msk [vmem:[%s1340] sm:$0x8] %vm1333, %v1332
  %s1342 = scalar_lea.vmem %s1, 796
  %1343 = vst.msk [vmem:[%s1342] sm:$0x10] %vm1333, %v1332
  %s1344 = scalar_lea.vmem %s1, 859
  %1345 = vst.msk [vmem:[%s1344] sm:$0x20] %vm1333, %v1332
  %s1346 = scalar_lea.vmem %s1, 922
  %1347 = vst.msk [vmem:[%s1346] sm:$0x40] %vm1333, %v1332
  %s1348 = scalar_lea.vmem %s1, 985
  %1349 = vst.msk [vmem:[%s1348] sm:$0x80] %vm1333, %v1332
  %v1350 = vld [vmem:[%s0] sm:$0xff]
  %1351 = vrot.lane.b32.xlu0 %v1350, 95
  %v1352 = vpop.permute.xlu0 %1351
  %vm1353 = vcmask 7168
  %s1354 = scalar_lea.vmem %s1, 33
  %1355 = vst.msk [vmem:[%s1354] sm:$0x1] %vm1353, %v1352
  %s1356 = scalar_lea.vmem %s1, 96
  %1357 = vst.msk [vmem:[%s1356] sm:$0x2] %vm1353, %v1352
  %s1358 = scalar_lea.vmem %s1, 159
  %1359 = vst.msk [vmem:[%s1358] sm:$0x4] %vm1353, %v1352
  %s1360 = scalar_lea.vmem %s1, 222
  %1361 = vst.msk [vmem:[%s1360] sm:$0x8] %vm1353, %v1352
  %s1362 = scalar_lea.vmem %s1, 285
  %1363 = vst.msk [vmem:[%s1362] sm:$0x10] %vm1353, %v1352
  %s1364 = scalar_lea.vmem %s1, 348
  %1365 = vst.msk [vmem:[%s1364] sm:$0x20] %vm1353, %v1352
  %s1366 = scalar_lea.vmem %s1, 411
  %1367 = vst.msk [vmem:[%s1366] sm:$0x40] %vm1353, %v1352
  %s1368 = scalar_lea.vmem %s1, 474
  %1369 = vst.msk [vmem:[%s1368] sm:$0x80] %vm1353, %v1352
  %s1370 = scalar_lea.vmem %s0, 8
  %v1371 = vld [vmem:[%s1370] sm:$0xff]
  %1372 = vrot.lane.b32.xlu0 %v1371, 95
  %v1373 = vpop.permute.xlu0 %1372
  %vm1374 = vcmask 7168
  %s1375 = scalar_lea.vmem %s1, 545
  %1376 = vst.msk [vmem:[%s1375] sm:$0x1] %vm1374, %v1373
  %s1377 = scalar_lea.vmem %s1, 608
  %1378 = vst.msk [vmem:[%s1377] sm:$0x2] %vm1374, %v1373
  %s1379 = scalar_lea.vmem %s1, 671
  %1380 = vst.msk [vmem:[%s1379] sm:$0x4] %vm1374, %v1373
  %s1381 = scalar_lea.vmem %s1, 734
  %1382 = vst.msk [vmem:[%s1381] sm:$0x8] %vm1374, %v1373
  %s1383 = scalar_lea.vmem %s1, 797
  %1384 = vst.msk [vmem:[%s1383] sm:$0x10] %vm1374, %v1373
  %s1385 = scalar_lea.vmem %s1, 860
  %1386 = vst.msk [vmem:[%s1385] sm:$0x20] %vm1374, %v1373
  %s1387 = scalar_lea.vmem %s1, 923
  %1388 = vst.msk [vmem:[%s1387] sm:$0x40] %vm1374, %v1373
  %s1389 = scalar_lea.vmem %s1, 986
  %1390 = vst.msk [vmem:[%s1389] sm:$0x80] %vm1374, %v1373
  %v1391 = vld [vmem:[%s0] sm:$0xff]
  %1392 = vrot.lane.b32.xlu0 %v1391, 94
  %v1393 = vpop.permute.xlu0 %1392
  %vm1394 = vcmask 7168
  %s1395 = scalar_lea.vmem %s1, 34
  %1396 = vst.msk [vmem:[%s1395] sm:$0x1] %vm1394, %v1393
  %s1397 = scalar_lea.vmem %s1, 97
  %1398 = vst.msk [vmem:[%s1397] sm:$0x2] %vm1394, %v1393
  %s1399 = scalar_lea.vmem %s1, 160
  %1400 = vst.msk [vmem:[%s1399] sm:$0x4] %vm1394, %v1393
  %s1401 = scalar_lea.vmem %s1, 223
  %1402 = vst.msk [vmem:[%s1401] sm:$0x8] %vm1394, %v1393
  %s1403 = scalar_lea.vmem %s1, 286
  %1404 = vst.msk [vmem:[%s1403] sm:$0x10] %vm1394, %v1393
  %s1405 = scalar_lea.vmem %s1, 349
  %1406 = vst.msk [vmem:[%s1405] sm:$0x20] %vm1394, %v1393
  %s1407 = scalar_lea.vmem %s1, 412
  %1408 = vst.msk [vmem:[%s1407] sm:$0x40] %vm1394, %v1393
  %s1409 = scalar_lea.vmem %s1, 475
  %1410 = vst.msk [vmem:[%s1409] sm:$0x80] %vm1394, %v1393
  %s1411 = scalar_lea.vmem %s0, 8
  %v1412 = vld [vmem:[%s1411] sm:$0xff]
  %1413 = vrot.lane.b32.xlu0 %v1412, 94
  %v1414 = vpop.permute.xlu0 %1413
  %vm1415 = vcmask 7168
  %s1416 = scalar_lea.vmem %s1, 546
  %1417 = vst.msk [vmem:[%s1416] sm:$0x1] %vm1415, %v1414
  %s1418 = scalar_lea.vmem %s1, 609
  %1419 = vst.msk [vmem:[%s1418] sm:$0x2] %vm1415, %v1414
  %s1420 = scalar_lea.vmem %s1, 672
  %1421 = vst.msk [vmem:[%s1420] sm:$0x4] %vm1415, %v1414
  %s1422 = scalar_lea.vmem %s1, 735
  %1423 = vst.msk [vmem:[%s1422] sm:$0x8] %vm1415, %v1414
  %s1424 = scalar_lea.vmem %s1, 798
  %1425 = vst.msk [vmem:[%s1424] sm:$0x10] %vm1415, %v1414
  %s1426 = scalar_lea.vmem %s1, 861
  %1427 = vst.msk [vmem:[%s1426] sm:$0x20] %vm1415, %v1414
  %s1428 = scalar_lea.vmem %s1, 924
  %1429 = vst.msk [vmem:[%s1428] sm:$0x40] %vm1415, %v1414
  %s1430 = scalar_lea.vmem %s1, 987
  %1431 = vst.msk [vmem:[%s1430] sm:$0x80] %vm1415, %v1414
  %v1432 = vld [vmem:[%s0] sm:$0xff]
  %1433 = vrot.lane.b32.xlu0 %v1432, 93
  %v1434 = vpop.permute.xlu0 %1433
  %vm1435 = vcmask 7168
  %s1436 = scalar_lea.vmem %s1, 35
  %1437 = vst.msk [vmem:[%s1436] sm:$0x1] %vm1435, %v1434
  %s1438 = scalar_lea.vmem %s1, 98
  %1439 = vst.msk [vmem:[%s1438] sm:$0x2] %vm1435, %v1434
  %s1440 = scalar_lea.vmem %s1, 161
  %1441 = vst.msk [vmem:[%s1440] sm:$0x4] %vm1435, %v1434
  %s1442 = scalar_lea.vmem %s1, 224
  %1443 = vst.msk [vmem:[%s1442] sm:$0x8] %vm1435, %v1434
  %s1444 = scalar_lea.vmem %s1, 287
  %1445 = vst.msk [vmem:[%s1444] sm:$0x10] %vm1435, %v1434
  %s1446 = scalar_lea.vmem %s1, 350
  %1447 = vst.msk [vmem:[%s1446] sm:$0x20] %vm1435, %v1434
  %s1448 = scalar_lea.vmem %s1, 413
  %1449 = vst.msk [vmem:[%s1448] sm:$0x40] %vm1435, %v1434
  %s1450 = scalar_lea.vmem %s1, 476
  %1451 = vst.msk [vmem:[%s1450] sm:$0x80] %vm1435, %v1434
  %s1452 = scalar_lea.vmem %s0, 8
  %v1453 = vld [vmem:[%s1452] sm:$0xff]
  %1454 = vrot.lane.b32.xlu0 %v1453, 93
  %v1455 = vpop.permute.xlu0 %1454
  %vm1456 = vcmask 7168
  %s1457 = scalar_lea.vmem %s1, 547
  %1458 = vst.msk [vmem:[%s1457] sm:$0x1] %vm1456, %v1455
  %s1459 = scalar_lea.vmem %s1, 610
  %1460 = vst.msk [vmem:[%s1459] sm:$0x2] %vm1456, %v1455
  %s1461 = scalar_lea.vmem %s1, 673
  %1462 = vst.msk [vmem:[%s1461] sm:$0x4] %vm1456, %v1455
  %s1463 = scalar_lea.vmem %s1, 736
  %1464 = vst.msk [vmem:[%s1463] sm:$0x8] %vm1456, %v1455
  %s1465 = scalar_lea.vmem %s1, 799
  %1466 = vst.msk [vmem:[%s1465] sm:$0x10] %vm1456, %v1455
  %s1467 = scalar_lea.vmem %s1, 862
  %1468 = vst.msk [vmem:[%s1467] sm:$0x20] %vm1456, %v1455
  %s1469 = scalar_lea.vmem %s1, 925
  %1470 = vst.msk [vmem:[%s1469] sm:$0x40] %vm1456, %v1455
  %s1471 = scalar_lea.vmem %s1, 988
  %1472 = vst.msk [vmem:[%s1471] sm:$0x80] %vm1456, %v1455
  %v1473 = vld [vmem:[%s0] sm:$0xff]
  %1474 = vrot.lane.b32.xlu0 %v1473, 92
  %v1475 = vpop.permute.xlu0 %1474
  %vm1476 = vcmask 7168
  %s1477 = scalar_lea.vmem %s1, 36
  %1478 = vst.msk [vmem:[%s1477] sm:$0x1] %vm1476, %v1475
  %s1479 = scalar_lea.vmem %s1, 99
  %1480 = vst.msk [vmem:[%s1479] sm:$0x2] %vm1476, %v1475
  %s1481 = scalar_lea.vmem %s1, 162
  %1482 = vst.msk [vmem:[%s1481] sm:$0x4] %vm1476, %v1475
  %s1483 = scalar_lea.vmem %s1, 225
  %1484 = vst.msk [vmem:[%s1483] sm:$0x8] %vm1476, %v1475
  %s1485 = scalar_lea.vmem %s1, 288
  %1486 = vst.msk [vmem:[%s1485] sm:$0x10] %vm1476, %v1475
  %s1487 = scalar_lea.vmem %s1, 351
  %1488 = vst.msk [vmem:[%s1487] sm:$0x20] %vm1476, %v1475
  %s1489 = scalar_lea.vmem %s1, 414
  %1490 = vst.msk [vmem:[%s1489] sm:$0x40] %vm1476, %v1475
  %s1491 = scalar_lea.vmem %s1, 477
  %1492 = vst.msk [vmem:[%s1491] sm:$0x80] %vm1476, %v1475
  %s1493 = scalar_lea.vmem %s0, 8
  %v1494 = vld [vmem:[%s1493] sm:$0xff]
  %1495 = vrot.lane.b32.xlu0 %v1494, 92
  %v1496 = vpop.permute.xlu0 %1495
  %vm1497 = vcmask 7168
  %s1498 = scalar_lea.vmem %s1, 548
  %1499 = vst.msk [vmem:[%s1498] sm:$0x1] %vm1497, %v1496
  %s1500 = scalar_lea.vmem %s1, 611
  %1501 = vst.msk [vmem:[%s1500] sm:$0x2] %vm1497, %v1496
  %s1502 = scalar_lea.vmem %s1, 674
  %1503 = vst.msk [vmem:[%s1502] sm:$0x4] %vm1497, %v1496
  %s1504 = scalar_lea.vmem %s1, 737
  %1505 = vst.msk [vmem:[%s1504] sm:$0x8] %vm1497, %v1496
  %s1506 = scalar_lea.vmem %s1, 800
  %1507 = vst.msk [vmem:[%s1506] sm:$0x10] %vm1497, %v1496
  %s1508 = scalar_lea.vmem %s1, 863
  %1509 = vst.msk [vmem:[%s1508] sm:$0x20] %vm1497, %v1496
  %s1510 = scalar_lea.vmem %s1, 926
  %1511 = vst.msk [vmem:[%s1510] sm:$0x40] %vm1497, %v1496
  %s1512 = scalar_lea.vmem %s1, 989
  %1513 = vst.msk [vmem:[%s1512] sm:$0x80] %vm1497, %v1496
  %v1514 = vld [vmem:[%s0] sm:$0xff]
  %1515 = vrot.lane.b32.xlu0 %v1514, 91
  %v1516 = vpop.permute.xlu0 %1515
  %vm1517 = vcmask 7168
  %s1518 = scalar_lea.vmem %s1, 37
  %1519 = vst.msk [vmem:[%s1518] sm:$0x1] %vm1517, %v1516
  %s1520 = scalar_lea.vmem %s1, 100
  %1521 = vst.msk [vmem:[%s1520] sm:$0x2] %vm1517, %v1516
  %s1522 = scalar_lea.vmem %s1, 163
  %1523 = vst.msk [vmem:[%s1522] sm:$0x4] %vm1517, %v1516
  %s1524 = scalar_lea.vmem %s1, 226
  %1525 = vst.msk [vmem:[%s1524] sm:$0x8] %vm1517, %v1516
  %s1526 = scalar_lea.vmem %s1, 289
  %1527 = vst.msk [vmem:[%s1526] sm:$0x10] %vm1517, %v1516
  %s1528 = scalar_lea.vmem %s1, 352
  %1529 = vst.msk [vmem:[%s1528] sm:$0x20] %vm1517, %v1516
  %s1530 = scalar_lea.vmem %s1, 415
  %1531 = vst.msk [vmem:[%s1530] sm:$0x40] %vm1517, %v1516
  %s1532 = scalar_lea.vmem %s1, 478
  %1533 = vst.msk [vmem:[%s1532] sm:$0x80] %vm1517, %v1516
  %s1534 = scalar_lea.vmem %s0, 8
  %v1535 = vld [vmem:[%s1534] sm:$0xff]
  %1536 = vrot.lane.b32.xlu0 %v1535, 91
  %v1537 = vpop.permute.xlu0 %1536
  %vm1538 = vcmask 7168
  %s1539 = scalar_lea.vmem %s1, 549
  %1540 = vst.msk [vmem:[%s1539] sm:$0x1] %vm1538, %v1537
  %s1541 = scalar_lea.vmem %s1, 612
  %1542 = vst.msk [vmem:[%s1541] sm:$0x2] %vm1538, %v1537
  %s1543 = scalar_lea.vmem %s1, 675
  %1544 = vst.msk [vmem:[%s1543] sm:$0x4] %vm1538, %v1537
  %s1545 = scalar_lea.vmem %s1, 738
  %1546 = vst.msk [vmem:[%s1545] sm:$0x8] %vm1538, %v1537
  %s1547 = scalar_lea.vmem %s1, 801
  %1548 = vst.msk [vmem:[%s1547] sm:$0x10] %vm1538, %v1537
  %s1549 = scalar_lea.vmem %s1, 864
  %1550 = vst.msk [vmem:[%s1549] sm:$0x20] %vm1538, %v1537
  %s1551 = scalar_lea.vmem %s1, 927
  %1552 = vst.msk [vmem:[%s1551] sm:$0x40] %vm1538, %v1537
  %s1553 = scalar_lea.vmem %s1, 990
  %1554 = vst.msk [vmem:[%s1553] sm:$0x80] %vm1538, %v1537
  %v1555 = vld [vmem:[%s0] sm:$0xff]
  %1556 = vrot.lane.b32.xlu0 %v1555, 90
  %v1557 = vpop.permute.xlu0 %1556
  %vm1558 = vcmask 7168
  %s1559 = scalar_lea.vmem %s1, 38
  %1560 = vst.msk [vmem:[%s1559] sm:$0x1] %vm1558, %v1557
  %s1561 = scalar_lea.vmem %s1, 101
  %1562 = vst.msk [vmem:[%s1561] sm:$0x2] %vm1558, %v1557
  %s1563 = scalar_lea.vmem %s1, 164
  %1564 = vst.msk [vmem:[%s1563] sm:$0x4] %vm1558, %v1557
  %s1565 = scalar_lea.vmem %s1, 227
  %1566 = vst.msk [vmem:[%s1565] sm:$0x8] %vm1558, %v1557
  %s1567 = scalar_lea.vmem %s1, 290
  %1568 = vst.msk [vmem:[%s1567] sm:$0x10] %vm1558, %v1557
  %s1569 = scalar_lea.vmem %s1, 353
  %1570 = vst.msk [vmem:[%s1569] sm:$0x20] %vm1558, %v1557
  %s1571 = scalar_lea.vmem %s1, 416
  %1572 = vst.msk [vmem:[%s1571] sm:$0x40] %vm1558, %v1557
  %s1573 = scalar_lea.vmem %s1, 479
  %1574 = vst.msk [vmem:[%s1573] sm:$0x80] %vm1558, %v1557
  %s1575 = scalar_lea.vmem %s0, 8
  %v1576 = vld [vmem:[%s1575] sm:$0xff]
  %1577 = vrot.lane.b32.xlu0 %v1576, 90
  %v1578 = vpop.permute.xlu0 %1577
  %vm1579 = vcmask 7168
  %s1580 = scalar_lea.vmem %s1, 550
  %1581 = vst.msk [vmem:[%s1580] sm:$0x1] %vm1579, %v1578
  %s1582 = scalar_lea.vmem %s1, 613
  %1583 = vst.msk [vmem:[%s1582] sm:$0x2] %vm1579, %v1578
  %s1584 = scalar_lea.vmem %s1, 676
  %1585 = vst.msk [vmem:[%s1584] sm:$0x4] %vm1579, %v1578
  %s1586 = scalar_lea.vmem %s1, 739
  %1587 = vst.msk [vmem:[%s1586] sm:$0x8] %vm1579, %v1578
  %s1588 = scalar_lea.vmem %s1, 802
  %1589 = vst.msk [vmem:[%s1588] sm:$0x10] %vm1579, %v1578
  %s1590 = scalar_lea.vmem %s1, 865
  %1591 = vst.msk [vmem:[%s1590] sm:$0x20] %vm1579, %v1578
  %s1592 = scalar_lea.vmem %s1, 928
  %1593 = vst.msk [vmem:[%s1592] sm:$0x40] %vm1579, %v1578
  %s1594 = scalar_lea.vmem %s1, 991
  %1595 = vst.msk [vmem:[%s1594] sm:$0x80] %vm1579, %v1578
  %v1596 = vld [vmem:[%s0] sm:$0xff]
  %1597 = vrot.lane.b32.xlu0 %v1596, 89
  %v1598 = vpop.permute.xlu0 %1597
  %vm1599 = vcmask 7168
  %s1600 = scalar_lea.vmem %s1, 39
  %1601 = vst.msk [vmem:[%s1600] sm:$0x1] %vm1599, %v1598
  %s1602 = scalar_lea.vmem %s1, 102
  %1603 = vst.msk [vmem:[%s1602] sm:$0x2] %vm1599, %v1598
  %s1604 = scalar_lea.vmem %s1, 165
  %1605 = vst.msk [vmem:[%s1604] sm:$0x4] %vm1599, %v1598
  %s1606 = scalar_lea.vmem %s1, 228
  %1607 = vst.msk [vmem:[%s1606] sm:$0x8] %vm1599, %v1598
  %s1608 = scalar_lea.vmem %s1, 291
  %1609 = vst.msk [vmem:[%s1608] sm:$0x10] %vm1599, %v1598
  %s1610 = scalar_lea.vmem %s1, 354
  %1611 = vst.msk [vmem:[%s1610] sm:$0x20] %vm1599, %v1598
  %s1612 = scalar_lea.vmem %s1, 417
  %1613 = vst.msk [vmem:[%s1612] sm:$0x40] %vm1599, %v1598
  %s1614 = scalar_lea.vmem %s1, 480
  %1615 = vst.msk [vmem:[%s1614] sm:$0x80] %vm1599, %v1598
  %s1616 = scalar_lea.vmem %s0, 8
  %v1617 = vld [vmem:[%s1616] sm:$0xff]
  %1618 = vrot.lane.b32.xlu0 %v1617, 89
  %v1619 = vpop.permute.xlu0 %1618
  %vm1620 = vcmask 7168
  %s1621 = scalar_lea.vmem %s1, 551
  %1622 = vst.msk [vmem:[%s1621] sm:$0x1] %vm1620, %v1619
  %s1623 = scalar_lea.vmem %s1, 614
  %1624 = vst.msk [vmem:[%s1623] sm:$0x2] %vm1620, %v1619
  %s1625 = scalar_lea.vmem %s1, 677
  %1626 = vst.msk [vmem:[%s1625] sm:$0x4] %vm1620, %v1619
  %s1627 = scalar_lea.vmem %s1, 740
  %1628 = vst.msk [vmem:[%s1627] sm:$0x8] %vm1620, %v1619
  %s1629 = scalar_lea.vmem %s1, 803
  %1630 = vst.msk [vmem:[%s1629] sm:$0x10] %vm1620, %v1619
  %s1631 = scalar_lea.vmem %s1, 866
  %1632 = vst.msk [vmem:[%s1631] sm:$0x20] %vm1620, %v1619
  %s1633 = scalar_lea.vmem %s1, 929
  %1634 = vst.msk [vmem:[%s1633] sm:$0x40] %vm1620, %v1619
  %s1635 = scalar_lea.vmem %s1, 992
  %1636 = vst.msk [vmem:[%s1635] sm:$0x80] %vm1620, %v1619
  %v1637 = vld [vmem:[%s0] sm:$0xff]
  %1638 = vrot.lane.b32.xlu0 %v1637, 88
  %v1639 = vpop.permute.xlu0 %1638
  %vm1640 = vcmask 7168
  %s1641 = scalar_lea.vmem %s1, 40
  %1642 = vst.msk [vmem:[%s1641] sm:$0x1] %vm1640, %v1639
  %s1643 = scalar_lea.vmem %s1, 103
  %1644 = vst.msk [vmem:[%s1643] sm:$0x2] %vm1640, %v1639
  %s1645 = scalar_lea.vmem %s1, 166
  %1646 = vst.msk [vmem:[%s1645] sm:$0x4] %vm1640, %v1639
  %s1647 = scalar_lea.vmem %s1, 229
  %1648 = vst.msk [vmem:[%s1647] sm:$0x8] %vm1640, %v1639
  %s1649 = scalar_lea.vmem %s1, 292
  %1650 = vst.msk [vmem:[%s1649] sm:$0x10] %vm1640, %v1639
  %s1651 = scalar_lea.vmem %s1, 355
  %1652 = vst.msk [vmem:[%s1651] sm:$0x20] %vm1640, %v1639
  %s1653 = scalar_lea.vmem %s1, 418
  %1654 = vst.msk [vmem:[%s1653] sm:$0x40] %vm1640, %v1639
  %s1655 = scalar_lea.vmem %s1, 481
  %1656 = vst.msk [vmem:[%s1655] sm:$0x80] %vm1640, %v1639
  %s1657 = scalar_lea.vmem %s0, 8
  %v1658 = vld [vmem:[%s1657] sm:$0xff]
  %1659 = vrot.lane.b32.xlu0 %v1658, 88
  %v1660 = vpop.permute.xlu0 %1659
  %vm1661 = vcmask 7168
  %s1662 = scalar_lea.vmem %s1, 552
  %1663 = vst.msk [vmem:[%s1662] sm:$0x1] %vm1661, %v1660
  %s1664 = scalar_lea.vmem %s1, 615
  %1665 = vst.msk [vmem:[%s1664] sm:$0x2] %vm1661, %v1660
  %s1666 = scalar_lea.vmem %s1, 678
  %1667 = vst.msk [vmem:[%s1666] sm:$0x4] %vm1661, %v1660
  %s1668 = scalar_lea.vmem %s1, 741
  %1669 = vst.msk [vmem:[%s1668] sm:$0x8] %vm1661, %v1660
  %s1670 = scalar_lea.vmem %s1, 804
  %1671 = vst.msk [vmem:[%s1670] sm:$0x10] %vm1661, %v1660
  %s1672 = scalar_lea.vmem %s1, 867
  %1673 = vst.msk [vmem:[%s1672] sm:$0x20] %vm1661, %v1660
  %s1674 = scalar_lea.vmem %s1, 930
  %1675 = vst.msk [vmem:[%s1674] sm:$0x40] %vm1661, %v1660
  %s1676 = scalar_lea.vmem %s1, 993
  %1677 = vst.msk [vmem:[%s1676] sm:$0x80] %vm1661, %v1660
  %v1678 = vld [vmem:[%s0] sm:$0xff]
  %1679 = vrot.lane.b32.xlu0 %v1678, 87
  %v1680 = vpop.permute.xlu0 %1679
  %vm1681 = vcmask 7168
  %s1682 = scalar_lea.vmem %s1, 41
  %1683 = vst.msk [vmem:[%s1682] sm:$0x1] %vm1681, %v1680
  %s1684 = scalar_lea.vmem %s1, 104
  %1685 = vst.msk [vmem:[%s1684] sm:$0x2] %vm1681, %v1680
  %s1686 = scalar_lea.vmem %s1, 167
  %1687 = vst.msk [vmem:[%s1686] sm:$0x4] %vm1681, %v1680
  %s1688 = scalar_lea.vmem %s1, 230
  %1689 = vst.msk [vmem:[%s1688] sm:$0x8] %vm1681, %v1680
  %s1690 = scalar_lea.vmem %s1, 293
  %1691 = vst.msk [vmem:[%s1690] sm:$0x10] %vm1681, %v1680
  %s1692 = scalar_lea.vmem %s1, 356
  %1693 = vst.msk [vmem:[%s1692] sm:$0x20] %vm1681, %v1680
  %s1694 = scalar_lea.vmem %s1, 419
  %1695 = vst.msk [vmem:[%s1694] sm:$0x40] %vm1681, %v1680
  %s1696 = scalar_lea.vmem %s1, 482
  %1697 = vst.msk [vmem:[%s1696] sm:$0x80] %vm1681, %v1680
  %s1698 = scalar_lea.vmem %s0, 8
  %v1699 = vld [vmem:[%s1698] sm:$0xff]
  %1700 = vrot.lane.b32.xlu0 %v1699, 87
  %v1701 = vpop.permute.xlu0 %1700
  %vm1702 = vcmask 7168
  %s1703 = scalar_lea.vmem %s1, 553
  %1704 = vst.msk [vmem:[%s1703] sm:$0x1] %vm1702, %v1701
  %s1705 = scalar_lea.vmem %s1, 616
  %1706 = vst.msk [vmem:[%s1705] sm:$0x2] %vm1702, %v1701
  %s1707 = scalar_lea.vmem %s1, 679
  %1708 = vst.msk [vmem:[%s1707] sm:$0x4] %vm1702, %v1701
  %s1709 = scalar_lea.vmem %s1, 742
  %1710 = vst.msk [vmem:[%s1709] sm:$0x8] %vm1702, %v1701
  %s1711 = scalar_lea.vmem %s1, 805
  %1712 = vst.msk [vmem:[%s1711] sm:$0x10] %vm1702, %v1701
  %s1713 = scalar_lea.vmem %s1, 868
  %1714 = vst.msk [vmem:[%s1713] sm:$0x20] %vm1702, %v1701
  %s1715 = scalar_lea.vmem %s1, 931
  %1716 = vst.msk [vmem:[%s1715] sm:$0x40] %vm1702, %v1701
  %s1717 = scalar_lea.vmem %s1, 994
  %1718 = vst.msk [vmem:[%s1717] sm:$0x80] %vm1702, %v1701
  %v1719 = vld [vmem:[%s0] sm:$0xff]
  %1720 = vrot.lane.b32.xlu0 %v1719, 86
  %v1721 = vpop.permute.xlu0 %1720
  %vm1722 = vcmask 7168
  %s1723 = scalar_lea.vmem %s1, 42
  %1724 = vst.msk [vmem:[%s1723] sm:$0x1] %vm1722, %v1721
  %s1725 = scalar_lea.vmem %s1, 105
  %1726 = vst.msk [vmem:[%s1725] sm:$0x2] %vm1722, %v1721
  %s1727 = scalar_lea.vmem %s1, 168
  %1728 = vst.msk [vmem:[%s1727] sm:$0x4] %vm1722, %v1721
  %s1729 = scalar_lea.vmem %s1, 231
  %1730 = vst.msk [vmem:[%s1729] sm:$0x8] %vm1722, %v1721
  %s1731 = scalar_lea.vmem %s1, 294
  %1732 = vst.msk [vmem:[%s1731] sm:$0x10] %vm1722, %v1721
  %s1733 = scalar_lea.vmem %s1, 357
  %1734 = vst.msk [vmem:[%s1733] sm:$0x20] %vm1722, %v1721
  %s1735 = scalar_lea.vmem %s1, 420
  %1736 = vst.msk [vmem:[%s1735] sm:$0x40] %vm1722, %v1721
  %s1737 = scalar_lea.vmem %s1, 483
  %1738 = vst.msk [vmem:[%s1737] sm:$0x80] %vm1722, %v1721
  %s1739 = scalar_lea.vmem %s0, 8
  %v1740 = vld [vmem:[%s1739] sm:$0xff]
  %1741 = vrot.lane.b32.xlu0 %v1740, 86
  %v1742 = vpop.permute.xlu0 %1741
  %vm1743 = vcmask 7168
  %s1744 = scalar_lea.vmem %s1, 554
  %1745 = vst.msk [vmem:[%s1744] sm:$0x1] %vm1743, %v1742
  %s1746 = scalar_lea.vmem %s1, 617
  %1747 = vst.msk [vmem:[%s1746] sm:$0x2] %vm1743, %v1742
  %s1748 = scalar_lea.vmem %s1, 680
  %1749 = vst.msk [vmem:[%s1748] sm:$0x4] %vm1743, %v1742
  %s1750 = scalar_lea.vmem %s1, 743
  %1751 = vst.msk [vmem:[%s1750] sm:$0x8] %vm1743, %v1742
  %s1752 = scalar_lea.vmem %s1, 806
  %1753 = vst.msk [vmem:[%s1752] sm:$0x10] %vm1743, %v1742
  %s1754 = scalar_lea.vmem %s1, 869
  %1755 = vst.msk [vmem:[%s1754] sm:$0x20] %vm1743, %v1742
  %s1756 = scalar_lea.vmem %s1, 932
  %1757 = vst.msk [vmem:[%s1756] sm:$0x40] %vm1743, %v1742
  %s1758 = scalar_lea.vmem %s1, 995
  %1759 = vst.msk [vmem:[%s1758] sm:$0x80] %vm1743, %v1742
  %v1760 = vld [vmem:[%s0] sm:$0xff]
  %1761 = vrot.lane.b32.xlu0 %v1760, 85
  %v1762 = vpop.permute.xlu0 %1761
  %vm1763 = vcmask 7168
  %s1764 = scalar_lea.vmem %s1, 43
  %1765 = vst.msk [vmem:[%s1764] sm:$0x1] %vm1763, %v1762
  %s1766 = scalar_lea.vmem %s1, 106
  %1767 = vst.msk [vmem:[%s1766] sm:$0x2] %vm1763, %v1762
  %s1768 = scalar_lea.vmem %s1, 169
  %1769 = vst.msk [vmem:[%s1768] sm:$0x4] %vm1763, %v1762
  %s1770 = scalar_lea.vmem %s1, 232
  %1771 = vst.msk [vmem:[%s1770] sm:$0x8] %vm1763, %v1762
  %s1772 = scalar_lea.vmem %s1, 295
  %1773 = vst.msk [vmem:[%s1772] sm:$0x10] %vm1763, %v1762
  %s1774 = scalar_lea.vmem %s1, 358
  %1775 = vst.msk [vmem:[%s1774] sm:$0x20] %vm1763, %v1762
  %s1776 = scalar_lea.vmem %s1, 421
  %1777 = vst.msk [vmem:[%s1776] sm:$0x40] %vm1763, %v1762
  %s1778 = scalar_lea.vmem %s1, 484
  %1779 = vst.msk [vmem:[%s1778] sm:$0x80] %vm1763, %v1762
  %s1780 = scalar_lea.vmem %s0, 8
  %v1781 = vld [vmem:[%s1780] sm:$0xff]
  %1782 = vrot.lane.b32.xlu0 %v1781, 85
  %v1783 = vpop.permute.xlu0 %1782
  %vm1784 = vcmask 7168
  %s1785 = scalar_lea.vmem %s1, 555
  %1786 = vst.msk [vmem:[%s1785] sm:$0x1] %vm1784, %v1783
  %s1787 = scalar_lea.vmem %s1, 618
  %1788 = vst.msk [vmem:[%s1787] sm:$0x2] %vm1784, %v1783
  %s1789 = scalar_lea.vmem %s1, 681
  %1790 = vst.msk [vmem:[%s1789] sm:$0x4] %vm1784, %v1783
  %s1791 = scalar_lea.vmem %s1, 744
  %1792 = vst.msk [vmem:[%s1791] sm:$0x8] %vm1784, %v1783
  %s1793 = scalar_lea.vmem %s1, 807
  %1794 = vst.msk [vmem:[%s1793] sm:$0x10] %vm1784, %v1783
  %s1795 = scalar_lea.vmem %s1, 870
  %1796 = vst.msk [vmem:[%s1795] sm:$0x20] %vm1784, %v1783
  %s1797 = scalar_lea.vmem %s1, 933
  %1798 = vst.msk [vmem:[%s1797] sm:$0x40] %vm1784, %v1783
  %s1799 = scalar_lea.vmem %s1, 996
  %1800 = vst.msk [vmem:[%s1799] sm:$0x80] %vm1784, %v1783
  %v1801 = vld [vmem:[%s0] sm:$0xff]
  %1802 = vrot.lane.b32.xlu0 %v1801, 84
  %v1803 = vpop.permute.xlu0 %1802
  %vm1804 = vcmask 7168
  %s1805 = scalar_lea.vmem %s1, 44
  %1806 = vst.msk [vmem:[%s1805] sm:$0x1] %vm1804, %v1803
  %s1807 = scalar_lea.vmem %s1, 107
  %1808 = vst.msk [vmem:[%s1807] sm:$0x2] %vm1804, %v1803
  %s1809 = scalar_lea.vmem %s1, 170
  %1810 = vst.msk [vmem:[%s1809] sm:$0x4] %vm1804, %v1803
  %s1811 = scalar_lea.vmem %s1, 233
  %1812 = vst.msk [vmem:[%s1811] sm:$0x8] %vm1804, %v1803
  %s1813 = scalar_lea.vmem %s1, 296
  %1814 = vst.msk [vmem:[%s1813] sm:$0x10] %vm1804, %v1803
  %s1815 = scalar_lea.vmem %s1, 359
  %1816 = vst.msk [vmem:[%s1815] sm:$0x20] %vm1804, %v1803
  %s1817 = scalar_lea.vmem %s1, 422
  %1818 = vst.msk [vmem:[%s1817] sm:$0x40] %vm1804, %v1803
  %s1819 = scalar_lea.vmem %s1, 485
  %1820 = vst.msk [vmem:[%s1819] sm:$0x80] %vm1804, %v1803
  %s1821 = scalar_lea.vmem %s0, 8
  %v1822 = vld [vmem:[%s1821] sm:$0xff]
  %1823 = vrot.lane.b32.xlu0 %v1822, 84
  %v1824 = vpop.permute.xlu0 %1823
  %vm1825 = vcmask 7168
  %s1826 = scalar_lea.vmem %s1, 556
  %1827 = vst.msk [vmem:[%s1826] sm:$0x1] %vm1825, %v1824
  %s1828 = scalar_lea.vmem %s1, 619
  %1829 = vst.msk [vmem:[%s1828] sm:$0x2] %vm1825, %v1824
  %s1830 = scalar_lea.vmem %s1, 682
  %1831 = vst.msk [vmem:[%s1830] sm:$0x4] %vm1825, %v1824
  %s1832 = scalar_lea.vmem %s1, 745
  %1833 = vst.msk [vmem:[%s1832] sm:$0x8] %vm1825, %v1824
  %s1834 = scalar_lea.vmem %s1, 808
  %1835 = vst.msk [vmem:[%s1834] sm:$0x10] %vm1825, %v1824
  %s1836 = scalar_lea.vmem %s1, 871
  %1837 = vst.msk [vmem:[%s1836] sm:$0x20] %vm1825, %v1824
  %s1838 = scalar_lea.vmem %s1, 934
  %1839 = vst.msk [vmem:[%s1838] sm:$0x40] %vm1825, %v1824
  %s1840 = scalar_lea.vmem %s1, 997
  %1841 = vst.msk [vmem:[%s1840] sm:$0x80] %vm1825, %v1824
  %v1842 = vld [vmem:[%s0] sm:$0xff]
  %1843 = vrot.lane.b32.xlu0 %v1842, 83
  %v1844 = vpop.permute.xlu0 %1843
  %vm1845 = vcmask 7168
  %s1846 = scalar_lea.vmem %s1, 45
  %1847 = vst.msk [vmem:[%s1846] sm:$0x1] %vm1845, %v1844
  %s1848 = scalar_lea.vmem %s1, 108
  %1849 = vst.msk [vmem:[%s1848] sm:$0x2] %vm1845, %v1844
  %s1850 = scalar_lea.vmem %s1, 171
  %1851 = vst.msk [vmem:[%s1850] sm:$0x4] %vm1845, %v1844
  %s1852 = scalar_lea.vmem %s1, 234
  %1853 = vst.msk [vmem:[%s1852] sm:$0x8] %vm1845, %v1844
  %s1854 = scalar_lea.vmem %s1, 297
  %1855 = vst.msk [vmem:[%s1854] sm:$0x10] %vm1845, %v1844
  %s1856 = scalar_lea.vmem %s1, 360
  %1857 = vst.msk [vmem:[%s1856] sm:$0x20] %vm1845, %v1844
  %s1858 = scalar_lea.vmem %s1, 423
  %1859 = vst.msk [vmem:[%s1858] sm:$0x40] %vm1845, %v1844
  %s1860 = scalar_lea.vmem %s1, 486
  %1861 = vst.msk [vmem:[%s1860] sm:$0x80] %vm1845, %v1844
  %s1862 = scalar_lea.vmem %s0, 8
  %v1863 = vld [vmem:[%s1862] sm:$0xff]
  %1864 = vrot.lane.b32.xlu0 %v1863, 83
  %v1865 = vpop.permute.xlu0 %1864
  %vm1866 = vcmask 7168
  %s1867 = scalar_lea.vmem %s1, 557
  %1868 = vst.msk [vmem:[%s1867] sm:$0x1] %vm1866, %v1865
  %s1869 = scalar_lea.vmem %s1, 620
  %1870 = vst.msk [vmem:[%s1869] sm:$0x2] %vm1866, %v1865
  %s1871 = scalar_lea.vmem %s1, 683
  %1872 = vst.msk [vmem:[%s1871] sm:$0x4] %vm1866, %v1865
  %s1873 = scalar_lea.vmem %s1, 746
  %1874 = vst.msk [vmem:[%s1873] sm:$0x8] %vm1866, %v1865
  %s1875 = scalar_lea.vmem %s1, 809
  %1876 = vst.msk [vmem:[%s1875] sm:$0x10] %vm1866, %v1865
  %s1877 = scalar_lea.vmem %s1, 872
  %1878 = vst.msk [vmem:[%s1877] sm:$0x20] %vm1866, %v1865
  %s1879 = scalar_lea.vmem %s1, 935
  %1880 = vst.msk [vmem:[%s1879] sm:$0x40] %vm1866, %v1865
  %s1881 = scalar_lea.vmem %s1, 998
  %1882 = vst.msk [vmem:[%s1881] sm:$0x80] %vm1866, %v1865
  %v1883 = vld [vmem:[%s0] sm:$0xff]
  %1884 = vrot.lane.b32.xlu0 %v1883, 82
  %v1885 = vpop.permute.xlu0 %1884
  %vm1886 = vcmask 7168
  %s1887 = scalar_lea.vmem %s1, 46
  %1888 = vst.msk [vmem:[%s1887] sm:$0x1] %vm1886, %v1885
  %s1889 = scalar_lea.vmem %s1, 109
  %1890 = vst.msk [vmem:[%s1889] sm:$0x2] %vm1886, %v1885
  %s1891 = scalar_lea.vmem %s1, 172
  %1892 = vst.msk [vmem:[%s1891] sm:$0x4] %vm1886, %v1885
  %s1893 = scalar_lea.vmem %s1, 235
  %1894 = vst.msk [vmem:[%s1893] sm:$0x8] %vm1886, %v1885
  %s1895 = scalar_lea.vmem %s1, 298
  %1896 = vst.msk [vmem:[%s1895] sm:$0x10] %vm1886, %v1885
  %s1897 = scalar_lea.vmem %s1, 361
  %1898 = vst.msk [vmem:[%s1897] sm:$0x20] %vm1886, %v1885
  %s1899 = scalar_lea.vmem %s1, 424
  %1900 = vst.msk [vmem:[%s1899] sm:$0x40] %vm1886, %v1885
  %s1901 = scalar_lea.vmem %s1, 487
  %1902 = vst.msk [vmem:[%s1901] sm:$0x80] %vm1886, %v1885
  %s1903 = scalar_lea.vmem %s0, 8
  %v1904 = vld [vmem:[%s1903] sm:$0xff]
  %1905 = vrot.lane.b32.xlu0 %v1904, 82
  %v1906 = vpop.permute.xlu0 %1905
  %vm1907 = vcmask 7168
  %s1908 = scalar_lea.vmem %s1, 558
  %1909 = vst.msk [vmem:[%s1908] sm:$0x1] %vm1907, %v1906
  %s1910 = scalar_lea.vmem %s1, 621
  %1911 = vst.msk [vmem:[%s1910] sm:$0x2] %vm1907, %v1906
  %s1912 = scalar_lea.vmem %s1, 684
  %1913 = vst.msk [vmem:[%s1912] sm:$0x4] %vm1907, %v1906
  %s1914 = scalar_lea.vmem %s1, 747
  %1915 = vst.msk [vmem:[%s1914] sm:$0x8] %vm1907, %v1906
  %s1916 = scalar_lea.vmem %s1, 810
  %1917 = vst.msk [vmem:[%s1916] sm:$0x10] %vm1907, %v1906
  %s1918 = scalar_lea.vmem %s1, 873
  %1919 = vst.msk [vmem:[%s1918] sm:$0x20] %vm1907, %v1906
  %s1920 = scalar_lea.vmem %s1, 936
  %1921 = vst.msk [vmem:[%s1920] sm:$0x40] %vm1907, %v1906
  %s1922 = scalar_lea.vmem %s1, 999
  %1923 = vst.msk [vmem:[%s1922] sm:$0x80] %vm1907, %v1906
  %v1924 = vld [vmem:[%s0] sm:$0xff]
  %1925 = vrot.lane.b32.xlu0 %v1924, 81
  %v1926 = vpop.permute.xlu0 %1925
  %vm1927 = vcmask 7168
  %s1928 = scalar_lea.vmem %s1, 47
  %1929 = vst.msk [vmem:[%s1928] sm:$0x1] %vm1927, %v1926
  %s1930 = scalar_lea.vmem %s1, 110
  %1931 = vst.msk [vmem:[%s1930] sm:$0x2] %vm1927, %v1926
  %s1932 = scalar_lea.vmem %s1, 173
  %1933 = vst.msk [vmem:[%s1932] sm:$0x4] %vm1927, %v1926
  %s1934 = scalar_lea.vmem %s1, 236
  %1935 = vst.msk [vmem:[%s1934] sm:$0x8] %vm1927, %v1926
  %s1936 = scalar_lea.vmem %s1, 299
  %1937 = vst.msk [vmem:[%s1936] sm:$0x10] %vm1927, %v1926
  %s1938 = scalar_lea.vmem %s1, 362
  %1939 = vst.msk [vmem:[%s1938] sm:$0x20] %vm1927, %v1926
  %s1940 = scalar_lea.vmem %s1, 425
  %1941 = vst.msk [vmem:[%s1940] sm:$0x40] %vm1927, %v1926
  %s1942 = scalar_lea.vmem %s1, 488
  %1943 = vst.msk [vmem:[%s1942] sm:$0x80] %vm1927, %v1926
  %s1944 = scalar_lea.vmem %s0, 8
  %v1945 = vld [vmem:[%s1944] sm:$0xff]
  %1946 = vrot.lane.b32.xlu0 %v1945, 81
  %v1947 = vpop.permute.xlu0 %1946
  %vm1948 = vcmask 7168
  %s1949 = scalar_lea.vmem %s1, 559
  %1950 = vst.msk [vmem:[%s1949] sm:$0x1] %vm1948, %v1947
  %s1951 = scalar_lea.vmem %s1, 622
  %1952 = vst.msk [vmem:[%s1951] sm:$0x2] %vm1948, %v1947
  %s1953 = scalar_lea.vmem %s1, 685
  %1954 = vst.msk [vmem:[%s1953] sm:$0x4] %vm1948, %v1947
  %s1955 = scalar_lea.vmem %s1, 748
  %1956 = vst.msk [vmem:[%s1955] sm:$0x8] %vm1948, %v1947
  %s1957 = scalar_lea.vmem %s1, 811
  %1958 = vst.msk [vmem:[%s1957] sm:$0x10] %vm1948, %v1947
  %s1959 = scalar_lea.vmem %s1, 874
  %1960 = vst.msk [vmem:[%s1959] sm:$0x20] %vm1948, %v1947
  %s1961 = scalar_lea.vmem %s1, 937
  %1962 = vst.msk [vmem:[%s1961] sm:$0x40] %vm1948, %v1947
  %s1963 = scalar_lea.vmem %s1, 1000
  %1964 = vst.msk [vmem:[%s1963] sm:$0x80] %vm1948, %v1947
  %v1965 = vld [vmem:[%s0] sm:$0xff]
  %1966 = vrot.lane.b32.xlu0 %v1965, 80
  %v1967 = vpop.permute.xlu0 %1966
  %vm1968 = vcmask 7168
  %s1969 = scalar_lea.vmem %s1, 48
  %1970 = vst.msk [vmem:[%s1969] sm:$0x1] %vm1968, %v1967
  %s1971 = scalar_lea.vmem %s1, 111
  %1972 = vst.msk [vmem:[%s1971] sm:$0x2] %vm1968, %v1967
  %s1973 = scalar_lea.vmem %s1, 174
  %1974 = vst.msk [vmem:[%s1973] sm:$0x4] %vm1968, %v1967
  %s1975 = scalar_lea.vmem %s1, 237
  %1976 = vst.msk [vmem:[%s1975] sm:$0x8] %vm1968, %v1967
  %s1977 = scalar_lea.vmem %s1, 300
  %1978 = vst.msk [vmem:[%s1977] sm:$0x10] %vm1968, %v1967
  %s1979 = scalar_lea.vmem %s1, 363
  %1980 = vst.msk [vmem:[%s1979] sm:$0x20] %vm1968, %v1967
  %s1981 = scalar_lea.vmem %s1, 426
  %1982 = vst.msk [vmem:[%s1981] sm:$0x40] %vm1968, %v1967
  %s1983 = scalar_lea.vmem %s1, 489
  %1984 = vst.msk [vmem:[%s1983] sm:$0x80] %vm1968, %v1967
  %s1985 = scalar_lea.vmem %s0, 8
  %v1986 = vld [vmem:[%s1985] sm:$0xff]
  %1987 = vrot.lane.b32.xlu0 %v1986, 80
  %v1988 = vpop.permute.xlu0 %1987
  %vm1989 = vcmask 7168
  %s1990 = scalar_lea.vmem %s1, 560
  %1991 = vst.msk [vmem:[%s1990] sm:$0x1] %vm1989, %v1988
  %s1992 = scalar_lea.vmem %s1, 623
  %1993 = vst.msk [vmem:[%s1992] sm:$0x2] %vm1989, %v1988
  %s1994 = scalar_lea.vmem %s1, 686
  %1995 = vst.msk [vmem:[%s1994] sm:$0x4] %vm1989, %v1988
  %s1996 = scalar_lea.vmem %s1, 749
  %1997 = vst.msk [vmem:[%s1996] sm:$0x8] %vm1989, %v1988
  %s1998 = scalar_lea.vmem %s1, 812
  %1999 = vst.msk [vmem:[%s1998] sm:$0x10] %vm1989, %v1988
  %s2000 = scalar_lea.vmem %s1, 875
  %2001 = vst.msk [vmem:[%s2000] sm:$0x20] %vm1989, %v1988
  %s2002 = scalar_lea.vmem %s1, 938
  %2003 = vst.msk [vmem:[%s2002] sm:$0x40] %vm1989, %v1988
  %s2004 = scalar_lea.vmem %s1, 1001
  %2005 = vst.msk [vmem:[%s2004] sm:$0x80] %vm1989, %v1988
  %v2006 = vld [vmem:[%s0] sm:$0xff]
  %2007 = vrot.lane.b32.xlu0 %v2006, 79
  %v2008 = vpop.permute.xlu0 %2007
  %vm2009 = vcmask 7168
  %s2010 = scalar_lea.vmem %s1, 49
  %2011 = vst.msk [vmem:[%s2010] sm:$0x1] %vm2009, %v2008
  %s2012 = scalar_lea.vmem %s1, 112
  %2013 = vst.msk [vmem:[%s2012] sm:$0x2] %vm2009, %v2008
  %s2014 = scalar_lea.vmem %s1, 175
  %2015 = vst.msk [vmem:[%s2014] sm:$0x4] %vm2009, %v2008
  %s2016 = scalar_lea.vmem %s1, 238
  %2017 = vst.msk [vmem:[%s2016] sm:$0x8] %vm2009, %v2008
  %s2018 = scalar_lea.vmem %s1, 301
  %2019 = vst.msk [vmem:[%s2018] sm:$0x10] %vm2009, %v2008
  %s2020 = scalar_lea.vmem %s1, 364
  %2021 = vst.msk [vmem:[%s2020] sm:$0x20] %vm2009, %v2008
  %s2022 = scalar_lea.vmem %s1, 427
  %2023 = vst.msk [vmem:[%s2022] sm:$0x40] %vm2009, %v2008
  %s2024 = scalar_lea.vmem %s1, 490
  %2025 = vst.msk [vmem:[%s2024] sm:$0x80] %vm2009, %v2008
  %s2026 = scalar_lea.vmem %s0, 8
  %v2027 = vld [vmem:[%s2026] sm:$0xff]
  %2028 = vrot.lane.b32.xlu0 %v2027, 79
  %v2029 = vpop.permute.xlu0 %2028
  %vm2030 = vcmask 7168
  %s2031 = scalar_lea.vmem %s1, 561
  %2032 = vst.msk [vmem:[%s2031] sm:$0x1] %vm2030, %v2029
  %s2033 = scalar_lea.vmem %s1, 624
  %2034 = vst.msk [vmem:[%s2033] sm:$0x2] %vm2030, %v2029
  %s2035 = scalar_lea.vmem %s1, 687
  %2036 = vst.msk [vmem:[%s2035] sm:$0x4] %vm2030, %v2029
  %s2037 = scalar_lea.vmem %s1, 750
  %2038 = vst.msk [vmem:[%s2037] sm:$0x8] %vm2030, %v2029
  %s2039 = scalar_lea.vmem %s1, 813
  %2040 = vst.msk [vmem:[%s2039] sm:$0x10] %vm2030, %v2029
  %s2041 = scalar_lea.vmem %s1, 876
  %2042 = vst.msk [vmem:[%s2041] sm:$0x20] %vm2030, %v2029
  %s2043 = scalar_lea.vmem %s1, 939
  %2044 = vst.msk [vmem:[%s2043] sm:$0x40] %vm2030, %v2029
  %s2045 = scalar_lea.vmem %s1, 1002
  %2046 = vst.msk [vmem:[%s2045] sm:$0x80] %vm2030, %v2029
  %v2047 = vld [vmem:[%s0] sm:$0xff]
  %2048 = vrot.lane.b32.xlu0 %v2047, 78
  %v2049 = vpop.permute.xlu0 %2048
  %vm2050 = vcmask 7168
  %s2051 = scalar_lea.vmem %s1, 50
  %2052 = vst.msk [vmem:[%s2051] sm:$0x1] %vm2050, %v2049
  %s2053 = scalar_lea.vmem %s1, 113
  %2054 = vst.msk [vmem:[%s2053] sm:$0x2] %vm2050, %v2049
  %s2055 = scalar_lea.vmem %s1, 176
  %2056 = vst.msk [vmem:[%s2055] sm:$0x4] %vm2050, %v2049
  %s2057 = scalar_lea.vmem %s1, 239
  %2058 = vst.msk [vmem:[%s2057] sm:$0x8] %vm2050, %v2049
  %s2059 = scalar_lea.vmem %s1, 302
  %2060 = vst.msk [vmem:[%s2059] sm:$0x10] %vm2050, %v2049
  %s2061 = scalar_lea.vmem %s1, 365
  %2062 = vst.msk [vmem:[%s2061] sm:$0x20] %vm2050, %v2049
  %s2063 = scalar_lea.vmem %s1, 428
  %2064 = vst.msk [vmem:[%s2063] sm:$0x40] %vm2050, %v2049
  %s2065 = scalar_lea.vmem %s1, 491
  %2066 = vst.msk [vmem:[%s2065] sm:$0x80] %vm2050, %v2049
  %s2067 = scalar_lea.vmem %s0, 8
  %v2068 = vld [vmem:[%s2067] sm:$0xff]
  %2069 = vrot.lane.b32.xlu0 %v2068, 78
  %v2070 = vpop.permute.xlu0 %2069
  %vm2071 = vcmask 7168
  %s2072 = scalar_lea.vmem %s1, 562
  %2073 = vst.msk [vmem:[%s2072] sm:$0x1] %vm2071, %v2070
  %s2074 = scalar_lea.vmem %s1, 625
  %2075 = vst.msk [vmem:[%s2074] sm:$0x2] %vm2071, %v2070
  %s2076 = scalar_lea.vmem %s1, 688
  %2077 = vst.msk [vmem:[%s2076] sm:$0x4] %vm2071, %v2070
  %s2078 = scalar_lea.vmem %s1, 751
  %2079 = vst.msk [vmem:[%s2078] sm:$0x8] %vm2071, %v2070
  %s2080 = scalar_lea.vmem %s1, 814
  %2081 = vst.msk [vmem:[%s2080] sm:$0x10] %vm2071, %v2070
  %s2082 = scalar_lea.vmem %s1, 877
  %2083 = vst.msk [vmem:[%s2082] sm:$0x20] %vm2071, %v2070
  %s2084 = scalar_lea.vmem %s1, 940
  %2085 = vst.msk [vmem:[%s2084] sm:$0x40] %vm2071, %v2070
  %s2086 = scalar_lea.vmem %s1, 1003
  %2087 = vst.msk [vmem:[%s2086] sm:$0x80] %vm2071, %v2070
  %v2088 = vld [vmem:[%s0] sm:$0xff]
  %2089 = vrot.lane.b32.xlu0 %v2088, 77
  %v2090 = vpop.permute.xlu0 %2089
  %vm2091 = vcmask 7168
  %s2092 = scalar_lea.vmem %s1, 51
  %2093 = vst.msk [vmem:[%s2092] sm:$0x1] %vm2091, %v2090
  %s2094 = scalar_lea.vmem %s1, 114
  %2095 = vst.msk [vmem:[%s2094] sm:$0x2] %vm2091, %v2090
  %s2096 = scalar_lea.vmem %s1, 177
  %2097 = vst.msk [vmem:[%s2096] sm:$0x4] %vm2091, %v2090
  %s2098 = scalar_lea.vmem %s1, 240
  %2099 = vst.msk [vmem:[%s2098] sm:$0x8] %vm2091, %v2090
  %s2100 = scalar_lea.vmem %s1, 303
  %2101 = vst.msk [vmem:[%s2100] sm:$0x10] %vm2091, %v2090
  %s2102 = scalar_lea.vmem %s1, 366
  %2103 = vst.msk [vmem:[%s2102] sm:$0x20] %vm2091, %v2090
  %s2104 = scalar_lea.vmem %s1, 429
  %2105 = vst.msk [vmem:[%s2104] sm:$0x40] %vm2091, %v2090
  %s2106 = scalar_lea.vmem %s1, 492
  %2107 = vst.msk [vmem:[%s2106] sm:$0x80] %vm2091, %v2090
  %s2108 = scalar_lea.vmem %s0, 8
  %v2109 = vld [vmem:[%s2108] sm:$0xff]
  %2110 = vrot.lane.b32.xlu0 %v2109, 77
  %v2111 = vpop.permute.xlu0 %2110
  %vm2112 = vcmask 7168
  %s2113 = scalar_lea.vmem %s1, 563
  %2114 = vst.msk [vmem:[%s2113] sm:$0x1] %vm2112, %v2111
  %s2115 = scalar_lea.vmem %s1, 626
  %2116 = vst.msk [vmem:[%s2115] sm:$0x2] %vm2112, %v2111
  %s2117 = scalar_lea.vmem %s1, 689
  %2118 = vst.msk [vmem:[%s2117] sm:$0x4] %vm2112, %v2111
  %s2119 = scalar_lea.vmem %s1, 752
  %2120 = vst.msk [vmem:[%s2119] sm:$0x8] %vm2112, %v2111
  %s2121 = scalar_lea.vmem %s1, 815
  %2122 = vst.msk [vmem:[%s2121] sm:$0x10] %vm2112, %v2111
  %s2123 = scalar_lea.vmem %s1, 878
  %2124 = vst.msk [vmem:[%s2123] sm:$0x20] %vm2112, %v2111
  %s2125 = scalar_lea.vmem %s1, 941
  %2126 = vst.msk [vmem:[%s2125] sm:$0x40] %vm2112, %v2111
  %s2127 = scalar_lea.vmem %s1, 1004
  %2128 = vst.msk [vmem:[%s2127] sm:$0x80] %vm2112, %v2111
  %v2129 = vld [vmem:[%s0] sm:$0xff]
  %2130 = vrot.lane.b32.xlu0 %v2129, 76
  %v2131 = vpop.permute.xlu0 %2130
  %vm2132 = vcmask 7168
  %s2133 = scalar_lea.vmem %s1, 52
  %2134 = vst.msk [vmem:[%s2133] sm:$0x1] %vm2132, %v2131
  %s2135 = scalar_lea.vmem %s1, 115
  %2136 = vst.msk [vmem:[%s2135] sm:$0x2] %vm2132, %v2131
  %s2137 = scalar_lea.vmem %s1, 178
  %2138 = vst.msk [vmem:[%s2137] sm:$0x4] %vm2132, %v2131
  %s2139 = scalar_lea.vmem %s1, 241
  %2140 = vst.msk [vmem:[%s2139] sm:$0x8] %vm2132, %v2131
  %s2141 = scalar_lea.vmem %s1, 304
  %2142 = vst.msk [vmem:[%s2141] sm:$0x10] %vm2132, %v2131
  %s2143 = scalar_lea.vmem %s1, 367
  %2144 = vst.msk [vmem:[%s2143] sm:$0x20] %vm2132, %v2131
  %s2145 = scalar_lea.vmem %s1, 430
  %2146 = vst.msk [vmem:[%s2145] sm:$0x40] %vm2132, %v2131
  %s2147 = scalar_lea.vmem %s1, 493
  %2148 = vst.msk [vmem:[%s2147] sm:$0x80] %vm2132, %v2131
  %s2149 = scalar_lea.vmem %s0, 8
  %v2150 = vld [vmem:[%s2149] sm:$0xff]
  %2151 = vrot.lane.b32.xlu0 %v2150, 76
  %v2152 = vpop.permute.xlu0 %2151
  %vm2153 = vcmask 7168
  %s2154 = scalar_lea.vmem %s1, 564
  %2155 = vst.msk [vmem:[%s2154] sm:$0x1] %vm2153, %v2152
  %s2156 = scalar_lea.vmem %s1, 627
  %2157 = vst.msk [vmem:[%s2156] sm:$0x2] %vm2153, %v2152
  %s2158 = scalar_lea.vmem %s1, 690
  %2159 = vst.msk [vmem:[%s2158] sm:$0x4] %vm2153, %v2152
  %s2160 = scalar_lea.vmem %s1, 753
  %2161 = vst.msk [vmem:[%s2160] sm:$0x8] %vm2153, %v2152
  %s2162 = scalar_lea.vmem %s1, 816
  %2163 = vst.msk [vmem:[%s2162] sm:$0x10] %vm2153, %v2152
  %s2164 = scalar_lea.vmem %s1, 879
  %2165 = vst.msk [vmem:[%s2164] sm:$0x20] %vm2153, %v2152
  %s2166 = scalar_lea.vmem %s1, 942
  %2167 = vst.msk [vmem:[%s2166] sm:$0x40] %vm2153, %v2152
  %s2168 = scalar_lea.vmem %s1, 1005
  %2169 = vst.msk [vmem:[%s2168] sm:$0x80] %vm2153, %v2152
  %v2170 = vld [vmem:[%s0] sm:$0xff]
  %2171 = vrot.lane.b32.xlu0 %v2170, 75
  %v2172 = vpop.permute.xlu0 %2171
  %vm2173 = vcmask 7168
  %s2174 = scalar_lea.vmem %s1, 53
  %2175 = vst.msk [vmem:[%s2174] sm:$0x1] %vm2173, %v2172
  %s2176 = scalar_lea.vmem %s1, 116
  %2177 = vst.msk [vmem:[%s2176] sm:$0x2] %vm2173, %v2172
  %s2178 = scalar_lea.vmem %s1, 179
  %2179 = vst.msk [vmem:[%s2178] sm:$0x4] %vm2173, %v2172
  %s2180 = scalar_lea.vmem %s1, 242
  %2181 = vst.msk [vmem:[%s2180] sm:$0x8] %vm2173, %v2172
  %s2182 = scalar_lea.vmem %s1, 305
  %2183 = vst.msk [vmem:[%s2182] sm:$0x10] %vm2173, %v2172
  %s2184 = scalar_lea.vmem %s1, 368
  %2185 = vst.msk [vmem:[%s2184] sm:$0x20] %vm2173, %v2172
  %s2186 = scalar_lea.vmem %s1, 431
  %2187 = vst.msk [vmem:[%s2186] sm:$0x40] %vm2173, %v2172
  %s2188 = scalar_lea.vmem %s1, 494
  %2189 = vst.msk [vmem:[%s2188] sm:$0x80] %vm2173, %v2172
  %s2190 = scalar_lea.vmem %s0, 8
  %v2191 = vld [vmem:[%s2190] sm:$0xff]
  %2192 = vrot.lane.b32.xlu0 %v2191, 75
  %v2193 = vpop.permute.xlu0 %2192
  %vm2194 = vcmask 7168
  %s2195 = scalar_lea.vmem %s1, 565
  %2196 = vst.msk [vmem:[%s2195] sm:$0x1] %vm2194, %v2193
  %s2197 = scalar_lea.vmem %s1, 628
  %2198 = vst.msk [vmem:[%s2197] sm:$0x2] %vm2194, %v2193
  %s2199 = scalar_lea.vmem %s1, 691
  %2200 = vst.msk [vmem:[%s2199] sm:$0x4] %vm2194, %v2193
  %s2201 = scalar_lea.vmem %s1, 754
  %2202 = vst.msk [vmem:[%s2201] sm:$0x8] %vm2194, %v2193
  %s2203 = scalar_lea.vmem %s1, 817
  %2204 = vst.msk [vmem:[%s2203] sm:$0x10] %vm2194, %v2193
  %s2205 = scalar_lea.vmem %s1, 880
  %2206 = vst.msk [vmem:[%s2205] sm:$0x20] %vm2194, %v2193
  %s2207 = scalar_lea.vmem %s1, 943
  %2208 = vst.msk [vmem:[%s2207] sm:$0x40] %vm2194, %v2193
  %s2209 = scalar_lea.vmem %s1, 1006
  %2210 = vst.msk [vmem:[%s2209] sm:$0x80] %vm2194, %v2193
  %v2211 = vld [vmem:[%s0] sm:$0xff]
  %2212 = vrot.lane.b32.xlu0 %v2211, 74
  %v2213 = vpop.permute.xlu0 %2212
  %vm2214 = vcmask 7168
  %s2215 = scalar_lea.vmem %s1, 54
  %2216 = vst.msk [vmem:[%s2215] sm:$0x1] %vm2214, %v2213
  %s2217 = scalar_lea.vmem %s1, 117
  %2218 = vst.msk [vmem:[%s2217] sm:$0x2] %vm2214, %v2213
  %s2219 = scalar_lea.vmem %s1, 180
  %2220 = vst.msk [vmem:[%s2219] sm:$0x4] %vm2214, %v2213
  %s2221 = scalar_lea.vmem %s1, 243
  %2222 = vst.msk [vmem:[%s2221] sm:$0x8] %vm2214, %v2213
  %s2223 = scalar_lea.vmem %s1, 306
  %2224 = vst.msk [vmem:[%s2223] sm:$0x10] %vm2214, %v2213
  %s2225 = scalar_lea.vmem %s1, 369
  %2226 = vst.msk [vmem:[%s2225] sm:$0x20] %vm2214, %v2213
  %s2227 = scalar_lea.vmem %s1, 432
  %2228 = vst.msk [vmem:[%s2227] sm:$0x40] %vm2214, %v2213
  %s2229 = scalar_lea.vmem %s1, 495
  %2230 = vst.msk [vmem:[%s2229] sm:$0x80] %vm2214, %v2213
  %s2231 = scalar_lea.vmem %s0, 8
  %v2232 = vld [vmem:[%s2231] sm:$0xff]
  %2233 = vrot.lane.b32.xlu0 %v2232, 74
  %v2234 = vpop.permute.xlu0 %2233
  %vm2235 = vcmask 7168
  %s2236 = scalar_lea.vmem %s1, 566
  %2237 = vst.msk [vmem:[%s2236] sm:$0x1] %vm2235, %v2234
  %s2238 = scalar_lea.vmem %s1, 629
  %2239 = vst.msk [vmem:[%s2238] sm:$0x2] %vm2235, %v2234
  %s2240 = scalar_lea.vmem %s1, 692
  %2241 = vst.msk [vmem:[%s2240] sm:$0x4] %vm2235, %v2234
  %s2242 = scalar_lea.vmem %s1, 755
  %2243 = vst.msk [vmem:[%s2242] sm:$0x8] %vm2235, %v2234
  %s2244 = scalar_lea.vmem %s1, 818
  %2245 = vst.msk [vmem:[%s2244] sm:$0x10] %vm2235, %v2234
  %s2246 = scalar_lea.vmem %s1, 881
  %2247 = vst.msk [vmem:[%s2246] sm:$0x20] %vm2235, %v2234
  %s2248 = scalar_lea.vmem %s1, 944
  %2249 = vst.msk [vmem:[%s2248] sm:$0x40] %vm2235, %v2234
  %s2250 = scalar_lea.vmem %s1, 1007
  %2251 = vst.msk [vmem:[%s2250] sm:$0x80] %vm2235, %v2234
  %v2252 = vld [vmem:[%s0] sm:$0xff]
  %2253 = vrot.lane.b32.xlu0 %v2252, 73
  %v2254 = vpop.permute.xlu0 %2253
  %vm2255 = vcmask 7168
  %s2256 = scalar_lea.vmem %s1, 55
  %2257 = vst.msk [vmem:[%s2256] sm:$0x1] %vm2255, %v2254
  %s2258 = scalar_lea.vmem %s1, 118
  %2259 = vst.msk [vmem:[%s2258] sm:$0x2] %vm2255, %v2254
  %s2260 = scalar_lea.vmem %s1, 181
  %2261 = vst.msk [vmem:[%s2260] sm:$0x4] %vm2255, %v2254
  %s2262 = scalar_lea.vmem %s1, 244
  %2263 = vst.msk [vmem:[%s2262] sm:$0x8] %vm2255, %v2254
  %s2264 = scalar_lea.vmem %s1, 307
  %2265 = vst.msk [vmem:[%s2264] sm:$0x10] %vm2255, %v2254
  %s2266 = scalar_lea.vmem %s1, 370
  %2267 = vst.msk [vmem:[%s2266] sm:$0x20] %vm2255, %v2254
  %s2268 = scalar_lea.vmem %s1, 433
  %2269 = vst.msk [vmem:[%s2268] sm:$0x40] %vm2255, %v2254
  %s2270 = scalar_lea.vmem %s1, 496
  %2271 = vst.msk [vmem:[%s2270] sm:$0x80] %vm2255, %v2254
  %s2272 = scalar_lea.vmem %s0, 8
  %v2273 = vld [vmem:[%s2272] sm:$0xff]
  %2274 = vrot.lane.b32.xlu0 %v2273, 73
  %v2275 = vpop.permute.xlu0 %2274
  %vm2276 = vcmask 7168
  %s2277 = scalar_lea.vmem %s1, 567
  %2278 = vst.msk [vmem:[%s2277] sm:$0x1] %vm2276, %v2275
  %s2279 = scalar_lea.vmem %s1, 630
  %2280 = vst.msk [vmem:[%s2279] sm:$0x2] %vm2276, %v2275
  %s2281 = scalar_lea.vmem %s1, 693
  %2282 = vst.msk [vmem:[%s2281] sm:$0x4] %vm2276, %v2275
  %s2283 = scalar_lea.vmem %s1, 756
  %2284 = vst.msk [vmem:[%s2283] sm:$0x8] %vm2276, %v2275
  %s2285 = scalar_lea.vmem %s1, 819
  %2286 = vst.msk [vmem:[%s2285] sm:$0x10] %vm2276, %v2275
  %s2287 = scalar_lea.vmem %s1, 882
  %2288 = vst.msk [vmem:[%s2287] sm:$0x20] %vm2276, %v2275
  %s2289 = scalar_lea.vmem %s1, 945
  %2290 = vst.msk [vmem:[%s2289] sm:$0x40] %vm2276, %v2275
  %s2291 = scalar_lea.vmem %s1, 1008
  %2292 = vst.msk [vmem:[%s2291] sm:$0x80] %vm2276, %v2275
  %v2293 = vld [vmem:[%s0] sm:$0xff]
  %2294 = vrot.lane.b32.xlu0 %v2293, 72
  %v2295 = vpop.permute.xlu0 %2294
  %vm2296 = vcmask 7168
  %s2297 = scalar_lea.vmem %s1, 56
  %2298 = vst.msk [vmem:[%s2297] sm:$0x1] %vm2296, %v2295
  %s2299 = scalar_lea.vmem %s1, 119
  %2300 = vst.msk [vmem:[%s2299] sm:$0x2] %vm2296, %v2295
  %s2301 = scalar_lea.vmem %s1, 182
  %2302 = vst.msk [vmem:[%s2301] sm:$0x4] %vm2296, %v2295
  %s2303 = scalar_lea.vmem %s1, 245
  %2304 = vst.msk [vmem:[%s2303] sm:$0x8] %vm2296, %v2295
  %s2305 = scalar_lea.vmem %s1, 308
  %2306 = vst.msk [vmem:[%s2305] sm:$0x10] %vm2296, %v2295
  %s2307 = scalar_lea.vmem %s1, 371
  %2308 = vst.msk [vmem:[%s2307] sm:$0x20] %vm2296, %v2295
  %s2309 = scalar_lea.vmem %s1, 434
  %2310 = vst.msk [vmem:[%s2309] sm:$0x40] %vm2296, %v2295
  %s2311 = scalar_lea.vmem %s1, 497
  %2312 = vst.msk [vmem:[%s2311] sm:$0x80] %vm2296, %v2295
  %s2313 = scalar_lea.vmem %s0, 8
  %v2314 = vld [vmem:[%s2313] sm:$0xff]
  %2315 = vrot.lane.b32.xlu0 %v2314, 72
  %v2316 = vpop.permute.xlu0 %2315
  %vm2317 = vcmask 7168
  %s2318 = scalar_lea.vmem %s1, 568
  %2319 = vst.msk [vmem:[%s2318] sm:$0x1] %vm2317, %v2316
  %s2320 = scalar_lea.vmem %s1, 631
  %2321 = vst.msk [vmem:[%s2320] sm:$0x2] %vm2317, %v2316
  %s2322 = scalar_lea.vmem %s1, 694
  %2323 = vst.msk [vmem:[%s2322] sm:$0x4] %vm2317, %v2316
  %s2324 = scalar_lea.vmem %s1, 757
  %2325 = vst.msk [vmem:[%s2324] sm:$0x8] %vm2317, %v2316
  %s2326 = scalar_lea.vmem %s1, 820
  %2327 = vst.msk [vmem:[%s2326] sm:$0x10] %vm2317, %v2316
  %s2328 = scalar_lea.vmem %s1, 883
  %2329 = vst.msk [vmem:[%s2328] sm:$0x20] %vm2317, %v2316
  %s2330 = scalar_lea.vmem %s1, 946
  %2331 = vst.msk [vmem:[%s2330] sm:$0x40] %vm2317, %v2316
  %s2332 = scalar_lea.vmem %s1, 1009
  %2333 = vst.msk [vmem:[%s2332] sm:$0x80] %vm2317, %v2316
  %v2334 = vld [vmem:[%s0] sm:$0xff]
  %2335 = vrot.lane.b32.xlu0 %v2334, 71
  %v2336 = vpop.permute.xlu0 %2335
  %vm2337 = vcmask 7168
  %s2338 = scalar_lea.vmem %s1, 57
  %2339 = vst.msk [vmem:[%s2338] sm:$0x1] %vm2337, %v2336
  %s2340 = scalar_lea.vmem %s1, 120
  %2341 = vst.msk [vmem:[%s2340] sm:$0x2] %vm2337, %v2336
  %s2342 = scalar_lea.vmem %s1, 183
  %2343 = vst.msk [vmem:[%s2342] sm:$0x4] %vm2337, %v2336
  %s2344 = scalar_lea.vmem %s1, 246
  %2345 = vst.msk [vmem:[%s2344] sm:$0x8] %vm2337, %v2336
  %s2346 = scalar_lea.vmem %s1, 309
  %2347 = vst.msk [vmem:[%s2346] sm:$0x10] %vm2337, %v2336
  %s2348 = scalar_lea.vmem %s1, 372
  %2349 = vst.msk [vmem:[%s2348] sm:$0x20] %vm2337, %v2336
  %s2350 = scalar_lea.vmem %s1, 435
  %2351 = vst.msk [vmem:[%s2350] sm:$0x40] %vm2337, %v2336
  %s2352 = scalar_lea.vmem %s1, 498
  %2353 = vst.msk [vmem:[%s2352] sm:$0x80] %vm2337, %v2336
  %s2354 = scalar_lea.vmem %s0, 8
  %v2355 = vld [vmem:[%s2354] sm:$0xff]
  %2356 = vrot.lane.b32.xlu0 %v2355, 71
  %v2357 = vpop.permute.xlu0 %2356
  %vm2358 = vcmask 7168
  %s2359 = scalar_lea.vmem %s1, 569
  %2360 = vst.msk [vmem:[%s2359] sm:$0x1] %vm2358, %v2357
  %s2361 = scalar_lea.vmem %s1, 632
  %2362 = vst.msk [vmem:[%s2361] sm:$0x2] %vm2358, %v2357
  %s2363 = scalar_lea.vmem %s1, 695
  %2364 = vst.msk [vmem:[%s2363] sm:$0x4] %vm2358, %v2357
  %s2365 = scalar_lea.vmem %s1, 758
  %2366 = vst.msk [vmem:[%s2365] sm:$0x8] %vm2358, %v2357
  %s2367 = scalar_lea.vmem %s1, 821
  %2368 = vst.msk [vmem:[%s2367] sm:$0x10] %vm2358, %v2357
  %s2369 = scalar_lea.vmem %s1, 884
  %2370 = vst.msk [vmem:[%s2369] sm:$0x20] %vm2358, %v2357
  %s2371 = scalar_lea.vmem %s1, 947
  %2372 = vst.msk [vmem:[%s2371] sm:$0x40] %vm2358, %v2357
  %s2373 = scalar_lea.vmem %s1, 1010
  %2374 = vst.msk [vmem:[%s2373] sm:$0x80] %vm2358, %v2357
  %v2375 = vld [vmem:[%s0] sm:$0xff]
  %2376 = vrot.lane.b32.xlu0 %v2375, 70
  %v2377 = vpop.permute.xlu0 %2376
  %vm2378 = vcmask 7168
  %s2379 = scalar_lea.vmem %s1, 58
  %2380 = vst.msk [vmem:[%s2379] sm:$0x1] %vm2378, %v2377
  %s2381 = scalar_lea.vmem %s1, 121
  %2382 = vst.msk [vmem:[%s2381] sm:$0x2] %vm2378, %v2377
  %s2383 = scalar_lea.vmem %s1, 184
  %2384 = vst.msk [vmem:[%s2383] sm:$0x4] %vm2378, %v2377
  %s2385 = scalar_lea.vmem %s1, 247
  %2386 = vst.msk [vmem:[%s2385] sm:$0x8] %vm2378, %v2377
  %s2387 = scalar_lea.vmem %s1, 310
  %2388 = vst.msk [vmem:[%s2387] sm:$0x10] %vm2378, %v2377
  %s2389 = scalar_lea.vmem %s1, 373
  %2390 = vst.msk [vmem:[%s2389] sm:$0x20] %vm2378, %v2377
  %s2391 = scalar_lea.vmem %s1, 436
  %2392 = vst.msk [vmem:[%s2391] sm:$0x40] %vm2378, %v2377
  %s2393 = scalar_lea.vmem %s1, 499
  %2394 = vst.msk [vmem:[%s2393] sm:$0x80] %vm2378, %v2377
  %s2395 = scalar_lea.vmem %s0, 8
  %v2396 = vld [vmem:[%s2395] sm:$0xff]
  %2397 = vrot.lane.b32.xlu0 %v2396, 70
  %v2398 = vpop.permute.xlu0 %2397
  %vm2399 = vcmask 7168
  %s2400 = scalar_lea.vmem %s1, 570
  %2401 = vst.msk [vmem:[%s2400] sm:$0x1] %vm2399, %v2398
  %s2402 = scalar_lea.vmem %s1, 633
  %2403 = vst.msk [vmem:[%s2402] sm:$0x2] %vm2399, %v2398
  %s2404 = scalar_lea.vmem %s1, 696
  %2405 = vst.msk [vmem:[%s2404] sm:$0x4] %vm2399, %v2398
  %s2406 = scalar_lea.vmem %s1, 759
  %2407 = vst.msk [vmem:[%s2406] sm:$0x8] %vm2399, %v2398
  %s2408 = scalar_lea.vmem %s1, 822
  %2409 = vst.msk [vmem:[%s2408] sm:$0x10] %vm2399, %v2398
  %s2410 = scalar_lea.vmem %s1, 885
  %2411 = vst.msk [vmem:[%s2410] sm:$0x20] %vm2399, %v2398
  %s2412 = scalar_lea.vmem %s1, 948
  %2413 = vst.msk [vmem:[%s2412] sm:$0x40] %vm2399, %v2398
  %s2414 = scalar_lea.vmem %s1, 1011
  %2415 = vst.msk [vmem:[%s2414] sm:$0x80] %vm2399, %v2398
  %v2416 = vld [vmem:[%s0] sm:$0xff]
  %2417 = vrot.lane.b32.xlu0 %v2416, 69
  %v2418 = vpop.permute.xlu0 %2417
  %vm2419 = vcmask 7168
  %s2420 = scalar_lea.vmem %s1, 59
  %2421 = vst.msk [vmem:[%s2420] sm:$0x1] %vm2419, %v2418
  %s2422 = scalar_lea.vmem %s1, 122
  %2423 = vst.msk [vmem:[%s2422] sm:$0x2] %vm2419, %v2418
  %s2424 = scalar_lea.vmem %s1, 185
  %2425 = vst.msk [vmem:[%s2424] sm:$0x4] %vm2419, %v2418
  %s2426 = scalar_lea.vmem %s1, 248
  %2427 = vst.msk [vmem:[%s2426] sm:$0x8] %vm2419, %v2418
  %s2428 = scalar_lea.vmem %s1, 311
  %2429 = vst.msk [vmem:[%s2428] sm:$0x10] %vm2419, %v2418
  %s2430 = scalar_lea.vmem %s1, 374
  %2431 = vst.msk [vmem:[%s2430] sm:$0x20] %vm2419, %v2418
  %s2432 = scalar_lea.vmem %s1, 437
  %2433 = vst.msk [vmem:[%s2432] sm:$0x40] %vm2419, %v2418
  %s2434 = scalar_lea.vmem %s1, 500
  %2435 = vst.msk [vmem:[%s2434] sm:$0x80] %vm2419, %v2418
  %s2436 = scalar_lea.vmem %s0, 8
  %v2437 = vld [vmem:[%s2436] sm:$0xff]
  %2438 = vrot.lane.b32.xlu0 %v2437, 69
  %v2439 = vpop.permute.xlu0 %2438
  %vm2440 = vcmask 7168
  %s2441 = scalar_lea.vmem %s1, 571
  %2442 = vst.msk [vmem:[%s2441] sm:$0x1] %vm2440, %v2439
  %s2443 = scalar_lea.vmem %s1, 634
  %2444 = vst.msk [vmem:[%s2443] sm:$0x2] %vm2440, %v2439
  %s2445 = scalar_lea.vmem %s1, 697
  %2446 = vst.msk [vmem:[%s2445] sm:$0x4] %vm2440, %v2439
  %s2447 = scalar_lea.vmem %s1, 760
  %2448 = vst.msk [vmem:[%s2447] sm:$0x8] %vm2440, %v2439
  %s2449 = scalar_lea.vmem %s1, 823
  %2450 = vst.msk [vmem:[%s2449] sm:$0x10] %vm2440, %v2439
  %s2451 = scalar_lea.vmem %s1, 886
  %2452 = vst.msk [vmem:[%s2451] sm:$0x20] %vm2440, %v2439
  %s2453 = scalar_lea.vmem %s1, 949
  %2454 = vst.msk [vmem:[%s2453] sm:$0x40] %vm2440, %v2439
  %s2455 = scalar_lea.vmem %s1, 1012
  %2456 = vst.msk [vmem:[%s2455] sm:$0x80] %vm2440, %v2439
  %v2457 = vld [vmem:[%s0] sm:$0xff]
  %2458 = vrot.lane.b32.xlu0 %v2457, 68
  %v2459 = vpop.permute.xlu0 %2458
  %vm2460 = vcmask 7168
  %s2461 = scalar_lea.vmem %s1, 60
  %2462 = vst.msk [vmem:[%s2461] sm:$0x1] %vm2460, %v2459
  %s2463 = scalar_lea.vmem %s1, 123
  %2464 = vst.msk [vmem:[%s2463] sm:$0x2] %vm2460, %v2459
  %s2465 = scalar_lea.vmem %s1, 186
  %2466 = vst.msk [vmem:[%s2465] sm:$0x4] %vm2460, %v2459
  %s2467 = scalar_lea.vmem %s1, 249
  %2468 = vst.msk [vmem:[%s2467] sm:$0x8] %vm2460, %v2459
  %s2469 = scalar_lea.vmem %s1, 312
  %2470 = vst.msk [vmem:[%s2469] sm:$0x10] %vm2460, %v2459
  %s2471 = scalar_lea.vmem %s1, 375
  %2472 = vst.msk [vmem:[%s2471] sm:$0x20] %vm2460, %v2459
  %s2473 = scalar_lea.vmem %s1, 438
  %2474 = vst.msk [vmem:[%s2473] sm:$0x40] %vm2460, %v2459
  %s2475 = scalar_lea.vmem %s1, 501
  %2476 = vst.msk [vmem:[%s2475] sm:$0x80] %vm2460, %v2459
  %s2477 = scalar_lea.vmem %s0, 8
  %v2478 = vld [vmem:[%s2477] sm:$0xff]
  %2479 = vrot.lane.b32.xlu0 %v2478, 68
  %v2480 = vpop.permute.xlu0 %2479
  %vm2481 = vcmask 7168
  %s2482 = scalar_lea.vmem %s1, 572
  %2483 = vst.msk [vmem:[%s2482] sm:$0x1] %vm2481, %v2480
  %s2484 = scalar_lea.vmem %s1, 635
  %2485 = vst.msk [vmem:[%s2484] sm:$0x2] %vm2481, %v2480
  %s2486 = scalar_lea.vmem %s1, 698
  %2487 = vst.msk [vmem:[%s2486] sm:$0x4] %vm2481, %v2480
  %s2488 = scalar_lea.vmem %s1, 761
  %2489 = vst.msk [vmem:[%s2488] sm:$0x8] %vm2481, %v2480
  %s2490 = scalar_lea.vmem %s1, 824
  %2491 = vst.msk [vmem:[%s2490] sm:$0x10] %vm2481, %v2480
  %s2492 = scalar_lea.vmem %s1, 887
  %2493 = vst.msk [vmem:[%s2492] sm:$0x20] %vm2481, %v2480
  %s2494 = scalar_lea.vmem %s1, 950
  %2495 = vst.msk [vmem:[%s2494] sm:$0x40] %vm2481, %v2480
  %s2496 = scalar_lea.vmem %s1, 1013
  %2497 = vst.msk [vmem:[%s2496] sm:$0x80] %vm2481, %v2480
  %v2498 = vld [vmem:[%s0] sm:$0xff]
  %2499 = vrot.lane.b32.xlu0 %v2498, 67
  %v2500 = vpop.permute.xlu0 %2499
  %vm2501 = vcmask 7168
  %s2502 = scalar_lea.vmem %s1, 61
  %2503 = vst.msk [vmem:[%s2502] sm:$0x1] %vm2501, %v2500
  %s2504 = scalar_lea.vmem %s1, 124
  %2505 = vst.msk [vmem:[%s2504] sm:$0x2] %vm2501, %v2500
  %s2506 = scalar_lea.vmem %s1, 187
  %2507 = vst.msk [vmem:[%s2506] sm:$0x4] %vm2501, %v2500
  %s2508 = scalar_lea.vmem %s1, 250
  %2509 = vst.msk [vmem:[%s2508] sm:$0x8] %vm2501, %v2500
  %s2510 = scalar_lea.vmem %s1, 313
  %2511 = vst.msk [vmem:[%s2510] sm:$0x10] %vm2501, %v2500
  %s2512 = scalar_lea.vmem %s1, 376
  %2513 = vst.msk [vmem:[%s2512] sm:$0x20] %vm2501, %v2500
  %s2514 = scalar_lea.vmem %s1, 439
  %2515 = vst.msk [vmem:[%s2514] sm:$0x40] %vm2501, %v2500
  %s2516 = scalar_lea.vmem %s1, 502
  %2517 = vst.msk [vmem:[%s2516] sm:$0x80] %vm2501, %v2500
  %s2518 = scalar_lea.vmem %s0, 8
  %v2519 = vld [vmem:[%s2518] sm:$0xff]
  %2520 = vrot.lane.b32.xlu0 %v2519, 67
  %v2521 = vpop.permute.xlu0 %2520
  %vm2522 = vcmask 7168
  %s2523 = scalar_lea.vmem %s1, 573
  %2524 = vst.msk [vmem:[%s2523] sm:$0x1] %vm2522, %v2521
  %s2525 = scalar_lea.vmem %s1, 636
  %2526 = vst.msk [vmem:[%s2525] sm:$0x2] %vm2522, %v2521
  %s2527 = scalar_lea.vmem %s1, 699
  %2528 = vst.msk [vmem:[%s2527] sm:$0x4] %vm2522, %v2521
  %s2529 = scalar_lea.vmem %s1, 762
  %2530 = vst.msk [vmem:[%s2529] sm:$0x8] %vm2522, %v2521
  %s2531 = scalar_lea.vmem %s1, 825
  %2532 = vst.msk [vmem:[%s2531] sm:$0x10] %vm2522, %v2521
  %s2533 = scalar_lea.vmem %s1, 888
  %2534 = vst.msk [vmem:[%s2533] sm:$0x20] %vm2522, %v2521
  %s2535 = scalar_lea.vmem %s1, 951
  %2536 = vst.msk [vmem:[%s2535] sm:$0x40] %vm2522, %v2521
  %s2537 = scalar_lea.vmem %s1, 1014
  %2538 = vst.msk [vmem:[%s2537] sm:$0x80] %vm2522, %v2521
  %v2539 = vld [vmem:[%s0] sm:$0xff]
  %2540 = vrot.lane.b32.xlu0 %v2539, 66
  %v2541 = vpop.permute.xlu0 %2540
  %vm2542 = vcmask 7168
  %s2543 = scalar_lea.vmem %s1, 62
  %2544 = vst.msk [vmem:[%s2543] sm:$0x1] %vm2542, %v2541
  %s2545 = scalar_lea.vmem %s1, 125
  %2546 = vst.msk [vmem:[%s2545] sm:$0x2] %vm2542, %v2541
  %s2547 = scalar_lea.vmem %s1, 188
  %2548 = vst.msk [vmem:[%s2547] sm:$0x4] %vm2542, %v2541
  %s2549 = scalar_lea.vmem %s1, 251
  %2550 = vst.msk [vmem:[%s2549] sm:$0x8] %vm2542, %v2541
  %s2551 = scalar_lea.vmem %s1, 314
  %2552 = vst.msk [vmem:[%s2551] sm:$0x10] %vm2542, %v2541
  %s2553 = scalar_lea.vmem %s1, 377
  %2554 = vst.msk [vmem:[%s2553] sm:$0x20] %vm2542, %v2541
  %s2555 = scalar_lea.vmem %s1, 440
  %2556 = vst.msk [vmem:[%s2555] sm:$0x40] %vm2542, %v2541
  %s2557 = scalar_lea.vmem %s1, 503
  %2558 = vst.msk [vmem:[%s2557] sm:$0x80] %vm2542, %v2541
  %s2559 = scalar_lea.vmem %s0, 8
  %v2560 = vld [vmem:[%s2559] sm:$0xff]
  %2561 = vrot.lane.b32.xlu0 %v2560, 66
  %v2562 = vpop.permute.xlu0 %2561
  %vm2563 = vcmask 7168
  %s2564 = scalar_lea.vmem %s1, 574
  %2565 = vst.msk [vmem:[%s2564] sm:$0x1] %vm2563, %v2562
  %s2566 = scalar_lea.vmem %s1, 637
  %2567 = vst.msk [vmem:[%s2566] sm:$0x2] %vm2563, %v2562
  %s2568 = scalar_lea.vmem %s1, 700
  %2569 = vst.msk [vmem:[%s2568] sm:$0x4] %vm2563, %v2562
  %s2570 = scalar_lea.vmem %s1, 763
  %2571 = vst.msk [vmem:[%s2570] sm:$0x8] %vm2563, %v2562
  %s2572 = scalar_lea.vmem %s1, 826
  %2573 = vst.msk [vmem:[%s2572] sm:$0x10] %vm2563, %v2562
  %s2574 = scalar_lea.vmem %s1, 889
  %2575 = vst.msk [vmem:[%s2574] sm:$0x20] %vm2563, %v2562
  %s2576 = scalar_lea.vmem %s1, 952
  %2577 = vst.msk [vmem:[%s2576] sm:$0x40] %vm2563, %v2562
  %s2578 = scalar_lea.vmem %s1, 1015
  %2579 = vst.msk [vmem:[%s2578] sm:$0x80] %vm2563, %v2562
  %v2580 = vld [vmem:[%s0] sm:$0xff]
  %2581 = vrot.lane.b32.xlu0 %v2580, 65
  %v2582 = vpop.permute.xlu0 %2581
  %vm2583 = vcmask 7168
  %s2584 = scalar_lea.vmem %s1, 63
  %2585 = vst.msk [vmem:[%s2584] sm:$0x1] %vm2583, %v2582
  %s2586 = scalar_lea.vmem %s1, 126
  %2587 = vst.msk [vmem:[%s2586] sm:$0x2] %vm2583, %v2582
  %s2588 = scalar_lea.vmem %s1, 189
  %2589 = vst.msk [vmem:[%s2588] sm:$0x4] %vm2583, %v2582
  %s2590 = scalar_lea.vmem %s1, 252
  %2591 = vst.msk [vmem:[%s2590] sm:$0x8] %vm2583, %v2582
  %s2592 = scalar_lea.vmem %s1, 315
  %2593 = vst.msk [vmem:[%s2592] sm:$0x10] %vm2583, %v2582
  %s2594 = scalar_lea.vmem %s1, 378
  %2595 = vst.msk [vmem:[%s2594] sm:$0x20] %vm2583, %v2582
  %s2596 = scalar_lea.vmem %s1, 441
  %2597 = vst.msk [vmem:[%s2596] sm:$0x40] %vm2583, %v2582
  %s2598 = scalar_lea.vmem %s1, 504
  %2599 = vst.msk [vmem:[%s2598] sm:$0x80] %vm2583, %v2582
  %s2600 = scalar_lea.vmem %s0, 8
  %v2601 = vld [vmem:[%s2600] sm:$0xff]
  %2602 = vrot.lane.b32.xlu0 %v2601, 65
  %v2603 = vpop.permute.xlu0 %2602
  %vm2604 = vcmask 7168
  %s2605 = scalar_lea.vmem %s1, 575
  %2606 = vst.msk [vmem:[%s2605] sm:$0x1] %vm2604, %v2603
  %s2607 = scalar_lea.vmem %s1, 638
  %2608 = vst.msk [vmem:[%s2607] sm:$0x2] %vm2604, %v2603
  %s2609 = scalar_lea.vmem %s1, 701
  %2610 = vst.msk [vmem:[%s2609] sm:$0x4] %vm2604, %v2603
  %s2611 = scalar_lea.vmem %s1, 764
  %2612 = vst.msk [vmem:[%s2611] sm:$0x8] %vm2604, %v2603
  %s2613 = scalar_lea.vmem %s1, 827
  %2614 = vst.msk [vmem:[%s2613] sm:$0x10] %vm2604, %v2603
  %s2615 = scalar_lea.vmem %s1, 890
  %2616 = vst.msk [vmem:[%s2615] sm:$0x20] %vm2604, %v2603
  %s2617 = scalar_lea.vmem %s1, 953
  %2618 = vst.msk [vmem:[%s2617] sm:$0x40] %vm2604, %v2603
  %s2619 = scalar_lea.vmem %s1, 1016
  %2620 = vst.msk [vmem:[%s2619] sm:$0x80] %vm2604, %v2603

// kernel: _lambda_.8
$region0: #{_lambda_.8}
  #allocation0 [shape = 'u32[]', space=smem, size = 0x4, offset = 0x4, fixed_abs, tag = 'smem constant byte address 0x4 - core index']
  #allocation1 [shape = 'u32[144,128]{1,0:T(1,128)}', space=vmem, size = 0x12000, scoped, tag = 'internal scratch']
  %s0 = inlined_call_operand.vmem [shape: bf16[512,128], index: 0, kind: input, shape index: {}]
  %s1 = inlined_call_operand.vmem [shape: bf16[64,512], index: 1, kind: input, shape index: {}]
  %s2 = inlined_call_operand.vmem [shape: f32[512,1], index: 2, kind: input, shape index: {}]
  %s3 = inlined_call_operand.vmem [shape: f32[512,1], index: 3, kind: input, shape index: {}]
  %s4 = inlined_call_operand.vmem [shape: f32[64,1], index: 4, kind: input, shape index: {}]
  %s5 = inlined_call_operand.vmem [shape: bf16[64,128], index: 5, kind: output, shape index: {0}]
  %s6 = inlined_call_operand.vmem [shape: f32[1,64,1], index: 6, kind: output, shape index: {1}]
  %s7 = inlined_call_operand.vmem [shape: f32[1,64,1], index: 7, kind: output, shape index: {2}]
  %8 = xla_tuple %s5, %s6, %s7
  %s9 = sld [smem:[#allocation0]]
  $region46: #{_lambda_.8} parent=0
    _
  %s11 = ssub.s32 1, %s9
  %s12 = scalar_select 0, %s11, %s9
  // Predicated region
  $region2: #{_lambda_.8} parent=0 // pred_check
    _
  $region3: #{_lambda_.8} parent=0 // pred_check_branch
    %14 = sbr.rel (0) target = $region5
  $region4: #{_lambda_.8} parent=0 // pred_region
    _
  $region5: #{_lambda_.8} parent=0 // pred_fallthru
    _
  // Predicated region
  $region6: #{_lambda_.8} parent=0 // pred_check
    _
  $region7: #{_lambda_.8} parent=0 // pred_check_branch
    %16 = sbr.rel (0) target = $region9
  $region8: #{_lambda_.8} parent=0 // pred_region
    _
  $region9: #{_lambda_.8} parent=0 // pred_fallthru
    _
  // Predicated region
  $region10: #{_lambda_.8} parent=0 // pred_check
    _
  $region11: #{_lambda_.8} parent=0 // pred_check_branch
    %18 = sbr.rel (0) target = $region13
  $region12: #{_lambda_.8} parent=0 // pred_region
    _
  $region13: #{_lambda_.8} parent=0 // pred_fallthru
    _
  // Predicated region
  $region14: #{_lambda_.8} parent=0 // pred_check
    _
  $region15: #{_lambda_.8} parent=0 // pred_check_branch
    %20 = sbr.rel (0) target = $region17
  $region16: #{_lambda_.8} parent=0 // pred_region
    _
  $region17: #{_lambda_.8} parent=0 // pred_fallthru
    _
  // Predicated region
  $region18: #{_lambda_.8} parent=0 // pred_check
    _
  $region19: #{_lambda_.8} parent=0 // pred_check_branch
    %22 = sbr.rel (0) target = $region21
  $region20: #{_lambda_.8} parent=0 // pred_region
    _
  $region21: #{_lambda_.8} parent=0 // pred_fallthru
    _
  %v24 = vld [vmem:[%s0] sm:$0xf]
  %v25 = vld [vmem:[%s0 + $0x4] sm:$0xf]
  %v26 = vld [vmem:[%s0 + $0x8] sm:$0xf]
  %v27 = vld [vmem:[%s0 + $0xc] sm:$0xf]
  %v28 = vld [vmem:[%s0 + $0x10] sm:$0xf]
  %v29 = vld [vmem:[%s0 + $0x14] sm:$0xf]
  %v30 = vld [vmem:[%s0 + $0x18] sm:$0xf]
  %v31 = vld [vmem:[%s0 + $0x1c] sm:$0xf]
  %v32 = vld [vmem:[%s0 + $0x20] sm:$0xf]
  %v33 = vld [vmem:[%s0 + $0x24] sm:$0xf]
  %v34 = vld [vmem:[%s0 + $0x28] sm:$0xf]
  %v35 = vld [vmem:[%s0 + $0x2c] sm:$0xf]
  %v36 = vld [vmem:[%s0 + $0x30] sm:$0xf]
  %v37 = vld [vmem:[%s0 + $0x34] sm:$0xf]
  %v38 = vld [vmem:[%s0 + $0x38] sm:$0xf]
  %v39 = vld [vmem:[%s0 + $0x3c] sm:$0xf]
  %v40 = vld [vmem:[%s0 + $0x40] sm:$0xf]
  %v41 = vld [vmem:[%s0 + $0x44] sm:$0xf]
  %v42 = vld [vmem:[%s0 + $0x48] sm:$0xf]
  %v43 = vld [vmem:[%s0 + $0x4c] sm:$0xf]
  %v44 = vld [vmem:[%s0 + $0x50] sm:$0xf]
  %v45 = vld [vmem:[%s0 + $0x54] sm:$0xf]
  %v46 = vld [vmem:[%s0 + $0x58] sm:$0xf]
  %v47 = vld [vmem:[%s0 + $0x5c] sm:$0xf]
  %v48 = vld [vmem:[%s0 + $0x60] sm:$0xf]
  %v49 = vld [vmem:[%s0 + $0x64] sm:$0xf]
  %v50 = vld [vmem:[%s0 + $0x68] sm:$0xf]
  %v51 = vld [vmem:[%s0 + $0x6c] sm:$0xf]
  %v52 = vld [vmem:[%s0 + $0x70] sm:$0xf]
  %v53 = vld [vmem:[%s0 + $0x74] sm:$0xf]
  %v54 = vld [vmem:[%s0 + $0x78] sm:$0xf]
  %v55 = vld [vmem:[%s0 + $0x7c] sm:$0xf]
  %v56 = vld [vmem:[%s0 + $0x80] sm:$0xf]
  %v57 = vld [vmem:[%s0 + $0x84] sm:$0xf]
  %v58 = vld [vmem:[%s0 + $0x88] sm:$0xf]
  %v59 = vld [vmem:[%s0 + $0x8c] sm:$0xf]
  %v60 = vld [vmem:[%s0 + $0x90] sm:$0xf]
  %v61 = vld [vmem:[%s0 + $0x94] sm:$0xf]
  %v62 = vld [vmem:[%s0 + $0x98] sm:$0xf]
  %v63 = vld [vmem:[%s0 + $0x9c] sm:$0xf]
  %v64 = vld [vmem:[%s0 + $0xa0] sm:$0xf]
  %v65 = vld [vmem:[%s0 + $0xa4] sm:$0xf]
  %v66 = vld [vmem:[%s0 + $0xa8] sm:$0xf]
  %v67 = vld [vmem:[%s0 + $0xac] sm:$0xf]
  %v68 = vld [vmem:[%s0 + $0xb0] sm:$0xf]
  %v69 = vld [vmem:[%s0 + $0xb4] sm:$0xf]
  %v70 = vld [vmem:[%s0 + $0xb8] sm:$0xf]
  %v71 = vld [vmem:[%s0 + $0xbc] sm:$0xf]
  %v72 = vld [vmem:[%s0 + $0xc0] sm:$0xf]
  %v73 = vld [vmem:[%s0 + $0xc4] sm:$0xf]
  %v74 = vld [vmem:[%s0 + $0xc8] sm:$0xf]
  %v75 = vld [vmem:[%s0 + $0xcc] sm:$0xf]
  %v76 = vld [vmem:[%s0 + $0xd0] sm:$0xf]
  %v77 = vld [vmem:[%s0 + $0xd4] sm:$0xf]
  %v78 = vld [vmem:[%s0 + $0xd8] sm:$0xf]
  %v79 = vld [vmem:[%s0 + $0xdc] sm:$0xf]
  %v80 = vld [vmem:[%s0 + $0xe0] sm:$0xf]
  %v81 = vld [vmem:[%s0 + $0xe4] sm:$0xf]
  %v82 = vld [vmem:[%s0 + $0xe8] sm:$0xf]
  %v83 = vld [vmem:[%s0 + $0xec] sm:$0xf]
  %v84 = vld [vmem:[%s0 + $0xf0] sm:$0xf]
  %v85 = vld [vmem:[%s0 + $0xf4] sm:$0xf]
  %v86 = vld [vmem:[%s0 + $0xf8] sm:$0xf]
  %v87 = vld [vmem:[%s0 + $0xfc] sm:$0xf]
  %v88 = vunpack.c.l.bf16 %v24
  %v89 = vunpack.c.l.bf16 %v25
  %v90 = vunpack.c.l.bf16 %v26
  %v91 = vunpack.c.l.bf16 %v27
  %v92 = vunpack.c.l.bf16 %v28
  %v93 = vunpack.c.l.bf16 %v29
  %v94 = vunpack.c.l.bf16 %v30
  %v95 = vunpack.c.l.bf16 %v31
  %v96 = vunpack.c.l.bf16 %v32
  %v97 = vunpack.c.l.bf16 %v33
  %v98 = vunpack.c.l.bf16 %v34
  %v99 = vunpack.c.l.bf16 %v35
  %v100 = vunpack.c.l.bf16 %v36
  %v101 = vunpack.c.l.bf16 %v37
  %v102 = vunpack.c.l.bf16 %v38
  %v103 = vunpack.c.l.bf16 %v39
  %v104 = vunpack.c.l.bf16 %v40
  %v105 = vunpack.c.l.bf16 %v41
  %v106 = vunpack.c.l.bf16 %v42
  %v107 = vunpack.c.l.bf16 %v43
  %v108 = vunpack.c.l.bf16 %v44
  %v109 = vunpack.c.l.bf16 %v45
  %v110 = vunpack.c.l.bf16 %v46
  %v111 = vunpack.c.l.bf16 %v47
  %v112 = vunpack.c.l.bf16 %v48
  %v113 = vunpack.c.l.bf16 %v49
  %v114 = vunpack.c.l.bf16 %v50
  %v115 = vunpack.c.l.bf16 %v51
  %v116 = vunpack.c.l.bf16 %v52
  %v117 = vunpack.c.l.bf16 %v53
  %v118 = vunpack.c.l.bf16 %v54
  %v119 = vunpack.c.l.bf16 %v55
  %v120 = vunpack.c.l.bf16 %v56
  %v121 = vunpack.c.l.bf16 %v57
  %v122 = vunpack.c.l.bf16 %v58
  %v123 = vunpack.c.l.bf16 %v59
  %v124 = vunpack.c.l.bf16 %v60
  %v125 = vunpack.c.l.bf16 %v61
  %v126 = vunpack.c.l.bf16 %v62
  %v127 = vunpack.c.l.bf16 %v63
  %v128 = vunpack.c.l.bf16 %v64
  %v129 = vunpack.c.l.bf16 %v65
  %v130 = vunpack.c.l.bf16 %v66
  %v131 = vunpack.c.l.bf16 %v67
  %v132 = vunpack.c.l.bf16 %v68
  %v133 = vunpack.c.l.bf16 %v69
  %v134 = vunpack.c.l.bf16 %v70
  %v135 = vunpack.c.l.bf16 %v71
  %v136 = vunpack.c.l.bf16 %v72
  %v137 = vunpack.c.l.bf16 %v73
  %v138 = vunpack.c.l.bf16 %v74
  %v139 = vunpack.c.l.bf16 %v75
  %v140 = vunpack.c.l.bf16 %v76
  %v141 = vunpack.c.l.bf16 %v77
  %v142 = vunpack.c.l.bf16 %v78
  %v143 = vunpack.c.l.bf16 %v79
  %v144 = vunpack.c.l.bf16 %v80
  %v145 = vunpack.c.l.bf16 %v81
  %v146 = vunpack.c.l.bf16 %v82
  %v147 = vunpack.c.l.bf16 %v83
  %v148 = vunpack.c.l.bf16 %v84
  %v149 = vunpack.c.l.bf16 %v85
  %v150 = vunpack.c.l.bf16 %v86
  %v151 = vunpack.c.l.bf16 %v87
  %v152 = vld [vmem:[%s2] sm:$0xff]
  %v153 = vld [vmem:[%s2 + $0x8] sm:$0xff]
  %v154 = vld [vmem:[%s2 + $0x10] sm:$0xff]
  %v155 = vld [vmem:[%s2 + $0x18] sm:$0xff]
  %v156 = vld [vmem:[%s2 + $0x20] sm:$0xff]
  %v157 = vld [vmem:[%s2 + $0x28] sm:$0xff]
  %v158 = vld [vmem:[%s2 + $0x30] sm:$0xff]
  %v159 = vld [vmem:[%s2 + $0x38] sm:$0xff]
  %v160 = vld [vmem:[%s2 + $0x40] sm:$0xff]
  %v161 = vld [vmem:[%s2 + $0x48] sm:$0xff]
  %v162 = vld [vmem:[%s2 + $0x50] sm:$0xff]
  %v163 = vld [vmem:[%s2 + $0x58] sm:$0xff]
  %v164 = vld [vmem:[%s2 + $0x60] sm:$0xff]
  %v165 = vld [vmem:[%s2 + $0x68] sm:$0xff]
  %v166 = vld [vmem:[%s2 + $0x70] sm:$0xff]
  %v167 = vld [vmem:[%s2 + $0x78] sm:$0xff]
  %v168 = vld [vmem:[%s2 + $0x80] sm:$0xff]
  %v169 = vld [vmem:[%s2 + $0x88] sm:$0xff]
  %v170 = vld [vmem:[%s2 + $0x90] sm:$0xff]
  %v171 = vld [vmem:[%s2 + $0x98] sm:$0xff]
  %v172 = vld [vmem:[%s2 + $0xa0] sm:$0xff]
  %v173 = vld [vmem:[%s2 + $0xa8] sm:$0xff]
  %v174 = vld [vmem:[%s2 + $0xb0] sm:$0xff]
  %v175 = vld [vmem:[%s2 + $0xb8] sm:$0xff]
  %v176 = vld [vmem:[%s2 + $0xc0] sm:$0xff]
  %v177 = vld [vmem:[%s2 + $0xc8] sm:$0xff]
  %v178 = vld [vmem:[%s2 + $0xd0] sm:$0xff]
  %v179 = vld [vmem:[%s2 + $0xd8] sm:$0xff]
  %v180 = vld [vmem:[%s2 + $0xe0] sm:$0xff]
  %v181 = vld [vmem:[%s2 + $0xe8] sm:$0xff]
  %v182 = vld [vmem:[%s2 + $0xf0] sm:$0xff]
  %v183 = vld [vmem:[%s2 + $0xf8] sm:$0xff]
  %v184 = vld [vmem:[%s2 + $0x100] sm:$0xff]
  %v185 = vld [vmem:[%s2 + $0x108] sm:$0xff]
  %v186 = vld [vmem:[%s2 + $0x110] sm:$0xff]
  %v187 = vld [vmem:[%s2 + $0x118] sm:$0xff]
  %v188 = vld [vmem:[%s2 + $0x120] sm:$0xff]
  %v189 = vld [vmem:[%s2 + $0x128] sm:$0xff]
  %v190 = vld [vmem:[%s2 + $0x130] sm:$0xff]
  %v191 = vld [vmem:[%s2 + $0x138] sm:$0xff]
  %v192 = vld [vmem:[%s2 + $0x140] sm:$0xff]
  %v193 = vld [vmem:[%s2 + $0x148] sm:$0xff]
  %v194 = vld [vmem:[%s2 + $0x150] sm:$0xff]
  %v195 = vld [vmem:[%s2 + $0x158] sm:$0xff]
  %v196 = vld [vmem:[%s2 + $0x160] sm:$0xff]
  %v197 = vld [vmem:[%s2 + $0x168] sm:$0xff]
  %v198 = vld [vmem:[%s2 + $0x170] sm:$0xff]
  %v199 = vld [vmem:[%s2 + $0x178] sm:$0xff]
  %v200 = vld [vmem:[%s2 + $0x180] sm:$0xff]
  %v201 = vld [vmem:[%s2 + $0x188] sm:$0xff]
  %v202 = vld [vmem:[%s2 + $0x190] sm:$0xff]
  %v203 = vld [vmem:[%s2 + $0x198] sm:$0xff]
  %v204 = vld [vmem:[%s2 + $0x1a0] sm:$0xff]
  %v205 = vld [vmem:[%s2 + $0x1a8] sm:$0xff]
  %v206 = vld [vmem:[%s2 + $0x1b0] sm:$0xff]
  %v207 = vld [vmem:[%s2 + $0x1b8] sm:$0xff]
  %v208 = vld [vmem:[%s2 + $0x1c0] sm:$0xff]
  %v209 = vld [vmem:[%s2 + $0x1c8] sm:$0xff]
  %v210 = vld [vmem:[%s2 + $0x1d0] sm:$0xff]
  %v211 = vld [vmem:[%s2 + $0x1d8] sm:$0xff]
  %v212 = vld [vmem:[%s2 + $0x1e0] sm:$0xff]
  %v213 = vld [vmem:[%s2 + $0x1e8] sm:$0xff]
  %v214 = vld [vmem:[%s2 + $0x1f0] sm:$0xff]
  %v215 = vld [vmem:[%s2 + $0x1f8] sm:$0xff]
  %217 = vset.pattern.permute.xlu0 0
  %218 = vperm.xlu0 %217, %v152
  %v219 = vpop.permute.xlu0 %218
  %222 = vset.pattern.permute.xlu0 0
  %223 = vperm.xlu0 %222, %v153
  %v224 = vpop.permute.xlu0 %223
  %227 = vset.pattern.permute.xlu0 0
  %228 = vperm.xlu0 %227, %v154
  %v229 = vpop.permute.xlu0 %228
  %232 = vset.pattern.permute.xlu0 0
  %233 = vperm.xlu0 %232, %v155
  %v234 = vpop.permute.xlu0 %233
  %237 = vset.pattern.permute.xlu0 0
  %238 = vperm.xlu0 %237, %v156
  %v239 = vpop.permute.xlu0 %238
  %242 = vset.pattern.permute.xlu0 0
  %243 = vperm.xlu0 %242, %v157
  %v244 = vpop.permute.xlu0 %243
  %247 = vset.pattern.permute.xlu0 0
  %248 = vperm.xlu0 %247, %v158
  %v249 = vpop.permute.xlu0 %248
  %252 = vset.pattern.permute.xlu0 0
  %253 = vperm.xlu0 %252, %v159
  %v254 = vpop.permute.xlu0 %253
  %257 = vset.pattern.permute.xlu0 0
  %258 = vperm.xlu0 %257, %v160
  %v259 = vpop.permute.xlu0 %258
  %262 = vset.pattern.permute.xlu0 0
  %263 = vperm.xlu0 %262, %v161
  %v264 = vpop.permute.xlu0 %263
  %267 = vset.pattern.permute.xlu0 0
  %268 = vperm.xlu0 %267, %v162
  %v269 = vpop.permute.xlu0 %268
  %272 = vset.pattern.permute.xlu0 0
  %273 = vperm.xlu0 %272, %v163
  %v274 = vpop.permute.xlu0 %273
  %277 = vset.pattern.permute.xlu0 0
  %278 = vperm.xlu0 %277, %v164
  %v279 = vpop.permute.xlu0 %278
  %282 = vset.pattern.permute.xlu0 0
  %283 = vperm.xlu0 %282, %v165
  %v284 = vpop.permute.xlu0 %283
  %287 = vset.pattern.permute.xlu0 0
  %288 = vperm.xlu0 %287, %v166
  %v289 = vpop.permute.xlu0 %288
  %292 = vset.pattern.permute.xlu0 0
  %293 = vperm.xlu0 %292, %v167
  %v294 = vpop.permute.xlu0 %293
  %297 = vset.pattern.permute.xlu0 0
  %298 = vperm.xlu0 %297, %v168
  %v299 = vpop.permute.xlu0 %298
  %302 = vset.pattern.permute.xlu0 0
  %303 = vperm.xlu0 %302, %v169
  %v304 = vpop.permute.xlu0 %303
  %307 = vset.pattern.permute.xlu0 0
  %308 = vperm.xlu0 %307, %v170
  %v309 = vpop.permute.xlu0 %308
  %312 = vset.pattern.permute.xlu0 0
  %313 = vperm.xlu0 %312, %v171
  %v314 = vpop.permute.xlu0 %313
  %317 = vset.pattern.permute.xlu0 0
  %318 = vperm.xlu0 %317, %v172
  %v319 = vpop.permute.xlu0 %318
  %322 = vset.pattern.permute.xlu0 0
  %323 = vperm.xlu0 %322, %v173
  %v324 = vpop.permute.xlu0 %323
  %327 = vset.pattern.permute.xlu0 0
  %328 = vperm.xlu0 %327, %v174
  %v329 = vpop.permute.xlu0 %328
  %332 = vset.pattern.permute.xlu0 0
  %333 = vperm.xlu0 %332, %v175
  %v334 = vpop.permute.xlu0 %333
  %337 = vset.pattern.permute.xlu0 0
  %338 = vperm.xlu0 %337, %v176
  %v339 = vpop.permute.xlu0 %338
  %342 = vset.pattern.permute.xlu0 0
  %343 = vperm.xlu0 %342, %v177
  %v344 = vpop.permute.xlu0 %343
  %347 = vset.pattern.permute.xlu0 0
  %348 = vperm.xlu0 %347, %v178
  %v349 = vpop.permute.xlu0 %348
  %352 = vset.pattern.permute.xlu0 0
  %353 = vperm.xlu0 %352, %v179
  %v354 = vpop.permute.xlu0 %353
  %357 = vset.pattern.permute.xlu0 0
  %358 = vperm.xlu0 %357, %v180
  %v359 = vpop.permute.xlu0 %358
  %362 = vset.pattern.permute.xlu0 0
  %363 = vperm.xlu0 %362, %v181
  %v364 = vpop.permute.xlu0 %363
  %367 = vset.pattern.permute.xlu0 0
  %368 = vperm.xlu0 %367, %v182
  %v369 = vpop.permute.xlu0 %368
  %372 = vset.pattern.permute.xlu0 0
  %373 = vperm.xlu0 %372, %v183
  %v374 = vpop.permute.xlu0 %373
  %377 = vset.pattern.permute.xlu0 0
  %378 = vperm.xlu0 %377, %v184
  %v379 = vpop.permute.xlu0 %378
  %382 = vset.pattern.permute.xlu0 0
  %383 = vperm.xlu0 %382, %v185
  %v384 = vpop.permute.xlu0 %383
  %387 = vset.pattern.permute.xlu0 0
  %388 = vperm.xlu0 %387, %v186
  %v389 = vpop.permute.xlu0 %388
  %392 = vset.pattern.permute.xlu0 0
  %393 = vperm.xlu0 %392, %v187
  %v394 = vpop.permute.xlu0 %393
  %397 = vset.pattern.permute.xlu0 0
  %398 = vperm.xlu0 %397, %v188
  %v399 = vpop.permute.xlu0 %398
  %402 = vset.pattern.permute.xlu0 0
  %403 = vperm.xlu0 %402, %v189
  %v404 = vpop.permute.xlu0 %403
  %407 = vset.pattern.permute.xlu0 0
  %408 = vperm.xlu0 %407, %v190
  %v409 = vpop.permute.xlu0 %408
  %412 = vset.pattern.permute.xlu0 0
  %413 = vperm.xlu0 %412, %v191
  %v414 = vpop.permute.xlu0 %413
  %417 = vset.pattern.permute.xlu0 0
  %418 = vperm.xlu0 %417, %v192
  %v419 = vpop.permute.xlu0 %418
  %422 = vset.pattern.permute.xlu0 0
  %423 = vperm.xlu0 %422, %v193
  %v424 = vpop.permute.xlu0 %423
  %427 = vset.pattern.permute.xlu0 0
  %428 = vperm.xlu0 %427, %v194
  %v429 = vpop.permute.xlu0 %428
  %432 = vset.pattern.permute.xlu0 0
  %433 = vperm.xlu0 %432, %v195
  %v434 = vpop.permute.xlu0 %433
  %437 = vset.pattern.permute.xlu0 0
  %438 = vperm.xlu0 %437, %v196
  %v439 = vpop.permute.xlu0 %438
  %442 = vset.pattern.permute.xlu0 0
  %443 = vperm.xlu0 %442, %v197
  %v444 = vpop.permute.xlu0 %443
  %447 = vset.pattern.permute.xlu0 0
  %448 = vperm.xlu0 %447, %v198
  %v449 = vpop.permute.xlu0 %448
  %452 = vset.pattern.permute.xlu0 0
  %453 = vperm.xlu0 %452, %v199
  %v454 = vpop.permute.xlu0 %453
  %457 = vset.pattern.permute.xlu0 0
  %458 = vperm.xlu0 %457, %v200
  %v459 = vpop.permute.xlu0 %458
  %462 = vset.pattern.permute.xlu0 0
  %463 = vperm.xlu0 %462, %v201
  %v464 = vpop.permute.xlu0 %463
  %467 = vset.pattern.permute.xlu0 0
  %468 = vperm.xlu0 %467, %v202
  %v469 = vpop.permute.xlu0 %468
  %472 = vset.pattern.permute.xlu0 0
  %473 = vperm.xlu0 %472, %v203
  %v474 = vpop.permute.xlu0 %473
  %477 = vset.pattern.permute.xlu0 0
  %478 = vperm.xlu0 %477, %v204
  %v479 = vpop.permute.xlu0 %478
  %482 = vset.pattern.permute.xlu0 0
  %483 = vperm.xlu0 %482, %v205
  %v484 = vpop.permute.xlu0 %483
  %487 = vset.pattern.permute.xlu0 0
  %488 = vperm.xlu0 %487, %v206
  %v489 = vpop.permute.xlu0 %488
  %492 = vset.pattern.permute.xlu0 0
  %493 = vperm.xlu0 %492, %v207
  %v494 = vpop.permute.xlu0 %493
  %497 = vset.pattern.permute.xlu0 0
  %498 = vperm.xlu0 %497, %v208
  %v499 = vpop.permute.xlu0 %498
  %502 = vset.pattern.permute.xlu0 0
  %503 = vperm.xlu0 %502, %v209
  %v504 = vpop.permute.xlu0 %503
  %507 = vset.pattern.permute.xlu0 0
  %508 = vperm.xlu0 %507, %v210
  %v509 = vpop.permute.xlu0 %508
  %512 = vset.pattern.permute.xlu0 0
  %513 = vperm.xlu0 %512, %v211
  %v514 = vpop.permute.xlu0 %513
  %517 = vset.pattern.permute.xlu0 0
  %518 = vperm.xlu0 %517, %v212
  %v519 = vpop.permute.xlu0 %518
  %522 = vset.pattern.permute.xlu0 0
  %523 = vperm.xlu0 %522, %v213
  %v524 = vpop.permute.xlu0 %523
  %527 = vset.pattern.permute.xlu0 0
  %528 = vperm.xlu0 %527, %v214
  %v529 = vpop.permute.xlu0 %528
  %532 = vset.pattern.permute.xlu0 0
  %533 = vperm.xlu0 %532, %v215
  %v534 = vpop.permute.xlu0 %533
  %v536 = vmul.f32 %v88, %v219
  %v537 = vmul.f32 %v89, %v224
  %v538 = vmul.f32 %v90, %v229
  %v539 = vmul.f32 %v91, %v234
  %v540 = vmul.f32 %v92, %v239
  %v541 = vmul.f32 %v93, %v244
  %v542 = vmul.f32 %v94, %v249
  %v543 = vmul.f32 %v95, %v254
  %v544 = vmul.f32 %v96, %v259
  %v545 = vmul.f32 %v97, %v264
  %v546 = vmul.f32 %v98, %v269
  %v547 = vmul.f32 %v99, %v274
  %v548 = vmul.f32 %v100, %v279
  %v549 = vmul.f32 %v101, %v284
  %v550 = vmul.f32 %v102, %v289
  %v551 = vmul.f32 %v103, %v294
  %v552 = vmul.f32 %v104, %v299
  %v553 = vmul.f32 %v105, %v304
  %v554 = vmul.f32 %v106, %v309
  %v555 = vmul.f32 %v107, %v314
  %v556 = vmul.f32 %v108, %v319
  %v557 = vmul.f32 %v109, %v324
  %v558 = vmul.f32 %v110, %v329
  %v559 = vmul.f32 %v111, %v334
  %v560 = vmul.f32 %v112, %v339
  %v561 = vmul.f32 %v113, %v344
  %v562 = vmul.f32 %v114, %v349
  %v563 = vmul.f32 %v115, %v354
  %v564 = vmul.f32 %v116, %v359
  %v565 = vmul.f32 %v117, %v364
  %v566 = vmul.f32 %v118, %v369
  %v567 = vmul.f32 %v119, %v374
  %v568 = vmul.f32 %v120, %v379
  %v569 = vmul.f32 %v121, %v384
  %v570 = vmul.f32 %v122, %v389
  %v571 = vmul.f32 %v123, %v394
  %v572 = vmul.f32 %v124, %v399
  %v573 = vmul.f32 %v125, %v404
  %v574 = vmul.f32 %v126, %v409
  %v575 = vmul.f32 %v127, %v414
  %v576 = vmul.f32 %v128, %v419
  %v577 = vmul.f32 %v129, %v424
  %v578 = vmul.f32 %v130, %v429
  %v579 = vmul.f32 %v131, %v434
  %v580 = vmul.f32 %v132, %v439
  %v581 = vmul.f32 %v133, %v444
  %v582 = vmul.f32 %v134, %v449
  %v583 = vmul.f32 %v135, %v454
  %v584 = vmul.f32 %v136, %v459
  %v585 = vmul.f32 %v137, %v464
  %v586 = vmul.f32 %v138, %v469
  %v587 = vmul.f32 %v139, %v474
  %v588 = vmul.f32 %v140, %v479
  %v589 = vmul.f32 %v141, %v484
  %v590 = vmul.f32 %v142, %v489
  %v591 = vmul.f32 %v143, %v494
  %v592 = vmul.f32 %v144, %v499
  %v593 = vmul.f32 %v145, %v504
  %v594 = vmul.f32 %v146, %v509
  %v595 = vmul.f32 %v147, %v514
  %v596 = vmul.f32 %v148, %v519
  %v597 = vmul.f32 %v149, %v524
  %v598 = vmul.f32 %v150, %v529
  %v599 = vmul.f32 %v151, %v534
  %v600 = vld [vmem:[%s3] sm:$0xff]
  %v601 = vld [vmem:[%s3 + $0x8] sm:$0xff]
  %v602 = vld [vmem:[%s3 + $0x10] sm:$0xff]
  %v603 = vld [vmem:[%s3 + $0x18] sm:$0xff]
  %v604 = vld [vmem:[%s3 + $0x20] sm:$0xff]
  %v605 = vld [vmem:[%s3 + $0x28] sm:$0xff]
  %v606 = vld [vmem:[%s3 + $0x30] sm:$0xff]
  %v607 = vld [vmem:[%s3 + $0x38] sm:$0xff]
  %v608 = vld [vmem:[%s3 + $0x40] sm:$0xff]
  %v609 = vld [vmem:[%s3 + $0x48] sm:$0xff]
  %v610 = vld [vmem:[%s3 + $0x50] sm:$0xff]
  %v611 = vld [vmem:[%s3 + $0x58] sm:$0xff]
  %v612 = vld [vmem:[%s3 + $0x60] sm:$0xff]
  %v613 = vld [vmem:[%s3 + $0x68] sm:$0xff]
  %v614 = vld [vmem:[%s3 + $0x70] sm:$0xff]
  %v615 = vld [vmem:[%s3 + $0x78] sm:$0xff]
  %v616 = vld [vmem:[%s3 + $0x80] sm:$0xff]
  %v617 = vld [vmem:[%s3 + $0x88] sm:$0xff]
  %v618 = vld [vmem:[%s3 + $0x90] sm:$0xff]
  %v619 = vld [vmem:[%s3 + $0x98] sm:$0xff]
  %v620 = vld [vmem:[%s3 + $0xa0] sm:$0xff]
  %v621 = vld [vmem:[%s3 + $0xa8] sm:$0xff]
  %v622 = vld [vmem:[%s3 + $0xb0] sm:$0xff]
  %v623 = vld [vmem:[%s3 + $0xb8] sm:$0xff]
  %v624 = vld [vmem:[%s3 + $0xc0] sm:$0xff]
  %v625 = vld [vmem:[%s3 + $0xc8] sm:$0xff]
  %v626 = vld [vmem:[%s3 + $0xd0] sm:$0xff]
  %v627 = vld [vmem:[%s3 + $0xd8] sm:$0xff]
  %v628 = vld [vmem:[%s3 + $0xe0] sm:$0xff]
  %v629 = vld [vmem:[%s3 + $0xe8] sm:$0xff]
  %v630 = vld [vmem:[%s3 + $0xf0] sm:$0xff]
  %v631 = vld [vmem:[%s3 + $0xf8] sm:$0xff]
  %v632 = vld [vmem:[%s3 + $0x100] sm:$0xff]
  %v633 = vld [vmem:[%s3 + $0x108] sm:$0xff]
  %v634 = vld [vmem:[%s3 + $0x110] sm:$0xff]
  %v635 = vld [vmem:[%s3 + $0x118] sm:$0xff]
  %v636 = vld [vmem:[%s3 + $0x120] sm:$0xff]
  %v637 = vld [vmem:[%s3 + $0x128] sm:$0xff]
  %v638 = vld [vmem:[%s3 + $0x130] sm:$0xff]
  %v639 = vld [vmem:[%s3 + $0x138] sm:$0xff]
  %v640 = vld [vmem:[%s3 + $0x140] sm:$0xff]
  %v641 = vld [vmem:[%s3 + $0x148] sm:$0xff]
  %v642 = vld [vmem:[%s3 + $0x150] sm:$0xff]
  %v643 = vld [vmem:[%s3 + $0x158] sm:$0xff]
  %v644 = vld [vmem:[%s3 + $0x160] sm:$0xff]
  %v645 = vld [vmem:[%s3 + $0x168] sm:$0xff]
  %v646 = vld [vmem:[%s3 + $0x170] sm:$0xff]
  %v647 = vld [vmem:[%s3 + $0x178] sm:$0xff]
  %v648 = vld [vmem:[%s3 + $0x180] sm:$0xff]
  %v649 = vld [vmem:[%s3 + $0x188] sm:$0xff]
  %v650 = vld [vmem:[%s3 + $0x190] sm:$0xff]
  %v651 = vld [vmem:[%s3 + $0x198] sm:$0xff]
  %v652 = vld [vmem:[%s3 + $0x1a0] sm:$0xff]
  %v653 = vld [vmem:[%s3 + $0x1a8] sm:$0xff]
  %v654 = vld [vmem:[%s3 + $0x1b0] sm:$0xff]
  %v655 = vld [vmem:[%s3 + $0x1b8] sm:$0xff]
  %v656 = vld [vmem:[%s3 + $0x1c0] sm:$0xff]
  %v657 = vld [vmem:[%s3 + $0x1c8] sm:$0xff]
  %v658 = vld [vmem:[%s3 + $0x1d0] sm:$0xff]
  %v659 = vld [vmem:[%s3 + $0x1d8] sm:$0xff]
  %v660 = vld [vmem:[%s3 + $0x1e0] sm:$0xff]
  %v661 = vld [vmem:[%s3 + $0x1e8] sm:$0xff]
  %v662 = vld [vmem:[%s3 + $0x1f0] sm:$0xff]
  %v663 = vld [vmem:[%s3 + $0x1f8] sm:$0xff]
  %665 = vset.pattern.permute.xlu0 0
  %666 = vperm.xlu0 %665, %v600
  %v667 = vpop.permute.xlu0 %666
  %670 = vset.pattern.permute.xlu0 0
  %671 = vperm.xlu0 %670, %v601
  %v672 = vpop.permute.xlu0 %671
  %675 = vset.pattern.permute.xlu0 0
  %676 = vperm.xlu0 %675, %v602
  %v677 = vpop.permute.xlu0 %676
  %680 = vset.pattern.permute.xlu0 0
  %681 = vperm.xlu0 %680, %v603
  %v682 = vpop.permute.xlu0 %681
  %685 = vset.pattern.permute.xlu0 0
  %686 = vperm.xlu0 %685, %v604
  %v687 = vpop.permute.xlu0 %686
  %690 = vset.pattern.permute.xlu0 0
  %691 = vperm.xlu0 %690, %v605
  %v692 = vpop.permute.xlu0 %691
  %695 = vset.pattern.permute.xlu0 0
  %696 = vperm.xlu0 %695, %v606
  %v697 = vpop.permute.xlu0 %696
  %700 = vset.pattern.permute.xlu0 0
  %701 = vperm.xlu0 %700, %v607
  %v702 = vpop.permute.xlu0 %701
  %705 = vset.pattern.permute.xlu0 0
  %706 = vperm.xlu0 %705, %v608
  %v707 = vpop.permute.xlu0 %706
  %710 = vset.pattern.permute.xlu0 0
  %711 = vperm.xlu0 %710, %v609
  %v712 = vpop.permute.xlu0 %711
  %715 = vset.pattern.permute.xlu0 0
  %716 = vperm.xlu0 %715, %v610
  %v717 = vpop.permute.xlu0 %716
  %720 = vset.pattern.permute.xlu0 0
  %721 = vperm.xlu0 %720, %v611
  %v722 = vpop.permute.xlu0 %721
  %725 = vset.pattern.permute.xlu0 0
  %726 = vperm.xlu0 %725, %v612
  %v727 = vpop.permute.xlu0 %726
  %730 = vset.pattern.permute.xlu0 0
  %731 = vperm.xlu0 %730, %v613
  %v732 = vpop.permute.xlu0 %731
  %735 = vset.pattern.permute.xlu0 0
  %736 = vperm.xlu0 %735, %v614
  %v737 = vpop.permute.xlu0 %736
  %740 = vset.pattern.permute.xlu0 0
  %741 = vperm.xlu0 %740, %v615
  %v742 = vpop.permute.xlu0 %741
  %745 = vset.pattern.permute.xlu0 0
  %746 = vperm.xlu0 %745, %v616
  %v747 = vpop.permute.xlu0 %746
  %750 = vset.pattern.permute.xlu0 0
  %751 = vperm.xlu0 %750, %v617
  %v752 = vpop.permute.xlu0 %751
  %755 = vset.pattern.permute.xlu0 0
  %756 = vperm.xlu0 %755, %v618
  %v757 = vpop.permute.xlu0 %756
  %760 = vset.pattern.permute.xlu0 0
  %761 = vperm.xlu0 %760, %v619
  %v762 = vpop.permute.xlu0 %761
  %765 = vset.pattern.permute.xlu0 0
  %766 = vperm.xlu0 %765, %v620
  %v767 = vpop.permute.xlu0 %766
  %770 = vset.pattern.permute.xlu0 0
  %771 = vperm.xlu0 %770, %v621
  %v772 = vpop.permute.xlu0 %771
  %775 = vset.pattern.permute.xlu0 0
  %776 = vperm.xlu0 %775, %v622
  %v777 = vpop.permute.xlu0 %776
  %780 = vset.pattern.permute.xlu0 0
  %781 = vperm.xlu0 %780, %v623
  %v782 = vpop.permute.xlu0 %781
  %785 = vset.pattern.permute.xlu0 0
  %786 = vperm.xlu0 %785, %v624
  %v787 = vpop.permute.xlu0 %786
  %790 = vset.pattern.permute.xlu0 0
  %791 = vperm.xlu0 %790, %v625
  %v792 = vpop.permute.xlu0 %791
  %795 = vset.pattern.permute.xlu0 0
  %796 = vperm.xlu0 %795, %v626
  %v797 = vpop.permute.xlu0 %796
  %800 = vset.pattern.permute.xlu0 0
  %801 = vperm.xlu0 %800, %v627
  %v802 = vpop.permute.xlu0 %801
  %805 = vset.pattern.permute.xlu0 0
  %806 = vperm.xlu0 %805, %v628
  %v807 = vpop.permute.xlu0 %806
  %810 = vset.pattern.permute.xlu0 0
  %811 = vperm.xlu0 %810, %v629
  %v812 = vpop.permute.xlu0 %811
  %815 = vset.pattern.permute.xlu0 0
  %816 = vperm.xlu0 %815, %v630
  %v817 = vpop.permute.xlu0 %816
  %820 = vset.pattern.permute.xlu0 0
  %821 = vperm.xlu0 %820, %v631
  %v822 = vpop.permute.xlu0 %821
  %825 = vset.pattern.permute.xlu0 0
  %826 = vperm.xlu0 %825, %v632
  %v827 = vpop.permute.xlu0 %826
  %830 = vset.pattern.permute.xlu0 0
  %831 = vperm.xlu0 %830, %v633
  %v832 = vpop.permute.xlu0 %831
  %835 = vset.pattern.permute.xlu0 0
  %836 = vperm.xlu0 %835, %v634
  %v837 = vpop.permute.xlu0 %836
  %840 = vset.pattern.permute.xlu0 0
  %841 = vperm.xlu0 %840, %v635
  %v842 = vpop.permute.xlu0 %841
  %845 = vset.pattern.permute.xlu0 0
  %846 = vperm.xlu0 %845, %v636
  %v847 = vpop.permute.xlu0 %846
  %850 = vset.pattern.permute.xlu0 0
  %851 = vperm.xlu0 %850, %v637
  %v852 = vpop.permute.xlu0 %851
  %855 = vset.pattern.permute.xlu0 0
  %856 = vperm.xlu0 %855, %v638
  %v857 = vpop.permute.xlu0 %856
  %860 = vset.pattern.permute.xlu0 0
  %861 = vperm.xlu0 %860, %v639
  %v862 = vpop.permute.xlu0 %861
  %865 = vset.pattern.permute.xlu0 0
  %866 = vperm.xlu0 %865, %v640
  %v867 = vpop.permute.xlu0 %866
  %870 = vset.pattern.permute.xlu0 0
  %871 = vperm.xlu0 %870, %v641
  %v872 = vpop.permute.xlu0 %871
  %875 = vset.pattern.permute.xlu0 0
  %876 = vperm.xlu0 %875, %v642
  %v877 = vpop.permute.xlu0 %876
  %880 = vset.pattern.permute.xlu0 0
  %881 = vperm.xlu0 %880, %v643
  %v882 = vpop.permute.xlu0 %881
  %885 = vset.pattern.permute.xlu0 0
  %886 = vperm.xlu0 %885, %v644
  %v887 = vpop.permute.xlu0 %886
  %890 = vset.pattern.permute.xlu0 0
  %891 = vperm.xlu0 %890, %v645
  %v892 = vpop.permute.xlu0 %891
  %895 = vset.pattern.permute.xlu0 0
  %896 = vperm.xlu0 %895, %v646
  %v897 = vpop.permute.xlu0 %896
  %900 = vset.pattern.permute.xlu0 0
  %901 = vperm.xlu0 %900, %v647
  %v902 = vpop.permute.xlu0 %901
  %905 = vset.pattern.permute.xlu0 0
  %906 = vperm.xlu0 %905, %v648
  %v907 = vpop.permute.xlu0 %906
  %910 = vset.pattern.permute.xlu0 0
  %911 = vperm.xlu0 %910, %v649
  %v912 = vpop.permute.xlu0 %911
  %915 = vset.pattern.permute.xlu0 0
  %916 = vperm.xlu0 %915, %v650
  %v917 = vpop.permute.xlu0 %916
  %920 = vset.pattern.permute.xlu0 0
  %921 = vperm.xlu0 %920, %v651
  %v922 = vpop.permute.xlu0 %921
  %925 = vset.pattern.permute.xlu0 0
  %926 = vperm.xlu0 %925, %v652
  %v927 = vpop.permute.xlu0 %926
  %930 = vset.pattern.permute.xlu0 0
  %931 = vperm.xlu0 %930, %v653
  %v932 = vpop.permute.xlu0 %931
  %935 = vset.pattern.permute.xlu0 0
  %936 = vperm.xlu0 %935, %v654
  %v937 = vpop.permute.xlu0 %936
  %940 = vset.pattern.permute.xlu0 0
  %941 = vperm.xlu0 %940, %v655
  %v942 = vpop.permute.xlu0 %941
  %945 = vset.pattern.permute.xlu0 0
  %946 = vperm.xlu0 %945, %v656
  %v947 = vpop.permute.xlu0 %946
  %950 = vset.pattern.permute.xlu0 0
  %951 = vperm.xlu0 %950, %v657
  %v952 = vpop.permute.xlu0 %951
  %955 = vset.pattern.permute.xlu0 0
  %956 = vperm.xlu0 %955, %v658
  %v957 = vpop.permute.xlu0 %956
  %960 = vset.pattern.permute.xlu0 0
  %961 = vperm.xlu0 %960, %v659
  %v962 = vpop.permute.xlu0 %961
  %965 = vset.pattern.permute.xlu0 0
  %966 = vperm.xlu0 %965, %v660
  %v967 = vpop.permute.xlu0 %966
  %970 = vset.pattern.permute.xlu0 0
  %971 = vperm.xlu0 %970, %v661
  %v972 = vpop.permute.xlu0 %971
  %975 = vset.pattern.permute.xlu0 0
  %976 = vperm.xlu0 %975, %v662
  %v977 = vpop.permute.xlu0 %976
  %980 = vset.pattern.permute.xlu0 0
  %981 = vperm.xlu0 %980, %v663
  %v982 = vpop.permute.xlu0 %981
  %v984 = vadd.f32 %v536, %v667
  %v985 = vadd.f32 %v537, %v672
  %v986 = vadd.f32 %v538, %v677
  %v987 = vadd.f32 %v539, %v682
  %v988 = vadd.f32 %v540, %v687
  %v989 = vadd.f32 %v541, %v692
  %v990 = vadd.f32 %v542, %v697
  %v991 = vadd.f32 %v543, %v702
  %v992 = vadd.f32 %v544, %v707
  %v993 = vadd.f32 %v545, %v712
  %v994 = vadd.f32 %v546, %v717
  %v995 = vadd.f32 %v547, %v722
  %v996 = vadd.f32 %v548, %v727
  %v997 = vadd.f32 %v549, %v732
  %v998 = vadd.f32 %v550, %v737
  %v999 = vadd.f32 %v551, %v742
  %v1000 = vadd.f32 %v552, %v747
  %v1001 = vadd.f32 %v553, %v752
  %v1002 = vadd.f32 %v554, %v757
  %v1003 = vadd.f32 %v555, %v762
  %v1004 = vadd.f32 %v556, %v767
  %v1005 = vadd.f32 %v557, %v772
  %v1006 = vadd.f32 %v558, %v777
  %v1007 = vadd.f32 %v559, %v782
  %v1008 = vadd.f32 %v560, %v787
  %v1009 = vadd.f32 %v561, %v792
  %v1010 = vadd.f32 %v562, %v797
  %v1011 = vadd.f32 %v563, %v802
  %v1012 = vadd.f32 %v564, %v807
  %v1013 = vadd.f32 %v565, %v812
  %v1014 = vadd.f32 %v566, %v817
  %v1015 = vadd.f32 %v567, %v822
  %v1016 = vadd.f32 %v568, %v827
  %v1017 = vadd.f32 %v569, %v832
  %v1018 = vadd.f32 %v570, %v837
  %v1019 = vadd.f32 %v571, %v842
  %v1020 = vadd.f32 %v572, %v847
  %v1021 = vadd.f32 %v573, %v852
  %v1022 = vadd.f32 %v574, %v857
  %v1023 = vadd.f32 %v575, %v862
  %v1024 = vadd.f32 %v576, %v867
  %v1025 = vadd.f32 %v577, %v872
  %v1026 = vadd.f32 %v578, %v877
  %v1027 = vadd.f32 %v579, %v882
  %v1028 = vadd.f32 %v580, %v887
  %v1029 = vadd.f32 %v581, %v892
  %v1030 = vadd.f32 %v582, %v897
  %v1031 = vadd.f32 %v583, %v902
  %v1032 = vadd.f32 %v584, %v907
  %v1033 = vadd.f32 %v585, %v912
  %v1034 = vadd.f32 %v586, %v917
  %v1035 = vadd.f32 %v587, %v922
  %v1036 = vadd.f32 %v588, %v927
  %v1037 = vadd.f32 %v589, %v932
  %v1038 = vadd.f32 %v590, %v937
  %v1039 = vadd.f32 %v591, %v942
  %v1040 = vadd.f32 %v592, %v947
  %v1041 = vadd.f32 %v593, %v952
  %v1042 = vadd.f32 %v594, %v957
  %v1043 = vadd.f32 %v595, %v962
  %v1044 = vadd.f32 %v596, %v967
  %v1045 = vadd.f32 %v597, %v972
  %v1046 = vadd.f32 %v598, %v977
  %v1047 = vadd.f32 %v599, %v982
  %vm1048 = vcmp.ge.f32.partialorder %v984, 0.0
  %vm1049 = vcmp.ge.f32.partialorder %v985, 0.0
  %vm1050 = vcmp.ge.f32.partialorder %v986, 0.0
  %vm1051 = vcmp.ge.f32.partialorder %v987, 0.0
  %vm1052 = vcmp.ge.f32.partialorder %v988, 0.0
  %vm1053 = vcmp.ge.f32.partialorder %v989, 0.0
  %vm1054 = vcmp.ge.f32.partialorder %v990, 0.0
  %vm1055 = vcmp.ge.f32.partialorder %v991, 0.0
  %vm1056 = vcmp.ge.f32.partialorder %v992, 0.0
  %vm1057 = vcmp.ge.f32.partialorder %v993, 0.0
  %vm1058 = vcmp.ge.f32.partialorder %v994, 0.0
  %vm1059 = vcmp.ge.f32.partialorder %v995, 0.0
  %vm1060 = vcmp.ge.f32.partialorder %v996, 0.0
  %vm1061 = vcmp.ge.f32.partialorder %v997, 0.0
  %vm1062 = vcmp.ge.f32.partialorder %v998, 0.0
  %vm1063 = vcmp.ge.f32.partialorder %v999, 0.0
  %vm1064 = vcmp.ge.f32.partialorder %v1000, 0.0
  %vm1065 = vcmp.ge.f32.partialorder %v1001, 0.0
  %vm1066 = vcmp.ge.f32.partialorder %v1002, 0.0
  %vm1067 = vcmp.ge.f32.partialorder %v1003, 0.0
  %vm1068 = vcmp.ge.f32.partialorder %v1004, 0.0
  %vm1069 = vcmp.ge.f32.partialorder %v1005, 0.0
  %vm1070 = vcmp.ge.f32.partialorder %v1006, 0.0
  %vm1071 = vcmp.ge.f32.partialorder %v1007, 0.0
  %vm1072 = vcmp.ge.f32.partialorder %v1008, 0.0
  %vm1073 = vcmp.ge.f32.partialorder %v1009, 0.0
  %vm1074 = vcmp.ge.f32.partialorder %v1010, 0.0
  %vm1075 = vcmp.ge.f32.partialorder %v1011, 0.0
  %vm1076 = vcmp.ge.f32.partialorder %v1012, 0.0
  %vm1077 = vcmp.ge.f32.partialorder %v1013, 0.0
  %vm1078 = vcmp.ge.f32.partialorder %v1014, 0.0
  %vm1079 = vcmp.ge.f32.partialorder %v1015, 0.0
  %vm1080 = vcmp.ge.f32.partialorder %v1016, 0.0
  %vm1081 = vcmp.ge.f32.partialorder %v1017, 0.0
  %vm1082 = vcmp.ge.f32.partialorder %v1018, 0.0
  %vm1083 = vcmp.ge.f32.partialorder %v1019, 0.0
  %vm1084 = vcmp.ge.f32.partialorder %v1020, 0.0
  %vm1085 = vcmp.ge.f32.partialorder %v1021, 0.0
  %vm1086 = vcmp.ge.f32.partialorder %v1022, 0.0
  %vm1087 = vcmp.ge.f32.partialorder %v1023, 0.0
  %vm1088 = vcmp.ge.f32.partialorder %v1024, 0.0
  %vm1089 = vcmp.ge.f32.partialorder %v1025, 0.0
  %vm1090 = vcmp.ge.f32.partialorder %v1026, 0.0
  %vm1091 = vcmp.ge.f32.partialorder %v1027, 0.0
  %vm1092 = vcmp.ge.f32.partialorder %v1028, 0.0
  %vm1093 = vcmp.ge.f32.partialorder %v1029, 0.0
  %vm1094 = vcmp.ge.f32.partialorder %v1030, 0.0
  %vm1095 = vcmp.ge.f32.partialorder %v1031, 0.0
  %vm1096 = vcmp.ge.f32.partialorder %v1032, 0.0
  %vm1097 = vcmp.ge.f32.partialorder %v1033, 0.0
  %vm1098 = vcmp.ge.f32.partialorder %v1034, 0.0
  %vm1099 = vcmp.ge.f32.partialorder %v1035, 0.0
  %vm1100 = vcmp.ge.f32.partialorder %v1036, 0.0
  %vm1101 = vcmp.ge.f32.partialorder %v1037, 0.0
  %vm1102 = vcmp.ge.f32.partialorder %v1038, 0.0
  %vm1103 = vcmp.ge.f32.partialorder %v1039, 0.0
  %vm1104 = vcmp.ge.f32.partialorder %v1040, 0.0
  %vm1105 = vcmp.ge.f32.partialorder %v1041, 0.0
  %vm1106 = vcmp.ge.f32.partialorder %v1042, 0.0
  %vm1107 = vcmp.ge.f32.partialorder %v1043, 0.0
  %vm1108 = vcmp.ge.f32.partialorder %v1044, 0.0
  %vm1109 = vcmp.ge.f32.partialorder %v1045, 0.0
  %vm1110 = vcmp.ge.f32.partialorder %v1046, 0.0
  %vm1111 = vcmp.ge.f32.partialorder %v1047, 0.0
  %v1112 = vmul.f32 %v984, 0.2
  %v1113 = vmul.f32 %v985, 0.2
  %v1114 = vmul.f32 %v986, 0.2
  %v1115 = vmul.f32 %v987, 0.2
  %v1116 = vmul.f32 %v988, 0.2
  %v1117 = vmul.f32 %v989, 0.2
  %v1118 = vmul.f32 %v990, 0.2
  %v1119 = vmul.f32 %v991, 0.2
  %v1120 = vmul.f32 %v992, 0.2
  %v1121 = vmul.f32 %v993, 0.2
  %v1122 = vmul.f32 %v994, 0.2
  %v1123 = vmul.f32 %v995, 0.2
  %v1124 = vmul.f32 %v996, 0.2
  %v1125 = vmul.f32 %v997, 0.2
  %v1126 = vmul.f32 %v998, 0.2
  %v1127 = vmul.f32 %v999, 0.2
  %v1128 = vmul.f32 %v1000, 0.2
  %v1129 = vmul.f32 %v1001, 0.2
  %v1130 = vmul.f32 %v1002, 0.2
  %v1131 = vmul.f32 %v1003, 0.2
  %v1132 = vmul.f32 %v1004, 0.2
  %v1133 = vmul.f32 %v1005, 0.2
  %v1134 = vmul.f32 %v1006, 0.2
  %v1135 = vmul.f32 %v1007, 0.2
  %v1136 = vmul.f32 %v1008, 0.2
  %v1137 = vmul.f32 %v1009, 0.2
  %v1138 = vmul.f32 %v1010, 0.2
  %v1139 = vmul.f32 %v1011, 0.2
  %v1140 = vmul.f32 %v1012, 0.2
  %v1141 = vmul.f32 %v1013, 0.2
  %v1142 = vmul.f32 %v1014, 0.2
  %v1143 = vmul.f32 %v1015, 0.2
  %v1144 = vmul.f32 %v1016, 0.2
  %v1145 = vmul.f32 %v1017, 0.2
  %v1146 = vmul.f32 %v1018, 0.2
  %v1147 = vmul.f32 %v1019, 0.2
  %v1148 = vmul.f32 %v1020, 0.2
  %v1149 = vmul.f32 %v1021, 0.2
  %v1150 = vmul.f32 %v1022, 0.2
  %v1151 = vmul.f32 %v1023, 0.2
  %v1152 = vmul.f32 %v1024, 0.2
  %v1153 = vmul.f32 %v1025, 0.2
  %v1154 = vmul.f32 %v1026, 0.2
  %v1155 = vmul.f32 %v1027, 0.2
  %v1156 = vmul.f32 %v1028, 0.2
  %v1157 = vmul.f32 %v1029, 0.2
  %v1158 = vmul.f32 %v1030, 0.2
  %v1159 = vmul.f32 %v1031, 0.2
  %v1160 = vmul.f32 %v1032, 0.2
  %v1161 = vmul.f32 %v1033, 0.2
  %v1162 = vmul.f32 %v1034, 0.2
  %v1163 = vmul.f32 %v1035, 0.2
  %v1164 = vmul.f32 %v1036, 0.2
  %v1165 = vmul.f32 %v1037, 0.2
  %v1166 = vmul.f32 %v1038, 0.2
  %v1167 = vmul.f32 %v1039, 0.2
  %v1168 = vmul.f32 %v1040, 0.2
  %v1169 = vmul.f32 %v1041, 0.2
  %v1170 = vmul.f32 %v1042, 0.2
  %v1171 = vmul.f32 %v1043, 0.2
  %v1172 = vmul.f32 %v1044, 0.2
  %v1173 = vmul.f32 %v1045, 0.2
  %v1174 = vmul.f32 %v1046, 0.2
  %v1175 = vmul.f32 %v1047, 0.2
  %v1176 = vsel %vm1048, %v984, %v1112
  %v1177 = vsel %vm1049, %v985, %v1113
  %v1178 = vsel %vm1050, %v986, %v1114
  %v1179 = vsel %vm1051, %v987, %v1115
  %v1180 = vsel %vm1052, %v988, %v1116
  %v1181 = vsel %vm1053, %v989, %v1117
  %v1182 = vsel %vm1054, %v990, %v1118
  %v1183 = vsel %vm1055, %v991, %v1119
  %v1184 = vsel %vm1056, %v992, %v1120
  %v1185 = vsel %vm1057, %v993, %v1121
  %v1186 = vsel %vm1058, %v994, %v1122
  %v1187 = vsel %vm1059, %v995, %v1123
  %v1188 = vsel %vm1060, %v996, %v1124
  %v1189 = vsel %vm1061, %v997, %v1125
  %v1190 = vsel %vm1062, %v998, %v1126
  %v1191 = vsel %vm1063, %v999, %v1127
  %v1192 = vsel %vm1064, %v1000, %v1128
  %v1193 = vsel %vm1065, %v1001, %v1129
  %v1194 = vsel %vm1066, %v1002, %v1130
  %v1195 = vsel %vm1067, %v1003, %v1131
  %v1196 = vsel %vm1068, %v1004, %v1132
  %v1197 = vsel %vm1069, %v1005, %v1133
  %v1198 = vsel %vm1070, %v1006, %v1134
  %v1199 = vsel %vm1071, %v1007, %v1135
  %v1200 = vsel %vm1072, %v1008, %v1136
  %v1201 = vsel %vm1073, %v1009, %v1137
  %v1202 = vsel %vm1074, %v1010, %v1138
  %v1203 = vsel %vm1075, %v1011, %v1139
  %v1204 = vsel %vm1076, %v1012, %v1140
  %v1205 = vsel %vm1077, %v1013, %v1141
  %v1206 = vsel %vm1078, %v1014, %v1142
  %v1207 = vsel %vm1079, %v1015, %v1143
  %v1208 = vsel %vm1080, %v1016, %v1144
  %v1209 = vsel %vm1081, %v1017, %v1145
  %v1210 = vsel %vm1082, %v1018, %v1146
  %v1211 = vsel %vm1083, %v1019, %v1147
  %v1212 = vsel %vm1084, %v1020, %v1148
  %v1213 = vsel %vm1085, %v1021, %v1149
  %v1214 = vsel %vm1086, %v1022, %v1150
  %v1215 = vsel %vm1087, %v1023, %v1151
  %v1216 = vsel %vm1088, %v1024, %v1152
  %v1217 = vsel %vm1089, %v1025, %v1153
  %v1218 = vsel %vm1090, %v1026, %v1154
  %v1219 = vsel %vm1091, %v1027, %v1155
  %v1220 = vsel %vm1092, %v1028, %v1156
  %v1221 = vsel %vm1093, %v1029, %v1157
  %v1222 = vsel %vm1094, %v1030, %v1158
  %v1223 = vsel %vm1095, %v1031, %v1159
  %v1224 = vsel %vm1096, %v1032, %v1160
  %v1225 = vsel %vm1097, %v1033, %v1161
  %v1226 = vsel %vm1098, %v1034, %v1162
  %v1227 = vsel %vm1099, %v1035, %v1163
  %v1228 = vsel %vm1100, %v1036, %v1164
  %v1229 = vsel %vm1101, %v1037, %v1165
  %v1230 = vsel %vm1102, %v1038, %v1166
  %v1231 = vsel %vm1103, %v1039, %v1167
  %v1232 = vsel %vm1104, %v1040, %v1168
  %v1233 = vsel %vm1105, %v1041, %v1169
  %v1234 = vsel %vm1106, %v1042, %v1170
  %v1235 = vsel %vm1107, %v1043, %v1171
  %v1236 = vsel %vm1108, %v1044, %v1172
  %v1237 = vsel %vm1109, %v1045, %v1173
  %v1238 = vsel %vm1110, %v1046, %v1174
  %v1239 = vsel %vm1111, %v1047, %v1175
  %v1240 = vpack.c.bf16 %v1177, %v1176
  %v1241 = vpack.c.bf16 %v1179, %v1178
  %v1242 = vpack.c.bf16 %v1181, %v1180
  %v1243 = vpack.c.bf16 %v1183, %v1182
  %v1244 = vpack.c.bf16 %v1185, %v1184
  %v1245 = vpack.c.bf16 %v1187, %v1186
  %v1246 = vpack.c.bf16 %v1189, %v1188
  %v1247 = vpack.c.bf16 %v1191, %v1190
  %v1248 = vpack.c.bf16 %v1193, %v1192
  %v1249 = vpack.c.bf16 %v1195, %v1194
  %v1250 = vpack.c.bf16 %v1197, %v1196
  %v1251 = vpack.c.bf16 %v1199, %v1198
  %v1252 = vpack.c.bf16 %v1201, %v1200
  %v1253 = vpack.c.bf16 %v1203, %v1202
  %v1254 = vpack.c.bf16 %v1205, %v1204
  %v1255 = vpack.c.bf16 %v1207, %v1206
  %v1256 = vpack.c.bf16 %v1209, %v1208
  %v1257 = vpack.c.bf16 %v1211, %v1210
  %v1258 = vpack.c.bf16 %v1213, %v1212
  %v1259 = vpack.c.bf16 %v1215, %v1214
  %v1260 = vpack.c.bf16 %v1217, %v1216
  %v1261 = vpack.c.bf16 %v1219, %v1218
  %v1262 = vpack.c.bf16 %v1221, %v1220
  %v1263 = vpack.c.bf16 %v1223, %v1222
  %v1264 = vpack.c.bf16 %v1225, %v1224
  %v1265 = vpack.c.bf16 %v1227, %v1226
  %v1266 = vpack.c.bf16 %v1229, %v1228
  %v1267 = vpack.c.bf16 %v1231, %v1230
  %v1268 = vpack.c.bf16 %v1233, %v1232
  %v1269 = vpack.c.bf16 %v1235, %v1234
  %v1270 = vpack.c.bf16 %v1237, %v1236
  %v1271 = vpack.c.bf16 %v1239, %v1238
  %v1272 = vld [vmem:[%s1] sm:$0xff]
  %v1273 = vld [vmem:[%s1 + $0x8] sm:$0xff]
  %v1274 = vld [vmem:[%s1 + $0x10] sm:$0xff]
  %v1275 = vld [vmem:[%s1 + $0x18] sm:$0xff]
  %v1276 = vld [vmem:[%s1 + $0x20] sm:$0xff]
  %v1277 = vld [vmem:[%s1 + $0x28] sm:$0xff]
  %v1278 = vld [vmem:[%s1 + $0x30] sm:$0xff]
  %v1279 = vld [vmem:[%s1 + $0x38] sm:$0xff]
  %v1280 = vld [vmem:[%s1 + $0x40] sm:$0xff]
  %v1281 = vld [vmem:[%s1 + $0x48] sm:$0xff]
  %v1282 = vld [vmem:[%s1 + $0x50] sm:$0xff]
  %v1283 = vld [vmem:[%s1 + $0x58] sm:$0xff]
  %v1284 = vld [vmem:[%s1 + $0x60] sm:$0xff]
  %v1285 = vld [vmem:[%s1 + $0x68] sm:$0xff]
  %v1286 = vld [vmem:[%s1 + $0x70] sm:$0xff]
  %v1287 = vld [vmem:[%s1 + $0x78] sm:$0xff]
  %v1304 = vunpack.c.l.b16 %v1272
  %v1305 = vunpack.c.h.b16 %v1272
  %v1306 = vunpack.c.l.b16 %v1273
  %v1307 = vunpack.c.h.b16 %v1273
  %v1308 = vunpack.c.l.b16 %v1274
  %v1309 = vunpack.c.h.b16 %v1274
  %v1310 = vunpack.c.l.b16 %v1275
  %v1311 = vunpack.c.h.b16 %v1275
  %v1312 = vunpack.c.l.b16 %v1276
  %v1313 = vunpack.c.h.b16 %v1276
  %v1314 = vunpack.c.l.b16 %v1277
  %v1315 = vunpack.c.h.b16 %v1277
  %v1316 = vunpack.c.l.b16 %v1278
  %v1317 = vunpack.c.h.b16 %v1278
  %v1318 = vunpack.c.l.b16 %v1279
  %v1319 = vunpack.c.h.b16 %v1279
  %v1320 = vunpack.c.l.b16 %v1280
  %v1321 = vunpack.c.h.b16 %v1280
  %v1322 = vunpack.c.l.b16 %v1281
  %v1323 = vunpack.c.h.b16 %v1281
  %v1324 = vunpack.c.l.b16 %v1282
  %v1325 = vunpack.c.h.b16 %v1282
  %v1326 = vunpack.c.l.b16 %v1283
  %v1327 = vunpack.c.h.b16 %v1283
  %v1328 = vunpack.c.l.b16 %v1284
  %v1329 = vunpack.c.h.b16 %v1284
  %v1330 = vunpack.c.l.b16 %v1285
  %v1331 = vunpack.c.h.b16 %v1285
  %v1332 = vunpack.c.l.b16 %v1286
  %v1333 = vunpack.c.h.b16 %v1286
  %v1334 = vunpack.c.l.b16 %v1287
  %v1335 = vunpack.c.h.b16 %v1287
  %v1336 = vpack.c.b16 %v1308, %v1304
  %v1337 = vpack.c.b16 %v1309, %v1305
  %v1338 = vpack.c.b16 %v1310, %v1306
  %v1339 = vpack.c.b16 %v1311, %v1307
  %v1340 = vpack.c.b16 %v1316, %v1312
  %v1341 = vpack.c.b16 %v1317, %v1313
  %v1342 = vpack.c.b16 %v1318, %v1314
  %v1343 = vpack.c.b16 %v1319, %v1315
  %v1344 = vpack.c.b16 %v1324, %v1320
  %v1345 = vpack.c.b16 %v1325, %v1321
  %v1346 = vpack.c.b16 %v1326, %v1322
  %v1347 = vpack.c.b16 %v1327, %v1323
  %v1348 = vpack.c.b16 %v1332, %v1328
  %v1349 = vpack.c.b16 %v1333, %v1329
  %v1350 = vpack.c.b16 %v1334, %v1330
  %v1351 = vpack.c.b16 %v1335, %v1331
  %1368 = vmatprep.subr.bf16.mxu0 0
  %1369 = vmatpush1.bf16.msra.mxu0 %v1240
  %1370 = vmatprep.subr.bf16.mxu0 0
  %1371 = vmatpush1.bf16.msra.mxu0 %v1241
  %1372 = vmatprep.subr.bf16.mxu0 0
  %1373 = vmatpush1.bf16.msra.mxu0 %v1242
  %1374 = vmatprep.subr.bf16.mxu0 0
  %1375 = vmatpush1.bf16.msra.mxu0 %v1243
  %1376 = vmatprep.subr.bf16.mxu0 0
  %1377 = vmatpush1.bf16.msra.mxu0 %v1244
  %1378 = vmatprep.subr.bf16.mxu0 0
  %1379 = vmatpush1.bf16.msra.mxu0 %v1245
  %1380 = vmatprep.subr.bf16.mxu0 0
  %1381 = vmatpush1.bf16.msra.mxu0 %v1246
  %1382 = vmatprep.subr.bf16.mxu0 0
  %1383 = vmatpush1.bf16.msra.mxu0 %v1247
  %1384 = vmatprep.subr.bf16.mxu0 0
  %1385 = vmatpush1.bf16.msra.mxu0 %v1248
  %1386 = vmatprep.subr.bf16.mxu0 0
  %1387 = vmatpush1.bf16.msra.mxu0 %v1249
  %1388 = vmatprep.subr.bf16.mxu0 0
  %1389 = vmatpush1.bf16.msra.mxu0 %v1250
  %1390 = vmatprep.subr.bf16.mxu0 0
  %1391 = vmatpush1.bf16.msra.mxu0 %v1251
  %1392 = vmatprep.subr.bf16.mxu0 0
  %1393 = vmatpush1.bf16.msra.mxu0 %v1252
  %1394 = vmatprep.subr.bf16.mxu0 0
  %1395 = vmatpush1.bf16.msra.mxu0 %v1253
  %1396 = vmatprep.subr.bf16.mxu0 0
  %1397 = vmatpush1.bf16.msra.mxu0 %v1254
  %1398 = vmatprep.subr.bf16.mxu0 0
  %1399 = vmatpush1.bf16.msra.mxu0 %v1255
  %1400 = vmatprep.mubr.bf16.mxu0 %v1337
  %1401 = vmatmul.mubr.bf16.gmra.mrb[0].mxu0 %v1336
  %v1402 = vpop.f32.mrb[0].mxu0
  %v1403 = vadd.f32 0.0, %v1402
  %v1404 = vpop.f32.mrb[0].mxu0
  %v1405 = vpop.f32.mrb[0].mxu0
  %v1406 = vadd.f32 0.0, %v1405
  %v1407 = vpop.f32.mrb[0].mxu0
  %1408 = vmatprep.mubr.bf16.mxu0 %v1341
  %1409 = vmatmul.mubr.bf16.gmra.mrb[0].mxu0 %v1340
  %v1410 = vpop.f32.mrb[0].mxu0
  %v1411 = vadd.f32 0.0, %v1410
  %v1412 = vpop.f32.mrb[0].mxu0
  %v1413 = vpop.f32.mrb[0].mxu0
  %v1414 = vadd.f32 0.0, %v1413
  %v1415 = vpop.f32.mrb[0].mxu0
  %1416 = vmatprep.mubr.bf16.mxu0 %v1345
  %1417 = vmatmul.mubr.bf16.gmra.mrb[0].mxu0 %v1344
  %v1418 = vpop.f32.mrb[0].mxu0
  %v1419 = vadd.f32 0.0, %v1418
  %v1420 = vpop.f32.mrb[0].mxu0
  %v1421 = vpop.f32.mrb[0].mxu0
  %v1422 = vadd.f32 0.0, %v1421
  %v1423 = vpop.f32.mrb[0].mxu0
  %1424 = vmatprep.mubr.bf16.mxu0 %v1349
  %1425 = vmatmul.mubr.bf16.gmra.mrb[0].mxu0 %v1348
  %v1426 = vpop.f32.mrb[0].mxu0
  %v1427 = vadd.f32 0.0, %v1426
  %v1428 = vpop.f32.mrb[0].mxu0
  %v1429 = vpop.f32.mrb[0].mxu0
  %v1430 = vadd.f32 0.0, %v1429
  %v1431 = vpop.f32.mrb[0].mxu0
  %1432 = vdwg.mxu0
  %1433 = vmatprep.subr.bf16.mxu0 0
  %1434 = vmatpush1.bf16.msra.mxu0 %v1256
  %1435 = vmatprep.subr.bf16.mxu0 0
  %1436 = vmatpush1.bf16.msra.mxu0 %v1257
  %1437 = vmatprep.subr.bf16.mxu0 0
  %1438 = vmatpush1.bf16.msra.mxu0 %v1258
  %1439 = vmatprep.subr.bf16.mxu0 0
  %1440 = vmatpush1.bf16.msra.mxu0 %v1259
  %1441 = vmatprep.subr.bf16.mxu0 0
  %1442 = vmatpush1.bf16.msra.mxu0 %v1260
  %1443 = vmatprep.subr.bf16.mxu0 0
  %1444 = vmatpush1.bf16.msra.mxu0 %v1261
  %1445 = vmatprep.subr.bf16.mxu0 0
  %1446 = vmatpush1.bf16.msra.mxu0 %v1262
  %1447 = vmatprep.subr.bf16.mxu0 0
  %1448 = vmatpush1.bf16.msra.mxu0 %v1263
  %1449 = vmatprep.subr.bf16.mxu0 0
  %1450 = vmatpush1.bf16.msra.mxu0 %v1264
  %1451 = vmatprep.subr.bf16.mxu0 0
  %1452 = vmatpush1.bf16.msra.mxu0 %v1265
  %1453 = vmatprep.subr.bf16.mxu0 0
  %1454 = vmatpush1.bf16.msra.mxu0 %v1266
  %1455 = vmatprep.subr.bf16.mxu0 0
  %1456 = vmatpush1.bf16.msra.mxu0 %v1267
  %1457 = vmatprep.subr.bf16.mxu0 0
  %1458 = vmatpush1.bf16.msra.mxu0 %v1268
  %1459 = vmatprep.subr.bf16.mxu0 0
  %1460 = vmatpush1.bf16.msra.mxu0 %v1269
  %1461 = vmatprep.subr.bf16.mxu0 0
  %1462 = vmatpush1.bf16.msra.mxu0 %v1270
  %1463 = vmatprep.subr.bf16.mxu0 0
  %1464 = vmatpush1.bf16.msra.mxu0 %v1271
  %1465 = vmatprep.mubr.bf16.mxu0 %v1339
  %1466 = vmatmul.mubr.bf16.gmra.mrb[0].mxu0 %v1338
  %v1467 = vpop.f32.mrb[0].mxu0
  %v1468 = vadd.f32 %v1403, %v1467
  %v1469 = vpop.f32.mrb[0].mxu0
  %v1470 = vpop.f32.mrb[0].mxu0
  %v1471 = vadd.f32 %v1406, %v1470
  %v1472 = vpop.f32.mrb[0].mxu0
  %1473 = vmatprep.mubr.bf16.mxu0 %v1343
  %1474 = vmatmul.mubr.bf16.gmra.mrb[0].mxu0 %v1342
  %v1475 = vpop.f32.mrb[0].mxu0
  %v1476 = vadd.f32 %v1411, %v1475
  %v1477 = vpop.f32.mrb[0].mxu0
  %v1478 = vpop.f32.mrb[0].mxu0
  %v1479 = vadd.f32 %v1414, %v1478
  %v1480 = vpop.f32.mrb[0].mxu0
  %1481 = vmatprep.mubr.bf16.mxu0 %v1347
  %1482 = vmatmul.mubr.bf16.gmra.mrb[0].mxu0 %v1346
  %v1483 = vpop.f32.mrb[0].mxu0
  %v1484 = vadd.f32 %v1419, %v1483
  %v1485 = vpop.f32.mrb[0].mxu0
  %v1486 = vpop.f32.mrb[0].mxu0
  %v1487 = vadd.f32 %v1422, %v1486
  %v1488 = vpop.f32.mrb[0].mxu0
  %1489 = vmatprep.mubr.bf16.mxu0 %v1351
  %1490 = vmatmul.mubr.bf16.gmra.mrb[0].mxu0 %v1350
  %v1491 = vpop.f32.mrb[0].mxu0
  %v1492 = vadd.f32 %v1427, %v1491
  %v1493 = vpop.f32.mrb[0].mxu0
  %v1494 = vpop.f32.mrb[0].mxu0
  %v1495 = vadd.f32 %v1430, %v1494
  %v1496 = vpop.f32.mrb[0].mxu0
  %1497 = vdwg.mxu0
  %s1498 = smul.u32 0, 128
  %v1499 = vlaneseq
  %v1500 = vand.u32 %v1499, 127
  %v1501 = vstv %s1498
  %v1502 = vadd.s32 %v1501, %v1500
  %vm1503 = vcmp.lt.s32.totalorder %v1502, 18
  %v1504 = vsel %vm1503, 1, 0
  %vm1505 = vcmp.eq.s32.totalorder %v1504, 1
  %v1506 = vsel %vm1505, %v1468, 0.0
  %v1507 = vsel %vm1505, %v1471, 0.0
  %v1508 = vsel %vm1505, %v1476, 0.0
  %v1509 = vsel %vm1505, %v1479, 0.0
  %v1510 = vsel %vm1505, %v1484, 0.0
  %v1511 = vsel %vm1505, %v1487, 0.0
  %v1512 = vsel %vm1505, %v1492, 0.0
  %v1513 = vsel %vm1505, %v1495, 0.0
  %1514 = vadd.xlane.f32.xlu0 %v1506
  %v1515 = vpop.xlane.xlu0 %1514
  %1516 = vadd.xlane.f32.xlu0 %v1507
  %v1517 = vpop.xlane.xlu0 %1516
  %1518 = vadd.xlane.f32.xlu0 %v1508
  %v1519 = vpop.xlane.xlu0 %1518
  %1520 = vadd.xlane.f32.xlu0 %v1509
  %v1521 = vpop.xlane.xlu0 %1520
  %1522 = vadd.xlane.f32.xlu0 %v1510
  %v1523 = vpop.xlane.xlu0 %1522
  %1524 = vadd.xlane.f32.xlu0 %v1511
  %v1525 = vpop.xlane.xlu0 %1524
  %1526 = vadd.xlane.f32.xlu0 %v1512
  %v1527 = vpop.xlane.xlu0 %1526
  %1528 = vadd.xlane.f32.xlu0 %v1513
  %v1529 = vpop.xlane.xlu0 %1528
  %vm1530 = vcmask 7168
  %1531 = vst.msk [vmem:[%s6] sm:$0xff] %vm1530, %v1515
  %1532 = vst.msk [vmem:[%s6 + $0x8] sm:$0xff] %vm1530, %v1517
  %1533 = vst.msk [vmem:[%s6 + $0x10] sm:$0xff] %vm1530, %v1519
  %1534 = vst.msk [vmem:[%s6 + $0x18] sm:$0xff] %vm1530, %v1521
  %1535 = vst.msk [vmem:[%s6 + $0x20] sm:$0xff] %vm1530, %v1523
  %1536 = vst.msk [vmem:[%s6 + $0x28] sm:$0xff] %vm1530, %v1525
  %1537 = vst.msk [vmem:[%s6 + $0x30] sm:$0xff] %vm1530, %v1527
  %1538 = vst.msk [vmem:[%s6 + $0x38] sm:$0xff] %vm1530, %v1529
  %v1539 = vmul.f32 %v1506, %v1506
  %v1540 = vmul.f32 %v1507, %v1507
  %v1541 = vmul.f32 %v1508, %v1508
  %v1542 = vmul.f32 %v1509, %v1509
  %v1543 = vmul.f32 %v1510, %v1510
  %v1544 = vmul.f32 %v1511, %v1511
  %v1545 = vmul.f32 %v1512, %v1512
  %v1546 = vmul.f32 %v1513, %v1513
  %1547 = vadd.xlane.f32.xlu0 %v1539
  %v1548 = vpop.xlane.xlu0 %1547
  %1549 = vadd.xlane.f32.xlu0 %v1540
  %v1550 = vpop.xlane.xlu0 %1549
  %1551 = vadd.xlane.f32.xlu0 %v1541
  %v1552 = vpop.xlane.xlu0 %1551
  %1553 = vadd.xlane.f32.xlu0 %v1542
  %v1554 = vpop.xlane.xlu0 %1553
  %1555 = vadd.xlane.f32.xlu0 %v1543
  %v1556 = vpop.xlane.xlu0 %1555
  %1557 = vadd.xlane.f32.xlu0 %v1544
  %v1558 = vpop.xlane.xlu0 %1557
  %1559 = vadd.xlane.f32.xlu0 %v1545
  %v1560 = vpop.xlane.xlu0 %1559
  %1561 = vadd.xlane.f32.xlu0 %v1546
  %v1562 = vpop.xlane.xlu0 %1561
  %1563 = vst.msk [vmem:[%s7] sm:$0xff] %vm1530, %v1548
  %1564 = vst.msk [vmem:[%s7 + $0x8] sm:$0xff] %vm1530, %v1550
  %1565 = vst.msk [vmem:[%s7 + $0x10] sm:$0xff] %vm1530, %v1552
  %1566 = vst.msk [vmem:[%s7 + $0x18] sm:$0xff] %vm1530, %v1554
  %1567 = vst.msk [vmem:[%s7 + $0x20] sm:$0xff] %vm1530, %v1556
  %1568 = vst.msk [vmem:[%s7 + $0x28] sm:$0xff] %vm1530, %v1558
  %1569 = vst.msk [vmem:[%s7 + $0x30] sm:$0xff] %vm1530, %v1560
  %1570 = vst.msk [vmem:[%s7 + $0x38] sm:$0xff] %vm1530, %v1562
  %v1571 = vpack.c.bf16 %v1471, %v1468
  %v1572 = vpack.c.bf16 %v1479, %v1476
  %v1573 = vpack.c.bf16 %v1487, %v1484
  %v1574 = vpack.c.bf16 %v1495, %v1492
  %v1579 = vunpack.c.l.b16 %v1571
  %v1580 = vunpack.c.h.b16 %v1571
  %v1581 = vunpack.c.l.b16 %v1572
  %v1582 = vunpack.c.h.b16 %v1572
  %v1583 = vunpack.c.l.b16 %v1573
  %v1584 = vunpack.c.h.b16 %v1573
  %v1585 = vunpack.c.l.b16 %v1574
  %v1586 = vunpack.c.h.b16 %v1574
  %v1587 = vpack.c.b16 %v1579, %v1579
  %v1588 = vpack.c.b16 %v1580, %v1580
  %v1589 = vpack.c.b16 %v1581, %v1581
  %v1590 = vpack.c.b16 %v1582, %v1582
  %v1591 = vpack.c.b16 %v1583, %v1583
  %v1592 = vpack.c.b16 %v1584, %v1584
  %v1593 = vpack.c.b16 %v1585, %v1585
  %v1594 = vpack.c.b16 %v1586, %v1586
  %1603 = vst [vmem:[%s5] sm:$0xf] %v1587
  %1604 = vst [vmem:[%s5 + $0x4] sm:$0xf] %v1588
  %1605 = vst [vmem:[%s5 + $0x8] sm:$0xf] %v1589
  %1606 = vst [vmem:[%s5 + $0xc] sm:$0xf] %v1590
  %1607 = vst [vmem:[%s5 + $0x10] sm:$0xf] %v1591
  %1608 = vst [vmem:[%s5 + $0x14] sm:$0xf] %v1592
  %1609 = vst [vmem:[%s5 + $0x18] sm:$0xf] %v1593
  %1610 = vst [vmem:[%s5 + $0x1c] sm:$0xf] %v1594
  // Predicated region
  $region22: #{_lambda_.8} parent=0 // pred_check
    _
  $region23: #{_lambda_.8} parent=0 // pred_check_branch
    %1612 = sbr.rel (0) target = $region25
  $region24: #{_lambda_.8} parent=0 // pred_region
    _
  $region25: #{_lambda_.8} parent=0 // pred_fallthru
    _
  // Predicated region
  $region26: #{_lambda_.8} parent=0 // pred_check
    _
  $region27: #{_lambda_.8} parent=0 // pred_check_branch
    %1614 = sbr.rel (0) target = $region29
  $region28: #{_lambda_.8} parent=0 // pred_region
    _
  $region29: #{_lambda_.8} parent=0 // pred_fallthru
    _
  // Predicated region
  $region30: #{_lambda_.8} parent=0 // pred_check
    _
  $region31: #{_lambda_.8} parent=0 // pred_check_branch
    %1616 = sbr.rel (0) target = $region33
  $region32: #{_lambda_.8} parent=0 // pred_region
    _
  $region33: #{_lambda_.8} parent=0 // pred_fallthru
    _
  // Predicated region
  $region34: #{_lambda_.8} parent=0 // pred_check
    _
  $region35: #{_lambda_.8} parent=0 // pred_check_branch
    %1618 = sbr.rel (0) target = $region37
  $region36: #{_lambda_.8} parent=0 // pred_region
    _
  $region37: #{_lambda_.8} parent=0 // pred_fallthru
    _
  // Predicated region
  $region38: #{_lambda_.8} parent=0 // pred_check
    _
  $region39: #{_lambda_.8} parent=0 // pred_check_branch
    %1620 = sbr.rel (0) target = $region41
  $region40: #{_lambda_.8} parent=0 // pred_region
    _
  $region41: #{_lambda_.8} parent=0 // pred_fallthru
    _
  // Predicated region
  $region42: #{_lambda_.8} parent=0 // pred_check
    _
  $region43: #{_lambda_.8} parent=0 // pred_check_branch
    %1622 = sbr.rel (0) target = $region45
  $region44: #{_lambda_.8} parent=0 // pred_region
    _
  $region45: #{_lambda_.8} parent=0 // pred_fallthru
    _

// kernel: _lambda_.9
$region0: #{_lambda_.9}
  #allocation0 [shape = 'u32[]', space=smem, size = 0x4, offset = 0x4, fixed_abs, tag = 'smem constant byte address 0x4 - core index']
  #allocation1 [shape = 'u32[144,128]{1,0:T(1,128)}', space=vmem, size = 0x12000, scoped, tag = 'internal scratch']
  %s0 = inlined_call_operand.vmem [shape: bf16[1024,128], index: 0, kind: input, shape index: {}]
  %s1 = inlined_call_operand.vmem [shape: bf16[8,1024], index: 1, kind: input, shape index: {}]
  %s2 = inlined_call_operand.vmem [shape: f32[1024,1], index: 2, kind: input, shape index: {}]
  %s3 = inlined_call_operand.vmem [shape: f32[1024,1], index: 3, kind: input, shape index: {}]
  %s4 = inlined_call_operand.vmem [shape: f32[8,1], index: 4, kind: input, shape index: {}]
  %s5 = inlined_call_operand.vmem [shape: f32[8,128], index: 5, kind: output, shape index: {0}]
  %s6 = inlined_call_operand.hbm [shape: f32[1,8,1], index: 6, kind: output, shape index: {1}]
  %s7 = inlined_call_operand.hbm [shape: f32[1,8,1], index: 7, kind: output, shape index: {2}]
  %8 = xla_tuple %s5, %s6, %s7
  %s9 = sld [smem:[#allocation0]]
  $region46: #{_lambda_.9} parent=0
    _
  %s11 = ssub.s32 1, %s9
  %s12 = scalar_select 0, %s11, %s9
  $region1: #{_lambda_.9} parent=0
    #allocation2 [shape = 'u8[4096]{0}', space=vmem, size = 0x1000, scoped, tag = 'output window, operand 1, single buffered']
    #allocation3 [shape = 's32[1]{0}', space=sflag, size = 0x4, scoped, tag = 'scoped memory for _lambda_.9']
    #allocation4 [shape = 'u8[4096]{0}', space=vmem, size = 0x1000, scoped, tag = 'output window, operand 2, single buffered']
    #allocation5 [shape = 's32[1]{0}', space=sflag, size = 0x4, scoped, tag = 'scoped memory for _lambda_.9']
    %13 = vsyncpa [#allocation3], 0
    %14 = vsyncpa [#allocation5], 0
    // Predicated region
    $region2: #{_lambda_.9} parent=1 // pred_check
      _
    $region3: #{_lambda_.9} parent=1 // pred_check_branch
      %16 = sbr.rel (0) target = $region5
    $region4: #{_lambda_.9} parent=1 // pred_region
      _
    $region5: #{_lambda_.9} parent=1 // pred_fallthru
      _
    // Predicated region
    $region6: #{_lambda_.9} parent=1 // pred_check
      _
    $region7: #{_lambda_.9} parent=1 // pred_check_branch
      %18 = sbr.rel (0) target = $region9
    $region8: #{_lambda_.9} parent=1 // pred_region
      _
    $region9: #{_lambda_.9} parent=1 // pred_fallthru
      _
    // Predicated region
    $region10: #{_lambda_.9} parent=1 // pred_check
      _
    $region11: #{_lambda_.9} parent=1 // pred_check_branch
      %20 = sbr.rel (0) target = $region13
    $region12: #{_lambda_.9} parent=1 // pred_region
      _
    $region13: #{_lambda_.9} parent=1 // pred_fallthru
      _
    // Predicated region
    $region14: #{_lambda_.9} parent=1 // pred_check
      _
    $region15: #{_lambda_.9} parent=1 // pred_check_branch
      %22 = sbr.rel (0) target = $region17
    $region16: #{_lambda_.9} parent=1 // pred_region
      _
    $region17: #{_lambda_.9} parent=1 // pred_fallthru
      _
    // Predicated region
    $region18: #{_lambda_.9} parent=1 // pred_check
      _
    $region19: #{_lambda_.9} parent=1 // pred_check_branch
      %24 = sbr.rel (0) target = $region21
    $region20: #{_lambda_.9} parent=1 // pred_region
      _
    $region21: #{_lambda_.9} parent=1 // pred_fallthru
      _
    %v26 = vld [vmem:[%s0] sm:$0xf]
    %v27 = vld [vmem:[%s0 + $0x4] sm:$0xf]
    %v28 = vld [vmem:[%s0 + $0x8] sm:$0xf]
    %v29 = vld [vmem:[%s0 + $0xc] sm:$0xf]
    %v30 = vld [vmem:[%s0 + $0x10] sm:$0xf]
    %v31 = vld [vmem:[%s0 + $0x14] sm:$0xf]
    %v32 = vld [vmem:[%s0 + $0x18] sm:$0xf]
    %v33 = vld [vmem:[%s0 + $0x1c] sm:$0xf]
    %v34 = vld [vmem:[%s0 + $0x20] sm:$0xf]
    %v35 = vld [vmem:[%s0 + $0x24] sm:$0xf]
    %v36 = vld [vmem:[%s0 + $0x28] sm:$0xf]
    %v37 = vld [vmem:[%s0 + $0x2c] sm:$0xf]
    %v38 = vld [vmem:[%s0 + $0x30] sm:$0xf]
    %v39 = vld [vmem:[%s0 + $0x34] sm:$0xf]
    %v40 = vld [vmem:[%s0 + $0x38] sm:$0xf]
    %v41 = vld [vmem:[%s0 + $0x3c] sm:$0xf]
    %v42 = vld [vmem:[%s0 + $0x40] sm:$0xf]
    %v43 = vld [vmem:[%s0 + $0x44] sm:$0xf]
    %v44 = vld [vmem:[%s0 + $0x48] sm:$0xf]
    %v45 = vld [vmem:[%s0 + $0x4c] sm:$0xf]
    %v46 = vld [vmem:[%s0 + $0x50] sm:$0xf]
    %v47 = vld [vmem:[%s0 + $0x54] sm:$0xf]
    %v48 = vld [vmem:[%s0 + $0x58] sm:$0xf]
    %v49 = vld [vmem:[%s0 + $0x5c] sm:$0xf]
    %v50 = vld [vmem:[%s0 + $0x60] sm:$0xf]
    %v51 = vld [vmem:[%s0 + $0x64] sm:$0xf]
    %v52 = vld [vmem:[%s0 + $0x68] sm:$0xf]
    %v53 = vld [vmem:[%s0 + $0x6c] sm:$0xf]
    %v54 = vld [vmem:[%s0 + $0x70] sm:$0xf]
    %v55 = vld [vmem:[%s0 + $0x74] sm:$0xf]
    %v56 = vld [vmem:[%s0 + $0x78] sm:$0xf]
    %v57 = vld [vmem:[%s0 + $0x7c] sm:$0xf]
    %v58 = vld [vmem:[%s0 + $0x80] sm:$0xf]
    %v59 = vld [vmem:[%s0 + $0x84] sm:$0xf]
    %v60 = vld [vmem:[%s0 + $0x88] sm:$0xf]
    %v61 = vld [vmem:[%s0 + $0x8c] sm:$0xf]
    %v62 = vld [vmem:[%s0 + $0x90] sm:$0xf]
    %v63 = vld [vmem:[%s0 + $0x94] sm:$0xf]
    %v64 = vld [vmem:[%s0 + $0x98] sm:$0xf]
    %v65 = vld [vmem:[%s0 + $0x9c] sm:$0xf]
    %v66 = vld [vmem:[%s0 + $0xa0] sm:$0xf]
    %v67 = vld [vmem:[%s0 + $0xa4] sm:$0xf]
    %v68 = vld [vmem:[%s0 + $0xa8] sm:$0xf]
    %v69 = vld [vmem:[%s0 + $0xac] sm:$0xf]
    %v70 = vld [vmem:[%s0 + $0xb0] sm:$0xf]
    %v71 = vld [vmem:[%s0 + $0xb4] sm:$0xf]
    %v72 = vld [vmem:[%s0 + $0xb8] sm:$0xf]
    %v73 = vld [vmem:[%s0 + $0xbc] sm:$0xf]
    %v74 = vld [vmem:[%s0 + $0xc0] sm:$0xf]
    %v75 = vld [vmem:[%s0 + $0xc4] sm:$0xf]
    %v76 = vld [vmem:[%s0 + $0xc8] sm:$0xf]
    %v77 = vld [vmem:[%s0 + $0xcc] sm:$0xf]
    %v78 = vld [vmem:[%s0 + $0xd0] sm:$0xf]
    %v79 = vld [vmem:[%s0 + $0xd4] sm:$0xf]
    %v80 = vld [vmem:[%s0 + $0xd8] sm:$0xf]
    %v81 = vld [vmem:[%s0 + $0xdc] sm:$0xf]
    %v82 = vld [vmem:[%s0 + $0xe0] sm:$0xf]
    %v83 = vld [vmem:[%s0 + $0xe4] sm:$0xf]
    %v84 = vld [vmem:[%s0 + $0xe8] sm:$0xf]
    %v85 = vld [vmem:[%s0 + $0xec] sm:$0xf]
    %v86 = vld [vmem:[%s0 + $0xf0] sm:$0xf]
    %v87 = vld [vmem:[%s0 + $0xf4] sm:$0xf]
    %v88 = vld [vmem:[%s0 + $0xf8] sm:$0xf]
    %v89 = vld [vmem:[%s0 + $0xfc] sm:$0xf]
    %v90 = vld [vmem:[%s0 + $0x100] sm:$0xf]
    %v91 = vld [vmem:[%s0 + $0x104] sm:$0xf]
    %v92 = vld [vmem:[%s0 + $0x108] sm:$0xf]
    %v93 = vld [vmem:[%s0 + $0x10c] sm:$0xf]
    %v94 = vld [vmem:[%s0 + $0x110] sm:$0xf]
    %v95 = vld [vmem:[%s0 + $0x114] sm:$0xf]
    %v96 = vld [vmem:[%s0 + $0x118] sm:$0xf]
    %v97 = vld [vmem:[%s0 + $0x11c] sm:$0xf]
    %v98 = vld [vmem:[%s0 + $0x120] sm:$0xf]
    %v99 = vld [vmem:[%s0 + $0x124] sm:$0xf]
    %v100 = vld [vmem:[%s0 + $0x128] sm:$0xf]
    %v101 = vld [vmem:[%s0 + $0x12c] sm:$0xf]
    %v102 = vld [vmem:[%s0 + $0x130] sm:$0xf]
    %v103 = vld [vmem:[%s0 + $0x134] sm:$0xf]
    %v104 = vld [vmem:[%s0 + $0x138] sm:$0xf]
    %v105 = vld [vmem:[%s0 + $0x13c] sm:$0xf]
    %v106 = vld [vmem:[%s0 + $0x140] sm:$0xf]
    %v107 = vld [vmem:[%s0 + $0x144] sm:$0xf]
    %v108 = vld [vmem:[%s0 + $0x148] sm:$0xf]
    %v109 = vld [vmem:[%s0 + $0x14c] sm:$0xf]
    %v110 = vld [vmem:[%s0 + $0x150] sm:$0xf]
    %v111 = vld [vmem:[%s0 + $0x154] sm:$0xf]
    %v112 = vld [vmem:[%s0 + $0x158] sm:$0xf]
    %v113 = vld [vmem:[%s0 + $0x15c] sm:$0xf]
    %v114 = vld [vmem:[%s0 + $0x160] sm:$0xf]
    %v115 = vld [vmem:[%s0 + $0x164] sm:$0xf]
    %v116 = vld [vmem:[%s0 + $0x168] sm:$0xf]
    %v117 = vld [vmem:[%s0 + $0x16c] sm:$0xf]
    %v118 = vld [vmem:[%s0 + $0x170] sm:$0xf]
    %v119 = vld [vmem:[%s0 + $0x174] sm:$0xf]
    %v120 = vld [vmem:[%s0 + $0x178] sm:$0xf]
    %v121 = vld [vmem:[%s0 + $0x17c] sm:$0xf]
    %v122 = vld [vmem:[%s0 + $0x180] sm:$0xf]
    %v123 = vld [vmem:[%s0 + $0x184] sm:$0xf]
    %v124 = vld [vmem:[%s0 + $0x188] sm:$0xf]
    %v125 = vld [vmem:[%s0 + $0x18c] sm:$0xf]
    %v126 = vld [vmem:[%s0 + $0x190] sm:$0xf]
    %v127 = vld [vmem:[%s0 + $0x194] sm:$0xf]
    %v128 = vld [vmem:[%s0 + $0x198] sm:$0xf]
    %v129 = vld [vmem:[%s0 + $0x19c] sm:$0xf]
    %v130 = vld [vmem:[%s0 + $0x1a0] sm:$0xf]
    %v131 = vld [vmem:[%s0 + $0x1a4] sm:$0xf]
    %v132 = vld [vmem:[%s0 + $0x1a8] sm:$0xf]
    %v133 = vld [vmem:[%s0 + $0x1ac] sm:$0xf]
    %v134 = vld [vmem:[%s0 + $0x1b0] sm:$0xf]
    %v135 = vld [vmem:[%s0 + $0x1b4] sm:$0xf]
    %v136 = vld [vmem:[%s0 + $0x1b8] sm:$0xf]
    %v137 = vld [vmem:[%s0 + $0x1bc] sm:$0xf]
    %v138 = vld [vmem:[%s0 + $0x1c0] sm:$0xf]
    %v139 = vld [vmem:[%s0 + $0x1c4] sm:$0xf]
    %v140 = vld [vmem:[%s0 + $0x1c8] sm:$0xf]
    %v141 = vld [vmem:[%s0 + $0x1cc] sm:$0xf]
    %v142 = vld [vmem:[%s0 + $0x1d0] sm:$0xf]
    %v143 = vld [vmem:[%s0 + $0x1d4] sm:$0xf]
    %v144 = vld [vmem:[%s0 + $0x1d8] sm:$0xf]
    %v145 = vld [vmem:[%s0 + $0x1dc] sm:$0xf]
    %v146 = vld [vmem:[%s0 + $0x1e0] sm:$0xf]
    %v147 = vld [vmem:[%s0 + $0x1e4] sm:$0xf]
    %v148 = vld [vmem:[%s0 + $0x1e8] sm:$0xf]
    %v149 = vld [vmem:[%s0 + $0x1ec] sm:$0xf]
    %v150 = vld [vmem:[%s0 + $0x1f0] sm:$0xf]
    %v151 = vld [vmem:[%s0 + $0x1f4] sm:$0xf]
    %v152 = vld [vmem:[%s0 + $0x1f8] sm:$0xf]
    %v153 = vld [vmem:[%s0 + $0x1fc] sm:$0xf]
    %v154 = vunpack.c.l.bf16 %v26
    %v155 = vunpack.c.l.bf16 %v27
    %v156 = vunpack.c.l.bf16 %v28
    %v157 = vunpack.c.l.bf16 %v29
    %v158 = vunpack.c.l.bf16 %v30
    %v159 = vunpack.c.l.bf16 %v31
    %v160 = vunpack.c.l.bf16 %v32
    %v161 = vunpack.c.l.bf16 %v33
    %v162 = vunpack.c.l.bf16 %v34
    %v163 = vunpack.c.l.bf16 %v35
    %v164 = vunpack.c.l.bf16 %v36
    %v165 = vunpack.c.l.bf16 %v37
    %v166 = vunpack.c.l.bf16 %v38
    %v167 = vunpack.c.l.bf16 %v39
    %v168 = vunpack.c.l.bf16 %v40
    %v169 = vunpack.c.l.bf16 %v41
    %v170 = vunpack.c.l.bf16 %v42
    %v171 = vunpack.c.l.bf16 %v43
    %v172 = vunpack.c.l.bf16 %v44
    %v173 = vunpack.c.l.bf16 %v45
    %v174 = vunpack.c.l.bf16 %v46
    %v175 = vunpack.c.l.bf16 %v47
    %v176 = vunpack.c.l.bf16 %v48
    %v177 = vunpack.c.l.bf16 %v49
    %v178 = vunpack.c.l.bf16 %v50
    %v179 = vunpack.c.l.bf16 %v51
    %v180 = vunpack.c.l.bf16 %v52
    %v181 = vunpack.c.l.bf16 %v53
    %v182 = vunpack.c.l.bf16 %v54
    %v183 = vunpack.c.l.bf16 %v55
    %v184 = vunpack.c.l.bf16 %v56
    %v185 = vunpack.c.l.bf16 %v57
    %v186 = vunpack.c.l.bf16 %v58
    %v187 = vunpack.c.l.bf16 %v59
    %v188 = vunpack.c.l.bf16 %v60
    %v189 = vunpack.c.l.bf16 %v61
    %v190 = vunpack.c.l.bf16 %v62
    %v191 = vunpack.c.l.bf16 %v63
    %v192 = vunpack.c.l.bf16 %v64
    %v193 = vunpack.c.l.bf16 %v65
    %v194 = vunpack.c.l.bf16 %v66
    %v195 = vunpack.c.l.bf16 %v67
    %v196 = vunpack.c.l.bf16 %v68
    %v197 = vunpack.c.l.bf16 %v69
    %v198 = vunpack.c.l.bf16 %v70
    %v199 = vunpack.c.l.bf16 %v71
    %v200 = vunpack.c.l.bf16 %v72
    %v201 = vunpack.c.l.bf16 %v73
    %v202 = vunpack.c.l.bf16 %v74
    %v203 = vunpack.c.l.bf16 %v75
    %v204 = vunpack.c.l.bf16 %v76
    %v205 = vunpack.c.l.bf16 %v77
    %v206 = vunpack.c.l.bf16 %v78
    %v207 = vunpack.c.l.bf16 %v79
    %v208 = vunpack.c.l.bf16 %v80
    %v209 = vunpack.c.l.bf16 %v81
    %v210 = vunpack.c.l.bf16 %v82
    %v211 = vunpack.c.l.bf16 %v83
    %v212 = vunpack.c.l.bf16 %v84
    %v213 = vunpack.c.l.bf16 %v85
    %v214 = vunpack.c.l.bf16 %v86
    %v215 = vunpack.c.l.bf16 %v87
    %v216 = vunpack.c.l.bf16 %v88
    %v217 = vunpack.c.l.bf16 %v89
    %v218 = vunpack.c.l.bf16 %v90
    %v219 = vunpack.c.l.bf16 %v91
    %v220 = vunpack.c.l.bf16 %v92
    %v221 = vunpack.c.l.bf16 %v93
    %v222 = vunpack.c.l.bf16 %v94
    %v223 = vunpack.c.l.bf16 %v95
    %v224 = vunpack.c.l.bf16 %v96
    %v225 = vunpack.c.l.bf16 %v97
    %v226 = vunpack.c.l.bf16 %v98
    %v227 = vunpack.c.l.bf16 %v99
    %v228 = vunpack.c.l.bf16 %v100
    %v229 = vunpack.c.l.bf16 %v101
    %v230 = vunpack.c.l.bf16 %v102
    %v231 = vunpack.c.l.bf16 %v103
    %v232 = vunpack.c.l.bf16 %v104
    %v233 = vunpack.c.l.bf16 %v105
    %v234 = vunpack.c.l.bf16 %v106
    %v235 = vunpack.c.l.bf16 %v107
    %v236 = vunpack.c.l.bf16 %v108
    %v237 = vunpack.c.l.bf16 %v109
    %v238 = vunpack.c.l.bf16 %v110
    %v239 = vunpack.c.l.bf16 %v111
    %v240 = vunpack.c.l.bf16 %v112
    %v241 = vunpack.c.l.bf16 %v113
    %v242 = vunpack.c.l.bf16 %v114
    %v243 = vunpack.c.l.bf16 %v115
    %v244 = vunpack.c.l.bf16 %v116
    %v245 = vunpack.c.l.bf16 %v117
    %v246 = vunpack.c.l.bf16 %v118
    %v247 = vunpack.c.l.bf16 %v119
    %v248 = vunpack.c.l.bf16 %v120
    %v249 = vunpack.c.l.bf16 %v121
    %v250 = vunpack.c.l.bf16 %v122
    %v251 = vunpack.c.l.bf16 %v123
    %v252 = vunpack.c.l.bf16 %v124
    %v253 = vunpack.c.l.bf16 %v125
    %v254 = vunpack.c.l.bf16 %v126
    %v255 = vunpack.c.l.bf16 %v127
    %v256 = vunpack.c.l.bf16 %v128
    %v257 = vunpack.c.l.bf16 %v129
    %v258 = vunpack.c.l.bf16 %v130
    %v259 = vunpack.c.l.bf16 %v131
    %v260 = vunpack.c.l.bf16 %v132
    %v261 = vunpack.c.l.bf16 %v133
    %v262 = vunpack.c.l.bf16 %v134
    %v263 = vunpack.c.l.bf16 %v135
    %v264 = vunpack.c.l.bf16 %v136
    %v265 = vunpack.c.l.bf16 %v137
    %v266 = vunpack.c.l.bf16 %v138
    %v267 = vunpack.c.l.bf16 %v139
    %v268 = vunpack.c.l.bf16 %v140
    %v269 = vunpack.c.l.bf16 %v141
    %v270 = vunpack.c.l.bf16 %v142
    %v271 = vunpack.c.l.bf16 %v143
    %v272 = vunpack.c.l.bf16 %v144
    %v273 = vunpack.c.l.bf16 %v145
    %v274 = vunpack.c.l.bf16 %v146
    %v275 = vunpack.c.l.bf16 %v147
    %v276 = vunpack.c.l.bf16 %v148
    %v277 = vunpack.c.l.bf16 %v149
    %v278 = vunpack.c.l.bf16 %v150
    %v279 = vunpack.c.l.bf16 %v151
    %v280 = vunpack.c.l.bf16 %v152
    %v281 = vunpack.c.l.bf16 %v153
    %v282 = vld [vmem:[%s2] sm:$0xff]
    %v283 = vld [vmem:[%s2 + $0x8] sm:$0xff]
    %v284 = vld [vmem:[%s2 + $0x10] sm:$0xff]
    %v285 = vld [vmem:[%s2 + $0x18] sm:$0xff]
    %v286 = vld [vmem:[%s2 + $0x20] sm:$0xff]
    %v287 = vld [vmem:[%s2 + $0x28] sm:$0xff]
    %v288 = vld [vmem:[%s2 + $0x30] sm:$0xff]
    %v289 = vld [vmem:[%s2 + $0x38] sm:$0xff]
    %v290 = vld [vmem:[%s2 + $0x40] sm:$0xff]
    %v291 = vld [vmem:[%s2 + $0x48] sm:$0xff]
    %v292 = vld [vmem:[%s2 + $0x50] sm:$0xff]
    %v293 = vld [vmem:[%s2 + $0x58] sm:$0xff]
    %v294 = vld [vmem:[%s2 + $0x60] sm:$0xff]
    %v295 = vld [vmem:[%s2 + $0x68] sm:$0xff]
    %v296 = vld [vmem:[%s2 + $0x70] sm:$0xff]
    %v297 = vld [vmem:[%s2 + $0x78] sm:$0xff]
    %v298 = vld [vmem:[%s2 + $0x80] sm:$0xff]
    %v299 = vld [vmem:[%s2 + $0x88] sm:$0xff]
    %v300 = vld [vmem:[%s2 + $0x90] sm:$0xff]
    %v301 = vld [vmem:[%s2 + $0x98] sm:$0xff]
    %v302 = vld [vmem:[%s2 + $0xa0] sm:$0xff]
    %v303 = vld [vmem:[%s2 + $0xa8] sm:$0xff]
    %v304 = vld [vmem:[%s2 + $0xb0] sm:$0xff]
    %v305 = vld [vmem:[%s2 + $0xb8] sm:$0xff]
    %v306 = vld [vmem:[%s2 + $0xc0] sm:$0xff]
    %v307 = vld [vmem:[%s2 + $0xc8] sm:$0xff]
    %v308 = vld [vmem:[%s2 + $0xd0] sm:$0xff]
    %v309 = vld [vmem:[%s2 + $0xd8] sm:$0xff]
    %v310 = vld [vmem:[%s2 + $0xe0] sm:$0xff]
    %v311 = vld [vmem:[%s2 + $0xe8] sm:$0xff]
    %v312 = vld [vmem:[%s2 + $0xf0] sm:$0xff]
    %v313 = vld [vmem:[%s2 + $0xf8] sm:$0xff]
    %v314 = vld [vmem:[%s2 + $0x100] sm:$0xff]
    %v315 = vld [vmem:[%s2 + $0x108] sm:$0xff]
    %v316 = vld [vmem:[%s2 + $0x110] sm:$0xff]
    %v317 = vld [vmem:[%s2 + $0x118] sm:$0xff]
    %v318 = vld [vmem:[%s2 + $0x120] sm:$0xff]
    %v319 = vld [vmem:[%s2 + $0x128] sm:$0xff]
    %v320 = vld [vmem:[%s2 + $0x130] sm:$0xff]
    %v321 = vld [vmem:[%s2 + $0x138] sm:$0xff]
    %v322 = vld [vmem:[%s2 + $0x140] sm:$0xff]
    %v323 = vld [vmem:[%s2 + $0x148] sm:$0xff]
    %v324 = vld [vmem:[%s2 + $0x150] sm:$0xff]
    %v325 = vld [vmem:[%s2 + $0x158] sm:$0xff]
    %v326 = vld [vmem:[%s2 + $0x160] sm:$0xff]
    %v327 = vld [vmem:[%s2 + $0x168] sm:$0xff]
    %v328 = vld [vmem:[%s2 + $0x170] sm:$0xff]
    %v329 = vld [vmem:[%s2 + $0x178] sm:$0xff]
    %v330 = vld [vmem:[%s2 + $0x180] sm:$0xff]
    %v331 = vld [vmem:[%s2 + $0x188] sm:$0xff]
    %v332 = vld [vmem:[%s2 + $0x190] sm:$0xff]
    %v333 = vld [vmem:[%s2 + $0x198] sm:$0xff]
    %v334 = vld [vmem:[%s2 + $0x1a0] sm:$0xff]
    %v335 = vld [vmem:[%s2 + $0x1a8] sm:$0xff]
    %v336 = vld [vmem:[%s2 + $0x1b0] sm:$0xff]
    %v337 = vld [vmem:[%s2 + $0x1b8] sm:$0xff]
    %v338 = vld [vmem:[%s2 + $0x1c0] sm:$0xff]
    %v339 = vld [vmem:[%s2 + $0x1c8] sm:$0xff]
    %v340 = vld [vmem:[%s2 + $0x1d0] sm:$0xff]
    %v341 = vld [vmem:[%s2 + $0x1d8] sm:$0xff]
    %v342 = vld [vmem:[%s2 + $0x1e0] sm:$0xff]
    %v343 = vld [vmem:[%s2 + $0x1e8] sm:$0xff]
    %v344 = vld [vmem:[%s2 + $0x1f0] sm:$0xff]
    %v345 = vld [vmem:[%s2 + $0x1f8] sm:$0xff]
    %v346 = vld [vmem:[%s2 + $0x200] sm:$0xff]
    %v347 = vld [vmem:[%s2 + $0x208] sm:$0xff]
    %v348 = vld [vmem:[%s2 + $0x210] sm:$0xff]
    %v349 = vld [vmem:[%s2 + $0x218] sm:$0xff]
    %v350 = vld [vmem:[%s2 + $0x220] sm:$0xff]
    %v351 = vld [vmem:[%s2 + $0x228] sm:$0xff]
    %v352 = vld [vmem:[%s2 + $0x230] sm:$0xff]
    %v353 = vld [vmem:[%s2 + $0x238] sm:$0xff]
    %v354 = vld [vmem:[%s2 + $0x240] sm:$0xff]
    %v355 = vld [vmem:[%s2 + $0x248] sm:$0xff]
    %v356 = vld [vmem:[%s2 + $0x250] sm:$0xff]
    %v357 = vld [vmem:[%s2 + $0x258] sm:$0xff]
    %v358 = vld [vmem:[%s2 + $0x260] sm:$0xff]
    %v359 = vld [vmem:[%s2 + $0x268] sm:$0xff]
    %v360 = vld [vmem:[%s2 + $0x270] sm:$0xff]
    %v361 = vld [vmem:[%s2 + $0x278] sm:$0xff]
    %v362 = vld [vmem:[%s2 + $0x280] sm:$0xff]
    %v363 = vld [vmem:[%s2 + $0x288] sm:$0xff]
    %v364 = vld [vmem:[%s2 + $0x290] sm:$0xff]
    %v365 = vld [vmem:[%s2 + $0x298] sm:$0xff]
    %v366 = vld [vmem:[%s2 + $0x2a0] sm:$0xff]
    %v367 = vld [vmem:[%s2 + $0x2a8] sm:$0xff]
    %v368 = vld [vmem:[%s2 + $0x2b0] sm:$0xff]
    %v369 = vld [vmem:[%s2 + $0x2b8] sm:$0xff]
    %v370 = vld [vmem:[%s2 + $0x2c0] sm:$0xff]
    %v371 = vld [vmem:[%s2 + $0x2c8] sm:$0xff]
    %v372 = vld [vmem:[%s2 + $0x2d0] sm:$0xff]
    %v373 = vld [vmem:[%s2 + $0x2d8] sm:$0xff]
    %v374 = vld [vmem:[%s2 + $0x2e0] sm:$0xff]
    %v375 = vld [vmem:[%s2 + $0x2e8] sm:$0xff]
    %v376 = vld [vmem:[%s2 + $0x2f0] sm:$0xff]
    %v377 = vld [vmem:[%s2 + $0x2f8] sm:$0xff]
    %v378 = vld [vmem:[%s2 + $0x300] sm:$0xff]
    %v379 = vld [vmem:[%s2 + $0x308] sm:$0xff]
    %v380 = vld [vmem:[%s2 + $0x310] sm:$0xff]
    %v381 = vld [vmem:[%s2 + $0x318] sm:$0xff]
    %v382 = vld [vmem:[%s2 + $0x320] sm:$0xff]
    %v383 = vld [vmem:[%s2 + $0x328] sm:$0xff]
    %v384 = vld [vmem:[%s2 + $0x330] sm:$0xff]
    %v385 = vld [vmem:[%s2 + $0x338] sm:$0xff]
    %v386 = vld [vmem:[%s2 + $0x340] sm:$0xff]
    %v387 = vld [vmem:[%s2 + $0x348] sm:$0xff]
    %v388 = vld [vmem:[%s2 + $0x350] sm:$0xff]
    %v389 = vld [vmem:[%s2 + $0x358] sm:$0xff]
    %v390 = vld [vmem:[%s2 + $0x360] sm:$0xff]
    %v391 = vld [vmem:[%s2 + $0x368] sm:$0xff]
    %v392 = vld [vmem:[%s2 + $0x370] sm:$0xff]
    %v393 = vld [vmem:[%s2 + $0x378] sm:$0xff]
    %v394 = vld [vmem:[%s2 + $0x380] sm:$0xff]
    %v395 = vld [vmem:[%s2 + $0x388] sm:$0xff]
    %v396 = vld [vmem:[%s2 + $0x390] sm:$0xff]
    %v397 = vld [vmem:[%s2 + $0x398] sm:$0xff]
    %v398 = vld [vmem:[%s2 + $0x3a0] sm:$0xff]
    %v399 = vld [vmem:[%s2 + $0x3a8] sm:$0xff]
    %v400 = vld [vmem:[%s2 + $0x3b0] sm:$0xff]
    %v401 = vld [vmem:[%s2 + $0x3b8] sm:$0xff]
    %v402 = vld [vmem:[%s2 + $0x3c0] sm:$0xff]
    %v403 = vld [vmem:[%s2 + $0x3c8] sm:$0xff]
    %v404 = vld [vmem:[%s2 + $0x3d0] sm:$0xff]
    %v405 = vld [vmem:[%s2 + $0x3d8] sm:$0xff]
    %v406 = vld [vmem:[%s2 + $0x3e0] sm:$0xff]
    %v407 = vld [vmem:[%s2 + $0x3e8] sm:$0xff]
    %v408 = vld [vmem:[%s2 + $0x3f0] sm:$0xff]
    %v409 = vld [vmem:[%s2 + $0x3f8] sm:$0xff]
    %411 = vset.pattern.permute.xlu0 0
    %412 = vperm.xlu0 %411, %v282
    %v413 = vpop.permute.xlu0 %412
    %416 = vset.pattern.permute.xlu0 0
    %417 = vperm.xlu0 %416, %v283
    %v418 = vpop.permute.xlu0 %417
    %421 = vset.pattern.permute.xlu0 0
    %422 = vperm.xlu0 %421, %v284
    %v423 = vpop.permute.xlu0 %422
    %426 = vset.pattern.permute.xlu0 0
    %427 = vperm.xlu0 %426, %v285
    %v428 = vpop.permute.xlu0 %427
    %431 = vset.pattern.permute.xlu0 0
    %432 = vperm.xlu0 %431, %v286
    %v433 = vpop.permute.xlu0 %432
    %436 = vset.pattern.permute.xlu0 0
    %437 = vperm.xlu0 %436, %v287
    %v438 = vpop.permute.xlu0 %437
    %441 = vset.pattern.permute.xlu0 0
    %442 = vperm.xlu0 %441, %v288
    %v443 = vpop.permute.xlu0 %442
    %446 = vset.pattern.permute.xlu0 0
    %447 = vperm.xlu0 %446, %v289
    %v448 = vpop.permute.xlu0 %447
    %451 = vset.pattern.permute.xlu0 0
    %452 = vperm.xlu0 %451, %v290
    %v453 = vpop.permute.xlu0 %452
    %456 = vset.pattern.permute.xlu0 0
    %457 = vperm.xlu0 %456, %v291
    %v458 = vpop.permute.xlu0 %457
    %461 = vset.pattern.permute.xlu0 0
    %462 = vperm.xlu0 %461, %v292
    %v463 = vpop.permute.xlu0 %462
    %466 = vset.pattern.permute.xlu0 0
    %467 = vperm.xlu0 %466, %v293
    %v468 = vpop.permute.xlu0 %467
    %471 = vset.pattern.permute.xlu0 0
    %472 = vperm.xlu0 %471, %v294
    %v473 = vpop.permute.xlu0 %472
    %476 = vset.pattern.permute.xlu0 0
    %477 = vperm.xlu0 %476, %v295
    %v478 = vpop.permute.xlu0 %477
    %481 = vset.pattern.permute.xlu0 0
    %482 = vperm.xlu0 %481, %v296
    %v483 = vpop.permute.xlu0 %482
    %486 = vset.pattern.permute.xlu0 0
    %487 = vperm.xlu0 %486, %v297
    %v488 = vpop.permute.xlu0 %487
    %491 = vset.pattern.permute.xlu0 0
    %492 = vperm.xlu0 %491, %v298
    %v493 = vpop.permute.xlu0 %492
    %496 = vset.pattern.permute.xlu0 0
    %497 = vperm.xlu0 %496, %v299
    %v498 = vpop.permute.xlu0 %497
    %501 = vset.pattern.permute.xlu0 0
    %502 = vperm.xlu0 %501, %v300
    %v503 = vpop.permute.xlu0 %502
    %506 = vset.pattern.permute.xlu0 0
    %507 = vperm.xlu0 %506, %v301
    %v508 = vpop.permute.xlu0 %507
    %511 = vset.pattern.permute.xlu0 0
    %512 = vperm.xlu0 %511, %v302
    %v513 = vpop.permute.xlu0 %512
    %516 = vset.pattern.permute.xlu0 0
    %517 = vperm.xlu0 %516, %v303
    %v518 = vpop.permute.xlu0 %517
    %521 = vset.pattern.permute.xlu0 0
    %522 = vperm.xlu0 %521, %v304
    %v523 = vpop.permute.xlu0 %522
    %526 = vset.pattern.permute.xlu0 0
    %527 = vperm.xlu0 %526, %v305
    %v528 = vpop.permute.xlu0 %527
    %531 = vset.pattern.permute.xlu0 0
    %532 = vperm.xlu0 %531, %v306
    %v533 = vpop.permute.xlu0 %532
    %536 = vset.pattern.permute.xlu0 0
    %537 = vperm.xlu0 %536, %v307
    %v538 = vpop.permute.xlu0 %537
    %541 = vset.pattern.permute.xlu0 0
    %542 = vperm.xlu0 %541, %v308
    %v543 = vpop.permute.xlu0 %542
    %546 = vset.pattern.permute.xlu0 0
    %547 = vperm.xlu0 %546, %v309
    %v548 = vpop.permute.xlu0 %547
    %551 = vset.pattern.permute.xlu0 0
    %552 = vperm.xlu0 %551, %v310
    %v553 = vpop.permute.xlu0 %552
    %556 = vset.pattern.permute.xlu0 0
    %557 = vperm.xlu0 %556, %v311
    %v558 = vpop.permute.xlu0 %557
    %561 = vset.pattern.permute.xlu0 0
    %562 = vperm.xlu0 %561, %v312
    %v563 = vpop.permute.xlu0 %562
    %566 = vset.pattern.permute.xlu0 0
    %567 = vperm.xlu0 %566, %v313
    %v568 = vpop.permute.xlu0 %567
    %571 = vset.pattern.permute.xlu0 0
    %572 = vperm.xlu0 %571, %v314
    %v573 = vpop.permute.xlu0 %572
    %576 = vset.pattern.permute.xlu0 0
    %577 = vperm.xlu0 %576, %v315
    %v578 = vpop.permute.xlu0 %577
    %581 = vset.pattern.permute.xlu0 0
    %582 = vperm.xlu0 %581, %v316
    %v583 = vpop.permute.xlu0 %582
    %586 = vset.pattern.permute.xlu0 0
    %587 = vperm.xlu0 %586, %v317
    %v588 = vpop.permute.xlu0 %587
    %591 = vset.pattern.permute.xlu0 0
    %592 = vperm.xlu0 %591, %v318
    %v593 = vpop.permute.xlu0 %592
    %596 = vset.pattern.permute.xlu0 0
    %597 = vperm.xlu0 %596, %v319
    %v598 = vpop.permute.xlu0 %597
    %601 = vset.pattern.permute.xlu0 0
    %602 = vperm.xlu0 %601, %v320
    %v603 = vpop.permute.xlu0 %602
    %606 = vset.pattern.permute.xlu0 0
    %607 = vperm.xlu0 %606, %v321
    %v608 = vpop.permute.xlu0 %607
    %611 = vset.pattern.permute.xlu0 0
    %612 = vperm.xlu0 %611, %v322
    %v613 = vpop.permute.xlu0 %612
    %616 = vset.pattern.permute.xlu0 0
    %617 = vperm.xlu0 %616, %v323
    %v618 = vpop.permute.xlu0 %617
    %621 = vset.pattern.permute.xlu0 0
    %622 = vperm.xlu0 %621, %v324
    %v623 = vpop.permute.xlu0 %622
    %626 = vset.pattern.permute.xlu0 0
    %627 = vperm.xlu0 %626, %v325
    %v628 = vpop.permute.xlu0 %627
    %631 = vset.pattern.permute.xlu0 0
    %632 = vperm.xlu0 %631, %v326
    %v633 = vpop.permute.xlu0 %632
    %636 = vset.pattern.permute.xlu0 0
    %637 = vperm.xlu0 %636, %v327
    %v638 = vpop.permute.xlu0 %637
    %641 = vset.pattern.permute.xlu0 0
    %642 = vperm.xlu0 %641, %v328
    %v643 = vpop.permute.xlu0 %642
    %646 = vset.pattern.permute.xlu0 0
    %647 = vperm.xlu0 %646, %v329
    %v648 = vpop.permute.xlu0 %647
    %651 = vset.pattern.permute.xlu0 0
    %652 = vperm.xlu0 %651, %v330
    %v653 = vpop.permute.xlu0 %652
    %656 = vset.pattern.permute.xlu0 0
    %657 = vperm.xlu0 %656, %v331
    %v658 = vpop.permute.xlu0 %657
    %661 = vset.pattern.permute.xlu0 0
    %662 = vperm.xlu0 %661, %v332
    %v663 = vpop.permute.xlu0 %662
    %666 = vset.pattern.permute.xlu0 0
    %667 = vperm.xlu0 %666, %v333
    %v668 = vpop.permute.xlu0 %667
    %671 = vset.pattern.permute.xlu0 0
    %672 = vperm.xlu0 %671, %v334
    %v673 = vpop.permute.xlu0 %672
    %676 = vset.pattern.permute.xlu0 0
    %677 = vperm.xlu0 %676, %v335
    %v678 = vpop.permute.xlu0 %677
    %681 = vset.pattern.permute.xlu0 0
    %682 = vperm.xlu0 %681, %v336
    %v683 = vpop.permute.xlu0 %682
    %686 = vset.pattern.permute.xlu0 0
    %687 = vperm.xlu0 %686, %v337
    %v688 = vpop.permute.xlu0 %687
    %691 = vset.pattern.permute.xlu0 0
    %692 = vperm.xlu0 %691, %v338
    %v693 = vpop.permute.xlu0 %692
    %696 = vset.pattern.permute.xlu0 0
    %697 = vperm.xlu0 %696, %v339
    %v698 = vpop.permute.xlu0 %697
    %701 = vset.pattern.permute.xlu0 0
    %702 = vperm.xlu0 %701, %v340
    %v703 = vpop.permute.xlu0 %702
    %706 = vset.pattern.permute.xlu0 0
    %707 = vperm.xlu0 %706, %v341
    %v708 = vpop.permute.xlu0 %707
    %711 = vset.pattern.permute.xlu0 0
    %712 = vperm.xlu0 %711, %v342
    %v713 = vpop.permute.xlu0 %712
    %716 = vset.pattern.permute.xlu0 0
    %717 = vperm.xlu0 %716, %v343
    %v718 = vpop.permute.xlu0 %717
    %721 = vset.pattern.permute.xlu0 0
    %722 = vperm.xlu0 %721, %v344
    %v723 = vpop.permute.xlu0 %722
    %726 = vset.pattern.permute.xlu0 0
    %727 = vperm.xlu0 %726, %v345
    %v728 = vpop.permute.xlu0 %727
    %731 = vset.pattern.permute.xlu0 0
    %732 = vperm.xlu0 %731, %v346
    %v733 = vpop.permute.xlu0 %732
    %736 = vset.pattern.permute.xlu0 0
    %737 = vperm.xlu0 %736, %v347
    %v738 = vpop.permute.xlu0 %737
    %741 = vset.pattern.permute.xlu0 0
    %742 = vperm.xlu0 %741, %v348
    %v743 = vpop.permute.xlu0 %742
    %746 = vset.pattern.permute.xlu0 0
    %747 = vperm.xlu0 %746, %v349
    %v748 = vpop.permute.xlu0 %747
    %751 = vset.pattern.permute.xlu0 0
    %752 = vperm.xlu0 %751, %v350
    %v753 = vpop.permute.xlu0 %752
    %756 = vset.pattern.permute.xlu0 0
    %757 = vperm.xlu0 %756, %v351
    %v758 = vpop.permute.xlu0 %757
    %761 = vset.pattern.permute.xlu0 0
    %762 = vperm.xlu0 %761, %v352
    %v763 = vpop.permute.xlu0 %762
    %766 = vset.pattern.permute.xlu0 0
    %767 = vperm.xlu0 %766, %v353
    %v768 = vpop.permute.xlu0 %767
    %771 = vset.pattern.permute.xlu0 0
    %772 = vperm.xlu0 %771, %v354
    %v773 = vpop.permute.xlu0 %772
    %776 = vset.pattern.permute.xlu0 0
    %777 = vperm.xlu0 %776, %v355
    %v778 = vpop.permute.xlu0 %777
    %781 = vset.pattern.permute.xlu0 0
    %782 = vperm.xlu0 %781, %v356
    %v783 = vpop.permute.xlu0 %782
    %786 = vset.pattern.permute.xlu0 0
    %787 = vperm.xlu0 %786, %v357
    %v788 = vpop.permute.xlu0 %787
    %791 = vset.pattern.permute.xlu0 0
    %792 = vperm.xlu0 %791, %v358
    %v793 = vpop.permute.xlu0 %792
    %796 = vset.pattern.permute.xlu0 0
    %797 = vperm.xlu0 %796, %v359
    %v798 = vpop.permute.xlu0 %797
    %801 = vset.pattern.permute.xlu0 0
    %802 = vperm.xlu0 %801, %v360
    %v803 = vpop.permute.xlu0 %802
    %806 = vset.pattern.permute.xlu0 0
    %807 = vperm.xlu0 %806, %v361
    %v808 = vpop.permute.xlu0 %807
    %811 = vset.pattern.permute.xlu0 0
    %812 = vperm.xlu0 %811, %v362
    %v813 = vpop.permute.xlu0 %812
    %816 = vset.pattern.permute.xlu0 0
    %817 = vperm.xlu0 %816, %v363
    %v818 = vpop.permute.xlu0 %817
    %821 = vset.pattern.permute.xlu0 0
    %822 = vperm.xlu0 %821, %v364
    %v823 = vpop.permute.xlu0 %822
    %826 = vset.pattern.permute.xlu0 0
    %827 = vperm.xlu0 %826, %v365
    %v828 = vpop.permute.xlu0 %827
    %831 = vset.pattern.permute.xlu0 0
    %832 = vperm.xlu0 %831, %v366
    %v833 = vpop.permute.xlu0 %832
    %836 = vset.pattern.permute.xlu0 0
    %837 = vperm.xlu0 %836, %v367
    %v838 = vpop.permute.xlu0 %837
    %841 = vset.pattern.permute.xlu0 0
    %842 = vperm.xlu0 %841, %v368
    %v843 = vpop.permute.xlu0 %842
    %846 = vset.pattern.permute.xlu0 0
    %847 = vperm.xlu0 %846, %v369
    %v848 = vpop.permute.xlu0 %847
    %851 = vset.pattern.permute.xlu0 0
    %852 = vperm.xlu0 %851, %v370
    %v853 = vpop.permute.xlu0 %852
    %856 = vset.pattern.permute.xlu0 0
    %857 = vperm.xlu0 %856, %v371
    %v858 = vpop.permute.xlu0 %857
    %861 = vset.pattern.permute.xlu0 0
    %862 = vperm.xlu0 %861, %v372
    %v863 = vpop.permute.xlu0 %862
    %866 = vset.pattern.permute.xlu0 0
    %867 = vperm.xlu0 %866, %v373
    %v868 = vpop.permute.xlu0 %867
    %871 = vset.pattern.permute.xlu0 0
    %872 = vperm.xlu0 %871, %v374
    %v873 = vpop.permute.xlu0 %872
    %876 = vset.pattern.permute.xlu0 0
    %877 = vperm.xlu0 %876, %v375
    %v878 = vpop.permute.xlu0 %877
    %881 = vset.pattern.permute.xlu0 0
    %882 = vperm.xlu0 %881, %v376
    %v883 = vpop.permute.xlu0 %882
    %886 = vset.pattern.permute.xlu0 0
    %887 = vperm.xlu0 %886, %v377
    %v888 = vpop.permute.xlu0 %887
    %891 = vset.pattern.permute.xlu0 0
    %892 = vperm.xlu0 %891, %v378
    %v893 = vpop.permute.xlu0 %892
    %896 = vset.pattern.permute.xlu0 0
    %897 = vperm.xlu0 %896, %v379
    %v898 = vpop.permute.xlu0 %897
    %901 = vset.pattern.permute.xlu0 0
    %902 = vperm.xlu0 %901, %v380
    %v903 = vpop.permute.xlu0 %902
    %906 = vset.pattern.permute.xlu0 0
    %907 = vperm.xlu0 %906, %v381
    %v908 = vpop.permute.xlu0 %907
    %911 = vset.pattern.permute.xlu0 0
    %912 = vperm.xlu0 %911, %v382
    %v913 = vpop.permute.xlu0 %912
    %916 = vset.pattern.permute.xlu0 0
    %917 = vperm.xlu0 %916, %v383
    %v918 = vpop.permute.xlu0 %917
    %921 = vset.pattern.permute.xlu0 0
    %922 = vperm.xlu0 %921, %v384
    %v923 = vpop.permute.xlu0 %922
    %926 = vset.pattern.permute.xlu0 0
    %927 = vperm.xlu0 %926, %v385
    %v928 = vpop.permute.xlu0 %927
    %931 = vset.pattern.permute.xlu0 0
    %932 = vperm.xlu0 %931, %v386
    %v933 = vpop.permute.xlu0 %932
    %936 = vset.pattern.permute.xlu0 0
    %937 = vperm.xlu0 %936, %v387
    %v938 = vpop.permute.xlu0 %937
    %941 = vset.pattern.permute.xlu0 0
    %942 = vperm.xlu0 %941, %v388
    %v943 = vpop.permute.xlu0 %942
    %946 = vset.pattern.permute.xlu0 0
    %947 = vperm.xlu0 %946, %v389
    %v948 = vpop.permute.xlu0 %947
    %951 = vset.pattern.permute.xlu0 0
    %952 = vperm.xlu0 %951, %v390
    %v953 = vpop.permute.xlu0 %952
    %956 = vset.pattern.permute.xlu0 0
    %957 = vperm.xlu0 %956, %v391
    %v958 = vpop.permute.xlu0 %957
    %961 = vset.pattern.permute.xlu0 0
    %962 = vperm.xlu0 %961, %v392
    %v963 = vpop.permute.xlu0 %962
    %966 = vset.pattern.permute.xlu0 0
    %967 = vperm.xlu0 %966, %v393
    %v968 = vpop.permute.xlu0 %967
    %971 = vset.pattern.permute.xlu0 0
    %972 = vperm.xlu0 %971, %v394
    %v973 = vpop.permute.xlu0 %972
    %976 = vset.pattern.permute.xlu0 0
    %977 = vperm.xlu0 %976, %v395
    %v978 = vpop.permute.xlu0 %977
    %981 = vset.pattern.permute.xlu0 0
    %982 = vperm.xlu0 %981, %v396
    %v983 = vpop.permute.xlu0 %982
    %986 = vset.pattern.permute.xlu0 0
    %987 = vperm.xlu0 %986, %v397
    %v988 = vpop.permute.xlu0 %987
    %991 = vset.pattern.permute.xlu0 0
    %992 = vperm.xlu0 %991, %v398
    %v993 = vpop.permute.xlu0 %992
    %996 = vset.pattern.permute.xlu0 0
    %997 = vperm.xlu0 %996, %v399
    %v998 = vpop.permute.xlu0 %997
    %1001 = vset.pattern.permute.xlu0 0
    %1002 = vperm.xlu0 %1001, %v400
    %v1003 = vpop.permute.xlu0 %1002
    %1006 = vset.pattern.permute.xlu0 0
    %1007 = vperm.xlu0 %1006, %v401
    %v1008 = vpop.permute.xlu0 %1007
    %1011 = vset.pattern.permute.xlu0 0
    %1012 = vperm.xlu0 %1011, %v402
    %v1013 = vpop.permute.xlu0 %1012
    %1016 = vset.pattern.permute.xlu0 0
    %1017 = vperm.xlu0 %1016, %v403
    %v1018 = vpop.permute.xlu0 %1017
    %1021 = vset.pattern.permute.xlu0 0
    %1022 = vperm.xlu0 %1021, %v404
    %v1023 = vpop.permute.xlu0 %1022
    %1026 = vset.pattern.permute.xlu0 0
    %1027 = vperm.xlu0 %1026, %v405
    %v1028 = vpop.permute.xlu0 %1027
    %1031 = vset.pattern.permute.xlu0 0
    %1032 = vperm.xlu0 %1031, %v406
    %v1033 = vpop.permute.xlu0 %1032
    %1036 = vset.pattern.permute.xlu0 0
    %1037 = vperm.xlu0 %1036, %v407
    %v1038 = vpop.permute.xlu0 %1037
    %1041 = vset.pattern.permute.xlu0 0
    %1042 = vperm.xlu0 %1041, %v408
    %v1043 = vpop.permute.xlu0 %1042
    %1046 = vset.pattern.permute.xlu0 0
    %1047 = vperm.xlu0 %1046, %v409
    %v1048 = vpop.permute.xlu0 %1047
    %v1050 = vmul.f32 %v154, %v413
    %v1051 = vmul.f32 %v155, %v418
    %v1052 = vmul.f32 %v156, %v423
    %v1053 = vmul.f32 %v157, %v428
    %v1054 = vmul.f32 %v158, %v433
    %v1055 = vmul.f32 %v159, %v438
    %v1056 = vmul.f32 %v160, %v443
    %v1057 = vmul.f32 %v161, %v448
    %v1058 = vmul.f32 %v162, %v453
    %v1059 = vmul.f32 %v163, %v458
    %v1060 = vmul.f32 %v164, %v463
    %v1061 = vmul.f32 %v165, %v468
    %v1062 = vmul.f32 %v166, %v473
    %v1063 = vmul.f32 %v167, %v478
    %v1064 = vmul.f32 %v168, %v483
    %v1065 = vmul.f32 %v169, %v488
    %v1066 = vmul.f32 %v170, %v493
    %v1067 = vmul.f32 %v171, %v498
    %v1068 = vmul.f32 %v172, %v503
    %v1069 = vmul.f32 %v173, %v508
    %v1070 = vmul.f32 %v174, %v513
    %v1071 = vmul.f32 %v175, %v518
    %v1072 = vmul.f32 %v176, %v523
    %v1073 = vmul.f32 %v177, %v528
    %v1074 = vmul.f32 %v178, %v533
    %v1075 = vmul.f32 %v179, %v538
    %v1076 = vmul.f32 %v180, %v543
    %v1077 = vmul.f32 %v181, %v548
    %v1078 = vmul.f32 %v182, %v553
    %v1079 = vmul.f32 %v183, %v558
    %v1080 = vmul.f32 %v184, %v563
    %v1081 = vmul.f32 %v185, %v568
    %v1082 = vmul.f32 %v186, %v573
    %v1083 = vmul.f32 %v187, %v578
    %v1084 = vmul.f32 %v188, %v583
    %v1085 = vmul.f32 %v189, %v588
    %v1086 = vmul.f32 %v190, %v593
    %v1087 = vmul.f32 %v191, %v598
    %v1088 = vmul.f32 %v192, %v603
    %v1089 = vmul.f32 %v193, %v608
    %v1090 = vmul.f32 %v194, %v613
    %v1091 = vmul.f32 %v195, %v618
    %v1092 = vmul.f32 %v196, %v623
    %v1093 = vmul.f32 %v197, %v628
    %v1094 = vmul.f32 %v198, %v633
    %v1095 = vmul.f32 %v199, %v638
    %v1096 = vmul.f32 %v200, %v643
    %v1097 = vmul.f32 %v201, %v648
    %v1098 = vmul.f32 %v202, %v653
    %v1099 = vmul.f32 %v203, %v658
    %v1100 = vmul.f32 %v204, %v663
    %v1101 = vmul.f32 %v205, %v668
    %v1102 = vmul.f32 %v206, %v673
    %v1103 = vmul.f32 %v207, %v678
    %v1104 = vmul.f32 %v208, %v683
    %v1105 = vmul.f32 %v209, %v688
    %v1106 = vmul.f32 %v210, %v693
    %v1107 = vmul.f32 %v211, %v698
    %v1108 = vmul.f32 %v212, %v703
    %v1109 = vmul.f32 %v213, %v708
    %v1110 = vmul.f32 %v214, %v713
    %v1111 = vmul.f32 %v215, %v718
    %v1112 = vmul.f32 %v216, %v723
    %v1113 = vmul.f32 %v217, %v728
    %v1114 = vmul.f32 %v218, %v733
    %v1115 = vmul.f32 %v219, %v738
    %v1116 = vmul.f32 %v220, %v743
    %v1117 = vmul.f32 %v221, %v748
    %v1118 = vmul.f32 %v222, %v753
    %v1119 = vmul.f32 %v223, %v758
    %v1120 = vmul.f32 %v224, %v763
    %v1121 = vmul.f32 %v225, %v768
    %v1122 = vmul.f32 %v226, %v773
    %v1123 = vmul.f32 %v227, %v778
    %v1124 = vmul.f32 %v228, %v783
    %v1125 = vmul.f32 %v229, %v788
    %v1126 = vmul.f32 %v230, %v793
    %v1127 = vmul.f32 %v231, %v798
    %v1128 = vmul.f32 %v232, %v803
    %v1129 = vmul.f32 %v233, %v808
    %v1130 = vmul.f32 %v234, %v813
    %v1131 = vmul.f32 %v235, %v818
    %v1132 = vmul.f32 %v236, %v823
    %v1133 = vmul.f32 %v237, %v828
    %v1134 = vmul.f32 %v238, %v833
    %v1135 = vmul.f32 %v239, %v838
    %v1136 = vmul.f32 %v240, %v843
    %v1137 = vmul.f32 %v241, %v848
    %v1138 = vmul.f32 %v242, %v853
    %v1139 = vmul.f32 %v243, %v858
    %v1140 = vmul.f32 %v244, %v863
    %v1141 = vmul.f32 %v245, %v868
    %v1142 = vmul.f32 %v246, %v873
    %v1143 = vmul.f32 %v247, %v878
    %v1144 = vmul.f32 %v248, %v883
    %v1145 = vmul.f32 %v249, %v888
    %v1146 = vmul.f32 %v250, %v893
    %v1147 = vmul.f32 %v251, %v898
    %v1148 = vmul.f32 %v252, %v903
    %v1149 = vmul.f32 %v253, %v908
    %v1150 = vmul.f32 %v254, %v913
    %v1151 = vmul.f32 %v255, %v918
    %v1152 = vmul.f32 %v256, %v923
    %v1153 = vmul.f32 %v257, %v928
    %v1154 = vmul.f32 %v258, %v933
    %v1155 = vmul.f32 %v259, %v938
    %v1156 = vmul.f32 %v260, %v943
    %v1157 = vmul.f32 %v261, %v948
    %v1158 = vmul.f32 %v262, %v953
    %v1159 = vmul.f32 %v263, %v958
    %v1160 = vmul.f32 %v264, %v963
    %v1161 = vmul.f32 %v265, %v968
    %v1162 = vmul.f32 %v266, %v973
    %v1163 = vmul.f32 %v267, %v978
    %v1164 = vmul.f32 %v268, %v983
    %v1165 = vmul.f32 %v269, %v988
    %v1166 = vmul.f32 %v270, %v993
    %v1167 = vmul.f32 %v271, %v998
    %v1168 = vmul.f32 %v272, %v1003
    %v1169 = vmul.f32 %v273, %v1008
    %v1170 = vmul.f32 %v274, %v1013
    %v1171 = vmul.f32 %v275, %v1018
    %v1172 = vmul.f32 %v276, %v1023
    %v1173 = vmul.f32 %v277, %v1028
    %v1174 = vmul.f32 %v278, %v1033
    %v1175 = vmul.f32 %v279, %v1038
    %v1176 = vmul.f32 %v280, %v1043
    %v1177 = vmul.f32 %v281, %v1048
    %v1178 = vld [vmem:[%s3] sm:$0xff]
    %v1179 = vld [vmem:[%s3 + $0x8] sm:$0xff]
    %v1180 = vld [vmem:[%s3 + $0x10] sm:$0xff]
    %v1181 = vld [vmem:[%s3 + $0x18] sm:$0xff]
    %v1182 = vld [vmem:[%s3 + $0x20] sm:$0xff]
    %v1183 = vld [vmem:[%s3 + $0x28] sm:$0xff]
    %v1184 = vld [vmem:[%s3 + $0x30] sm:$0xff]
    %v1185 = vld [vmem:[%s3 + $0x38] sm:$0xff]
    %v1186 = vld [vmem:[%s3 + $0x40] sm:$0xff]
    %v1187 = vld [vmem:[%s3 + $0x48] sm:$0xff]
    %v1188 = vld [vmem:[%s3 + $0x50] sm:$0xff]
    %v1189 = vld [vmem:[%s3 + $0x58] sm:$0xff]
    %v1190 = vld [vmem:[%s3 + $0x60] sm:$0xff]
    %v1191 = vld [vmem:[%s3 + $0x68] sm:$0xff]
    %v1192 = vld [vmem:[%s3 + $0x70] sm:$0xff]
    %v1193 = vld [vmem:[%s3 + $0x78] sm:$0xff]
    %v1194 = vld [vmem:[%s3 + $0x80] sm:$0xff]
    %v1195 = vld [vmem:[%s3 + $0x88] sm:$0xff]
    %v1196 = vld [vmem:[%s3 + $0x90] sm:$0xff]
    %v1197 = vld [vmem:[%s3 + $0x98] sm:$0xff]
    %v1198 = vld [vmem:[%s3 + $0xa0] sm:$0xff]
    %v1199 = vld [vmem:[%s3 + $0xa8] sm:$0xff]
    %v1200 = vld [vmem:[%s3 + $0xb0] sm:$0xff]
    %v1201 = vld [vmem:[%s3 + $0xb8] sm:$0xff]
    %v1202 = vld [vmem:[%s3 + $0xc0] sm:$0xff]
    %v1203 = vld [vmem:[%s3 + $0xc8] sm:$0xff]
    %v1204 = vld [vmem:[%s3 + $0xd0] sm:$0xff]
    %v1205 = vld [vmem:[%s3 + $0xd8] sm:$0xff]
    %v1206 = vld [vmem:[%s3 + $0xe0] sm:$0xff]
    %v1207 = vld [vmem:[%s3 + $0xe8] sm:$0xff]
    %v1208 = vld [vmem:[%s3 + $0xf0] sm:$0xff]
    %v1209 = vld [vmem:[%s3 + $0xf8] sm:$0xff]
    %v1210 = vld [vmem:[%s3 + $0x100] sm:$0xff]
    %v1211 = vld [vmem:[%s3 + $0x108] sm:$0xff]
    %v1212 = vld [vmem:[%s3 + $0x110] sm:$0xff]
    %v1213 = vld [vmem:[%s3 + $0x118] sm:$0xff]
    %v1214 = vld [vmem:[%s3 + $0x120] sm:$0xff]
    %v1215 = vld [vmem:[%s3 + $0x128] sm:$0xff]
    %v1216 = vld [vmem:[%s3 + $0x130] sm:$0xff]
    %v1217 = vld [vmem:[%s3 + $0x138] sm:$0xff]
    %v1218 = vld [vmem:[%s3 + $0x140] sm:$0xff]
    %v1219 = vld [vmem:[%s3 + $0x148] sm:$0xff]
    %v1220 = vld [vmem:[%s3 + $0x150] sm:$0xff]
    %v1221 = vld [vmem:[%s3 + $0x158] sm:$0xff]
    %v1222 = vld [vmem:[%s3 + $0x160] sm:$0xff]
    %v1223 = vld [vmem:[%s3 + $0x168] sm:$0xff]
    %v1224 = vld [vmem:[%s3 + $0x170] sm:$0xff]
    %v1225 = vld [vmem:[%s3 + $0x178] sm:$0xff]
    %v1226 = vld [vmem:[%s3 + $0x180] sm:$0xff]
    %v1227 = vld [vmem:[%s3 + $0x188] sm:$0xff]
    %v1228 = vld [vmem:[%s3 + $0x190] sm:$0xff]
    %v1229 = vld [vmem:[%s3 + $0x198] sm:$0xff]
    %v1230 = vld [vmem:[%s3 + $0x1a0] sm:$0xff]
    %v1231 = vld [vmem:[%s3 + $0x1a8] sm:$0xff]
    %v1232 = vld [vmem:[%s3 + $0x1b0] sm:$0xff]
    %v1233 = vld [vmem:[%s3 + $0x1b8] sm:$0xff]
    %v1234 = vld [vmem:[%s3 + $0x1c0] sm:$0xff]
    %v1235 = vld [vmem:[%s3 + $0x1c8] sm:$0xff]
    %v1236 = vld [vmem:[%s3 + $0x1d0] sm:$0xff]
    %v1237 = vld [vmem:[%s3 + $0x1d8] sm:$0xff]
    %v1238 = vld [vmem:[%s3 + $0x1e0] sm:$0xff]
    %v1239 = vld [vmem:[%s3 + $0x1e8] sm:$0xff]
    %v1240 = vld [vmem:[%s3 + $0x1f0] sm:$0xff]
    %v1241 = vld [vmem:[%s3 + $0x1f8] sm:$0xff]
    %v1242 = vld [vmem:[%s3 + $0x200] sm:$0xff]
    %v1243 = vld [vmem:[%s3 + $0x208] sm:$0xff]
    %v1244 = vld [vmem:[%s3 + $0x210] sm:$0xff]
    %v1245 = vld [vmem:[%s3 + $0x218] sm:$0xff]
    %v1246 = vld [vmem:[%s3 + $0x220] sm:$0xff]
    %v1247 = vld [vmem:[%s3 + $0x228] sm:$0xff]
    %v1248 = vld [vmem:[%s3 + $0x230] sm:$0xff]
    %v1249 = vld [vmem:[%s3 + $0x238] sm:$0xff]
    %v1250 = vld [vmem:[%s3 + $0x240] sm:$0xff]
    %v1251 = vld [vmem:[%s3 + $0x248] sm:$0xff]
    %v1252 = vld [vmem:[%s3 + $0x250] sm:$0xff]
    %v1253 = vld [vmem:[%s3 + $0x258] sm:$0xff]
    %v1254 = vld [vmem:[%s3 + $0x260] sm:$0xff]
    %v1255 = vld [vmem:[%s3 + $0x268] sm:$0xff]
    %v1256 = vld [vmem:[%s3 + $0x270] sm:$0xff]
    %v1257 = vld [vmem:[%s3 + $0x278] sm:$0xff]
    %v1258 = vld [vmem:[%s3 + $0x280] sm:$0xff]
    %v1259 = vld [vmem:[%s3 + $0x288] sm:$0xff]
    %v1260 = vld [vmem:[%s3 + $0x290] sm:$0xff]
    %v1261 = vld [vmem:[%s3 + $0x298] sm:$0xff]
    %v1262 = vld [vmem:[%s3 + $0x2a0] sm:$0xff]
    %v1263 = vld [vmem:[%s3 + $0x2a8] sm:$0xff]
    %v1264 = vld [vmem:[%s3 + $0x2b0] sm:$0xff]
    %v1265 = vld [vmem:[%s3 + $0x2b8] sm:$0xff]
    %v1266 = vld [vmem:[%s3 + $0x2c0] sm:$0xff]
    %v1267 = vld [vmem:[%s3 + $0x2c8] sm:$0xff]
    %v1268 = vld [vmem:[%s3 + $0x2d0] sm:$0xff]
    %v1269 = vld [vmem:[%s3 + $0x2d8] sm:$0xff]
    %v1270 = vld [vmem:[%s3 + $0x2e0] sm:$0xff]
    %v1271 = vld [vmem:[%s3 + $0x2e8] sm:$0xff]
    %v1272 = vld [vmem:[%s3 + $0x2f0] sm:$0xff]
    %v1273 = vld [vmem:[%s3 + $0x2f8] sm:$0xff]
    %v1274 = vld [vmem:[%s3 + $0x300] sm:$0xff]
    %v1275 = vld [vmem:[%s3 + $0x308] sm:$0xff]
    %v1276 = vld [vmem:[%s3 + $0x310] sm:$0xff]
    %v1277 = vld [vmem:[%s3 + $0x318] sm:$0xff]
    %v1278 = vld [vmem:[%s3 + $0x320] sm:$0xff]
    %v1279 = vld [vmem:[%s3 + $0x328] sm:$0xff]
    %v1280 = vld [vmem:[%s3 + $0x330] sm:$0xff]
    %v1281 = vld [vmem:[%s3 + $0x338] sm:$0xff]
    %v1282 = vld [vmem:[%s3 + $0x340] sm:$0xff]
    %v1283 = vld [vmem:[%s3 + $0x348] sm:$0xff]
    %v1284 = vld [vmem:[%s3 + $0x350] sm:$0xff]
    %v1285 = vld [vmem:[%s3 + $0x358] sm:$0xff]
    %v1286 = vld [vmem:[%s3 + $0x360] sm:$0xff]
    %v1287 = vld [vmem:[%s3 + $0x368] sm:$0xff]
    %v1288 = vld [vmem:[%s3 + $0x370] sm:$0xff]
    %v1289 = vld [vmem:[%s3 + $0x378] sm:$0xff]
    %v1290 = vld [vmem:[%s3 + $0x380] sm:$0xff]
    %v1291 = vld [vmem:[%s3 + $0x388] sm:$0xff]
    %v1292 = vld [vmem:[%s3 + $0x390] sm:$0xff]
    %v1293 = vld [vmem:[%s3 + $0x398] sm:$0xff]
    %v1294 = vld [vmem:[%s3 + $0x3a0] sm:$0xff]
    %v1295 = vld [vmem:[%s3 + $0x3a8] sm:$0xff]
    %v1296 = vld [vmem:[%s3 + $0x3b0] sm:$0xff]
    %v1297 = vld [vmem:[%s3 + $0x3b8] sm:$0xff]
    %v1298 = vld [vmem:[%s3 + $0x3c0] sm:$0xff]
    %v1299 = vld [vmem:[%s3 + $0x3c8] sm:$0xff]
    %v1300 = vld [vmem:[%s3 + $0x3d0] sm:$0xff]
    %v1301 = vld [vmem:[%s3 + $0x3d8] sm:$0xff]
    %v1302 = vld [vmem:[%s3 + $0x3e0] sm:$0xff]
    %v1303 = vld [vmem:[%s3 + $0x3e8] sm:$0xff]
    %v1304 = vld [vmem:[%s3 + $0x3f0] sm:$0xff]
    %v1305 = vld [vmem:[%s3 + $0x3f8] sm:$0xff]
    %1307 = vset.pattern.permute.xlu0 0
    %1308 = vperm.xlu0 %1307, %v1178
    %v1309 = vpop.permute.xlu0 %1308
    %1312 = vset.pattern.permute.xlu0 0
    %1313 = vperm.xlu0 %1312, %v1179
    %v1314 = vpop.permute.xlu0 %1313
    %1317 = vset.pattern.permute.xlu0 0
    %1318 = vperm.xlu0 %1317, %v1180
    %v1319 = vpop.permute.xlu0 %1318
    %1322 = vset.pattern.permute.xlu0 0
    %1323 = vperm.xlu0 %1322, %v1181
    %v1324 = vpop.permute.xlu0 %1323
    %1327 = vset.pattern.permute.xlu0 0
    %1328 = vperm.xlu0 %1327, %v1182
    %v1329 = vpop.permute.xlu0 %1328
    %1332 = vset.pattern.permute.xlu0 0
    %1333 = vperm.xlu0 %1332, %v1183
    %v1334 = vpop.permute.xlu0 %1333
    %1337 = vset.pattern.permute.xlu0 0
    %1338 = vperm.xlu0 %1337, %v1184
    %v1339 = vpop.permute.xlu0 %1338
    %1342 = vset.pattern.permute.xlu0 0
    %1343 = vperm.xlu0 %1342, %v1185
    %v1344 = vpop.permute.xlu0 %1343
    %1347 = vset.pattern.permute.xlu0 0
    %1348 = vperm.xlu0 %1347, %v1186
    %v1349 = vpop.permute.xlu0 %1348
    %1352 = vset.pattern.permute.xlu0 0
    %1353 = vperm.xlu0 %1352, %v1187
    %v1354 = vpop.permute.xlu0 %1353
    %1357 = vset.pattern.permute.xlu0 0
    %1358 = vperm.xlu0 %1357, %v1188
    %v1359 = vpop.permute.xlu0 %1358
    %1362 = vset.pattern.permute.xlu0 0
    %1363 = vperm.xlu0 %1362, %v1189
    %v1364 = vpop.permute.xlu0 %1363
    %1367 = vset.pattern.permute.xlu0 0
    %1368 = vperm.xlu0 %1367, %v1190
    %v1369 = vpop.permute.xlu0 %1368
    %1372 = vset.pattern.permute.xlu0 0
    %1373 = vperm.xlu0 %1372, %v1191
    %v1374 = vpop.permute.xlu0 %1373
    %1377 = vset.pattern.permute.xlu0 0
    %1378 = vperm.xlu0 %1377, %v1192
    %v1379 = vpop.permute.xlu0 %1378
    %1382 = vset.pattern.permute.xlu0 0
    %1383 = vperm.xlu0 %1382, %v1193
    %v1384 = vpop.permute.xlu0 %1383
    %1387 = vset.pattern.permute.xlu0 0
    %1388 = vperm.xlu0 %1387, %v1194
    %v1389 = vpop.permute.xlu0 %1388
    %1392 = vset.pattern.permute.xlu0 0
    %1393 = vperm.xlu0 %1392, %v1195
    %v1394 = vpop.permute.xlu0 %1393
    %1397 = vset.pattern.permute.xlu0 0
    %1398 = vperm.xlu0 %1397, %v1196
    %v1399 = vpop.permute.xlu0 %1398
    %1402 = vset.pattern.permute.xlu0 0
    %1403 = vperm.xlu0 %1402, %v1197
    %v1404 = vpop.permute.xlu0 %1403
    %1407 = vset.pattern.permute.xlu0 0
    %1408 = vperm.xlu0 %1407, %v1198
    %v1409 = vpop.permute.xlu0 %1408
    %1412 = vset.pattern.permute.xlu0 0
    %1413 = vperm.xlu0 %1412, %v1199
    %v1414 = vpop.permute.xlu0 %1413
    %1417 = vset.pattern.permute.xlu0 0
    %1418 = vperm.xlu0 %1417, %v1200
    %v1419 = vpop.permute.xlu0 %1418
    %1422 = vset.pattern.permute.xlu0 0
    %1423 = vperm.xlu0 %1422, %v1201
    %v1424 = vpop.permute.xlu0 %1423
    %1427 = vset.pattern.permute.xlu0 0
    %1428 = vperm.xlu0 %1427, %v1202
    %v1429 = vpop.permute.xlu0 %1428
    %1432 = vset.pattern.permute.xlu0 0
    %1433 = vperm.xlu0 %1432, %v1203
    %v1434 = vpop.permute.xlu0 %1433
    %1437 = vset.pattern.permute.xlu0 0
    %1438 = vperm.xlu0 %1437, %v1204
    %v1439 = vpop.permute.xlu0 %1438
    %1442 = vset.pattern.permute.xlu0 0
    %1443 = vperm.xlu0 %1442, %v1205
    %v1444 = vpop.permute.xlu0 %1443
    %1447 = vset.pattern.permute.xlu0 0
    %1448 = vperm.xlu0 %1447, %v1206
    %v1449 = vpop.permute.xlu0 %1448
    %1452 = vset.pattern.permute.xlu0 0
    %1453 = vperm.xlu0 %1452, %v1207
    %v1454 = vpop.permute.xlu0 %1453
    %1457 = vset.pattern.permute.xlu0 0
    %1458 = vperm.xlu0 %1457, %v1208
    %v1459 = vpop.permute.xlu0 %1458
    %1462 = vset.pattern.permute.xlu0 0
    %1463 = vperm.xlu0 %1462, %v1209
    %v1464 = vpop.permute.xlu0 %1463
    %1467 = vset.pattern.permute.xlu0 0
    %1468 = vperm.xlu0 %1467, %v1210
    %v1469 = vpop.permute.xlu0 %1468
    %1472 = vset.pattern.permute.xlu0 0
    %1473 = vperm.xlu0 %1472, %v1211
    %v1474 = vpop.permute.xlu0 %1473
    %1477 = vset.pattern.permute.xlu0 0
    %1478 = vperm.xlu0 %1477, %v1212
    %v1479 = vpop.permute.xlu0 %1478
    %1482 = vset.pattern.permute.xlu0 0
    %1483 = vperm.xlu0 %1482, %v1213
    %v1484 = vpop.permute.xlu0 %1483
    %1487 = vset.pattern.permute.xlu0 0
    %1488 = vperm.xlu0 %1487, %v1214
    %v1489 = vpop.permute.xlu0 %1488
    %1492 = vset.pattern.permute.xlu0 0
    %1493 = vperm.xlu0 %1492, %v1215
    %v1494 = vpop.permute.xlu0 %1493
    %1497 = vset.pattern.permute.xlu0 0
    %1498 = vperm.xlu0 %1497, %v1216
    %v1499 = vpop.permute.xlu0 %1498
    %1502 = vset.pattern.permute.xlu0 0
    %1503 = vperm.xlu0 %1502, %v1217
    %v1504 = vpop.permute.xlu0 %1503
    %1507 = vset.pattern.permute.xlu0 0
    %1508 = vperm.xlu0 %1507, %v1218
    %v1509 = vpop.permute.xlu0 %1508
    %1512 = vset.pattern.permute.xlu0 0
    %1513 = vperm.xlu0 %1512, %v1219
    %v1514 = vpop.permute.xlu0 %1513
    %1517 = vset.pattern.permute.xlu0 0
    %1518 = vperm.xlu0 %1517, %v1220
    %v1519 = vpop.permute.xlu0 %1518
    %1522 = vset.pattern.permute.xlu0 0
    %1523 = vperm.xlu0 %1522, %v1221
    %v1524 = vpop.permute.xlu0 %1523
    %1527 = vset.pattern.permute.xlu0 0
    %1528 = vperm.xlu0 %1527, %v1222
    %v1529 = vpop.permute.xlu0 %1528
    %1532 = vset.pattern.permute.xlu0 0
    %1533 = vperm.xlu0 %1532, %v1223
    %v1534 = vpop.permute.xlu0 %1533
    %1537 = vset.pattern.permute.xlu0 0
    %1538 = vperm.xlu0 %1537, %v1224
    %v1539 = vpop.permute.xlu0 %1538
    %1542 = vset.pattern.permute.xlu0 0
    %1543 = vperm.xlu0 %1542, %v1225
    %v1544 = vpop.permute.xlu0 %1543
    %1547 = vset.pattern.permute.xlu0 0
    %1548 = vperm.xlu0 %1547, %v1226
    %v1549 = vpop.permute.xlu0 %1548
    %1552 = vset.pattern.permute.xlu0 0
    %1553 = vperm.xlu0 %1552, %v1227
    %v1554 = vpop.permute.xlu0 %1553
    %1557 = vset.pattern.permute.xlu0 0
    %1558 = vperm.xlu0 %1557, %v1228
    %v1559 = vpop.permute.xlu0 %1558
    %1562 = vset.pattern.permute.xlu0 0
    %1563 = vperm.xlu0 %1562, %v1229
    %v1564 = vpop.permute.xlu0 %1563
    %1567 = vset.pattern.permute.xlu0 0
    %1568 = vperm.xlu0 %1567, %v1230
    %v1569 = vpop.permute.xlu0 %1568
    %1572 = vset.pattern.permute.xlu0 0
    %1573 = vperm.xlu0 %1572, %v1231
    %v1574 = vpop.permute.xlu0 %1573
    %1577 = vset.pattern.permute.xlu0 0
    %1578 = vperm.xlu0 %1577, %v1232
    %v1579 = vpop.permute.xlu0 %1578
    %1582 = vset.pattern.permute.xlu0 0
    %1583 = vperm.xlu0 %1582, %v1233
    %v1584 = vpop.permute.xlu0 %1583
    %1587 = vset.pattern.permute.xlu0 0
    %1588 = vperm.xlu0 %1587, %v1234
    %v1589 = vpop.permute.xlu0 %1588
    %1592 = vset.pattern.permute.xlu0 0
    %1593 = vperm.xlu0 %1592, %v1235
    %v1594 = vpop.permute.xlu0 %1593
    %1597 = vset.pattern.permute.xlu0 0
    %1598 = vperm.xlu0 %1597, %v1236
    %v1599 = vpop.permute.xlu0 %1598
    %1602 = vset.pattern.permute.xlu0 0
    %1603 = vperm.xlu0 %1602, %v1237
    %v1604 = vpop.permute.xlu0 %1603
    %1607 = vset.pattern.permute.xlu0 0
    %1608 = vperm.xlu0 %1607, %v1238
    %v1609 = vpop.permute.xlu0 %1608
    %1612 = vset.pattern.permute.xlu0 0
    %1613 = vperm.xlu0 %1612, %v1239
    %v1614 = vpop.permute.xlu0 %1613
    %1617 = vset.pattern.permute.xlu0 0
    %1618 = vperm.xlu0 %1617, %v1240
    %v1619 = vpop.permute.xlu0 %1618
    %1622 = vset.pattern.permute.xlu0 0
    %1623 = vperm.xlu0 %1622, %v1241
    %v1624 = vpop.permute.xlu0 %1623
    %1627 = vset.pattern.permute.xlu0 0
    %1628 = vperm.xlu0 %1627, %v1242
    %v1629 = vpop.permute.xlu0 %1628
    %1632 = vset.pattern.permute.xlu0 0
    %1633 = vperm.xlu0 %1632, %v1243
    %v1634 = vpop.permute.xlu0 %1633
    %1637 = vset.pattern.permute.xlu0 0
    %1638 = vperm.xlu0 %1637, %v1244
    %v1639 = vpop.permute.xlu0 %1638
    %1642 = vset.pattern.permute.xlu0 0
    %1643 = vperm.xlu0 %1642, %v1245
    %v1644 = vpop.permute.xlu0 %1643
    %1647 = vset.pattern.permute.xlu0 0
    %1648 = vperm.xlu0 %1647, %v1246
    %v1649 = vpop.permute.xlu0 %1648
    %1652 = vset.pattern.permute.xlu0 0
    %1653 = vperm.xlu0 %1652, %v1247
    %v1654 = vpop.permute.xlu0 %1653
    %1657 = vset.pattern.permute.xlu0 0
    %1658 = vperm.xlu0 %1657, %v1248
    %v1659 = vpop.permute.xlu0 %1658
    %1662 = vset.pattern.permute.xlu0 0
    %1663 = vperm.xlu0 %1662, %v1249
    %v1664 = vpop.permute.xlu0 %1663
    %1667 = vset.pattern.permute.xlu0 0
    %1668 = vperm.xlu0 %1667, %v1250
    %v1669 = vpop.permute.xlu0 %1668
    %1672 = vset.pattern.permute.xlu0 0
    %1673 = vperm.xlu0 %1672, %v1251
    %v1674 = vpop.permute.xlu0 %1673
    %1677 = vset.pattern.permute.xlu0 0
    %1678 = vperm.xlu0 %1677, %v1252
    %v1679 = vpop.permute.xlu0 %1678
    %1682 = vset.pattern.permute.xlu0 0
    %1683 = vperm.xlu0 %1682, %v1253
    %v1684 = vpop.permute.xlu0 %1683
    %1687 = vset.pattern.permute.xlu0 0
    %1688 = vperm.xlu0 %1687, %v1254
    %v1689 = vpop.permute.xlu0 %1688
    %1692 = vset.pattern.permute.xlu0 0
    %1693 = vperm.xlu0 %1692, %v1255
    %v1694 = vpop.permute.xlu0 %1693
    %1697 = vset.pattern.permute.xlu0 0
    %1698 = vperm.xlu0 %1697, %v1256
    %v1699 = vpop.permute.xlu0 %1698
    %1702 = vset.pattern.permute.xlu0 0
    %1703 = vperm.xlu0 %1702, %v1257
    %v1704 = vpop.permute.xlu0 %1703
    %1707 = vset.pattern.permute.xlu0 0
    %1708 = vperm.xlu0 %1707, %v1258
    %v1709 = vpop.permute.xlu0 %1708
    %1712 = vset.pattern.permute.xlu0 0
    %1713 = vperm.xlu0 %1712, %v1259
    %v1714 = vpop.permute.xlu0 %1713
    %1717 = vset.pattern.permute.xlu0 0
    %1718 = vperm.xlu0 %1717, %v1260
    %v1719 = vpop.permute.xlu0 %1718
    %1722 = vset.pattern.permute.xlu0 0
    %1723 = vperm.xlu0 %1722, %v1261
    %v1724 = vpop.permute.xlu0 %1723
    %1727 = vset.pattern.permute.xlu0 0
    %1728 = vperm.xlu0 %1727, %v1262
    %v1729 = vpop.permute.xlu0 %1728
    %1732 = vset.pattern.permute.xlu0 0
    %1733 = vperm.xlu0 %1732, %v1263
    %v1734 = vpop.permute.xlu0 %1733
    %1737 = vset.pattern.permute.xlu0 0
    %1738 = vperm.xlu0 %1737, %v1264
    %v1739 = vpop.permute.xlu0 %1738
    %1742 = vset.pattern.permute.xlu0 0
    %1743 = vperm.xlu0 %1742, %v1265
    %v1744 = vpop.permute.xlu0 %1743
    %1747 = vset.pattern.permute.xlu0 0
    %1748 = vperm.xlu0 %1747, %v1266
    %v1749 = vpop.permute.xlu0 %1748
    %1752 = vset.pattern.permute.xlu0 0
    %1753 = vperm.xlu0 %1752, %v1267
    %v1754 = vpop.permute.xlu0 %1753
    %1757 = vset.pattern.permute.xlu0 0
    %1758 = vperm.xlu0 %1757, %v1268
    %v1759 = vpop.permute.xlu0 %1758
    %1762 = vset.pattern.permute.xlu0 0
    %1763 = vperm.xlu0 %1762, %v1269
    %v1764 = vpop.permute.xlu0 %1763
    %1767 = vset.pattern.permute.xlu0 0
    %1768 = vperm.xlu0 %1767, %v1270
    %v1769 = vpop.permute.xlu0 %1768
    %1772 = vset.pattern.permute.xlu0 0
    %1773 = vperm.xlu0 %1772, %v1271
    %v1774 = vpop.permute.xlu0 %1773
    %1777 = vset.pattern.permute.xlu0 0
    %1778 = vperm.xlu0 %1777, %v1272
    %v1779 = vpop.permute.xlu0 %1778
    %1782 = vset.pattern.permute.xlu0 0
    %1783 = vperm.xlu0 %1782, %v1273
    %v1784 = vpop.permute.xlu0 %1783
    %1787 = vset.pattern.permute.xlu0 0
    %1788 = vperm.xlu0 %1787, %v1274
    %v1789 = vpop.permute.xlu0 %1788
    %1792 = vset.pattern.permute.xlu0 0
    %1793 = vperm.xlu0 %1792, %v1275
    %v1794 = vpop.permute.xlu0 %1793
    %1797 = vset.pattern.permute.xlu0 0
    %1798 = vperm.xlu0 %1797, %v1276
    %v1799 = vpop.permute.xlu0 %1798
    %1802 = vset.pattern.permute.xlu0 0
    %1803 = vperm.xlu0 %1802, %v1277
    %v1804 = vpop.permute.xlu0 %1803
    %1807 = vset.pattern.permute.xlu0 0
    %1808 = vperm.xlu0 %1807, %v1278
    %v1809 = vpop.permute.xlu0 %1808
    %1812 = vset.pattern.permute.xlu0 0
    %1813 = vperm.xlu0 %1812, %v1279
    %v1814 = vpop.permute.xlu0 %1813
    %1817 = vset.pattern.permute.xlu0 0
    %1818 = vperm.xlu0 %1817, %v1280
    %v1819 = vpop.permute.xlu0 %1818
    %1822 = vset.pattern.permute.xlu0 0
    %1823 = vperm.xlu0 %1822, %v1281
    %v1824 = vpop.permute.xlu0 %1823
    %1827 = vset.pattern.permute.xlu0 0
    %1828 = vperm.xlu0 %1827, %v1282
    %v1829 = vpop.permute.xlu0 %1828
    %1832 = vset.pattern.permute.xlu0 0
    %1833 = vperm.xlu0 %1832, %v1283
    %v1834 = vpop.permute.xlu0 %1833
    %1837 = vset.pattern.permute.xlu0 0
    %1838 = vperm.xlu0 %1837, %v1284
    %v1839 = vpop.permute.xlu0 %1838
    %1842 = vset.pattern.permute.xlu0 0
    %1843 = vperm.xlu0 %1842, %v1285
    %v1844 = vpop.permute.xlu0 %1843
    %1847 = vset.pattern.permute.xlu0 0
    %1848 = vperm.xlu0 %1847, %v1286
    %v1849 = vpop.permute.xlu0 %1848
    %1852 = vset.pattern.permute.xlu0 0
    %1853 = vperm.xlu0 %1852, %v1287
    %v1854 = vpop.permute.xlu0 %1853
    %1857 = vset.pattern.permute.xlu0 0
    %1858 = vperm.xlu0 %1857, %v1288
    %v1859 = vpop.permute.xlu0 %1858
    %1862 = vset.pattern.permute.xlu0 0
    %1863 = vperm.xlu0 %1862, %v1289
    %v1864 = vpop.permute.xlu0 %1863
    %1867 = vset.pattern.permute.xlu0 0
    %1868 = vperm.xlu0 %1867, %v1290
    %v1869 = vpop.permute.xlu0 %1868
    %1872 = vset.pattern.permute.xlu0 0
    %1873 = vperm.xlu0 %1872, %v1291
    %v1874 = vpop.permute.xlu0 %1873
    %1877 = vset.pattern.permute.xlu0 0
    %1878 = vperm.xlu0 %1877, %v1292
    %v1879 = vpop.permute.xlu0 %1878
    %1882 = vset.pattern.permute.xlu0 0
    %1883 = vperm.xlu0 %1882, %v1293
    %v1884 = vpop.permute.xlu0 %1883
    %1887 = vset.pattern.permute.xlu0 0
    %1888 = vperm.xlu0 %1887, %v1294
    %v1889 = vpop.permute.xlu0 %1888
    %1892 = vset.pattern.permute.xlu0 0
    %1893 = vperm.xlu0 %1892, %v1295
    %v1894 = vpop.permute.xlu0 %1893
    %1897 = vset.pattern.permute.xlu0 0
    %1898 = vperm.xlu0 %1897, %v1296
    %v1899 = vpop.permute.xlu0 %1898
    %1902 = vset.pattern.permute.xlu0 0
    %1903 = vperm.xlu0 %1902, %v1297
    %v1904 = vpop.permute.xlu0 %1903
    %1907 = vset.pattern.permute.xlu0 0
    %1908 = vperm.xlu0 %1907, %v1298
    %v1909 = vpop.permute.xlu0 %1908
    %1912 = vset.pattern.permute.xlu0 0
    %1913 = vperm.xlu0 %1912, %v1299
    %v1914 = vpop.permute.xlu0 %1913
    %1917 = vset.pattern.permute.xlu0 0
    %1918 = vperm.xlu0 %1917, %v1300
    %v1919 = vpop.permute.xlu0 %1918
    %1922 = vset.pattern.permute.xlu0 0
    %1923 = vperm.xlu0 %1922, %v1301
    %v1924 = vpop.permute.xlu0 %1923
    %1927 = vset.pattern.permute.xlu0 0
    %1928 = vperm.xlu0 %1927, %v1302
    %v1929 = vpop.permute.xlu0 %1928
    %1932 = vset.pattern.permute.xlu0 0
    %1933 = vperm.xlu0 %1932, %v1303
    %v1934 = vpop.permute.xlu0 %1933
    %1937 = vset.pattern.permute.xlu0 0
    %1938 = vperm.xlu0 %1937, %v1304
    %v1939 = vpop.permute.xlu0 %1938
    %1942 = vset.pattern.permute.xlu0 0
    %1943 = vperm.xlu0 %1942, %v1305
    %v1944 = vpop.permute.xlu0 %1943
    %v1946 = vadd.f32 %v1050, %v1309
    %v1947 = vadd.f32 %v1051, %v1314
    %v1948 = vadd.f32 %v1052, %v1319
    %v1949 = vadd.f32 %v1053, %v1324
    %v1950 = vadd.f32 %v1054, %v1329
    %v1951 = vadd.f32 %v1055, %v1334
    %v1952 = vadd.f32 %v1056, %v1339
    %v1953 = vadd.f32 %v1057, %v1344
    %v1954 = vadd.f32 %v1058, %v1349
    %v1955 = vadd.f32 %v1059, %v1354
    %v1956 = vadd.f32 %v1060, %v1359
    %v1957 = vadd.f32 %v1061, %v1364
    %v1958 = vadd.f32 %v1062, %v1369
    %v1959 = vadd.f32 %v1063, %v1374
    %v1960 = vadd.f32 %v1064, %v1379
    %v1961 = vadd.f32 %v1065, %v1384
    %v1962 = vadd.f32 %v1066, %v1389
    %v1963 = vadd.f32 %v1067, %v1394
    %v1964 = vadd.f32 %v1068, %v1399
    %v1965 = vadd.f32 %v1069, %v1404
    %v1966 = vadd.f32 %v1070, %v1409
    %v1967 = vadd.f32 %v1071, %v1414
    %v1968 = vadd.f32 %v1072, %v1419
    %v1969 = vadd.f32 %v1073, %v1424
    %v1970 = vadd.f32 %v1074, %v1429
    %v1971 = vadd.f32 %v1075, %v1434
    %v1972 = vadd.f32 %v1076, %v1439
    %v1973 = vadd.f32 %v1077, %v1444
    %v1974 = vadd.f32 %v1078, %v1449
    %v1975 = vadd.f32 %v1079, %v1454
    %v1976 = vadd.f32 %v1080, %v1459
    %v1977 = vadd.f32 %v1081, %v1464
    %v1978 = vadd.f32 %v1082, %v1469
    %v1979 = vadd.f32 %v1083, %v1474
    %v1980 = vadd.f32 %v1084, %v1479
    %v1981 = vadd.f32 %v1085, %v1484
    %v1982 = vadd.f32 %v1086, %v1489
    %v1983 = vadd.f32 %v1087, %v1494
    %v1984 = vadd.f32 %v1088, %v1499
    %v1985 = vadd.f32 %v1089, %v1504
    %v1986 = vadd.f32 %v1090, %v1509
    %v1987 = vadd.f32 %v1091, %v1514
    %v1988 = vadd.f32 %v1092, %v1519
    %v1989 = vadd.f32 %v1093, %v1524
    %v1990 = vadd.f32 %v1094, %v1529
    %v1991 = vadd.f32 %v1095, %v1534
    %v1992 = vadd.f32 %v1096, %v1539
    %v1993 = vadd.f32 %v1097, %v1544
    %v1994 = vadd.f32 %v1098, %v1549
    %v1995 = vadd.f32 %v1099, %v1554
    %v1996 = vadd.f32 %v1100, %v1559
    %v1997 = vadd.f32 %v1101, %v1564
    %v1998 = vadd.f32 %v1102, %v1569
    %v1999 = vadd.f32 %v1103, %v1574
    %v2000 = vadd.f32 %v1104, %v1579
    %v2001 = vadd.f32 %v1105, %v1584
    %v2002 = vadd.f32 %v1106, %v1589
    %v2003 = vadd.f32 %v1107, %v1594
    %v2004 = vadd.f32 %v1108, %v1599
    %v2005 = vadd.f32 %v1109, %v1604
    %v2006 = vadd.f32 %v1110, %v1609
    %v2007 = vadd.f32 %v1111, %v1614
    %v2008 = vadd.f32 %v1112, %v1619
    %v2009 = vadd.f32 %v1113, %v1624
    %v2010 = vadd.f32 %v1114, %v1629
    %v2011 = vadd.f32 %v1115, %v1634
    %v2012 = vadd.f32 %v1116, %v1639
    %v2013 = vadd.f32 %v1117, %v1644
    %v2014 = vadd.f32 %v1118, %v1649
    %v2015 = vadd.f32 %v1119, %v1654
    %v2016 = vadd.f32 %v1120, %v1659
    %v2017 = vadd.f32 %v1121, %v1664
    %v2018 = vadd.f32 %v1122, %v1669
    %v2019 = vadd.f32 %v1123, %v1674
    %v2020 = vadd.f32 %v1124, %v1679
    %v2021 = vadd.f32 %v1125, %v1684
    %v2022 = vadd.f32 %v1126, %v1689
    %v2023 = vadd.f32 %v1127, %v1694
    %v2024 = vadd.f32 %v1128, %v1699
    %v2025 = vadd.f32 %v1129, %v1704
    %v2026 = vadd.f32 %v1130, %v1709
    %v2027 = vadd.f32 %v1131, %v1714
    %v2028 = vadd.f32 %v1132, %v1719
    %v2029 = vadd.f32 %v1133, %v1724
    %v2030 = vadd.f32 %v1134, %v1729
    %v2031 = vadd.f32 %v1135, %v1734
    %v2032 = vadd.f32 %v1136, %v1739
    %v2033 = vadd.f32 %v1137, %v1744
    %v2034 = vadd.f32 %v1138, %v1749
    %v2035 = vadd.f32 %v1139, %v1754
    %v2036 = vadd.f32 %v1140, %v1759
    %v2037 = vadd.f32 %v1141, %v1764
    %v2038 = vadd.f32 %v1142, %v1769
    %v2039 = vadd.f32 %v1143, %v1774
    %v2040 = vadd.f32 %v1144, %v1779
    %v2041 = vadd.f32 %v1145, %v1784
    %v2042 = vadd.f32 %v1146, %v1789
    %v2043 = vadd.f32 %v1147, %v1794
    %v2044 = vadd.f32 %v1148, %v1799
    %v2045 = vadd.f32 %v1149, %v1804
    %v2046 = vadd.f32 %v1150, %v1809
    %v2047 = vadd.f32 %v1151, %v1814
    %v2048 = vadd.f32 %v1152, %v1819
    %v2049 = vadd.f32 %v1153, %v1824
    %v2050 = vadd.f32 %v1154, %v1829
    %v2051 = vadd.f32 %v1155, %v1834
    %v2052 = vadd.f32 %v1156, %v1839
    %v2053 = vadd.f32 %v1157, %v1844
    %v2054 = vadd.f32 %v1158, %v1849
    %v2055 = vadd.f32 %v1159, %v1854
    %v2056 = vadd.f32 %v1160, %v1859
    %v2057 = vadd.f32 %v1161, %v1864
    %v2058 = vadd.f32 %v1162, %v1869
    %v2059 = vadd.f32 %v1163, %v1874
    %v2060 = vadd.f32 %v1164, %v1879
    %v2061 = vadd.f32 %v1165, %v1884
    %v2062 = vadd.f32 %v1166, %v1889
    %v2063 = vadd.f32 %v1167, %v1894
    %v2064 = vadd.f32 %v1168, %v1899
    %v2065 = vadd.f32 %v1169, %v1904
    %v2066 = vadd.f32 %v1170, %v1909
    %v2067 = vadd.f32 %v1171, %v1914
    %v2068 = vadd.f32 %v1172, %v1919
    %v2069 = vadd.f32 %v1173, %v1924
    %v2070 = vadd.f32 %v1174, %v1929
    %v2071 = vadd.f32 %v1175, %v1934
    %v2072 = vadd.f32 %v1176, %v1939
    %v2073 = vadd.f32 %v1177, %v1944
    %vm2074 = vcmp.ge.f32.partialorder %v1946, 0.0
    %vm2075 = vcmp.ge.f32.partialorder %v1947, 0.0
    %vm2076 = vcmp.ge.f32.partialorder %v1948, 0.0
    %vm2077 = vcmp.ge.f32.partialorder %v1949, 0.0
    %vm2078 = vcmp.ge.f32.partialorder %v1950, 0.0
    %vm2079 = vcmp.ge.f32.partialorder %v1951, 0.0
    %vm2080 = vcmp.ge.f32.partialorder %v1952, 0.0
    %vm2081 = vcmp.ge.f32.partialorder %v1953, 0.0
    %vm2082 = vcmp.ge.f32.partialorder %v1954, 0.0
    %vm2083 = vcmp.ge.f32.partialorder %v1955, 0.0
    %vm2084 = vcmp.ge.f32.partialorder %v1956, 0.0
    %vm2085 = vcmp.ge.f32.partialorder %v1957, 0.0
    %vm2086 = vcmp.ge.f32.partialorder %v1958, 0.0
    %vm2087 = vcmp.ge.f32.partialorder %v1959, 0.0
    %vm2088 = vcmp.ge.f32.partialorder %v1960, 0.0
    %vm2089 = vcmp.ge.f32.partialorder %v1961, 0.0
    %vm2090 = vcmp.ge.f32.partialorder %v1962, 0.0
    %vm2091 = vcmp.ge.f32.partialorder %v1963, 0.0
    %vm2092 = vcmp.ge.f32.partialorder %v1964, 0.0
    %vm2093 = vcmp.ge.f32.partialorder %v1965, 0.0
    %vm2094 = vcmp.ge.f32.partialorder %v1966, 0.0
    %vm2095 = vcmp.ge.f32.partialorder %v1967, 0.0
    %vm2096 = vcmp.ge.f32.partialorder %v1968, 0.0
    %vm2097 = vcmp.ge.f32.partialorder %v1969, 0.0
    %vm2098 = vcmp.ge.f32.partialorder %v1970, 0.0
    %vm2099 = vcmp.ge.f32.partialorder %v1971, 0.0
    %vm2100 = vcmp.ge.f32.partialorder %v1972, 0.0
    %vm2101 = vcmp.ge.f32.partialorder %v1973, 0.0
    %vm2102 = vcmp.ge.f32.partialorder %v1974, 0.0
    %vm2103 = vcmp.ge.f32.partialorder %v1975, 0.0
    %vm2104 = vcmp.ge.f32.partialorder %v1976, 0.0
    %vm2105 = vcmp.ge.f32.partialorder %v1977, 0.0
    %vm2106 = vcmp.ge.f32.partialorder %v1978, 0.0
    %vm2107 = vcmp.ge.f32.partialorder %v1979, 0.0
    %vm2108 = vcmp.ge.f32.partialorder %v1980, 0.0
    %vm2109 = vcmp.ge.f32.partialorder %v1981, 0.0
    %vm2110 = vcmp.ge.f32.partialorder %v1982, 0.0
    %vm2111 = vcmp.ge.f32.partialorder %v1983, 0.0
    %vm2112 = vcmp.ge.f32.partialorder %v1984, 0.0
    %vm2113 = vcmp.ge.f32.partialorder %v1985, 0.0
    %vm2114 = vcmp.ge.f32.partialorder %v1986, 0.0
    %vm2115 = vcmp.ge.f32.partialorder %v1987, 0.0
    %vm2116 = vcmp.ge.f32.partialorder %v1988, 0.0
    %vm2117 = vcmp.ge.f32.partialorder %v1989, 0.0
    %vm2118 = vcmp.ge.f32.partialorder %v1990, 0.0
    %vm2119 = vcmp.ge.f32.partialorder %v1991, 0.0
    %vm2120 = vcmp.ge.f32.partialorder %v1992, 0.0
    %vm2121 = vcmp.ge.f32.partialorder %v1993, 0.0
    %vm2122 = vcmp.ge.f32.partialorder %v1994, 0.0
    %vm2123 = vcmp.ge.f32.partialorder %v1995, 0.0
    %vm2124 = vcmp.ge.f32.partialorder %v1996, 0.0
    %vm2125 = vcmp.ge.f32.partialorder %v1997, 0.0
    %vm2126 = vcmp.ge.f32.partialorder %v1998, 0.0
    %vm2127 = vcmp.ge.f32.partialorder %v1999, 0.0
    %vm2128 = vcmp.ge.f32.partialorder %v2000, 0.0
    %vm2129 = vcmp.ge.f32.partialorder %v2001, 0.0
    %vm2130 = vcmp.ge.f32.partialorder %v2002, 0.0
    %vm2131 = vcmp.ge.f32.partialorder %v2003, 0.0
    %vm2132 = vcmp.ge.f32.partialorder %v2004, 0.0
    %vm2133 = vcmp.ge.f32.partialorder %v2005, 0.0
    %vm2134 = vcmp.ge.f32.partialorder %v2006, 0.0
    %vm2135 = vcmp.ge.f32.partialorder %v2007, 0.0
    %vm2136 = vcmp.ge.f32.partialorder %v2008, 0.0
    %vm2137 = vcmp.ge.f32.partialorder %v2009, 0.0
    %vm2138 = vcmp.ge.f32.partialorder %v2010, 0.0
    %vm2139 = vcmp.ge.f32.partialorder %v2011, 0.0
    %vm2140 = vcmp.ge.f32.partialorder %v2012, 0.0
    %vm2141 = vcmp.ge.f32.partialorder %v2013, 0.0
    %vm2142 = vcmp.ge.f32.partialorder %v2014, 0.0
    %vm2143 = vcmp.ge.f32.partialorder %v2015, 0.0
    %vm2144 = vcmp.ge.f32.partialorder %v2016, 0.0
    %vm2145 = vcmp.ge.f32.partialorder %v2017, 0.0
    %vm2146 = vcmp.ge.f32.partialorder %v2018, 0.0
    %vm2147 = vcmp.ge.f32.partialorder %v2019, 0.0
    %vm2148 = vcmp.ge.f32.partialorder %v2020, 0.0
    %vm2149 = vcmp.ge.f32.partialorder %v2021, 0.0
    %vm2150 = vcmp.ge.f32.partialorder %v2022, 0.0
    %vm2151 = vcmp.ge.f32.partialorder %v2023, 0.0
    %vm2152 = vcmp.ge.f32.partialorder %v2024, 0.0
    %vm2153 = vcmp.ge.f32.partialorder %v2025, 0.0
    %vm2154 = vcmp.ge.f32.partialorder %v2026, 0.0
    %vm2155 = vcmp.ge.f32.partialorder %v2027, 0.0
    %vm2156 = vcmp.ge.f32.partialorder %v2028, 0.0
    %vm2157 = vcmp.ge.f32.partialorder %v2029, 0.0
    %vm2158 = vcmp.ge.f32.partialorder %v2030, 0.0
    %vm2159 = vcmp.ge.f32.partialorder %v2031, 0.0
    %vm2160 = vcmp.ge.f32.partialorder %v2032, 0.0
    %vm2161 = vcmp.ge.f32.partialorder %v2033, 0.0
    %vm2162 = vcmp.ge.f32.partialorder %v2034, 0.0
    %vm2163 = vcmp.ge.f32.partialorder %v2035, 0.0
    %vm2164 = vcmp.ge.f32.partialorder %v2036, 0.0
    %vm2165 = vcmp.ge.f32.partialorder %v2037, 0.0
    %vm2166 = vcmp.ge.f32.partialorder %v2038, 0.0
    %vm2167 = vcmp.ge.f32.partialorder %v2039, 0.0
    %vm2168 = vcmp.ge.f32.partialorder %v2040, 0.0
    %vm2169 = vcmp.ge.f32.partialorder %v2041, 0.0
    %vm2170 = vcmp.ge.f32.partialorder %v2042, 0.0
    %vm2171 = vcmp.ge.f32.partialorder %v2043, 0.0
    %vm2172 = vcmp.ge.f32.partialorder %v2044, 0.0
    %vm2173 = vcmp.ge.f32.partialorder %v2045, 0.0
    %vm2174 = vcmp.ge.f32.partialorder %v2046, 0.0
    %vm2175 = vcmp.ge.f32.partialorder %v2047, 0.0
    %vm2176 = vcmp.ge.f32.partialorder %v2048, 0.0
    %vm2177 = vcmp.ge.f32.partialorder %v2049, 0.0
    %vm2178 = vcmp.ge.f32.partialorder %v2050, 0.0
    %vm2179 = vcmp.ge.f32.partialorder %v2051, 0.0
    %vm2180 = vcmp.ge.f32.partialorder %v2052, 0.0
    %vm2181 = vcmp.ge.f32.partialorder %v2053, 0.0
    %vm2182 = vcmp.ge.f32.partialorder %v2054, 0.0
    %vm2183 = vcmp.ge.f32.partialorder %v2055, 0.0
    %vm2184 = vcmp.ge.f32.partialorder %v2056, 0.0
    %vm2185 = vcmp.ge.f32.partialorder %v2057, 0.0
    %vm2186 = vcmp.ge.f32.partialorder %v2058, 0.0
    %vm2187 = vcmp.ge.f32.partialorder %v2059, 0.0
    %vm2188 = vcmp.ge.f32.partialorder %v2060, 0.0
    %vm2189 = vcmp.ge.f32.partialorder %v2061, 0.0
    %vm2190 = vcmp.ge.f32.partialorder %v2062, 0.0
    %vm2191 = vcmp.ge.f32.partialorder %v2063, 0.0
    %vm2192 = vcmp.ge.f32.partialorder %v2064, 0.0
    %vm2193 = vcmp.ge.f32.partialorder %v2065, 0.0
    %vm2194 = vcmp.ge.f32.partialorder %v2066, 0.0
    %vm2195 = vcmp.ge.f32.partialorder %v2067, 0.0
    %vm2196 = vcmp.ge.f32.partialorder %v2068, 0.0
    %vm2197 = vcmp.ge.f32.partialorder %v2069, 0.0
    %vm2198 = vcmp.ge.f32.partialorder %v2070, 0.0
    %vm2199 = vcmp.ge.f32.partialorder %v2071, 0.0
    %vm2200 = vcmp.ge.f32.partialorder %v2072, 0.0
    %vm2201 = vcmp.ge.f32.partialorder %v2073, 0.0
    %v2202 = vmul.f32 %v1946, 0.2
    %v2203 = vmul.f32 %v1947, 0.2
    %v2204 = vmul.f32 %v1948, 0.2
    %v2205 = vmul.f32 %v1949, 0.2
    %v2206 = vmul.f32 %v1950, 0.2
    %v2207 = vmul.f32 %v1951, 0.2
    %v2208 = vmul.f32 %v1952, 0.2
    %v2209 = vmul.f32 %v1953, 0.2
    %v2210 = vmul.f32 %v1954, 0.2
    %v2211 = vmul.f32 %v1955, 0.2
    %v2212 = vmul.f32 %v1956, 0.2
    %v2213 = vmul.f32 %v1957, 0.2
    %v2214 = vmul.f32 %v1958, 0.2
    %v2215 = vmul.f32 %v1959, 0.2
    %v2216 = vmul.f32 %v1960, 0.2
    %v2217 = vmul.f32 %v1961, 0.2
    %v2218 = vmul.f32 %v1962, 0.2
    %v2219 = vmul.f32 %v1963, 0.2
    %v2220 = vmul.f32 %v1964, 0.2
    %v2221 = vmul.f32 %v1965, 0.2
    %v2222 = vmul.f32 %v1966, 0.2
    %v2223 = vmul.f32 %v1967, 0.2
    %v2224 = vmul.f32 %v1968, 0.2
    %v2225 = vmul.f32 %v1969, 0.2
    %v2226 = vmul.f32 %v1970, 0.2
    %v2227 = vmul.f32 %v1971, 0.2
    %v2228 = vmul.f32 %v1972, 0.2
    %v2229 = vmul.f32 %v1973, 0.2
    %v2230 = vmul.f32 %v1974, 0.2
    %v2231 = vmul.f32 %v1975, 0.2
    %v2232 = vmul.f32 %v1976, 0.2
    %v2233 = vmul.f32 %v1977, 0.2
    %v2234 = vmul.f32 %v1978, 0.2
    %v2235 = vmul.f32 %v1979, 0.2
    %v2236 = vmul.f32 %v1980, 0.2
    %v2237 = vmul.f32 %v1981, 0.2
    %v2238 = vmul.f32 %v1982, 0.2
    %v2239 = vmul.f32 %v1983, 0.2
    %v2240 = vmul.f32 %v1984, 0.2
    %v2241 = vmul.f32 %v1985, 0.2
    %v2242 = vmul.f32 %v1986, 0.2
    %v2243 = vmul.f32 %v1987, 0.2
    %v2244 = vmul.f32 %v1988, 0.2
    %v2245 = vmul.f32 %v1989, 0.2
    %v2246 = vmul.f32 %v1990, 0.2
    %v2247 = vmul.f32 %v1991, 0.2
    %v2248 = vmul.f32 %v1992, 0.2
    %v2249 = vmul.f32 %v1993, 0.2
    %v2250 = vmul.f32 %v1994, 0.2
    %v2251 = vmul.f32 %v1995, 0.2
    %v2252 = vmul.f32 %v1996, 0.2
    %v2253 = vmul.f32 %v1997, 0.2
    %v2254 = vmul.f32 %v1998, 0.2
    %v2255 = vmul.f32 %v1999, 0.2
    %v2256 = vmul.f32 %v2000, 0.2
    %v2257 = vmul.f32 %v2001, 0.2
    %v2258 = vmul.f32 %v2002, 0.2
    %v2259 = vmul.f32 %v2003, 0.2
    %v2260 = vmul.f32 %v2004, 0.2
    %v2261 = vmul.f32 %v2005, 0.2
    %v2262 = vmul.f32 %v2006, 0.2
    %v2263 = vmul.f32 %v2007, 0.2
    %v2264 = vmul.f32 %v2008, 0.2
    %v2265 = vmul.f32 %v2009, 0.2
    %v2266 = vmul.f32 %v2010, 0.2
    %v2267 = vmul.f32 %v2011, 0.2
    %v2268 = vmul.f32 %v2012, 0.2
    %v2269 = vmul.f32 %v2013, 0.2
    %v2270 = vmul.f32 %v2014, 0.2
    %v2271 = vmul.f32 %v2015, 0.2
    %v2272 = vmul.f32 %v2016, 0.2
    %v2273 = vmul.f32 %v2017, 0.2
    %v2274 = vmul.f32 %v2018, 0.2
    %v2275 = vmul.f32 %v2019, 0.2
    %v2276 = vmul.f32 %v2020, 0.2
    %v2277 = vmul.f32 %v2021, 0.2
    %v2278 = vmul.f32 %v2022, 0.2
    %v2279 = vmul.f32 %v2023, 0.2
    %v2280 = vmul.f32 %v2024, 0.2
    %v2281 = vmul.f32 %v2025, 0.2
    %v2282 = vmul.f32 %v2026, 0.2
    %v2283 = vmul.f32 %v2027, 0.2
    %v2284 = vmul.f32 %v2028, 0.2
    %v2285 = vmul.f32 %v2029, 0.2
    %v2286 = vmul.f32 %v2030, 0.2
    %v2287 = vmul.f32 %v2031, 0.2
    %v2288 = vmul.f32 %v2032, 0.2
    %v2289 = vmul.f32 %v2033, 0.2
    %v2290 = vmul.f32 %v2034, 0.2
    %v2291 = vmul.f32 %v2035, 0.2
    %v2292 = vmul.f32 %v2036, 0.2
    %v2293 = vmul.f32 %v2037, 0.2
    %v2294 = vmul.f32 %v2038, 0.2
    %v2295 = vmul.f32 %v2039, 0.2
    %v2296 = vmul.f32 %v2040, 0.2
    %v2297 = vmul.f32 %v2041, 0.2
    %v2298 = vmul.f32 %v2042, 0.2
    %v2299 = vmul.f32 %v2043, 0.2
    %v2300 = vmul.f32 %v2044, 0.2
    %v2301 = vmul.f32 %v2045, 0.2
    %v2302 = vmul.f32 %v2046, 0.2
    %v2303 = vmul.f32 %v2047, 0.2
    %v2304 = vmul.f32 %v2048, 0.2
    %v2305 = vmul.f32 %v2049, 0.2
    %v2306 = vmul.f32 %v2050, 0.2
    %v2307 = vmul.f32 %v2051, 0.2
    %v2308 = vmul.f32 %v2052, 0.2
    %v2309 = vmul.f32 %v2053, 0.2
    %v2310 = vmul.f32 %v2054, 0.2
    %v2311 = vmul.f32 %v2055, 0.2
    %v2312 = vmul.f32 %v2056, 0.2
    %v2313 = vmul.f32 %v2057, 0.2
    %v2314 = vmul.f32 %v2058, 0.2
    %v2315 = vmul.f32 %v2059, 0.2
    %v2316 = vmul.f32 %v2060, 0.2
    %v2317 = vmul.f32 %v2061, 0.2
    %v2318 = vmul.f32 %v2062, 0.2
    %v2319 = vmul.f32 %v2063, 0.2
    %v2320 = vmul.f32 %v2064, 0.2
    %v2321 = vmul.f32 %v2065, 0.2
    %v2322 = vmul.f32 %v2066, 0.2
    %v2323 = vmul.f32 %v2067, 0.2
    %v2324 = vmul.f32 %v2068, 0.2
    %v2325 = vmul.f32 %v2069, 0.2
    %v2326 = vmul.f32 %v2070, 0.2
    %v2327 = vmul.f32 %v2071, 0.2
    %v2328 = vmul.f32 %v2072, 0.2
    %v2329 = vmul.f32 %v2073, 0.2
    %v2330 = vsel %vm2074, %v1946, %v2202
    %v2331 = vsel %vm2075, %v1947, %v2203
    %v2332 = vsel %vm2076, %v1948, %v2204
    %v2333 = vsel %vm2077, %v1949, %v2205
    %v2334 = vsel %vm2078, %v1950, %v2206
    %v2335 = vsel %vm2079, %v1951, %v2207
    %v2336 = vsel %vm2080, %v1952, %v2208
    %v2337 = vsel %vm2081, %v1953, %v2209
    %v2338 = vsel %vm2082, %v1954, %v2210
    %v2339 = vsel %vm2083, %v1955, %v2211
    %v2340 = vsel %vm2084, %v1956, %v2212
    %v2341 = vsel %vm2085, %v1957, %v2213
    %v2342 = vsel %vm2086, %v1958, %v2214
    %v2343 = vsel %vm2087, %v1959, %v2215
    %v2344 = vsel %vm2088, %v1960, %v2216
    %v2345 = vsel %vm2089, %v1961, %v2217
    %v2346 = vsel %vm2090, %v1962, %v2218
    %v2347 = vsel %vm2091, %v1963, %v2219
    %v2348 = vsel %vm2092, %v1964, %v2220
    %v2349 = vsel %vm2093, %v1965, %v2221
    %v2350 = vsel %vm2094, %v1966, %v2222
    %v2351 = vsel %vm2095, %v1967, %v2223
    %v2352 = vsel %vm2096, %v1968, %v2224
    %v2353 = vsel %vm2097, %v1969, %v2225
    %v2354 = vsel %vm2098, %v1970, %v2226
    %v2355 = vsel %vm2099, %v1971, %v2227
    %v2356 = vsel %vm2100, %v1972, %v2228
    %v2357 = vsel %vm2101, %v1973, %v2229
    %v2358 = vsel %vm2102, %v1974, %v2230
    %v2359 = vsel %vm2103, %v1975, %v2231
    %v2360 = vsel %vm2104, %v1976, %v2232
    %v2361 = vsel %vm2105, %v1977, %v2233
    %v2362 = vsel %vm2106, %v1978, %v2234
    %v2363 = vsel %vm2107, %v1979, %v2235
    %v2364 = vsel %vm2108, %v1980, %v2236
    %v2365 = vsel %vm2109, %v1981, %v2237
    %v2366 = vsel %vm2110, %v1982, %v2238
    %v2367 = vsel %vm2111, %v1983, %v2239
    %v2368 = vsel %vm2112, %v1984, %v2240
    %v2369 = vsel %vm2113, %v1985, %v2241
    %v2370 = vsel %vm2114, %v1986, %v2242
    %v2371 = vsel %vm2115, %v1987, %v2243
    %v2372 = vsel %vm2116, %v1988, %v2244
    %v2373 = vsel %vm2117, %v1989, %v2245
    %v2374 = vsel %vm2118, %v1990, %v2246
    %v2375 = vsel %vm2119, %v1991, %v2247
    %v2376 = vsel %vm2120, %v1992, %v2248
    %v2377 = vsel %vm2121, %v1993, %v2249
    %v2378 = vsel %vm2122, %v1994, %v2250
    %v2379 = vsel %vm2123, %v1995, %v2251
    %v2380 = vsel %vm2124, %v1996, %v2252
    %v2381 = vsel %vm2125, %v1997, %v2253
    %v2382 = vsel %vm2126, %v1998, %v2254
    %v2383 = vsel %vm2127, %v1999, %v2255
    %v2384 = vsel %vm2128, %v2000, %v2256
    %v2385 = vsel %vm2129, %v2001, %v2257
    %v2386 = vsel %vm2130, %v2002, %v2258
    %v2387 = vsel %vm2131, %v2003, %v2259
    %v2388 = vsel %vm2132, %v2004, %v2260
    %v2389 = vsel %vm2133, %v2005, %v2261
    %v2390 = vsel %vm2134, %v2006, %v2262
    %v2391 = vsel %vm2135, %v2007, %v2263
    %v2392 = vsel %vm2136, %v2008, %v2264
    %v2393 = vsel %vm2137, %v2009, %v2265
    %v2394 = vsel %vm2138, %v2010, %v2266
    %v2395 = vsel %vm2139, %v2011, %v2267
    %v2396 = vsel %vm2140, %v2012, %v2268
    %v2397 = vsel %vm2141, %v2013, %v2269
    %v2398 = vsel %vm2142, %v2014, %v2270
    %v2399 = vsel %vm2143, %v2015, %v2271
    %v2400 = vsel %vm2144, %v2016, %v2272
    %v2401 = vsel %vm2145, %v2017, %v2273
    %v2402 = vsel %vm2146, %v2018, %v2274
    %v2403 = vsel %vm2147, %v2019, %v2275
    %v2404 = vsel %vm2148, %v2020, %v2276
    %v2405 = vsel %vm2149, %v2021, %v2277
    %v2406 = vsel %vm2150, %v2022, %v2278
    %v2407 = vsel %vm2151, %v2023, %v2279
    %v2408 = vsel %vm2152, %v2024, %v2280
    %v2409 = vsel %vm2153, %v2025, %v2281
    %v2410 = vsel %vm2154, %v2026, %v2282
    %v2411 = vsel %vm2155, %v2027, %v2283
    %v2412 = vsel %vm2156, %v2028, %v2284
    %v2413 = vsel %vm2157, %v2029, %v2285
    %v2414 = vsel %vm2158, %v2030, %v2286
    %v2415 = vsel %vm2159, %v2031, %v2287
    %v2416 = vsel %vm2160, %v2032, %v2288
    %v2417 = vsel %vm2161, %v2033, %v2289
    %v2418 = vsel %vm2162, %v2034, %v2290
    %v2419 = vsel %vm2163, %v2035, %v2291
    %v2420 = vsel %vm2164, %v2036, %v2292
    %v2421 = vsel %vm2165, %v2037, %v2293
    %v2422 = vsel %vm2166, %v2038, %v2294
    %v2423 = vsel %vm2167, %v2039, %v2295
    %v2424 = vsel %vm2168, %v2040, %v2296
    %v2425 = vsel %vm2169, %v2041, %v2297
    %v2426 = vsel %vm2170, %v2042, %v2298
    %v2427 = vsel %vm2171, %v2043, %v2299
    %v2428 = vsel %vm2172, %v2044, %v2300
    %v2429 = vsel %vm2173, %v2045, %v2301
    %v2430 = vsel %vm2174, %v2046, %v2302
    %v2431 = vsel %vm2175, %v2047, %v2303
    %v2432 = vsel %vm2176, %v2048, %v2304
    %v2433 = vsel %vm2177, %v2049, %v2305
    %v2434 = vsel %vm2178, %v2050, %v2306
    %v2435 = vsel %vm2179, %v2051, %v2307
    %v2436 = vsel %vm2180, %v2052, %v2308
    %v2437 = vsel %vm2181, %v2053, %v2309
    %v2438 = vsel %vm2182, %v2054, %v2310
    %v2439 = vsel %vm2183, %v2055, %v2311
    %v2440 = vsel %vm2184, %v2056, %v2312
    %v2441 = vsel %vm2185, %v2057, %v2313
    %v2442 = vsel %vm2186, %v2058, %v2314
    %v2443 = vsel %vm2187, %v2059, %v2315
    %v2444 = vsel %vm2188, %v2060, %v2316
    %v2445 = vsel %vm2189, %v2061, %v2317
    %v2446 = vsel %vm2190, %v2062, %v2318
    %v2447 = vsel %vm2191, %v2063, %v2319
    %v2448 = vsel %vm2192, %v2064, %v2320
    %v2449 = vsel %vm2193, %v2065, %v2321
    %v2450 = vsel %vm2194, %v2066, %v2322
    %v2451 = vsel %vm2195, %v2067, %v2323
    %v2452 = vsel %vm2196, %v2068, %v2324
    %v2453 = vsel %vm2197, %v2069, %v2325
    %v2454 = vsel %vm2198, %v2070, %v2326
    %v2455 = vsel %vm2199, %v2071, %v2327
    %v2456 = vsel %vm2200, %v2072, %v2328
    %v2457 = vsel %vm2201, %v2073, %v2329
    %v2458 = vpack.c.bf16 %v2331, %v2330
    %v2459 = vpack.c.bf16 %v2333, %v2332
    %v2460 = vpack.c.bf16 %v2335, %v2334
    %v2461 = vpack.c.bf16 %v2337, %v2336
    %v2462 = vpack.c.bf16 %v2339, %v2338
    %v2463 = vpack.c.bf16 %v2341, %v2340
    %v2464 = vpack.c.bf16 %v2343, %v2342
    %v2465 = vpack.c.bf16 %v2345, %v2344
    %v2466 = vpack.c.bf16 %v2347, %v2346
    %v2467 = vpack.c.bf16 %v2349, %v2348
    %v2468 = vpack.c.bf16 %v2351, %v2350
    %v2469 = vpack.c.bf16 %v2353, %v2352
    %v2470 = vpack.c.bf16 %v2355, %v2354
    %v2471 = vpack.c.bf16 %v2357, %v2356
    %v2472 = vpack.c.bf16 %v2359, %v2358
    %v2473 = vpack.c.bf16 %v2361, %v2360
    %v2474 = vpack.c.bf16 %v2363, %v2362
    %v2475 = vpack.c.bf16 %v2365, %v2364
    %v2476 = vpack.c.bf16 %v2367, %v2366
    %v2477 = vpack.c.bf16 %v2369, %v2368
    %v2478 = vpack.c.bf16 %v2371, %v2370
    %v2479 = vpack.c.bf16 %v2373, %v2372
    %v2480 = vpack.c.bf16 %v2375, %v2374
    %v2481 = vpack.c.bf16 %v2377, %v2376
    %v2482 = vpack.c.bf16 %v2379, %v2378
    %v2483 = vpack.c.bf16 %v2381, %v2380
    %v2484 = vpack.c.bf16 %v2383, %v2382
    %v2485 = vpack.c.bf16 %v2385, %v2384
    %v2486 = vpack.c.bf16 %v2387, %v2386
    %v2487 = vpack.c.bf16 %v2389, %v2388
    %v2488 = vpack.c.bf16 %v2391, %v2390
    %v2489 = vpack.c.bf16 %v2393, %v2392
    %v2490 = vpack.c.bf16 %v2395, %v2394
    %v2491 = vpack.c.bf16 %v2397, %v2396
    %v2492 = vpack.c.bf16 %v2399, %v2398
    %v2493 = vpack.c.bf16 %v2401, %v2400
    %v2494 = vpack.c.bf16 %v2403, %v2402
    %v2495 = vpack.c.bf16 %v2405, %v2404
    %v2496 = vpack.c.bf16 %v2407, %v2406
    %v2497 = vpack.c.bf16 %v2409, %v2408
    %v2498 = vpack.c.bf16 %v2411, %v2410
    %v2499 = vpack.c.bf16 %v2413, %v2412
    %v2500 = vpack.c.bf16 %v2415, %v2414
    %v2501 = vpack.c.bf16 %v2417, %v2416
    %v2502 = vpack.c.bf16 %v2419, %v2418
    %v2503 = vpack.c.bf16 %v2421, %v2420
    %v2504 = vpack.c.bf16 %v2423, %v2422
    %v2505 = vpack.c.bf16 %v2425, %v2424
    %v2506 = vpack.c.bf16 %v2427, %v2426
    %v2507 = vpack.c.bf16 %v2429, %v2428
    %v2508 = vpack.c.bf16 %v2431, %v2430
    %v2509 = vpack.c.bf16 %v2433, %v2432
    %v2510 = vpack.c.bf16 %v2435, %v2434
    %v2511 = vpack.c.bf16 %v2437, %v2436
    %v2512 = vpack.c.bf16 %v2439, %v2438
    %v2513 = vpack.c.bf16 %v2441, %v2440
    %v2514 = vpack.c.bf16 %v2443, %v2442
    %v2515 = vpack.c.bf16 %v2445, %v2444
    %v2516 = vpack.c.bf16 %v2447, %v2446
    %v2517 = vpack.c.bf16 %v2449, %v2448
    %v2518 = vpack.c.bf16 %v2451, %v2450
    %v2519 = vpack.c.bf16 %v2453, %v2452
    %v2520 = vpack.c.bf16 %v2455, %v2454
    %v2521 = vpack.c.bf16 %v2457, %v2456
    %v2522 = vld [vmem:[%s1] sm:$0xff]
    %v2523 = vld [vmem:[%s1 + $0x8] sm:$0xff]
    %v2524 = vld [vmem:[%s1 + $0x10] sm:$0xff]
    %v2525 = vld [vmem:[%s1 + $0x18] sm:$0xff]
    %v2530 = vunpack.c.l.b16 %v2522
    %v2531 = vunpack.c.h.b16 %v2522
    %v2532 = vunpack.c.l.b16 %v2523
    %v2533 = vunpack.c.h.b16 %v2523
    %v2534 = vunpack.c.l.b16 %v2524
    %v2535 = vunpack.c.h.b16 %v2524
    %v2536 = vunpack.c.l.b16 %v2525
    %v2537 = vunpack.c.h.b16 %v2525
    %v2538 = vpack.c.b16 %v2530, %v2530
    %v2539 = vpack.c.b16 %v2531, %v2531
    %v2540 = vpack.c.b16 %v2532, %v2532
    %v2541 = vpack.c.b16 %v2533, %v2533
    %v2542 = vpack.c.b16 %v2534, %v2534
    %v2543 = vpack.c.b16 %v2535, %v2535
    %v2544 = vpack.c.b16 %v2536, %v2536
    %v2545 = vpack.c.b16 %v2537, %v2537
    %2554 = vmatprep.subr.bf16.mxu0 0
    %2555 = vmatpush1.bf16.msra.mxu0 %v2458
    %2556 = vmatprep.subr.bf16.mxu0 0
    %2557 = vmatpush1.bf16.msra.mxu0 %v2459
    %2558 = vmatprep.subr.bf16.mxu0 0
    %2559 = vmatpush1.bf16.msra.mxu0 %v2460
    %2560 = vmatprep.subr.bf16.mxu0 0
    %2561 = vmatpush1.bf16.msra.mxu0 %v2461
    %2562 = vmatprep.subr.bf16.mxu0 0
    %2563 = vmatpush1.bf16.msra.mxu0 %v2462
    %2564 = vmatprep.subr.bf16.mxu0 0
    %2565 = vmatpush1.bf16.msra.mxu0 %v2463
    %2566 = vmatprep.subr.bf16.mxu0 0
    %2567 = vmatpush1.bf16.msra.mxu0 %v2464
    %2568 = vmatprep.subr.bf16.mxu0 0
    %2569 = vmatpush1.bf16.msra.mxu0 %v2465
    %2570 = vmatprep.subr.bf16.mxu0 0
    %2571 = vmatpush1.bf16.msra.mxu0 %v2466
    %2572 = vmatprep.subr.bf16.mxu0 0
    %2573 = vmatpush1.bf16.msra.mxu0 %v2467
    %2574 = vmatprep.subr.bf16.mxu0 0
    %2575 = vmatpush1.bf16.msra.mxu0 %v2468
    %2576 = vmatprep.subr.bf16.mxu0 0
    %2577 = vmatpush1.bf16.msra.mxu0 %v2469
    %2578 = vmatprep.subr.bf16.mxu0 0
    %2579 = vmatpush1.bf16.msra.mxu0 %v2470
    %2580 = vmatprep.subr.bf16.mxu0 0
    %2581 = vmatpush1.bf16.msra.mxu0 %v2471
    %2582 = vmatprep.subr.bf16.mxu0 0
    %2583 = vmatpush1.bf16.msra.mxu0 %v2472
    %2584 = vmatprep.subr.bf16.mxu0 0
    %2585 = vmatpush1.bf16.msra.mxu0 %v2473
    %2586 = vmatprep.mubr.bf16.mxu0 %v2539
    %2587 = vmatmul.mubr.bf16.gmra.mrb[0].mxu0 %v2538
    %v2588 = vpop.f32.mrb[0].mxu0
    %v2589 = vadd.f32 0.0, %v2588
    %v2590 = vpop.f32.mrb[0].mxu0
    %v2591 = vpop.f32.mrb[0].mxu0
    %v2592 = vpop.f32.mrb[0].mxu0
    %2593 = vdwg.mxu0
    %2594 = vmatprep.subr.bf16.mxu0 0
    %2595 = vmatpush1.bf16.msra.mxu0 %v2474
    %2596 = vmatprep.subr.bf16.mxu0 0
    %2597 = vmatpush1.bf16.msra.mxu0 %v2475
    %2598 = vmatprep.subr.bf16.mxu0 0
    %2599 = vmatpush1.bf16.msra.mxu0 %v2476
    %2600 = vmatprep.subr.bf16.mxu0 0
    %2601 = vmatpush1.bf16.msra.mxu0 %v2477
    %2602 = vmatprep.subr.bf16.mxu0 0
    %2603 = vmatpush1.bf16.msra.mxu0 %v2478
    %2604 = vmatprep.subr.bf16.mxu0 0
    %2605 = vmatpush1.bf16.msra.mxu0 %v2479
    %2606 = vmatprep.subr.bf16.mxu0 0
    %2607 = vmatpush1.bf16.msra.mxu0 %v2480
    %2608 = vmatprep.subr.bf16.mxu0 0
    %2609 = vmatpush1.bf16.msra.mxu0 %v2481
    %2610 = vmatprep.subr.bf16.mxu0 0
    %2611 = vmatpush1.bf16.msra.mxu0 %v2482
    %2612 = vmatprep.subr.bf16.mxu0 0
    %2613 = vmatpush1.bf16.msra.mxu0 %v2483
    %2614 = vmatprep.subr.bf16.mxu0 0
    %2615 = vmatpush1.bf16.msra.mxu0 %v2484
    %2616 = vmatprep.subr.bf16.mxu0 0
    %2617 = vmatpush1.bf16.msra.mxu0 %v2485
    %2618 = vmatprep.subr.bf16.mxu0 0
    %2619 = vmatpush1.bf16.msra.mxu0 %v2486
    %2620 = vmatprep.subr.bf16.mxu0 0
    %2621 = vmatpush1.bf16.msra.mxu0 %v2487
    %2622 = vmatprep.subr.bf16.mxu0 0
    %2623 = vmatpush1.bf16.msra.mxu0 %v2488
    %2624 = vmatprep.subr.bf16.mxu0 0
    %2625 = vmatpush1.bf16.msra.mxu0 %v2489
    %2626 = vmatprep.mubr.bf16.mxu0 %v2541
    %2627 = vmatmul.mubr.bf16.gmra.mrb[0].mxu0 %v2540
    %v2628 = vpop.f32.mrb[0].mxu0
    %v2629 = vadd.f32 %v2589, %v2628
    %v2630 = vpop.f32.mrb[0].mxu0
    %v2631 = vpop.f32.mrb[0].mxu0
    %v2632 = vpop.f32.mrb[0].mxu0
    %2633 = vdwg.mxu0
    %2634 = vmatprep.subr.bf16.mxu0 0
    %2635 = vmatpush1.bf16.msra.mxu0 %v2490
    %2636 = vmatprep.subr.bf16.mxu0 0
    %2637 = vmatpush1.bf16.msra.mxu0 %v2491
    %2638 = vmatprep.subr.bf16.mxu0 0
    %2639 = vmatpush1.bf16.msra.mxu0 %v2492
    %2640 = vmatprep.subr.bf16.mxu0 0
    %2641 = vmatpush1.bf16.msra.mxu0 %v2493
    %2642 = vmatprep.subr.bf16.mxu0 0
    %2643 = vmatpush1.bf16.msra.mxu0 %v2494
    %2644 = vmatprep.subr.bf16.mxu0 0
    %2645 = vmatpush1.bf16.msra.mxu0 %v2495
    %2646 = vmatprep.subr.bf16.mxu0 0
    %2647 = vmatpush1.bf16.msra.mxu0 %v2496
    %2648 = vmatprep.subr.bf16.mxu0 0
    %2649 = vmatpush1.bf16.msra.mxu0 %v2497
    %2650 = vmatprep.subr.bf16.mxu0 0
    %2651 = vmatpush1.bf16.msra.mxu0 %v2498
    %2652 = vmatprep.subr.bf16.mxu0 0
    %2653 = vmatpush1.bf16.msra.mxu0 %v2499
    %2654 = vmatprep.subr.bf16.mxu0 0
    %2655 = vmatpush1.bf16.msra.mxu0 %v2500
    %2656 = vmatprep.subr.bf16.mxu0 0
    %2657 = vmatpush1.bf16.msra.mxu0 %v2501
    %2658 = vmatprep.subr.bf16.mxu0 0
    %2659 = vmatpush1.bf16.msra.mxu0 %v2502
    %2660 = vmatprep.subr.bf16.mxu0 0
    %2661 = vmatpush1.bf16.msra.mxu0 %v2503
    %2662 = vmatprep.subr.bf16.mxu0 0
    %2663 = vmatpush1.bf16.msra.mxu0 %v2504
    %2664 = vmatprep.subr.bf16.mxu0 0
    %2665 = vmatpush1.bf16.msra.mxu0 %v2505
    %2666 = vmatprep.mubr.bf16.mxu0 %v2543
    %2667 = vmatmul.mubr.bf16.gmra.mrb[0].mxu0 %v2542
    %v2668 = vpop.f32.mrb[0].mxu0
    %v2669 = vadd.f32 %v2629, %v2668
    %v2670 = vpop.f32.mrb[0].mxu0
    %v2671 = vpop.f32.mrb[0].mxu0
    %v2672 = vpop.f32.mrb[0].mxu0
    %2673 = vdwg.mxu0
    %2674 = vmatprep.subr.bf16.mxu0 0
    %2675 = vmatpush1.bf16.msra.mxu0 %v2506
    %2676 = vmatprep.subr.bf16.mxu0 0
    %2677 = vmatpush1.bf16.msra.mxu0 %v2507
    %2678 = vmatprep.subr.bf16.mxu0 0
    %2679 = vmatpush1.bf16.msra.mxu0 %v2508
    %2680 = vmatprep.subr.bf16.mxu0 0
    %2681 = vmatpush1.bf16.msra.mxu0 %v2509
    %2682 = vmatprep.subr.bf16.mxu0 0
    %2683 = vmatpush1.bf16.msra.mxu0 %v2510
    %2684 = vmatprep.subr.bf16.mxu0 0
    %2685 = vmatpush1.bf16.msra.mxu0 %v2511
    %2686 = vmatprep.subr.bf16.mxu0 0
    %2687 = vmatpush1.bf16.msra.mxu0 %v2512
    %2688 = vmatprep.subr.bf16.mxu0 0
    %2689 = vmatpush1.bf16.msra.mxu0 %v2513
    %2690 = vmatprep.subr.bf16.mxu0 0
    %2691 = vmatpush1.bf16.msra.mxu0 %v2514
    %2692 = vmatprep.subr.bf16.mxu0 0
    %2693 = vmatpush1.bf16.msra.mxu0 %v2515
    %2694 = vmatprep.subr.bf16.mxu0 0
    %2695 = vmatpush1.bf16.msra.mxu0 %v2516
    %2696 = vmatprep.subr.bf16.mxu0 0
    %2697 = vmatpush1.bf16.msra.mxu0 %v2517
    %2698 = vmatprep.subr.bf16.mxu0 0
    %2699 = vmatpush1.bf16.msra.mxu0 %v2518
    %2700 = vmatprep.subr.bf16.mxu0 0
    %2701 = vmatpush1.bf16.msra.mxu0 %v2519
    %2702 = vmatprep.subr.bf16.mxu0 0
    %2703 = vmatpush1.bf16.msra.mxu0 %v2520
    %2704 = vmatprep.subr.bf16.mxu0 0
    %2705 = vmatpush1.bf16.msra.mxu0 %v2521
    %2706 = vmatprep.mubr.bf16.mxu0 %v2545
    %2707 = vmatmul.mubr.bf16.gmra.mrb[0].mxu0 %v2544
    %v2708 = vpop.f32.mrb[0].mxu0
    %v2709 = vadd.f32 %v2669, %v2708
    %v2710 = vpop.f32.mrb[0].mxu0
    %v2711 = vpop.f32.mrb[0].mxu0
    %v2712 = vpop.f32.mrb[0].mxu0
    %2713 = vdwg.mxu0
    %s2714 = smul.u32 0, 128
    %v2715 = vlaneseq
    %v2716 = vand.u32 %v2715, 127
    %v2717 = vstv %s2714
    %v2718 = vadd.s32 %v2717, %v2716
    %vm2719 = vcmp.lt.s32.totalorder %v2718, 8
    %v2720 = vsel %vm2719, 1, 0
    %vm2721 = vcmp.eq.s32.totalorder %v2720, 1
    %v2722 = vsel %vm2721, %v2709, 0.0
    %2723 = vadd.xlane.f32.xlu0 %v2722
    %v2724 = vpop.xlane.xlu0 %2723
    %vm2725 = vcmask 7168
    %2726 = vst.msk [vmem:[#allocation2] sm:$0xff] %vm2725, %v2724
    %v2727 = vmul.f32 %v2722, %v2722
    %2728 = vadd.xlane.f32.xlu0 %v2727
    %v2729 = vpop.xlane.xlu0 %2728
    %2730 = vst.msk [vmem:[#allocation4] sm:$0xff] %vm2725, %v2729
    %v2731 = vld [vmem:[%s4] sm:$0xff]
    %2733 = vset.pattern.permute.xlu0 0
    %2734 = vperm.xlu0 %2733, %v2731
    %v2735 = vpop.permute.xlu0 %2734
    %v2737 = vadd.f32 %v2709, %v2735
    %2738 = vst [vmem:[%s5] sm:$0xff] %v2737
    // Predicated region
    $region22: #{_lambda_.9} parent=1 // pred_check
      _
    $region23: #{_lambda_.9} parent=1 // pred_check_branch
      %2740 = sbr.rel (0) target = $region25
    $region24: #{_lambda_.9} parent=1 // pred_region
      _
    $region25: #{_lambda_.9} parent=1 // pred_fallthru
      _
    // Predicated region
    $region26: #{_lambda_.9} parent=1 // pred_check
      _
    $region27: #{_lambda_.9} parent=1 // pred_check_branch
      %2742 = sbr.rel (0) target = $region29
    $region28: #{_lambda_.9} parent=1 // pred_region
      %s2744 = ssub.s32 128, 128
      %2745 = vsyncadd [#allocation3], %s2744
      %s2747 = sshll.u32 [#allocation2], 4
      %s2748 = int_to_ptr.vmem [resolvable:$true] %s2747
      %2750 = dma.vmem_to_hbm [thread:$0]  %s2748, 128, %s6, [#allocation3]
    $region29: #{_lambda_.9} parent=1 // pred_fallthru
      _
    // Predicated region
    $region30: #{_lambda_.9} parent=1 // pred_check
      _
    $region31: #{_lambda_.9} parent=1 // pred_check_branch
      %2752 = sbr.rel (0) target = $region33
    $region32: #{_lambda_.9} parent=1 // pred_region
      %s2754 = ssub.s32 128, 128
      %2755 = vsyncadd [#allocation5], %s2754
      %s2757 = sshll.u32 [#allocation4], 4
      %s2758 = int_to_ptr.vmem [resolvable:$true] %s2757
      %2760 = dma.vmem_to_hbm [thread:$0]  %s2758, 128, %s7, [#allocation5]
    $region33: #{_lambda_.9} parent=1 // pred_fallthru
      _
    // Predicated region
    $region34: #{_lambda_.9} parent=1 // pred_check
      _
    $region35: #{_lambda_.9} parent=1 // pred_check_branch
      %2762 = sbr.rel (0) target = $region37
    $region36: #{_lambda_.9} parent=1 // pred_region
      _
    $region37: #{_lambda_.9} parent=1 // pred_fallthru
      _
    // Predicated region
    $region38: #{_lambda_.9} parent=1 // pred_check
      _
    $region39: #{_lambda_.9} parent=1 // pred_check_branch
      %2764 = sbr.rel (0) target = $region41
    $region40: #{_lambda_.9} parent=1 // pred_region
      %2765 = dma.done [#allocation3], 128
    $region41: #{_lambda_.9} parent=1 // pred_fallthru
      _
    // Predicated region
    $region42: #{_lambda_.9} parent=1 // pred_check
      _
    $region43: #{_lambda_.9} parent=1 // pred_check_branch
      %2767 = sbr.rel (0) target = $region45
    $region44: #{_lambda_.9} parent=1 // pred_region
      %2768 = dma.done [#allocation5], 128
    $region45: #{_lambda_.9} parent=1 // pred_fallthru
      _
    %2769 = vsyncpa [#allocation3], 1
    %2770 = vsyncpa [#allocation5], 1

</llo_original>
